<compile_context>
chip_gen: v5e
topology: v5e:2x2
jax: 0.10.0
libtpu: 0.0.40
codegen_flags: <defaults>
</compile_context>

<pallas_src>
import jax
import jax.numpy as jnp
import numpy as np
from jax.experimental import pallas as pl
from jax.experimental.pallas import tpu as pltpu

EPS = 1e-5   # PyTorch BatchNorm2d default eps
LANE = 128   # TPU lane width


def _round_up(x, m):
    return (x + m - 1) // m * m


def double_conv_kernel(xp_ref, w1_ref, g1_ref, b1_ref, w2_ref, g2_ref, b2_ref,
                       out_ref, h1pad_ref):
    # xp_ref   : (N, H+2, W+2, Cin_p)  spatially pre-padded, channel-padded input
    # w*_ref   : (9*Cin_p, C_p) / (9*C_p, C_p)  pre-flattened im2col weights
    # g*/b*    : (1, C_p)
    # out_ref  : (N*H*W, C_p)          lane-dense 2D output view
    # h1pad_ref: (N, H+2, W+2, C_p)    scratch for the padded intermediate
    N, Hp, Wp, _ = xp_ref.shape
    H, W = Hp - 2, Wp - 2
    C = out_ref.shape[-1]
    M = N * H * W
    inv_m = 1.0 / M

    def im2col(x_pad):
        # (N, H+2, W+2, cin) -> (M, 9*cin); the ky slice is hoisted out of the
        # kx loop and each tap slab is a multiple of 128 lanes wide, so the
        # concat along the lane axis is tile-aligned.
        cin = x_pad.shape[-1]
        cols = []
        for ky in range(3):
            row = x_pad[:, ky:ky + H, :, :]           # (N, H, W+2, cin)
            for kx in range(3):
                cols.append(row[:, :, kx:kx + W, :].reshape(M, cin))
        return jnp.concatenate(cols, axis=-1)         # (M, 9*cin)

    def conv_bn_relu(x_pad, w_ref, g_ref, b_ref):
        # one MXU matmul per conv: (M, 9*cin) x (9*cin, C) -> (M, C), f32 acc
        y = jnp.dot(im2col(x_pad), w_ref[...],
                    preferred_element_type=jnp.float32)
        # single-pass train-mode batch stats over the full (N, H, W) extent
        s1 = jnp.sum(y, axis=0, keepdims=True)          # (1, C)
        s2 = jnp.sum(y * y, axis=0, keepdims=True)      # (1, C)
        mean = s1 * inv_m
        var = s2 * inv_m - mean * mean                  # biased variance
        scale = g_ref[...] * jax.lax.rsqrt(var + EPS)   # gamma folded (EUP rsqrt)
        shift = b_ref[...] - mean * scale
        return jnp.maximum(y * scale + shift, 0.0)      # fused affine + ReLU

    # --- conv1 -> bn1 -> relu (all math stays 2D) ---
    h1 = conv_bn_relu(xp_ref[...], w1_ref, g1_ref, b1_ref)

    # Re-pad h1 spatially in the VMEM scratch: zero ONLY the 1-pixel border
    # ring (4 thin stores), then store the interior once -- no full memset.
    zrow = jnp.zeros((N, 1, Wp, C), jnp.float32)
    zcol = jnp.zeros((N, Hp, 1, C), jnp.float32)
    h1pad_ref[:, 0:1, :, :] = zrow
    h1pad_ref[:, H + 1:H + 2, :, :] = zrow
    h1pad_ref[:, :, 0:1, :] = zcol
    h1pad_ref[:, :, W + 1:W + 2, :] = zcol
    h1pad_ref[:, 1:1 + H, 1:1 + W, :] = h1.reshape(N, H, W, C)

    # --- conv2 -> bn2 -> relu ---
    out_ref[...] = conv_bn_relu(h1pad_ref[...], w2_ref, g2_ref, b2_ref
                                ).astype(out_ref.dtype)


def double_conv_pallas(x_nchw, w1, g1, b1, w2, g2, b2):
    """x_nchw: (N, Cin, H, W); w1: (3,3,Cin,Cout), w2: (3,3,Cout,Cout) HWIO."""
    N, Cin, H, W = x_nchw.shape
    Cout = w1.shape[-1]
    cin_p = _round_up(Cin, LANE)
    c_p = _round_up(Cout, LANE)

    # NCHW -> NHWC, spatial zero-pad, channel-pad up to the lane width.
    x = jnp.transpose(x_nchw, (0, 2, 3, 1)).astype(jnp.float32)
    x = jnp.pad(x, ((0, 0), (1, 1), (1, 1), (0, cin_p - Cin)))

    # Pre-flatten the weights to im2col layout (9*cin, cout), channel-padded.
    w1f = jnp.pad(w1.astype(jnp.float32),
                  ((0, 0), (0, 0), (0, cin_p - Cin), (0, c_p - Cout))
                  ).reshape(9 * cin_p, c_p)
    w2f = jnp.pad(w2.astype(jnp.float32),
                  ((0, 0), (0, 0), (0, c_p - Cout), (0, c_p - Cout))
                  ).reshape(9 * c_p, c_p)

    def pad_vec(v):
        return jnp.pad(v.astype(jnp.float32), (0, c_p - Cout)).reshape(1, c_p)

    out2d = pl.pallas_call(
        double_conv_kernel,
        out_shape=jax.ShapeDtypeStruct((N * H * W, c_p), jnp.float32),
        in_specs=[pl.BlockSpec(memory_space=pltpu.MemorySpace.VMEM)] * 7,
        out_specs=pl.BlockSpec(memory_space=pltpu.MemorySpace.VMEM),
        scratch_shapes=[pltpu.VMEM((N, H + 2, W + 2, c_p), jnp.float32)],
        compiler_params=pltpu.CompilerParams(
            vmem_limit_bytes=48 * 1024 * 1024),
    )(x, w1f, pad_vec(g1), pad_vec(b1), w2f, pad_vec(g2), pad_vec(b2))

    out = out2d.reshape(N, H, W, c_p)[..., :Cout]
    return jnp.transpose(out, (0, 3, 1, 2)).astype(x_nchw.dtype)


def double_conv_ref(x_nchw, w1, g1, b1, w2, g2, b2):
    """Pure-JAX reference matching PyTorch DoubleConv forward (train-mode BN)."""
    def block(x, w, g, b):
        w_oihw = jnp.transpose(w, (3, 2, 0, 1))  # (Cout, Cin, 3, 3)
        y = jax.lax.conv_general_dilated(
            x, w_oihw, window_strides=(1, 1), padding=((1, 1), (1, 1)),
            dimension_numbers=('NCHW', 'OIHW', 'NCHW'),
            precision=jax.lax.Precision.HIGHEST)
        mean = y.mean(axis=(0, 2, 3), keepdims=True)
        var = ((y - mean) ** 2).mean(axis=(0, 2, 3), keepdims=True)
        y = (y - mean) / jnp.sqrt(var + EPS)
        y = y * g.reshape(1, -1, 1, 1) + b.reshape(1, -1, 1, 1)
        return jnp.maximum(y, 0.0)

    h = block(x_nchw, w1, g1, b1)
    return block(h, w2, g2, b2)


if __name__ == "__main__":
    # Small shapes consistent with the module: NCHW input.
    N, Cin, Cout, H, W = 2, 4, 8, 16, 16

    key = jax.random.PRNGKey(0)
    kx, kw1, kw2, kg1, kb1, kg2, kb2 = jax.random.split(key, 7)

    x = jax.random.normal(kx, (N, Cin, H, W), dtype=jnp.float32)

    # Deterministic synthetic parameters (no bias on convs, per the module).
    w1 = jax.random.normal(kw1, (3, 3, Cin, Cout), dtype=jnp.float32) * 0.2
    w2 = jax.random.normal(kw2, (3, 3, Cout, Cout), dtype=jnp.float32) * 0.2
    g1 = 1.0 + 0.1 * jax.random.normal(kg1, (Cout,), dtype=jnp.float32)
    b1 = 0.1 * jax.random.normal(kb1, (Cout,), dtype=jnp.float32)
    g2 = 1.0 + 0.1 * jax.random.normal(kg2, (Cout,), dtype=jnp.float32)
    b2 = 0.1 * jax.random.normal(kb2, (Cout,), dtype=jnp.float32)

    out = jax.block_until_ready(double_conv_pallas(x, w1, g1, b1, w2, g2, b2))
    ref = jax.block_until_ready(double_conv_ref(x, w1, g1, b1, w2, g2, b2))
    np.testing.assert_allclose(np.asarray(out), np.asarray(ref),
                               rtol=1e-4, atol=1e-4)

    print("KERNEL_OK")
</pallas_src>

<mosaic_0001>
module attributes {stable_mosaic.version = 11 : i64} {
  func.func @double_conv_kernel(%arg0: memref<2x18x18x128xf32, #tpu.memory_space<vmem>>, %arg1: memref<1152x128xf32, #tpu.memory_space<vmem>>, %arg2: memref<1x128xf32, #tpu.memory_space<vmem>>, %arg3: memref<1x128xf32, #tpu.memory_space<vmem>>, %arg4: memref<1152x128xf32, #tpu.memory_space<vmem>>, %arg5: memref<1x128xf32, #tpu.memory_space<vmem>>, %arg6: memref<1x128xf32, #tpu.memory_space<vmem>>, %arg7: memref<512x128xf32, #tpu.memory_space<vmem>>, %arg8: memref<2x18x18x128xf32, #tpu.memory_space<vmem>>) attributes {dimension_semantics = [], scalar_prefetch = 0 : i64, scratch_operands = 1 : i64, tpu.core_type = #tpu.core_type<tc>} {
    %c0 = arith.constant 0 : index
    %c0_0 = arith.constant 0 : index
    %c0_1 = arith.constant 0 : index
    %c0_2 = arith.constant 0 : index
    %0 = vector.load %arg0[%c0, %c0_0, %c0_1, %c0_2] : memref<2x18x18x128xf32, #tpu.memory_space<vmem>>, vector<2x18x18x128xf32>
    %1 = vector.extract_strided_slice %0 {offsets = [0, 0, 0, 0], sizes = [2, 16, 18, 128], strides = [1, 1, 1, 1]} : vector<2x18x18x128xf32> to vector<2x16x18x128xf32>
    %2 = vector.extract_strided_slice %1 {offsets = [0, 0, 0, 0], sizes = [2, 16, 16, 128], strides = [1, 1, 1, 1]} : vector<2x16x18x128xf32> to vector<2x16x16x128xf32>
    %3 = vector.shape_cast %2 : vector<2x16x16x128xf32> to vector<512x128xf32>
    %4 = vector.extract_strided_slice %1 {offsets = [0, 0, 1, 0], sizes = [2, 16, 16, 128], strides = [1, 1, 1, 1]} : vector<2x16x18x128xf32> to vector<2x16x16x128xf32>
    %5 = vector.shape_cast %4 : vector<2x16x16x128xf32> to vector<512x128xf32>
    %6 = vector.extract_strided_slice %1 {offsets = [0, 0, 2, 0], sizes = [2, 16, 16, 128], strides = [1, 1, 1, 1]} : vector<2x16x18x128xf32> to vector<2x16x16x128xf32>
    %7 = vector.shape_cast %6 : vector<2x16x16x128xf32> to vector<512x128xf32>
    %8 = vector.extract_strided_slice %0 {offsets = [0, 1, 0, 0], sizes = [2, 16, 18, 128], strides = [1, 1, 1, 1]} : vector<2x18x18x128xf32> to vector<2x16x18x128xf32>
    %9 = vector.extract_strided_slice %8 {offsets = [0, 0, 0, 0], sizes = [2, 16, 16, 128], strides = [1, 1, 1, 1]} : vector<2x16x18x128xf32> to vector<2x16x16x128xf32>
    %10 = vector.shape_cast %9 : vector<2x16x16x128xf32> to vector<512x128xf32>
    %11 = vector.extract_strided_slice %8 {offsets = [0, 0, 1, 0], sizes = [2, 16, 16, 128], strides = [1, 1, 1, 1]} : vector<2x16x18x128xf32> to vector<2x16x16x128xf32>
    %12 = vector.shape_cast %11 : vector<2x16x16x128xf32> to vector<512x128xf32>
    %13 = vector.extract_strided_slice %8 {offsets = [0, 0, 2, 0], sizes = [2, 16, 16, 128], strides = [1, 1, 1, 1]} : vector<2x16x18x128xf32> to vector<2x16x16x128xf32>
    %14 = vector.shape_cast %13 : vector<2x16x16x128xf32> to vector<512x128xf32>
    %15 = vector.extract_strided_slice %0 {offsets = [0, 2, 0, 0], sizes = [2, 16, 18, 128], strides = [1, 1, 1, 1]} : vector<2x18x18x128xf32> to vector<2x16x18x128xf32>
    %16 = vector.extract_strided_slice %15 {offsets = [0, 0, 0, 0], sizes = [2, 16, 16, 128], strides = [1, 1, 1, 1]} : vector<2x16x18x128xf32> to vector<2x16x16x128xf32>
    %17 = vector.shape_cast %16 : vector<2x16x16x128xf32> to vector<512x128xf32>
    %18 = vector.extract_strided_slice %15 {offsets = [0, 0, 1, 0], sizes = [2, 16, 16, 128], strides = [1, 1, 1, 1]} : vector<2x16x18x128xf32> to vector<2x16x16x128xf32>
    %19 = vector.shape_cast %18 : vector<2x16x16x128xf32> to vector<512x128xf32>
    %20 = vector.extract_strided_slice %15 {offsets = [0, 0, 2, 0], sizes = [2, 16, 16, 128], strides = [1, 1, 1, 1]} : vector<2x16x18x128xf32> to vector<2x16x16x128xf32>
    %21 = vector.shape_cast %20 : vector<2x16x16x128xf32> to vector<512x128xf32>
    %22 = tpu.concatenate %3, %5, %7, %10, %12, %14, %17, %19, %21 in 1 : vector<512x128xf32>, vector<512x128xf32>, vector<512x128xf32>, vector<512x128xf32>, vector<512x128xf32>, vector<512x128xf32>, vector<512x128xf32>, vector<512x128xf32>, vector<512x128xf32> -> vector<512x1152xf32>
    %c0_3 = arith.constant 0 : index
    %c0_4 = arith.constant 0 : index
    %23 = vector.load %arg1[%c0_3, %c0_4] : memref<1152x128xf32, #tpu.memory_space<vmem>>, vector<1152x128xf32>
    %cst = arith.constant dense<0.000000e+00> : vector<512x128xf32>
    %24 = tpu.matmul %22, %23, %cst {dimension_numbers = #tpu.dot_dimension_numbers<[1], [0], [0], [1], [0, 0, 1, 1], [], []>} : vector<512x1152xf32>, vector<1152x128xf32>, vector<512x128xf32> -> vector<512x128xf32>
    %cst_5 = arith.constant dense<0.000000e+00> : vector<128xf32>
    %25 = vector.multi_reduction <add>, %24, %cst_5 [0] : vector<512x128xf32> to vector<128xf32>
    %26 = vector.shape_cast %25 : vector<128xf32> to vector<1x128xf32>
    %27 = arith.mulf %24, %24 : vector<512x128xf32>
    %cst_6 = arith.constant dense<0.000000e+00> : vector<128xf32>
    %28 = vector.multi_reduction <add>, %27, %cst_6 [0] : vector<512x128xf32> to vector<128xf32>
    %29 = vector.shape_cast %28 : vector<128xf32> to vector<1x128xf32>
    %cst_7 = arith.constant 0.001953125 : f32
    %30 = vector.broadcast %cst_7 : f32 to vector<1x128xf32>
    %31 = arith.mulf %26, %30 : vector<1x128xf32>
    %cst_8 = arith.constant 0.001953125 : f32
    %32 = vector.broadcast %cst_8 : f32 to vector<1x128xf32>
    %33 = arith.mulf %29, %32 : vector<1x128xf32>
    %34 = arith.mulf %31, %31 : vector<1x128xf32>
    %35 = arith.subf %33, %34 : vector<1x128xf32>
    %c0_9 = arith.constant 0 : index
    %c0_10 = arith.constant 0 : index
    %36 = vector.load %arg2[%c0_9, %c0_10] : memref<1x128xf32, #tpu.memory_space<vmem>>, vector<1x128xf32>
    %cst_11 = arith.constant 9.99999974E-6 : f32
    %37 = vector.broadcast %cst_11 : f32 to vector<1x128xf32>
    %38 = arith.addf %35, %37 : vector<1x128xf32>
    %39 = math.rsqrt %38 : vector<1x128xf32>
    %40 = arith.mulf %36, %39 : vector<1x128xf32>
    %c0_12 = arith.constant 0 : index
    %c0_13 = arith.constant 0 : index
    %41 = vector.load %arg3[%c0_12, %c0_13] : memref<1x128xf32, #tpu.memory_space<vmem>>, vector<1x128xf32>
    %42 = arith.mulf %31, %40 : vector<1x128xf32>
    %43 = arith.subf %41, %42 : vector<1x128xf32>
    %44 = vector.broadcast %40 : vector<1x128xf32> to vector<512x128xf32>
    %45 = arith.mulf %24, %44 : vector<512x128xf32>
    %46 = vector.broadcast %43 : vector<1x128xf32> to vector<512x128xf32>
    %47 = arith.addf %45, %46 : vector<512x128xf32>
    %cst_14 = arith.constant 0.000000e+00 : f32
    %48 = vector.broadcast %cst_14 : f32 to vector<512x128xf32>
    %49 = arith.maximumf %47, %48 : vector<512x128xf32>
    %cst_15 = arith.constant 0.000000e+00 : f32
    %50 = vector.broadcast %cst_15 : f32 to vector<2x1x18x128xf32>
    %cst_16 = arith.constant 0.000000e+00 : f32
    %51 = vector.broadcast %cst_16 : f32 to vector<2x18x1x128xf32>
    %c0_17 = arith.constant 0 : index
    %c0_18 = arith.constant 0 : index
    %c0_19 = arith.constant 0 : index
    %c0_20 = arith.constant 0 : index
    %52 = vector.load %arg8[%c0_17, %c0_18, %c0_19, %c0_20] : memref<2x18x18x128xf32, #tpu.memory_space<vmem>>, vector<2x1x18x128xf32>
    tpu.vector_store %arg8[%c0_17, %c0_18, %c0_19, %c0_20], %50 {strides = array<i32>} : memref<2x18x18x128xf32, #tpu.memory_space<vmem>>, vector<2x1x18x128xf32>,
    %c0_21 = arith.constant 0 : index
    %c17 = arith.constant 17 : index
    %c0_22 = arith.constant 0 : index
    %c0_23 = arith.constant 0 : index
    %53 = vector.load %arg8[%c0_21, %c17, %c0_22, %c0_23] : memref<2x18x18x128xf32, #tpu.memory_space<vmem>>, vector<2x1x18x128xf32>
    tpu.vector_store %arg8[%c0_21, %c17, %c0_22, %c0_23], %50 {strides = array<i32>} : memref<2x18x18x128xf32, #tpu.memory_space<vmem>>, vector<2x1x18x128xf32>,
    %c0_24 = arith.constant 0 : index
    %c0_25 = arith.constant 0 : index
    %c0_26 = arith.constant 0 : index
    %c0_27 = arith.constant 0 : index
    %54 = vector.load %arg8[%c0_24, %c0_25, %c0_26, %c0_27] : memref<2x18x18x128xf32, #tpu.memory_space<vmem>>, vector<2x18x1x128xf32>
    tpu.vector_store %arg8[%c0_24, %c0_25, %c0_26, %c0_27], %51 {strides = array<i32>} : memref<2x18x18x128xf32, #tpu.memory_space<vmem>>, vector<2x18x1x128xf32>,
    %c0_28 = arith.constant 0 : index
    %c0_29 = arith.constant 0 : index
    %c17_30 = arith.constant 17 : index
    %c0_31 = arith.constant 0 : index
    %55 = vector.load %arg8[%c0_28, %c0_29, %c17_30, %c0_31] : memref<2x18x18x128xf32, #tpu.memory_space<vmem>>, vector<2x18x1x128xf32>
    tpu.vector_store %arg8[%c0_28, %c0_29, %c17_30, %c0_31], %51 {strides = array<i32>} : memref<2x18x18x128xf32, #tpu.memory_space<vmem>>, vector<2x18x1x128xf32>,
    %56 = vector.shape_cast %49 : vector<512x128xf32> to vector<2x16x16x128xf32>
    %c0_32 = arith.constant 0 : index
    %c1 = arith.constant 1 : index
    %c1_33 = arith.constant 1 : index
    %c0_34 = arith.constant 0 : index
    %57 = vector.load %arg8[%c0_32, %c1, %c1_33, %c0_34] : memref<2x18x18x128xf32, #tpu.memory_space<vmem>>, vector<2x16x16x128xf32>
    tpu.vector_store %arg8[%c0_32, %c1, %c1_33, %c0_34], %56 {strides = array<i32>} : memref<2x18x18x128xf32, #tpu.memory_space<vmem>>, vector<2x16x16x128xf32>,
    %c0_35 = arith.constant 0 : index
    %c0_36 = arith.constant 0 : index
    %c0_37 = arith.constant 0 : index
    %c0_38 = arith.constant 0 : index
    %58 = vector.load %arg8[%c0_35, %c0_36, %c0_37, %c0_38] : memref<2x18x18x128xf32, #tpu.memory_space<vmem>>, vector<2x18x18x128xf32>
    %59 = vector.extract_strided_slice %58 {offsets = [0, 0, 0, 0], sizes = [2, 16, 18, 128], strides = [1, 1, 1, 1]} : vector<2x18x18x128xf32> to vector<2x16x18x128xf32>
    %60 = vector.extract_strided_slice %59 {offsets = [0, 0, 0, 0], sizes = [2, 16, 16, 128], strides = [1, 1, 1, 1]} : vector<2x16x18x128xf32> to vector<2x16x16x128xf32>
    %61 = vector.shape_cast %60 : vector<2x16x16x128xf32> to vector<512x128xf32>
    %62 = vector.extract_strided_slice %59 {offsets = [0, 0, 1, 0], sizes = [2, 16, 16, 128], strides = [1, 1, 1, 1]} : vector<2x16x18x128xf32> to vector<2x16x16x128xf32>
    %63 = vector.shape_cast %62 : vector<2x16x16x128xf32> to vector<512x128xf32>
    %64 = vector.extract_strided_slice %59 {offsets = [0, 0, 2, 0], sizes = [2, 16, 16, 128], strides = [1, 1, 1, 1]} : vector<2x16x18x128xf32> to vector<2x16x16x128xf32>
    %65 = vector.shape_cast %64 : vector<2x16x16x128xf32> to vector<512x128xf32>
    %66 = vector.extract_strided_slice %58 {offsets = [0, 1, 0, 0], sizes = [2, 16, 18, 128], strides = [1, 1, 1, 1]} : vector<2x18x18x128xf32> to vector<2x16x18x128xf32>
    %67 = vector.extract_strided_slice %66 {offsets = [0, 0, 0, 0], sizes = [2, 16, 16, 128], strides = [1, 1, 1, 1]} : vector<2x16x18x128xf32> to vector<2x16x16x128xf32>
    %68 = vector.shape_cast %67 : vector<2x16x16x128xf32> to vector<512x128xf32>
    %69 = vector.extract_strided_slice %66 {offsets = [0, 0, 1, 0], sizes = [2, 16, 16, 128], strides = [1, 1, 1, 1]} : vector<2x16x18x128xf32> to vector<2x16x16x128xf32>
    %70 = vector.shape_cast %69 : vector<2x16x16x128xf32> to vector<512x128xf32>
    %71 = vector.extract_strided_slice %66 {offsets = [0, 0, 2, 0], sizes = [2, 16, 16, 128], strides = [1, 1, 1, 1]} : vector<2x16x18x128xf32> to vector<2x16x16x128xf32>
    %72 = vector.shape_cast %71 : vector<2x16x16x128xf32> to vector<512x128xf32>
    %73 = vector.extract_strided_slice %58 {offsets = [0, 2, 0, 0], sizes = [2, 16, 18, 128], strides = [1, 1, 1, 1]} : vector<2x18x18x128xf32> to vector<2x16x18x128xf32>
    %74 = vector.extract_strided_slice %73 {offsets = [0, 0, 0, 0], sizes = [2, 16, 16, 128], strides = [1, 1, 1, 1]} : vector<2x16x18x128xf32> to vector<2x16x16x128xf32>
    %75 = vector.shape_cast %74 : vector<2x16x16x128xf32> to vector<512x128xf32>
    %76 = vector.extract_strided_slice %73 {offsets = [0, 0, 1, 0], sizes = [2, 16, 16, 128], strides = [1, 1, 1, 1]} : vector<2x16x18x128xf32> to vector<2x16x16x128xf32>
    %77 = vector.shape_cast %76 : vector<2x16x16x128xf32> to vector<512x128xf32>
    %78 = vector.extract_strided_slice %73 {offsets = [0, 0, 2, 0], sizes = [2, 16, 16, 128], strides = [1, 1, 1, 1]} : vector<2x16x18x128xf32> to vector<2x16x16x128xf32>
    %79 = vector.shape_cast %78 : vector<2x16x16x128xf32> to vector<512x128xf32>
    %80 = tpu.concatenate %61, %63, %65, %68, %70, %72, %75, %77, %79 in 1 : vector<512x128xf32>, vector<512x128xf32>, vector<512x128xf32>, vector<512x128xf32>, vector<512x128xf32>, vector<512x128xf32>, vector<512x128xf32>, vector<512x128xf32>, vector<512x128xf32> -> vector<512x1152xf32>
    %c0_39 = arith.constant 0 : index
    %c0_40 = arith.constant 0 : index
    %81 = vector.load %arg4[%c0_39, %c0_40] : memref<1152x128xf32, #tpu.memory_space<vmem>>, vector<1152x128xf32>
    %cst_41 = arith.constant dense<0.000000e+00> : vector<512x128xf32>
    %82 = tpu.matmul %80, %81, %cst_41 {dimension_numbers = #tpu.dot_dimension_numbers<[1], [0], [0], [1], [0, 0, 1, 1], [], []>} : vector<512x1152xf32>, vector<1152x128xf32>, vector<512x128xf32> -> vector<512x128xf32>
    %cst_42 = arith.constant dense<0.000000e+00> : vector<128xf32>
    %83 = vector.multi_reduction <add>, %82, %cst_42 [0] : vector<512x128xf32> to vector<128xf32>
    %84 = vector.shape_cast %83 : vector<128xf32> to vector<1x128xf32>
    %85 = arith.mulf %82, %82 : vector<512x128xf32>
    %cst_43 = arith.constant dense<0.000000e+00> : vector<128xf32>
    %86 = vector.multi_reduction <add>, %85, %cst_43 [0] : vector<512x128xf32> to vector<128xf32>
    %87 = vector.shape_cast %86 : vector<128xf32> to vector<1x128xf32>
    %cst_44 = arith.constant 0.001953125 : f32
    %88 = vector.broadcast %cst_44 : f32 to vector<1x128xf32>
    %89 = arith.mulf %84, %88 : vector<1x128xf32>
    %cst_45 = arith.constant 0.001953125 : f32
    %90 = vector.broadcast %cst_45 : f32 to vector<1x128xf32>
    %91 = arith.mulf %87, %90 : vector<1x128xf32>
    %92 = arith.mulf %89, %89 : vector<1x128xf32>
    %93 = arith.subf %91, %92 : vector<1x128xf32>
    %c0_46 = arith.constant 0 : index
    %c0_47 = arith.constant 0 : index
    %94 = vector.load %arg5[%c0_46, %c0_47] : memref<1x128xf32, #tpu.memory_space<vmem>>, vector<1x128xf32>
    %cst_48 = arith.constant 9.99999974E-6 : f32
    %95 = vector.broadcast %cst_48 : f32 to vector<1x128xf32>
    %96 = arith.addf %93, %95 : vector<1x128xf32>
    %97 = math.rsqrt %96 : vector<1x128xf32>
    %98 = arith.mulf %94, %97 : vector<1x128xf32>
    %c0_49 = arith.constant 0 : index
    %c0_50 = arith.constant 0 : index
    %99 = vector.load %arg6[%c0_49, %c0_50] : memref<1x128xf32, #tpu.memory_space<vmem>>, vector<1x128xf32>
    %100 = arith.mulf %89, %98 : vector<1x128xf32>
    %101 = arith.subf %99, %100 : vector<1x128xf32>
    %102 = vector.broadcast %98 : vector<1x128xf32> to vector<512x128xf32>
    %103 = arith.mulf %82, %102 : vector<512x128xf32>
    %104 = vector.broadcast %101 : vector<1x128xf32> to vector<512x128xf32>
    %105 = arith.addf %103, %104 : vector<512x128xf32>
    %cst_51 = arith.constant 0.000000e+00 : f32
    %106 = vector.broadcast %cst_51 : f32 to vector<512x128xf32>
    %107 = arith.maximumf %105, %106 : vector<512x128xf32>
    %c0_52 = arith.constant 0 : index
    %c0_53 = arith.constant 0 : index
    %108 = vector.load %arg7[%c0_52, %c0_53] : memref<512x128xf32, #tpu.memory_space<vmem>>, vector<512x128xf32>
    tpu.vector_store %arg7[%c0_52, %c0_53], %107 {strides = array<i32>} : memref<512x128xf32, #tpu.memory_space<vmem>>, vector<512x128xf32>,
    return
  }
}

</mosaic_0001>

<llo_original>
// kernel: tpu_custom_call.1
$region0: #{tpu_custom_call.1}
  #allocation0 [shape = 'u32[]', space=smem, size = 0x4, offset = 0x4, fixed_abs, tag = 'smem constant byte address 0x4 - core index']
  #allocation1 [shape = 'u32[72,128]{1,0:T(1,128)}', space=vmem, size = 0x9000, scoped, tag = 'internal scratch']
  #allocation2 [shape = 'f32[2,18,18,128]{3,2,1,0:T(8,128)}', space=vmem, size = 0x6c000, scoped, tag = 'scratch operand']
  %s0 = inlined_call_operand.vmem [shape: f32[2,18,18,128], index: 0, kind: input, shape index: {}]
  %s1 = inlined_call_operand.vmem [shape: f32[1152,128], index: 1, kind: input, shape index: {}]
  %s2 = inlined_call_operand.vmem [shape: f32[1,128], index: 2, kind: input, shape index: {}]
  %s3 = inlined_call_operand.vmem [shape: f32[1,128], index: 3, kind: input, shape index: {}]
  %s4 = inlined_call_operand.hbm [shape: f32[1152,128], index: 4, kind: input, shape index: {}]
  %s5 = inlined_call_operand.vmem [shape: f32[1,128], index: 5, kind: input, shape index: {}]
  %s6 = inlined_call_operand.vmem [shape: f32[1,128], index: 6, kind: input, shape index: {}]
  %s7 = inlined_call_operand.hbm [shape: f32[512,128], index: 7, kind: output, shape index: {}]
  %s8 = sld [smem:[#allocation0]]
  $region42: #{tpu_custom_call.1} parent=0
    _
  %s10 = ssub.s32 1, %s8
  %s11 = scalar_select 0, %s10, %s8
  $region1: #{tpu_custom_call.1} parent=0
    #allocation3 [shape = 'u8[589824]{0}', space=vmem, size = 0x90000, scoped, tag = 'input window, operand 4, single buffered']
    #allocation4 [shape = 's32[1]{0}', space=sflag, size = 0x4, scoped, tag = 'scoped memory for tpu_custom_call.1']
    #allocation5 [shape = 's32[1]{0}', space=sflag, size = 0x4, scoped, tag = 'scoped memory for tpu_custom_call.1']
    #allocation6 [shape = 'u8[262144]{0}', space=vmem, size = 0x40000, scoped, tag = 'output window, operand 0, single buffered']
    %12 = vsyncpa [#allocation4], 0
    %13 = vsyncpa [#allocation5], 0
    // Predicated region
    $region2: #{tpu_custom_call.1} parent=1 // pred_check
      _
    $region3: #{tpu_custom_call.1} parent=1 // pred_check_branch
      %15 = sbr.rel (0) target = $region5
    $region4: #{tpu_custom_call.1} parent=1 // pred_region
      _
    $region5: #{tpu_custom_call.1} parent=1 // pred_fallthru
      _
    // Predicated region
    $region6: #{tpu_custom_call.1} parent=1 // pred_check
      _
    $region7: #{tpu_custom_call.1} parent=1 // pred_check_branch
      %17 = sbr.rel (0) target = $region9
    $region8: #{tpu_custom_call.1} parent=1 // pred_region
      _
    $region9: #{tpu_custom_call.1} parent=1 // pred_fallthru
      _
    // Predicated region
    $region10: #{tpu_custom_call.1} parent=1 // pred_check
      _
    $region11: #{tpu_custom_call.1} parent=1 // pred_check_branch
      %19 = sbr.rel (0) target = $region13
    $region12: #{tpu_custom_call.1} parent=1 // pred_region
      _
    $region13: #{tpu_custom_call.1} parent=1 // pred_fallthru
      _
    // Predicated region
    $region14: #{tpu_custom_call.1} parent=1 // pred_check
      _
    $region15: #{tpu_custom_call.1} parent=1 // pred_check_branch
      %21 = sbr.rel (0) target = $region17
    $region16: #{tpu_custom_call.1} parent=1 // pred_region
      _
    $region17: #{tpu_custom_call.1} parent=1 // pred_fallthru
      _
    // Predicated region
    $region18: #{tpu_custom_call.1} parent=1 // pred_check
      _
    $region19: #{tpu_custom_call.1} parent=1 // pred_check_branch
      %23 = sbr.rel (0) target = $region21
    $region20: #{tpu_custom_call.1} parent=1 // pred_region
      %25 = vsyncadd [#allocation4], 0
      %s26 = sshll.u32 %s4, 4
      %s27 = int_to_ptr.hbm [resolvable:$true] %s26
      %s28 = sshll.u32 [#allocation3], 4
      %s29 = int_to_ptr.vmem [resolvable:$true] %s28
      %34 = dma.hbm_to_vmem [thread:$0]  %s27, 18432, %s29, [#allocation4], 128, 128, 8
    $region21: #{tpu_custom_call.1} parent=1 // pred_fallthru
      _
    // Predicated region
    $region22: #{tpu_custom_call.1} parent=1 // pred_check
      _
    $region23: #{tpu_custom_call.1} parent=1 // pred_check_branch
      %36 = sbr.rel (0) target = $region25
    $region24: #{tpu_custom_call.1} parent=1 // pred_region
      _
    $region25: #{tpu_custom_call.1} parent=1 // pred_fallthru
      _
    // Predicated region
    $region26: #{tpu_custom_call.1} parent=1 // pred_check
      _
    $region27: #{tpu_custom_call.1} parent=1 // pred_check_branch
      %38 = sbr.rel (0) target = $region29
    $region28: #{tpu_custom_call.1} parent=1 // pred_region
      _
    $region29: #{tpu_custom_call.1} parent=1 // pred_fallthru
      _
    // Predicated region
    $region30: #{tpu_custom_call.1} parent=1 // pred_check
      _
    $region31: #{tpu_custom_call.1} parent=1 // pred_check_branch
      %40 = sbr.rel (0) target = $region33
    $region32: #{tpu_custom_call.1} parent=1 // pred_region
      %42 = dma.done [#allocation4], 18432
    $region33: #{tpu_custom_call.1} parent=1 // pred_fallthru
      _
    %v43 = vld [vmem:[%s0] sm:$0xff]
    %v44 = vld [vmem:[%s0 + $0x8] sm:$0xff]
    %v45 = vld [vmem:[%s0 + $0x10] sm:$0x3]
    %v46 = vld [vmem:[%s0 + $0x18] sm:$0xff]
    %v47 = vld [vmem:[%s0 + $0x20] sm:$0xff]
    %v48 = vld [vmem:[%s0 + $0x28] sm:$0x3]
    %v49 = vld [vmem:[%s0 + $0x30] sm:$0xff]
    %v50 = vld [vmem:[%s0 + $0x38] sm:$0xff]
    %v51 = vld [vmem:[%s0 + $0x40] sm:$0x3]
    %v52 = vld [vmem:[%s0 + $0x48] sm:$0xff]
    %v53 = vld [vmem:[%s0 + $0x50] sm:$0xff]
    %v54 = vld [vmem:[%s0 + $0x58] sm:$0x3]
    %v55 = vld [vmem:[%s0 + $0x60] sm:$0xff]
    %v56 = vld [vmem:[%s0 + $0x68] sm:$0xff]
    %v57 = vld [vmem:[%s0 + $0x70] sm:$0x3]
    %v58 = vld [vmem:[%s0 + $0x78] sm:$0xff]
    %v59 = vld [vmem:[%s0 + $0x80] sm:$0xff]
    %v60 = vld [vmem:[%s0 + $0x88] sm:$0x3]
    %v61 = vld [vmem:[%s0 + $0x90] sm:$0xff]
    %v62 = vld [vmem:[%s0 + $0x98] sm:$0xff]
    %v63 = vld [vmem:[%s0 + $0xa0] sm:$0x3]
    %v64 = vld [vmem:[%s0 + $0xa8] sm:$0xff]
    %v65 = vld [vmem:[%s0 + $0xb0] sm:$0xff]
    %v66 = vld [vmem:[%s0 + $0xb8] sm:$0x3]
    %v67 = vld [vmem:[%s0 + $0xc0] sm:$0xff]
    %v68 = vld [vmem:[%s0 + $0xc8] sm:$0xff]
    %v69 = vld [vmem:[%s0 + $0xd0] sm:$0x3]
    %v70 = vld [vmem:[%s0 + $0xd8] sm:$0xff]
    %v71 = vld [vmem:[%s0 + $0xe0] sm:$0xff]
    %v72 = vld [vmem:[%s0 + $0xe8] sm:$0x3]
    %v73 = vld [vmem:[%s0 + $0xf0] sm:$0xff]
    %v74 = vld [vmem:[%s0 + $0xf8] sm:$0xff]
    %v75 = vld [vmem:[%s0 + $0x100] sm:$0x3]
    %v76 = vld [vmem:[%s0 + $0x108] sm:$0xff]
    %v77 = vld [vmem:[%s0 + $0x110] sm:$0xff]
    %v78 = vld [vmem:[%s0 + $0x118] sm:$0x3]
    %v79 = vld [vmem:[%s0 + $0x120] sm:$0xff]
    %v80 = vld [vmem:[%s0 + $0x128] sm:$0xff]
    %v81 = vld [vmem:[%s0 + $0x130] sm:$0x3]
    %v82 = vld [vmem:[%s0 + $0x138] sm:$0xff]
    %v83 = vld [vmem:[%s0 + $0x140] sm:$0xff]
    %v84 = vld [vmem:[%s0 + $0x148] sm:$0x3]
    %v85 = vld [vmem:[%s0 + $0x150] sm:$0xff]
    %v86 = vld [vmem:[%s0 + $0x158] sm:$0xff]
    %v87 = vld [vmem:[%s0 + $0x160] sm:$0x3]
    %v88 = vld [vmem:[%s0 + $0x168] sm:$0xff]
    %v89 = vld [vmem:[%s0 + $0x170] sm:$0xff]
    %v90 = vld [vmem:[%s0 + $0x178] sm:$0x3]
    %v91 = vld [vmem:[%s0 + $0x180] sm:$0xff]
    %v92 = vld [vmem:[%s0 + $0x188] sm:$0xff]
    %v93 = vld [vmem:[%s0 + $0x190] sm:$0x3]
    %v94 = vld [vmem:[%s0 + $0x198] sm:$0xff]
    %v95 = vld [vmem:[%s0 + $0x1a0] sm:$0xff]
    %v96 = vld [vmem:[%s0 + $0x1a8] sm:$0x3]
    %v97 = vld [vmem:[%s0 + $0x1b0] sm:$0xff]
    %v98 = vld [vmem:[%s0 + $0x1b8] sm:$0xff]
    %v99 = vld [vmem:[%s0 + $0x1c0] sm:$0x3]
    %v100 = vld [vmem:[%s0 + $0x1c8] sm:$0xff]
    %v101 = vld [vmem:[%s0 + $0x1d0] sm:$0xff]
    %v102 = vld [vmem:[%s0 + $0x1d8] sm:$0x3]
    %v103 = vld [vmem:[%s0 + $0x1e0] sm:$0xff]
    %v104 = vld [vmem:[%s0 + $0x1e8] sm:$0xff]
    %v105 = vld [vmem:[%s0 + $0x1f0] sm:$0x3]
    %v106 = vld [vmem:[%s0 + $0x1f8] sm:$0xff]
    %v107 = vld [vmem:[%s0 + $0x200] sm:$0xff]
    %v108 = vld [vmem:[%s0 + $0x208] sm:$0x3]
    %v109 = vld [vmem:[%s0 + $0x210] sm:$0xff]
    %v110 = vld [vmem:[%s0 + $0x218] sm:$0xff]
    %v111 = vld [vmem:[%s0 + $0x220] sm:$0x3]
    %v112 = vld [vmem:[%s0 + $0x228] sm:$0xff]
    %v113 = vld [vmem:[%s0 + $0x230] sm:$0xff]
    %v114 = vld [vmem:[%s0 + $0x238] sm:$0x3]
    %v115 = vld [vmem:[%s0 + $0x240] sm:$0xff]
    %v116 = vld [vmem:[%s0 + $0x248] sm:$0xff]
    %v117 = vld [vmem:[%s0 + $0x250] sm:$0x3]
    %v118 = vld [vmem:[%s0 + $0x258] sm:$0xff]
    %v119 = vld [vmem:[%s0 + $0x260] sm:$0xff]
    %v120 = vld [vmem:[%s0 + $0x268] sm:$0x3]
    %v121 = vld [vmem:[%s0 + $0x270] sm:$0xff]
    %v122 = vld [vmem:[%s0 + $0x278] sm:$0xff]
    %v123 = vld [vmem:[%s0 + $0x280] sm:$0x3]
    %v124 = vld [vmem:[%s0 + $0x288] sm:$0xff]
    %v125 = vld [vmem:[%s0 + $0x290] sm:$0xff]
    %v126 = vld [vmem:[%s0 + $0x298] sm:$0x3]
    %v127 = vld [vmem:[%s0 + $0x2a0] sm:$0xff]
    %v128 = vld [vmem:[%s0 + $0x2a8] sm:$0xff]
    %v129 = vld [vmem:[%s0 + $0x2b0] sm:$0x3]
    %v130 = vld [vmem:[%s0 + $0x2b8] sm:$0xff]
    %v131 = vld [vmem:[%s0 + $0x2c0] sm:$0xff]
    %v132 = vld [vmem:[%s0 + $0x2c8] sm:$0x3]
    %v133 = vld [vmem:[%s0 + $0x2d0] sm:$0xff]
    %v134 = vld [vmem:[%s0 + $0x2d8] sm:$0xff]
    %v135 = vld [vmem:[%s0 + $0x2e0] sm:$0x3]
    %v136 = vld [vmem:[%s0 + $0x2e8] sm:$0xff]
    %v137 = vld [vmem:[%s0 + $0x2f0] sm:$0xff]
    %v138 = vld [vmem:[%s0 + $0x2f8] sm:$0x3]
    %v139 = vld [vmem:[%s0 + $0x300] sm:$0xff]
    %v140 = vld [vmem:[%s0 + $0x308] sm:$0xff]
    %v141 = vld [vmem:[%s0 + $0x310] sm:$0x3]
    %v142 = vld [vmem:[%s0 + $0x318] sm:$0xff]
    %v143 = vld [vmem:[%s0 + $0x320] sm:$0xff]
    %v144 = vld [vmem:[%s0 + $0x328] sm:$0x3]
    %v145 = vld [vmem:[%s0 + $0x330] sm:$0xff]
    %v146 = vld [vmem:[%s0 + $0x338] sm:$0xff]
    %v147 = vld [vmem:[%s0 + $0x340] sm:$0x3]
    %v148 = vld [vmem:[%s0 + $0x348] sm:$0xff]
    %v149 = vld [vmem:[%s0 + $0x350] sm:$0xff]
    %v150 = vld [vmem:[%s0 + $0x358] sm:$0x3]
    %vm247 = vcmask 1046528
    %v248 = vrot.slane %v43, 1
    %v249 = vrot.slane %v44, 1
    %v250 = vsel %vm247, %v248, %v249
    %v251 = vrot.slane %v45, 1
    %v252 = vsel %vm247, %v249, %v251
    %v253 = vrot.slane %v46, 1
    %v254 = vrot.slane %v47, 1
    %v255 = vsel %vm247, %v253, %v254
    %v256 = vrot.slane %v48, 1
    %v257 = vsel %vm247, %v254, %v256
    %v258 = vrot.slane %v49, 1
    %v259 = vrot.slane %v50, 1
    %v260 = vsel %vm247, %v258, %v259
    %v261 = vrot.slane %v51, 1
    %v262 = vsel %vm247, %v259, %v261
    %v263 = vrot.slane %v52, 1
    %v264 = vrot.slane %v53, 1
    %v265 = vsel %vm247, %v263, %v264
    %v266 = vrot.slane %v54, 1
    %v267 = vsel %vm247, %v264, %v266
    %v268 = vrot.slane %v55, 1
    %v269 = vrot.slane %v56, 1
    %v270 = vsel %vm247, %v268, %v269
    %v271 = vrot.slane %v57, 1
    %v272 = vsel %vm247, %v269, %v271
    %v273 = vrot.slane %v58, 1
    %v274 = vrot.slane %v59, 1
    %v275 = vsel %vm247, %v273, %v274
    %v276 = vrot.slane %v60, 1
    %v277 = vsel %vm247, %v274, %v276
    %v278 = vrot.slane %v61, 1
    %v279 = vrot.slane %v62, 1
    %v280 = vsel %vm247, %v278, %v279
    %v281 = vrot.slane %v63, 1
    %v282 = vsel %vm247, %v279, %v281
    %v283 = vrot.slane %v64, 1
    %v284 = vrot.slane %v65, 1
    %v285 = vsel %vm247, %v283, %v284
    %v286 = vrot.slane %v66, 1
    %v287 = vsel %vm247, %v284, %v286
    %v288 = vrot.slane %v67, 1
    %v289 = vrot.slane %v68, 1
    %v290 = vsel %vm247, %v288, %v289
    %v291 = vrot.slane %v69, 1
    %v292 = vsel %vm247, %v289, %v291
    %v293 = vrot.slane %v70, 1
    %v294 = vrot.slane %v71, 1
    %v295 = vsel %vm247, %v293, %v294
    %v296 = vrot.slane %v72, 1
    %v297 = vsel %vm247, %v294, %v296
    %v298 = vrot.slane %v73, 1
    %v299 = vrot.slane %v74, 1
    %v300 = vsel %vm247, %v298, %v299
    %v301 = vrot.slane %v75, 1
    %v302 = vsel %vm247, %v299, %v301
    %v303 = vrot.slane %v76, 1
    %v304 = vrot.slane %v77, 1
    %v305 = vsel %vm247, %v303, %v304
    %v306 = vrot.slane %v78, 1
    %v307 = vsel %vm247, %v304, %v306
    %v308 = vrot.slane %v79, 1
    %v309 = vrot.slane %v80, 1
    %v310 = vsel %vm247, %v308, %v309
    %v311 = vrot.slane %v81, 1
    %v312 = vsel %vm247, %v309, %v311
    %v313 = vrot.slane %v82, 1
    %v314 = vrot.slane %v83, 1
    %v315 = vsel %vm247, %v313, %v314
    %v316 = vrot.slane %v84, 1
    %v317 = vsel %vm247, %v314, %v316
    %v318 = vrot.slane %v85, 1
    %v319 = vrot.slane %v86, 1
    %v320 = vsel %vm247, %v318, %v319
    %v321 = vrot.slane %v87, 1
    %v322 = vsel %vm247, %v319, %v321
    %v323 = vrot.slane %v88, 1
    %v324 = vrot.slane %v89, 1
    %v325 = vsel %vm247, %v323, %v324
    %v326 = vrot.slane %v90, 1
    %v327 = vsel %vm247, %v324, %v326
    %v328 = vrot.slane %v97, 1
    %v329 = vrot.slane %v98, 1
    %v330 = vsel %vm247, %v328, %v329
    %v331 = vrot.slane %v99, 1
    %v332 = vsel %vm247, %v329, %v331
    %v333 = vrot.slane %v100, 1
    %v334 = vrot.slane %v101, 1
    %v335 = vsel %vm247, %v333, %v334
    %v336 = vrot.slane %v102, 1
    %v337 = vsel %vm247, %v334, %v336
    %v338 = vrot.slane %v103, 1
    %v339 = vrot.slane %v104, 1
    %v340 = vsel %vm247, %v338, %v339
    %v341 = vrot.slane %v105, 1
    %v342 = vsel %vm247, %v339, %v341
    %v343 = vrot.slane %v106, 1
    %v344 = vrot.slane %v107, 1
    %v345 = vsel %vm247, %v343, %v344
    %v346 = vrot.slane %v108, 1
    %v347 = vsel %vm247, %v344, %v346
    %v348 = vrot.slane %v109, 1
    %v349 = vrot.slane %v110, 1
    %v350 = vsel %vm247, %v348, %v349
    %v351 = vrot.slane %v111, 1
    %v352 = vsel %vm247, %v349, %v351
    %v353 = vrot.slane %v112, 1
    %v354 = vrot.slane %v113, 1
    %v355 = vsel %vm247, %v353, %v354
    %v356 = vrot.slane %v114, 1
    %v357 = vsel %vm247, %v354, %v356
    %v358 = vrot.slane %v115, 1
    %v359 = vrot.slane %v116, 1
    %v360 = vsel %vm247, %v358, %v359
    %v361 = vrot.slane %v117, 1
    %v362 = vsel %vm247, %v359, %v361
    %v363 = vrot.slane %v118, 1
    %v364 = vrot.slane %v119, 1
    %v365 = vsel %vm247, %v363, %v364
    %v366 = vrot.slane %v120, 1
    %v367 = vsel %vm247, %v364, %v366
    %v368 = vrot.slane %v121, 1
    %v369 = vrot.slane %v122, 1
    %v370 = vsel %vm247, %v368, %v369
    %v371 = vrot.slane %v123, 1
    %v372 = vsel %vm247, %v369, %v371
    %v373 = vrot.slane %v124, 1
    %v374 = vrot.slane %v125, 1
    %v375 = vsel %vm247, %v373, %v374
    %v376 = vrot.slane %v126, 1
    %v377 = vsel %vm247, %v374, %v376
    %v378 = vrot.slane %v127, 1
    %v379 = vrot.slane %v128, 1
    %v380 = vsel %vm247, %v378, %v379
    %v381 = vrot.slane %v129, 1
    %v382 = vsel %vm247, %v379, %v381
    %v383 = vrot.slane %v130, 1
    %v384 = vrot.slane %v131, 1
    %v385 = vsel %vm247, %v383, %v384
    %v386 = vrot.slane %v132, 1
    %v387 = vsel %vm247, %v384, %v386
    %v388 = vrot.slane %v133, 1
    %v389 = vrot.slane %v134, 1
    %v390 = vsel %vm247, %v388, %v389
    %v391 = vrot.slane %v135, 1
    %v392 = vsel %vm247, %v389, %v391
    %v393 = vrot.slane %v136, 1
    %v394 = vrot.slane %v137, 1
    %v395 = vsel %vm247, %v393, %v394
    %v396 = vrot.slane %v138, 1
    %v397 = vsel %vm247, %v394, %v396
    %v398 = vrot.slane %v139, 1
    %v399 = vrot.slane %v140, 1
    %v400 = vsel %vm247, %v398, %v399
    %v401 = vrot.slane %v141, 1
    %v402 = vsel %vm247, %v399, %v401
    %v403 = vrot.slane %v142, 1
    %v404 = vrot.slane %v143, 1
    %v405 = vsel %vm247, %v403, %v404
    %v406 = vrot.slane %v144, 1
    %v407 = vsel %vm247, %v404, %v406
    %vm472 = vcmask 1045504
    %v473 = vrot.slane %v43, 2
    %v474 = vrot.slane %v44, 2
    %v475 = vsel %vm472, %v473, %v474
    %v476 = vrot.slane %v45, 2
    %v477 = vsel %vm472, %v474, %v476
    %v478 = vrot.slane %v46, 2
    %v479 = vrot.slane %v47, 2
    %v480 = vsel %vm472, %v478, %v479
    %v481 = vrot.slane %v48, 2
    %v482 = vsel %vm472, %v479, %v481
    %v483 = vrot.slane %v49, 2
    %v484 = vrot.slane %v50, 2
    %v485 = vsel %vm472, %v483, %v484
    %v486 = vrot.slane %v51, 2
    %v487 = vsel %vm472, %v484, %v486
    %v488 = vrot.slane %v52, 2
    %v489 = vrot.slane %v53, 2
    %v490 = vsel %vm472, %v488, %v489
    %v491 = vrot.slane %v54, 2
    %v492 = vsel %vm472, %v489, %v491
    %v493 = vrot.slane %v55, 2
    %v494 = vrot.slane %v56, 2
    %v495 = vsel %vm472, %v493, %v494
    %v496 = vrot.slane %v57, 2
    %v497 = vsel %vm472, %v494, %v496
    %v498 = vrot.slane %v58, 2
    %v499 = vrot.slane %v59, 2
    %v500 = vsel %vm472, %v498, %v499
    %v501 = vrot.slane %v60, 2
    %v502 = vsel %vm472, %v499, %v501
    %v503 = vrot.slane %v61, 2
    %v504 = vrot.slane %v62, 2
    %v505 = vsel %vm472, %v503, %v504
    %v506 = vrot.slane %v63, 2
    %v507 = vsel %vm472, %v504, %v506
    %v508 = vrot.slane %v64, 2
    %v509 = vrot.slane %v65, 2
    %v510 = vsel %vm472, %v508, %v509
    %v511 = vrot.slane %v66, 2
    %v512 = vsel %vm472, %v509, %v511
    %v513 = vrot.slane %v67, 2
    %v514 = vrot.slane %v68, 2
    %v515 = vsel %vm472, %v513, %v514
    %v516 = vrot.slane %v69, 2
    %v517 = vsel %vm472, %v514, %v516
    %v518 = vrot.slane %v70, 2
    %v519 = vrot.slane %v71, 2
    %v520 = vsel %vm472, %v518, %v519
    %v521 = vrot.slane %v72, 2
    %v522 = vsel %vm472, %v519, %v521
    %v523 = vrot.slane %v73, 2
    %v524 = vrot.slane %v74, 2
    %v525 = vsel %vm472, %v523, %v524
    %v526 = vrot.slane %v75, 2
    %v527 = vsel %vm472, %v524, %v526
    %v528 = vrot.slane %v76, 2
    %v529 = vrot.slane %v77, 2
    %v530 = vsel %vm472, %v528, %v529
    %v531 = vrot.slane %v78, 2
    %v532 = vsel %vm472, %v529, %v531
    %v533 = vrot.slane %v79, 2
    %v534 = vrot.slane %v80, 2
    %v535 = vsel %vm472, %v533, %v534
    %v536 = vrot.slane %v81, 2
    %v537 = vsel %vm472, %v534, %v536
    %v538 = vrot.slane %v82, 2
    %v539 = vrot.slane %v83, 2
    %v540 = vsel %vm472, %v538, %v539
    %v541 = vrot.slane %v84, 2
    %v542 = vsel %vm472, %v539, %v541
    %v543 = vrot.slane %v85, 2
    %v544 = vrot.slane %v86, 2
    %v545 = vsel %vm472, %v543, %v544
    %v546 = vrot.slane %v87, 2
    %v547 = vsel %vm472, %v544, %v546
    %v548 = vrot.slane %v88, 2
    %v549 = vrot.slane %v89, 2
    %v550 = vsel %vm472, %v548, %v549
    %v551 = vrot.slane %v90, 2
    %v552 = vsel %vm472, %v549, %v551
    %v553 = vrot.slane %v97, 2
    %v554 = vrot.slane %v98, 2
    %v555 = vsel %vm472, %v553, %v554
    %v556 = vrot.slane %v99, 2
    %v557 = vsel %vm472, %v554, %v556
    %v558 = vrot.slane %v100, 2
    %v559 = vrot.slane %v101, 2
    %v560 = vsel %vm472, %v558, %v559
    %v561 = vrot.slane %v102, 2
    %v562 = vsel %vm472, %v559, %v561
    %v563 = vrot.slane %v103, 2
    %v564 = vrot.slane %v104, 2
    %v565 = vsel %vm472, %v563, %v564
    %v566 = vrot.slane %v105, 2
    %v567 = vsel %vm472, %v564, %v566
    %v568 = vrot.slane %v106, 2
    %v569 = vrot.slane %v107, 2
    %v570 = vsel %vm472, %v568, %v569
    %v571 = vrot.slane %v108, 2
    %v572 = vsel %vm472, %v569, %v571
    %v573 = vrot.slane %v109, 2
    %v574 = vrot.slane %v110, 2
    %v575 = vsel %vm472, %v573, %v574
    %v576 = vrot.slane %v111, 2
    %v577 = vsel %vm472, %v574, %v576
    %v578 = vrot.slane %v112, 2
    %v579 = vrot.slane %v113, 2
    %v580 = vsel %vm472, %v578, %v579
    %v581 = vrot.slane %v114, 2
    %v582 = vsel %vm472, %v579, %v581
    %v583 = vrot.slane %v115, 2
    %v584 = vrot.slane %v116, 2
    %v585 = vsel %vm472, %v583, %v584
    %v586 = vrot.slane %v117, 2
    %v587 = vsel %vm472, %v584, %v586
    %v588 = vrot.slane %v118, 2
    %v589 = vrot.slane %v119, 2
    %v590 = vsel %vm472, %v588, %v589
    %v591 = vrot.slane %v120, 2
    %v592 = vsel %vm472, %v589, %v591
    %v593 = vrot.slane %v121, 2
    %v594 = vrot.slane %v122, 2
    %v595 = vsel %vm472, %v593, %v594
    %v596 = vrot.slane %v123, 2
    %v597 = vsel %vm472, %v594, %v596
    %v598 = vrot.slane %v124, 2
    %v599 = vrot.slane %v125, 2
    %v600 = vsel %vm472, %v598, %v599
    %v601 = vrot.slane %v126, 2
    %v602 = vsel %vm472, %v599, %v601
    %v603 = vrot.slane %v127, 2
    %v604 = vrot.slane %v128, 2
    %v605 = vsel %vm472, %v603, %v604
    %v606 = vrot.slane %v129, 2
    %v607 = vsel %vm472, %v604, %v606
    %v608 = vrot.slane %v130, 2
    %v609 = vrot.slane %v131, 2
    %v610 = vsel %vm472, %v608, %v609
    %v611 = vrot.slane %v132, 2
    %v612 = vsel %vm472, %v609, %v611
    %v613 = vrot.slane %v133, 2
    %v614 = vrot.slane %v134, 2
    %v615 = vsel %vm472, %v613, %v614
    %v616 = vrot.slane %v135, 2
    %v617 = vsel %vm472, %v614, %v616
    %v618 = vrot.slane %v136, 2
    %v619 = vrot.slane %v137, 2
    %v620 = vsel %vm472, %v618, %v619
    %v621 = vrot.slane %v138, 2
    %v622 = vsel %vm472, %v619, %v621
    %v623 = vrot.slane %v139, 2
    %v624 = vrot.slane %v140, 2
    %v625 = vsel %vm472, %v623, %v624
    %v626 = vrot.slane %v141, 2
    %v627 = vsel %vm472, %v624, %v626
    %v628 = vrot.slane %v142, 2
    %v629 = vrot.slane %v143, 2
    %v630 = vsel %vm472, %v628, %v629
    %v631 = vrot.slane %v144, 2
    %v632 = vsel %vm472, %v629, %v631
    %v703 = vrot.slane %v91, 1
    %v704 = vrot.slane %v92, 1
    %v705 = vsel %vm247, %v703, %v704
    %v706 = vrot.slane %v93, 1
    %v707 = vsel %vm247, %v704, %v706
    %v708 = vrot.slane %v145, 1
    %v709 = vrot.slane %v146, 1
    %v710 = vsel %vm247, %v708, %v709
    %v711 = vrot.slane %v147, 1
    %v712 = vsel %vm247, %v709, %v711
    %v717 = vrot.slane %v91, 2
    %v718 = vrot.slane %v92, 2
    %v719 = vsel %vm472, %v717, %v718
    %v720 = vrot.slane %v93, 2
    %v721 = vsel %vm472, %v718, %v720
    %v722 = vrot.slane %v145, 2
    %v723 = vrot.slane %v146, 2
    %v724 = vsel %vm472, %v722, %v723
    %v725 = vrot.slane %v147, 2
    %v726 = vsel %vm472, %v723, %v725
    %v737 = vrot.slane %v94, 1
    %v738 = vrot.slane %v95, 1
    %v739 = vsel %vm247, %v737, %v738
    %v740 = vrot.slane %v96, 1
    %v741 = vsel %vm247, %v738, %v740
    %v742 = vrot.slane %v148, 1
    %v743 = vrot.slane %v149, 1
    %v744 = vsel %vm247, %v742, %v743
    %v745 = vrot.slane %v150, 1
    %v746 = vsel %vm247, %v743, %v745
    %v751 = vrot.slane %v94, 2
    %v752 = vrot.slane %v95, 2
    %v753 = vsel %vm472, %v751, %v752
    %v754 = vrot.slane %v96, 2
    %v755 = vsel %vm472, %v752, %v754
    %v756 = vrot.slane %v148, 2
    %v757 = vrot.slane %v149, 2
    %v758 = vsel %vm472, %v756, %v757
    %v759 = vrot.slane %v150, 2
    %v760 = vsel %vm472, %v757, %v759
    %v765 = vld [vmem:[%s1] sm:$0xff]
    %v766 = vld [vmem:[%s1 + $0x8] sm:$0xff]
    %v767 = vld [vmem:[%s1 + $0x10] sm:$0xff]
    %v768 = vld [vmem:[%s1 + $0x18] sm:$0xff]
    %v769 = vld [vmem:[%s1 + $0x20] sm:$0xff]
    %v770 = vld [vmem:[%s1 + $0x28] sm:$0xff]
    %v771 = vld [vmem:[%s1 + $0x30] sm:$0xff]
    %v772 = vld [vmem:[%s1 + $0x38] sm:$0xff]
    %v773 = vld [vmem:[%s1 + $0x40] sm:$0xff]
    %v774 = vld [vmem:[%s1 + $0x48] sm:$0xff]
    %v775 = vld [vmem:[%s1 + $0x50] sm:$0xff]
    %v776 = vld [vmem:[%s1 + $0x58] sm:$0xff]
    %v777 = vld [vmem:[%s1 + $0x60] sm:$0xff]
    %v778 = vld [vmem:[%s1 + $0x68] sm:$0xff]
    %v779 = vld [vmem:[%s1 + $0x70] sm:$0xff]
    %v780 = vld [vmem:[%s1 + $0x78] sm:$0xff]
    %v781 = vld [vmem:[%s1 + $0x80] sm:$0xff]
    %v782 = vld [vmem:[%s1 + $0x88] sm:$0xff]
    %v783 = vld [vmem:[%s1 + $0x90] sm:$0xff]
    %v784 = vld [vmem:[%s1 + $0x98] sm:$0xff]
    %v785 = vld [vmem:[%s1 + $0xa0] sm:$0xff]
    %v786 = vld [vmem:[%s1 + $0xa8] sm:$0xff]
    %v787 = vld [vmem:[%s1 + $0xb0] sm:$0xff]
    %v788 = vld [vmem:[%s1 + $0xb8] sm:$0xff]
    %v789 = vld [vmem:[%s1 + $0xc0] sm:$0xff]
    %v790 = vld [vmem:[%s1 + $0xc8] sm:$0xff]
    %v791 = vld [vmem:[%s1 + $0xd0] sm:$0xff]
    %v792 = vld [vmem:[%s1 + $0xd8] sm:$0xff]
    %v793 = vld [vmem:[%s1 + $0xe0] sm:$0xff]
    %v794 = vld [vmem:[%s1 + $0xe8] sm:$0xff]
    %v795 = vld [vmem:[%s1 + $0xf0] sm:$0xff]
    %v796 = vld [vmem:[%s1 + $0xf8] sm:$0xff]
    %v797 = vld [vmem:[%s1 + $0x100] sm:$0xff]
    %v798 = vld [vmem:[%s1 + $0x108] sm:$0xff]
    %v799 = vld [vmem:[%s1 + $0x110] sm:$0xff]
    %v800 = vld [vmem:[%s1 + $0x118] sm:$0xff]
    %v801 = vld [vmem:[%s1 + $0x120] sm:$0xff]
    %v802 = vld [vmem:[%s1 + $0x128] sm:$0xff]
    %v803 = vld [vmem:[%s1 + $0x130] sm:$0xff]
    %v804 = vld [vmem:[%s1 + $0x138] sm:$0xff]
    %v805 = vld [vmem:[%s1 + $0x140] sm:$0xff]
    %v806 = vld [vmem:[%s1 + $0x148] sm:$0xff]
    %v807 = vld [vmem:[%s1 + $0x150] sm:$0xff]
    %v808 = vld [vmem:[%s1 + $0x158] sm:$0xff]
    %v809 = vld [vmem:[%s1 + $0x160] sm:$0xff]
    %v810 = vld [vmem:[%s1 + $0x168] sm:$0xff]
    %v811 = vld [vmem:[%s1 + $0x170] sm:$0xff]
    %v812 = vld [vmem:[%s1 + $0x178] sm:$0xff]
    %v813 = vld [vmem:[%s1 + $0x180] sm:$0xff]
    %v814 = vld [vmem:[%s1 + $0x188] sm:$0xff]
    %v815 = vld [vmem:[%s1 + $0x190] sm:$0xff]
    %v816 = vld [vmem:[%s1 + $0x198] sm:$0xff]
    %v817 = vld [vmem:[%s1 + $0x1a0] sm:$0xff]
    %v818 = vld [vmem:[%s1 + $0x1a8] sm:$0xff]
    %v819 = vld [vmem:[%s1 + $0x1b0] sm:$0xff]
    %v820 = vld [vmem:[%s1 + $0x1b8] sm:$0xff]
    %v821 = vld [vmem:[%s1 + $0x1c0] sm:$0xff]
    %v822 = vld [vmem:[%s1 + $0x1c8] sm:$0xff]
    %v823 = vld [vmem:[%s1 + $0x1d0] sm:$0xff]
    %v824 = vld [vmem:[%s1 + $0x1d8] sm:$0xff]
    %v825 = vld [vmem:[%s1 + $0x1e0] sm:$0xff]
    %v826 = vld [vmem:[%s1 + $0x1e8] sm:$0xff]
    %v827 = vld [vmem:[%s1 + $0x1f0] sm:$0xff]
    %v828 = vld [vmem:[%s1 + $0x1f8] sm:$0xff]
    %v829 = vld [vmem:[%s1 + $0x200] sm:$0xff]
    %v830 = vld [vmem:[%s1 + $0x208] sm:$0xff]
    %v831 = vld [vmem:[%s1 + $0x210] sm:$0xff]
    %v832 = vld [vmem:[%s1 + $0x218] sm:$0xff]
    %v833 = vld [vmem:[%s1 + $0x220] sm:$0xff]
    %v834 = vld [vmem:[%s1 + $0x228] sm:$0xff]
    %v835 = vld [vmem:[%s1 + $0x230] sm:$0xff]
    %v836 = vld [vmem:[%s1 + $0x238] sm:$0xff]
    %v837 = vld [vmem:[%s1 + $0x240] sm:$0xff]
    %v838 = vld [vmem:[%s1 + $0x248] sm:$0xff]
    %v839 = vld [vmem:[%s1 + $0x250] sm:$0xff]
    %v840 = vld [vmem:[%s1 + $0x258] sm:$0xff]
    %v841 = vld [vmem:[%s1 + $0x260] sm:$0xff]
    %v842 = vld [vmem:[%s1 + $0x268] sm:$0xff]
    %v843 = vld [vmem:[%s1 + $0x270] sm:$0xff]
    %v844 = vld [vmem:[%s1 + $0x278] sm:$0xff]
    %v845 = vld [vmem:[%s1 + $0x280] sm:$0xff]
    %v846 = vld [vmem:[%s1 + $0x288] sm:$0xff]
    %v847 = vld [vmem:[%s1 + $0x290] sm:$0xff]
    %v848 = vld [vmem:[%s1 + $0x298] sm:$0xff]
    %v849 = vld [vmem:[%s1 + $0x2a0] sm:$0xff]
    %v850 = vld [vmem:[%s1 + $0x2a8] sm:$0xff]
    %v851 = vld [vmem:[%s1 + $0x2b0] sm:$0xff]
    %v852 = vld [vmem:[%s1 + $0x2b8] sm:$0xff]
    %v853 = vld [vmem:[%s1 + $0x2c0] sm:$0xff]
    %v854 = vld [vmem:[%s1 + $0x2c8] sm:$0xff]
    %v855 = vld [vmem:[%s1 + $0x2d0] sm:$0xff]
    %v856 = vld [vmem:[%s1 + $0x2d8] sm:$0xff]
    %v857 = vld [vmem:[%s1 + $0x2e0] sm:$0xff]
    %v858 = vld [vmem:[%s1 + $0x2e8] sm:$0xff]
    %v859 = vld [vmem:[%s1 + $0x2f0] sm:$0xff]
    %v860 = vld [vmem:[%s1 + $0x2f8] sm:$0xff]
    %v861 = vld [vmem:[%s1 + $0x300] sm:$0xff]
    %v862 = vld [vmem:[%s1 + $0x308] sm:$0xff]
    %v863 = vld [vmem:[%s1 + $0x310] sm:$0xff]
    %v864 = vld [vmem:[%s1 + $0x318] sm:$0xff]
    %v865 = vld [vmem:[%s1 + $0x320] sm:$0xff]
    %v866 = vld [vmem:[%s1 + $0x328] sm:$0xff]
    %v867 = vld [vmem:[%s1 + $0x330] sm:$0xff]
    %v868 = vld [vmem:[%s1 + $0x338] sm:$0xff]
    %v869 = vld [vmem:[%s1 + $0x340] sm:$0xff]
    %v870 = vld [vmem:[%s1 + $0x348] sm:$0xff]
    %v871 = vld [vmem:[%s1 + $0x350] sm:$0xff]
    %v872 = vld [vmem:[%s1 + $0x358] sm:$0xff]
    %v873 = vld [vmem:[%s1 + $0x360] sm:$0xff]
    %v874 = vld [vmem:[%s1 + $0x368] sm:$0xff]
    %v875 = vld [vmem:[%s1 + $0x370] sm:$0xff]
    %v876 = vld [vmem:[%s1 + $0x378] sm:$0xff]
    %v877 = vld [vmem:[%s1 + $0x380] sm:$0xff]
    %v878 = vld [vmem:[%s1 + $0x388] sm:$0xff]
    %v879 = vld [vmem:[%s1 + $0x390] sm:$0xff]
    %v880 = vld [vmem:[%s1 + $0x398] sm:$0xff]
    %v881 = vld [vmem:[%s1 + $0x3a0] sm:$0xff]
    %v882 = vld [vmem:[%s1 + $0x3a8] sm:$0xff]
    %v883 = vld [vmem:[%s1 + $0x3b0] sm:$0xff]
    %v884 = vld [vmem:[%s1 + $0x3b8] sm:$0xff]
    %v885 = vld [vmem:[%s1 + $0x3c0] sm:$0xff]
    %v886 = vld [vmem:[%s1 + $0x3c8] sm:$0xff]
    %v887 = vld [vmem:[%s1 + $0x3d0] sm:$0xff]
    %v888 = vld [vmem:[%s1 + $0x3d8] sm:$0xff]
    %v889 = vld [vmem:[%s1 + $0x3e0] sm:$0xff]
    %v890 = vld [vmem:[%s1 + $0x3e8] sm:$0xff]
    %v891 = vld [vmem:[%s1 + $0x3f0] sm:$0xff]
    %v892 = vld [vmem:[%s1 + $0x3f8] sm:$0xff]
    %v893 = vld [vmem:[%s1 + $0x400] sm:$0xff]
    %v894 = vld [vmem:[%s1 + $0x408] sm:$0xff]
    %v895 = vld [vmem:[%s1 + $0x410] sm:$0xff]
    %v896 = vld [vmem:[%s1 + $0x418] sm:$0xff]
    %v897 = vld [vmem:[%s1 + $0x420] sm:$0xff]
    %v898 = vld [vmem:[%s1 + $0x428] sm:$0xff]
    %v899 = vld [vmem:[%s1 + $0x430] sm:$0xff]
    %v900 = vld [vmem:[%s1 + $0x438] sm:$0xff]
    %v901 = vld [vmem:[%s1 + $0x440] sm:$0xff]
    %v902 = vld [vmem:[%s1 + $0x448] sm:$0xff]
    %v903 = vld [vmem:[%s1 + $0x450] sm:$0xff]
    %v904 = vld [vmem:[%s1 + $0x458] sm:$0xff]
    %v905 = vld [vmem:[%s1 + $0x460] sm:$0xff]
    %v906 = vld [vmem:[%s1 + $0x468] sm:$0xff]
    %v907 = vld [vmem:[%s1 + $0x470] sm:$0xff]
    %v908 = vld [vmem:[%s1 + $0x478] sm:$0xff]
    %909 = vmatpush.msra.mxu0 %v780
    %910 = vmatpush.msra.mxu0 %v779
    %911 = vmatpush.msra.mxu0 %v778
    %912 = vmatpush.msra.mxu0 %v777
    %913 = vmatpush.msra.mxu0 %v776
    %914 = vmatpush.msra.mxu0 %v775
    %915 = vmatpush.msra.mxu0 %v774
    %916 = vmatpush.msra.mxu0 %v773
    %917 = vmatpush.msra.mxu0 %v772
    %918 = vmatpush.msra.mxu0 %v771
    %919 = vmatpush.msra.mxu0 %v770
    %920 = vmatpush.msra.mxu0 %v769
    %921 = vmatpush.msra.mxu0 %v768
    %922 = vmatpush.msra.mxu0 %v767
    %923 = vmatpush.msra.mxu0 %v766
    %924 = vmatpush.msra.mxu0 %v765
    %925 = vmatmul.f32.gmra.mxu0 %v43
    %v926 = vpop.f32.mrf.mxu0
    %v927 = vadd.f32 0.0, %v926
    %928 = vmatmul.f32.gmra.mxu0 %v44
    %v929 = vpop.f32.mrf.mxu0
    %v930 = vadd.f32 0.0, %v929
    %931 = vmatmul.f32.gmra.mxu0 %v46
    %v932 = vpop.f32.mrf.mxu0
    %v933 = vadd.f32 0.0, %v932
    %934 = vmatmul.f32.gmra.mxu0 %v47
    %v935 = vpop.f32.mrf.mxu0
    %v936 = vadd.f32 0.0, %v935
    %937 = vmatmul.f32.gmra.mxu0 %v49
    %v938 = vpop.f32.mrf.mxu0
    %v939 = vadd.f32 0.0, %v938
    %940 = vmatmul.f32.gmra.mxu0 %v50
    %v941 = vpop.f32.mrf.mxu0
    %v942 = vadd.f32 0.0, %v941
    %943 = vmatmul.f32.gmra.mxu0 %v52
    %v944 = vpop.f32.mrf.mxu0
    %v945 = vadd.f32 0.0, %v944
    %946 = vmatmul.f32.gmra.mxu0 %v53
    %v947 = vpop.f32.mrf.mxu0
    %v948 = vadd.f32 0.0, %v947
    %949 = vmatmul.f32.gmra.mxu0 %v55
    %v950 = vpop.f32.mrf.mxu0
    %v951 = vadd.f32 0.0, %v950
    %952 = vmatmul.f32.gmra.mxu0 %v56
    %v953 = vpop.f32.mrf.mxu0
    %v954 = vadd.f32 0.0, %v953
    %955 = vmatmul.f32.gmra.mxu0 %v58
    %v956 = vpop.f32.mrf.mxu0
    %v957 = vadd.f32 0.0, %v956
    %958 = vmatmul.f32.gmra.mxu0 %v59
    %v959 = vpop.f32.mrf.mxu0
    %v960 = vadd.f32 0.0, %v959
    %961 = vmatmul.f32.gmra.mxu0 %v61
    %v962 = vpop.f32.mrf.mxu0
    %v963 = vadd.f32 0.0, %v962
    %964 = vmatmul.f32.gmra.mxu0 %v62
    %v965 = vpop.f32.mrf.mxu0
    %v966 = vadd.f32 0.0, %v965
    %967 = vmatmul.f32.gmra.mxu0 %v64
    %v968 = vpop.f32.mrf.mxu0
    %v969 = vadd.f32 0.0, %v968
    %970 = vmatmul.f32.gmra.mxu0 %v65
    %v971 = vpop.f32.mrf.mxu0
    %v972 = vadd.f32 0.0, %v971
    %973 = vmatmul.f32.gmra.mxu0 %v67
    %v974 = vpop.f32.mrf.mxu0
    %v975 = vadd.f32 0.0, %v974
    %976 = vmatmul.f32.gmra.mxu0 %v68
    %v977 = vpop.f32.mrf.mxu0
    %v978 = vadd.f32 0.0, %v977
    %979 = vmatmul.f32.gmra.mxu0 %v70
    %v980 = vpop.f32.mrf.mxu0
    %v981 = vadd.f32 0.0, %v980
    %982 = vmatmul.f32.gmra.mxu0 %v71
    %v983 = vpop.f32.mrf.mxu0
    %v984 = vadd.f32 0.0, %v983
    %985 = vmatmul.f32.gmra.mxu0 %v73
    %v986 = vpop.f32.mrf.mxu0
    %v987 = vadd.f32 0.0, %v986
    %988 = vmatmul.f32.gmra.mxu0 %v74
    %v989 = vpop.f32.mrf.mxu0
    %v990 = vadd.f32 0.0, %v989
    %991 = vmatmul.f32.gmra.mxu0 %v76
    %v992 = vpop.f32.mrf.mxu0
    %v993 = vadd.f32 0.0, %v992
    %994 = vmatmul.f32.gmra.mxu0 %v77
    %v995 = vpop.f32.mrf.mxu0
    %v996 = vadd.f32 0.0, %v995
    %997 = vmatmul.f32.gmra.mxu0 %v79
    %v998 = vpop.f32.mrf.mxu0
    %v999 = vadd.f32 0.0, %v998
    %1000 = vmatmul.f32.gmra.mxu0 %v80
    %v1001 = vpop.f32.mrf.mxu0
    %v1002 = vadd.f32 0.0, %v1001
    %1003 = vmatmul.f32.gmra.mxu0 %v82
    %v1004 = vpop.f32.mrf.mxu0
    %v1005 = vadd.f32 0.0, %v1004
    %1006 = vmatmul.f32.gmra.mxu0 %v83
    %v1007 = vpop.f32.mrf.mxu0
    %v1008 = vadd.f32 0.0, %v1007
    %1009 = vmatmul.f32.gmra.mxu0 %v85
    %v1010 = vpop.f32.mrf.mxu0
    %v1011 = vadd.f32 0.0, %v1010
    %1012 = vmatmul.f32.gmra.mxu0 %v86
    %v1013 = vpop.f32.mrf.mxu0
    %v1014 = vadd.f32 0.0, %v1013
    %1015 = vmatmul.f32.gmra.mxu0 %v88
    %v1016 = vpop.f32.mrf.mxu0
    %v1017 = vadd.f32 0.0, %v1016
    %1018 = vmatmul.f32.gmra.mxu0 %v89
    %v1019 = vpop.f32.mrf.mxu0
    %v1020 = vadd.f32 0.0, %v1019
    %1021 = vmatmul.f32.gmra.mxu0 %v97
    %v1022 = vpop.f32.mrf.mxu0
    %v1023 = vadd.f32 0.0, %v1022
    %1024 = vmatmul.f32.gmra.mxu0 %v98
    %v1025 = vpop.f32.mrf.mxu0
    %v1026 = vadd.f32 0.0, %v1025
    %1027 = vmatmul.f32.gmra.mxu0 %v100
    %v1028 = vpop.f32.mrf.mxu0
    %v1029 = vadd.f32 0.0, %v1028
    %1030 = vmatmul.f32.gmra.mxu0 %v101
    %v1031 = vpop.f32.mrf.mxu0
    %v1032 = vadd.f32 0.0, %v1031
    %1033 = vmatmul.f32.gmra.mxu0 %v103
    %v1034 = vpop.f32.mrf.mxu0
    %v1035 = vadd.f32 0.0, %v1034
    %1036 = vmatmul.f32.gmra.mxu0 %v104
    %v1037 = vpop.f32.mrf.mxu0
    %v1038 = vadd.f32 0.0, %v1037
    %1039 = vmatmul.f32.gmra.mxu0 %v106
    %v1040 = vpop.f32.mrf.mxu0
    %v1041 = vadd.f32 0.0, %v1040
    %1042 = vmatmul.f32.gmra.mxu0 %v107
    %v1043 = vpop.f32.mrf.mxu0
    %v1044 = vadd.f32 0.0, %v1043
    %1045 = vmatmul.f32.gmra.mxu0 %v109
    %v1046 = vpop.f32.mrf.mxu0
    %v1047 = vadd.f32 0.0, %v1046
    %1048 = vmatmul.f32.gmra.mxu0 %v110
    %v1049 = vpop.f32.mrf.mxu0
    %v1050 = vadd.f32 0.0, %v1049
    %1051 = vmatmul.f32.gmra.mxu0 %v112
    %v1052 = vpop.f32.mrf.mxu0
    %v1053 = vadd.f32 0.0, %v1052
    %1054 = vmatmul.f32.gmra.mxu0 %v113
    %v1055 = vpop.f32.mrf.mxu0
    %v1056 = vadd.f32 0.0, %v1055
    %1057 = vmatmul.f32.gmra.mxu0 %v115
    %v1058 = vpop.f32.mrf.mxu0
    %v1059 = vadd.f32 0.0, %v1058
    %1060 = vmatmul.f32.gmra.mxu0 %v116
    %v1061 = vpop.f32.mrf.mxu0
    %v1062 = vadd.f32 0.0, %v1061
    %1063 = vmatmul.f32.gmra.mxu0 %v118
    %v1064 = vpop.f32.mrf.mxu0
    %v1065 = vadd.f32 0.0, %v1064
    %1066 = vmatmul.f32.gmra.mxu0 %v119
    %v1067 = vpop.f32.mrf.mxu0
    %v1068 = vadd.f32 0.0, %v1067
    %1069 = vmatmul.f32.gmra.mxu0 %v121
    %v1070 = vpop.f32.mrf.mxu0
    %v1071 = vadd.f32 0.0, %v1070
    %1072 = vmatmul.f32.gmra.mxu0 %v122
    %v1073 = vpop.f32.mrf.mxu0
    %v1074 = vadd.f32 0.0, %v1073
    %1075 = vmatmul.f32.gmra.mxu0 %v124
    %v1076 = vpop.f32.mrf.mxu0
    %v1077 = vadd.f32 0.0, %v1076
    %1078 = vmatmul.f32.gmra.mxu0 %v125
    %v1079 = vpop.f32.mrf.mxu0
    %v1080 = vadd.f32 0.0, %v1079
    %1081 = vmatmul.f32.gmra.mxu0 %v127
    %v1082 = vpop.f32.mrf.mxu0
    %v1083 = vadd.f32 0.0, %v1082
    %1084 = vmatmul.f32.gmra.mxu0 %v128
    %v1085 = vpop.f32.mrf.mxu0
    %v1086 = vadd.f32 0.0, %v1085
    %1087 = vmatmul.f32.gmra.mxu0 %v130
    %v1088 = vpop.f32.mrf.mxu0
    %v1089 = vadd.f32 0.0, %v1088
    %1090 = vmatmul.f32.gmra.mxu0 %v131
    %v1091 = vpop.f32.mrf.mxu0
    %v1092 = vadd.f32 0.0, %v1091
    %1093 = vmatmul.f32.gmra.mxu0 %v133
    %v1094 = vpop.f32.mrf.mxu0
    %v1095 = vadd.f32 0.0, %v1094
    %1096 = vmatmul.f32.gmra.mxu0 %v134
    %v1097 = vpop.f32.mrf.mxu0
    %v1098 = vadd.f32 0.0, %v1097
    %1099 = vmatmul.f32.gmra.mxu0 %v136
    %v1100 = vpop.f32.mrf.mxu0
    %v1101 = vadd.f32 0.0, %v1100
    %1102 = vmatmul.f32.gmra.mxu0 %v137
    %v1103 = vpop.f32.mrf.mxu0
    %v1104 = vadd.f32 0.0, %v1103
    %1105 = vmatmul.f32.gmra.mxu0 %v139
    %v1106 = vpop.f32.mrf.mxu0
    %v1107 = vadd.f32 0.0, %v1106
    %1108 = vmatmul.f32.gmra.mxu0 %v140
    %v1109 = vpop.f32.mrf.mxu0
    %v1110 = vadd.f32 0.0, %v1109
    %1111 = vmatmul.f32.gmra.mxu0 %v142
    %v1112 = vpop.f32.mrf.mxu0
    %v1113 = vadd.f32 0.0, %v1112
    %1114 = vmatmul.f32.gmra.mxu0 %v143
    %v1115 = vpop.f32.mrf.mxu0
    %v1116 = vadd.f32 0.0, %v1115
    %1117 = vdwg.mxu0
    %1118 = vmatpush.msra.mxu0 %v796
    %1119 = vmatpush.msra.mxu0 %v795
    %1120 = vmatpush.msra.mxu0 %v794
    %1121 = vmatpush.msra.mxu0 %v793
    %1122 = vmatpush.msra.mxu0 %v792
    %1123 = vmatpush.msra.mxu0 %v791
    %1124 = vmatpush.msra.mxu0 %v790
    %1125 = vmatpush.msra.mxu0 %v789
    %1126 = vmatpush.msra.mxu0 %v788
    %1127 = vmatpush.msra.mxu0 %v787
    %1128 = vmatpush.msra.mxu0 %v786
    %1129 = vmatpush.msra.mxu0 %v785
    %1130 = vmatpush.msra.mxu0 %v784
    %1131 = vmatpush.msra.mxu0 %v783
    %1132 = vmatpush.msra.mxu0 %v782
    %1133 = vmatpush.msra.mxu0 %v781
    %1134 = vmatmul.f32.gmra.mxu0 %v250
    %v1135 = vpop.f32.mrf.mxu0
    %v1136 = vadd.f32 %v927, %v1135
    %1137 = vmatmul.f32.gmra.mxu0 %v252
    %v1138 = vpop.f32.mrf.mxu0
    %v1139 = vadd.f32 %v930, %v1138
    %1140 = vmatmul.f32.gmra.mxu0 %v255
    %v1141 = vpop.f32.mrf.mxu0
    %v1142 = vadd.f32 %v933, %v1141
    %1143 = vmatmul.f32.gmra.mxu0 %v257
    %v1144 = vpop.f32.mrf.mxu0
    %v1145 = vadd.f32 %v936, %v1144
    %1146 = vmatmul.f32.gmra.mxu0 %v260
    %v1147 = vpop.f32.mrf.mxu0
    %v1148 = vadd.f32 %v939, %v1147
    %1149 = vmatmul.f32.gmra.mxu0 %v262
    %v1150 = vpop.f32.mrf.mxu0
    %v1151 = vadd.f32 %v942, %v1150
    %1152 = vmatmul.f32.gmra.mxu0 %v265
    %v1153 = vpop.f32.mrf.mxu0
    %v1154 = vadd.f32 %v945, %v1153
    %1155 = vmatmul.f32.gmra.mxu0 %v267
    %v1156 = vpop.f32.mrf.mxu0
    %v1157 = vadd.f32 %v948, %v1156
    %1158 = vmatmul.f32.gmra.mxu0 %v270
    %v1159 = vpop.f32.mrf.mxu0
    %v1160 = vadd.f32 %v951, %v1159
    %1161 = vmatmul.f32.gmra.mxu0 %v272
    %v1162 = vpop.f32.mrf.mxu0
    %v1163 = vadd.f32 %v954, %v1162
    %1164 = vmatmul.f32.gmra.mxu0 %v275
    %v1165 = vpop.f32.mrf.mxu0
    %v1166 = vadd.f32 %v957, %v1165
    %1167 = vmatmul.f32.gmra.mxu0 %v277
    %v1168 = vpop.f32.mrf.mxu0
    %v1169 = vadd.f32 %v960, %v1168
    %1170 = vmatmul.f32.gmra.mxu0 %v280
    %v1171 = vpop.f32.mrf.mxu0
    %v1172 = vadd.f32 %v963, %v1171
    %1173 = vmatmul.f32.gmra.mxu0 %v282
    %v1174 = vpop.f32.mrf.mxu0
    %v1175 = vadd.f32 %v966, %v1174
    %1176 = vmatmul.f32.gmra.mxu0 %v285
    %v1177 = vpop.f32.mrf.mxu0
    %v1178 = vadd.f32 %v969, %v1177
    %1179 = vmatmul.f32.gmra.mxu0 %v287
    %v1180 = vpop.f32.mrf.mxu0
    %v1181 = vadd.f32 %v972, %v1180
    %1182 = vmatmul.f32.gmra.mxu0 %v290
    %v1183 = vpop.f32.mrf.mxu0
    %v1184 = vadd.f32 %v975, %v1183
    %1185 = vmatmul.f32.gmra.mxu0 %v292
    %v1186 = vpop.f32.mrf.mxu0
    %v1187 = vadd.f32 %v978, %v1186
    %1188 = vmatmul.f32.gmra.mxu0 %v295
    %v1189 = vpop.f32.mrf.mxu0
    %v1190 = vadd.f32 %v981, %v1189
    %1191 = vmatmul.f32.gmra.mxu0 %v297
    %v1192 = vpop.f32.mrf.mxu0
    %v1193 = vadd.f32 %v984, %v1192
    %1194 = vmatmul.f32.gmra.mxu0 %v300
    %v1195 = vpop.f32.mrf.mxu0
    %v1196 = vadd.f32 %v987, %v1195
    %1197 = vmatmul.f32.gmra.mxu0 %v302
    %v1198 = vpop.f32.mrf.mxu0
    %v1199 = vadd.f32 %v990, %v1198
    %1200 = vmatmul.f32.gmra.mxu0 %v305
    %v1201 = vpop.f32.mrf.mxu0
    %v1202 = vadd.f32 %v993, %v1201
    %1203 = vmatmul.f32.gmra.mxu0 %v307
    %v1204 = vpop.f32.mrf.mxu0
    %v1205 = vadd.f32 %v996, %v1204
    %1206 = vmatmul.f32.gmra.mxu0 %v310
    %v1207 = vpop.f32.mrf.mxu0
    %v1208 = vadd.f32 %v999, %v1207
    %1209 = vmatmul.f32.gmra.mxu0 %v312
    %v1210 = vpop.f32.mrf.mxu0
    %v1211 = vadd.f32 %v1002, %v1210
    %1212 = vmatmul.f32.gmra.mxu0 %v315
    %v1213 = vpop.f32.mrf.mxu0
    %v1214 = vadd.f32 %v1005, %v1213
    %1215 = vmatmul.f32.gmra.mxu0 %v317
    %v1216 = vpop.f32.mrf.mxu0
    %v1217 = vadd.f32 %v1008, %v1216
    %1218 = vmatmul.f32.gmra.mxu0 %v320
    %v1219 = vpop.f32.mrf.mxu0
    %v1220 = vadd.f32 %v1011, %v1219
    %1221 = vmatmul.f32.gmra.mxu0 %v322
    %v1222 = vpop.f32.mrf.mxu0
    %v1223 = vadd.f32 %v1014, %v1222
    %1224 = vmatmul.f32.gmra.mxu0 %v325
    %v1225 = vpop.f32.mrf.mxu0
    %v1226 = vadd.f32 %v1017, %v1225
    %1227 = vmatmul.f32.gmra.mxu0 %v327
    %v1228 = vpop.f32.mrf.mxu0
    %v1229 = vadd.f32 %v1020, %v1228
    %1230 = vmatmul.f32.gmra.mxu0 %v330
    %v1231 = vpop.f32.mrf.mxu0
    %v1232 = vadd.f32 %v1023, %v1231
    %1233 = vmatmul.f32.gmra.mxu0 %v332
    %v1234 = vpop.f32.mrf.mxu0
    %v1235 = vadd.f32 %v1026, %v1234
    %1236 = vmatmul.f32.gmra.mxu0 %v335
    %v1237 = vpop.f32.mrf.mxu0
    %v1238 = vadd.f32 %v1029, %v1237
    %1239 = vmatmul.f32.gmra.mxu0 %v337
    %v1240 = vpop.f32.mrf.mxu0
    %v1241 = vadd.f32 %v1032, %v1240
    %1242 = vmatmul.f32.gmra.mxu0 %v340
    %v1243 = vpop.f32.mrf.mxu0
    %v1244 = vadd.f32 %v1035, %v1243
    %1245 = vmatmul.f32.gmra.mxu0 %v342
    %v1246 = vpop.f32.mrf.mxu0
    %v1247 = vadd.f32 %v1038, %v1246
    %1248 = vmatmul.f32.gmra.mxu0 %v345
    %v1249 = vpop.f32.mrf.mxu0
    %v1250 = vadd.f32 %v1041, %v1249
    %1251 = vmatmul.f32.gmra.mxu0 %v347
    %v1252 = vpop.f32.mrf.mxu0
    %v1253 = vadd.f32 %v1044, %v1252
    %1254 = vmatmul.f32.gmra.mxu0 %v350
    %v1255 = vpop.f32.mrf.mxu0
    %v1256 = vadd.f32 %v1047, %v1255
    %1257 = vmatmul.f32.gmra.mxu0 %v352
    %v1258 = vpop.f32.mrf.mxu0
    %v1259 = vadd.f32 %v1050, %v1258
    %1260 = vmatmul.f32.gmra.mxu0 %v355
    %v1261 = vpop.f32.mrf.mxu0
    %v1262 = vadd.f32 %v1053, %v1261
    %1263 = vmatmul.f32.gmra.mxu0 %v357
    %v1264 = vpop.f32.mrf.mxu0
    %v1265 = vadd.f32 %v1056, %v1264
    %1266 = vmatmul.f32.gmra.mxu0 %v360
    %v1267 = vpop.f32.mrf.mxu0
    %v1268 = vadd.f32 %v1059, %v1267
    %1269 = vmatmul.f32.gmra.mxu0 %v362
    %v1270 = vpop.f32.mrf.mxu0
    %v1271 = vadd.f32 %v1062, %v1270
    %1272 = vmatmul.f32.gmra.mxu0 %v365
    %v1273 = vpop.f32.mrf.mxu0
    %v1274 = vadd.f32 %v1065, %v1273
    %1275 = vmatmul.f32.gmra.mxu0 %v367
    %v1276 = vpop.f32.mrf.mxu0
    %v1277 = vadd.f32 %v1068, %v1276
    %1278 = vmatmul.f32.gmra.mxu0 %v370
    %v1279 = vpop.f32.mrf.mxu0
    %v1280 = vadd.f32 %v1071, %v1279
    %1281 = vmatmul.f32.gmra.mxu0 %v372
    %v1282 = vpop.f32.mrf.mxu0
    %v1283 = vadd.f32 %v1074, %v1282
    %1284 = vmatmul.f32.gmra.mxu0 %v375
    %v1285 = vpop.f32.mrf.mxu0
    %v1286 = vadd.f32 %v1077, %v1285
    %1287 = vmatmul.f32.gmra.mxu0 %v377
    %v1288 = vpop.f32.mrf.mxu0
    %v1289 = vadd.f32 %v1080, %v1288
    %1290 = vmatmul.f32.gmra.mxu0 %v380
    %v1291 = vpop.f32.mrf.mxu0
    %v1292 = vadd.f32 %v1083, %v1291
    %1293 = vmatmul.f32.gmra.mxu0 %v382
    %v1294 = vpop.f32.mrf.mxu0
    %v1295 = vadd.f32 %v1086, %v1294
    %1296 = vmatmul.f32.gmra.mxu0 %v385
    %v1297 = vpop.f32.mrf.mxu0
    %v1298 = vadd.f32 %v1089, %v1297
    %1299 = vmatmul.f32.gmra.mxu0 %v387
    %v1300 = vpop.f32.mrf.mxu0
    %v1301 = vadd.f32 %v1092, %v1300
    %1302 = vmatmul.f32.gmra.mxu0 %v390
    %v1303 = vpop.f32.mrf.mxu0
    %v1304 = vadd.f32 %v1095, %v1303
    %1305 = vmatmul.f32.gmra.mxu0 %v392
    %v1306 = vpop.f32.mrf.mxu0
    %v1307 = vadd.f32 %v1098, %v1306
    %1308 = vmatmul.f32.gmra.mxu0 %v395
    %v1309 = vpop.f32.mrf.mxu0
    %v1310 = vadd.f32 %v1101, %v1309
    %1311 = vmatmul.f32.gmra.mxu0 %v397
    %v1312 = vpop.f32.mrf.mxu0
    %v1313 = vadd.f32 %v1104, %v1312
    %1314 = vmatmul.f32.gmra.mxu0 %v400
    %v1315 = vpop.f32.mrf.mxu0
    %v1316 = vadd.f32 %v1107, %v1315
    %1317 = vmatmul.f32.gmra.mxu0 %v402
    %v1318 = vpop.f32.mrf.mxu0
    %v1319 = vadd.f32 %v1110, %v1318
    %1320 = vmatmul.f32.gmra.mxu0 %v405
    %v1321 = vpop.f32.mrf.mxu0
    %v1322 = vadd.f32 %v1113, %v1321
    %1323 = vmatmul.f32.gmra.mxu0 %v407
    %v1324 = vpop.f32.mrf.mxu0
    %v1325 = vadd.f32 %v1116, %v1324
    %1326 = vdwg.mxu0
    %1327 = vmatpush.msra.mxu0 %v812
    %1328 = vmatpush.msra.mxu0 %v811
    %1329 = vmatpush.msra.mxu0 %v810
    %1330 = vmatpush.msra.mxu0 %v809
    %1331 = vmatpush.msra.mxu0 %v808
    %1332 = vmatpush.msra.mxu0 %v807
    %1333 = vmatpush.msra.mxu0 %v806
    %1334 = vmatpush.msra.mxu0 %v805
    %1335 = vmatpush.msra.mxu0 %v804
    %1336 = vmatpush.msra.mxu0 %v803
    %1337 = vmatpush.msra.mxu0 %v802
    %1338 = vmatpush.msra.mxu0 %v801
    %1339 = vmatpush.msra.mxu0 %v800
    %1340 = vmatpush.msra.mxu0 %v799
    %1341 = vmatpush.msra.mxu0 %v798
    %1342 = vmatpush.msra.mxu0 %v797
    %1343 = vmatmul.f32.gmra.mxu0 %v475
    %v1344 = vpop.f32.mrf.mxu0
    %v1345 = vadd.f32 %v1136, %v1344
    %1346 = vmatmul.f32.gmra.mxu0 %v477
    %v1347 = vpop.f32.mrf.mxu0
    %v1348 = vadd.f32 %v1139, %v1347
    %1349 = vmatmul.f32.gmra.mxu0 %v480
    %v1350 = vpop.f32.mrf.mxu0
    %v1351 = vadd.f32 %v1142, %v1350
    %1352 = vmatmul.f32.gmra.mxu0 %v482
    %v1353 = vpop.f32.mrf.mxu0
    %v1354 = vadd.f32 %v1145, %v1353
    %1355 = vmatmul.f32.gmra.mxu0 %v485
    %v1356 = vpop.f32.mrf.mxu0
    %v1357 = vadd.f32 %v1148, %v1356
    %1358 = vmatmul.f32.gmra.mxu0 %v487
    %v1359 = vpop.f32.mrf.mxu0
    %v1360 = vadd.f32 %v1151, %v1359
    %1361 = vmatmul.f32.gmra.mxu0 %v490
    %v1362 = vpop.f32.mrf.mxu0
    %v1363 = vadd.f32 %v1154, %v1362
    %1364 = vmatmul.f32.gmra.mxu0 %v492
    %v1365 = vpop.f32.mrf.mxu0
    %v1366 = vadd.f32 %v1157, %v1365
    %1367 = vmatmul.f32.gmra.mxu0 %v495
    %v1368 = vpop.f32.mrf.mxu0
    %v1369 = vadd.f32 %v1160, %v1368
    %1370 = vmatmul.f32.gmra.mxu0 %v497
    %v1371 = vpop.f32.mrf.mxu0
    %v1372 = vadd.f32 %v1163, %v1371
    %1373 = vmatmul.f32.gmra.mxu0 %v500
    %v1374 = vpop.f32.mrf.mxu0
    %v1375 = vadd.f32 %v1166, %v1374
    %1376 = vmatmul.f32.gmra.mxu0 %v502
    %v1377 = vpop.f32.mrf.mxu0
    %v1378 = vadd.f32 %v1169, %v1377
    %1379 = vmatmul.f32.gmra.mxu0 %v505
    %v1380 = vpop.f32.mrf.mxu0
    %v1381 = vadd.f32 %v1172, %v1380
    %1382 = vmatmul.f32.gmra.mxu0 %v507
    %v1383 = vpop.f32.mrf.mxu0
    %v1384 = vadd.f32 %v1175, %v1383
    %1385 = vmatmul.f32.gmra.mxu0 %v510
    %v1386 = vpop.f32.mrf.mxu0
    %v1387 = vadd.f32 %v1178, %v1386
    %1388 = vmatmul.f32.gmra.mxu0 %v512
    %v1389 = vpop.f32.mrf.mxu0
    %v1390 = vadd.f32 %v1181, %v1389
    %1391 = vmatmul.f32.gmra.mxu0 %v515
    %v1392 = vpop.f32.mrf.mxu0
    %v1393 = vadd.f32 %v1184, %v1392
    %1394 = vmatmul.f32.gmra.mxu0 %v517
    %v1395 = vpop.f32.mrf.mxu0
    %v1396 = vadd.f32 %v1187, %v1395
    %1397 = vmatmul.f32.gmra.mxu0 %v520
    %v1398 = vpop.f32.mrf.mxu0
    %v1399 = vadd.f32 %v1190, %v1398
    %1400 = vmatmul.f32.gmra.mxu0 %v522
    %v1401 = vpop.f32.mrf.mxu0
    %v1402 = vadd.f32 %v1193, %v1401
    %1403 = vmatmul.f32.gmra.mxu0 %v525
    %v1404 = vpop.f32.mrf.mxu0
    %v1405 = vadd.f32 %v1196, %v1404
    %1406 = vmatmul.f32.gmra.mxu0 %v527
    %v1407 = vpop.f32.mrf.mxu0
    %v1408 = vadd.f32 %v1199, %v1407
    %1409 = vmatmul.f32.gmra.mxu0 %v530
    %v1410 = vpop.f32.mrf.mxu0
    %v1411 = vadd.f32 %v1202, %v1410
    %1412 = vmatmul.f32.gmra.mxu0 %v532
    %v1413 = vpop.f32.mrf.mxu0
    %v1414 = vadd.f32 %v1205, %v1413
    %1415 = vmatmul.f32.gmra.mxu0 %v535
    %v1416 = vpop.f32.mrf.mxu0
    %v1417 = vadd.f32 %v1208, %v1416
    %1418 = vmatmul.f32.gmra.mxu0 %v537
    %v1419 = vpop.f32.mrf.mxu0
    %v1420 = vadd.f32 %v1211, %v1419
    %1421 = vmatmul.f32.gmra.mxu0 %v540
    %v1422 = vpop.f32.mrf.mxu0
    %v1423 = vadd.f32 %v1214, %v1422
    %1424 = vmatmul.f32.gmra.mxu0 %v542
    %v1425 = vpop.f32.mrf.mxu0
    %v1426 = vadd.f32 %v1217, %v1425
    %1427 = vmatmul.f32.gmra.mxu0 %v545
    %v1428 = vpop.f32.mrf.mxu0
    %v1429 = vadd.f32 %v1220, %v1428
    %1430 = vmatmul.f32.gmra.mxu0 %v547
    %v1431 = vpop.f32.mrf.mxu0
    %v1432 = vadd.f32 %v1223, %v1431
    %1433 = vmatmul.f32.gmra.mxu0 %v550
    %v1434 = vpop.f32.mrf.mxu0
    %v1435 = vadd.f32 %v1226, %v1434
    %1436 = vmatmul.f32.gmra.mxu0 %v552
    %v1437 = vpop.f32.mrf.mxu0
    %v1438 = vadd.f32 %v1229, %v1437
    %1439 = vmatmul.f32.gmra.mxu0 %v555
    %v1440 = vpop.f32.mrf.mxu0
    %v1441 = vadd.f32 %v1232, %v1440
    %1442 = vmatmul.f32.gmra.mxu0 %v557
    %v1443 = vpop.f32.mrf.mxu0
    %v1444 = vadd.f32 %v1235, %v1443
    %1445 = vmatmul.f32.gmra.mxu0 %v560
    %v1446 = vpop.f32.mrf.mxu0
    %v1447 = vadd.f32 %v1238, %v1446
    %1448 = vmatmul.f32.gmra.mxu0 %v562
    %v1449 = vpop.f32.mrf.mxu0
    %v1450 = vadd.f32 %v1241, %v1449
    %1451 = vmatmul.f32.gmra.mxu0 %v565
    %v1452 = vpop.f32.mrf.mxu0
    %v1453 = vadd.f32 %v1244, %v1452
    %1454 = vmatmul.f32.gmra.mxu0 %v567
    %v1455 = vpop.f32.mrf.mxu0
    %v1456 = vadd.f32 %v1247, %v1455
    %1457 = vmatmul.f32.gmra.mxu0 %v570
    %v1458 = vpop.f32.mrf.mxu0
    %v1459 = vadd.f32 %v1250, %v1458
    %1460 = vmatmul.f32.gmra.mxu0 %v572
    %v1461 = vpop.f32.mrf.mxu0
    %v1462 = vadd.f32 %v1253, %v1461
    %1463 = vmatmul.f32.gmra.mxu0 %v575
    %v1464 = vpop.f32.mrf.mxu0
    %v1465 = vadd.f32 %v1256, %v1464
    %1466 = vmatmul.f32.gmra.mxu0 %v577
    %v1467 = vpop.f32.mrf.mxu0
    %v1468 = vadd.f32 %v1259, %v1467
    %1469 = vmatmul.f32.gmra.mxu0 %v580
    %v1470 = vpop.f32.mrf.mxu0
    %v1471 = vadd.f32 %v1262, %v1470
    %1472 = vmatmul.f32.gmra.mxu0 %v582
    %v1473 = vpop.f32.mrf.mxu0
    %v1474 = vadd.f32 %v1265, %v1473
    %1475 = vmatmul.f32.gmra.mxu0 %v585
    %v1476 = vpop.f32.mrf.mxu0
    %v1477 = vadd.f32 %v1268, %v1476
    %1478 = vmatmul.f32.gmra.mxu0 %v587
    %v1479 = vpop.f32.mrf.mxu0
    %v1480 = vadd.f32 %v1271, %v1479
    %1481 = vmatmul.f32.gmra.mxu0 %v590
    %v1482 = vpop.f32.mrf.mxu0
    %v1483 = vadd.f32 %v1274, %v1482
    %1484 = vmatmul.f32.gmra.mxu0 %v592
    %v1485 = vpop.f32.mrf.mxu0
    %v1486 = vadd.f32 %v1277, %v1485
    %1487 = vmatmul.f32.gmra.mxu0 %v595
    %v1488 = vpop.f32.mrf.mxu0
    %v1489 = vadd.f32 %v1280, %v1488
    %1490 = vmatmul.f32.gmra.mxu0 %v597
    %v1491 = vpop.f32.mrf.mxu0
    %v1492 = vadd.f32 %v1283, %v1491
    %1493 = vmatmul.f32.gmra.mxu0 %v600
    %v1494 = vpop.f32.mrf.mxu0
    %v1495 = vadd.f32 %v1286, %v1494
    %1496 = vmatmul.f32.gmra.mxu0 %v602
    %v1497 = vpop.f32.mrf.mxu0
    %v1498 = vadd.f32 %v1289, %v1497
    %1499 = vmatmul.f32.gmra.mxu0 %v605
    %v1500 = vpop.f32.mrf.mxu0
    %v1501 = vadd.f32 %v1292, %v1500
    %1502 = vmatmul.f32.gmra.mxu0 %v607
    %v1503 = vpop.f32.mrf.mxu0
    %v1504 = vadd.f32 %v1295, %v1503
    %1505 = vmatmul.f32.gmra.mxu0 %v610
    %v1506 = vpop.f32.mrf.mxu0
    %v1507 = vadd.f32 %v1298, %v1506
    %1508 = vmatmul.f32.gmra.mxu0 %v612
    %v1509 = vpop.f32.mrf.mxu0
    %v1510 = vadd.f32 %v1301, %v1509
    %1511 = vmatmul.f32.gmra.mxu0 %v615
    %v1512 = vpop.f32.mrf.mxu0
    %v1513 = vadd.f32 %v1304, %v1512
    %1514 = vmatmul.f32.gmra.mxu0 %v617
    %v1515 = vpop.f32.mrf.mxu0
    %v1516 = vadd.f32 %v1307, %v1515
    %1517 = vmatmul.f32.gmra.mxu0 %v620
    %v1518 = vpop.f32.mrf.mxu0
    %v1519 = vadd.f32 %v1310, %v1518
    %1520 = vmatmul.f32.gmra.mxu0 %v622
    %v1521 = vpop.f32.mrf.mxu0
    %v1522 = vadd.f32 %v1313, %v1521
    %1523 = vmatmul.f32.gmra.mxu0 %v625
    %v1524 = vpop.f32.mrf.mxu0
    %v1525 = vadd.f32 %v1316, %v1524
    %1526 = vmatmul.f32.gmra.mxu0 %v627
    %v1527 = vpop.f32.mrf.mxu0
    %v1528 = vadd.f32 %v1319, %v1527
    %1529 = vmatmul.f32.gmra.mxu0 %v630
    %v1530 = vpop.f32.mrf.mxu0
    %v1531 = vadd.f32 %v1322, %v1530
    %1532 = vmatmul.f32.gmra.mxu0 %v632
    %v1533 = vpop.f32.mrf.mxu0
    %v1534 = vadd.f32 %v1325, %v1533
    %1535 = vdwg.mxu0
    %1536 = vmatpush.msra.mxu0 %v828
    %1537 = vmatpush.msra.mxu0 %v827
    %1538 = vmatpush.msra.mxu0 %v826
    %1539 = vmatpush.msra.mxu0 %v825
    %1540 = vmatpush.msra.mxu0 %v824
    %1541 = vmatpush.msra.mxu0 %v823
    %1542 = vmatpush.msra.mxu0 %v822
    %1543 = vmatpush.msra.mxu0 %v821
    %1544 = vmatpush.msra.mxu0 %v820
    %1545 = vmatpush.msra.mxu0 %v819
    %1546 = vmatpush.msra.mxu0 %v818
    %1547 = vmatpush.msra.mxu0 %v817
    %1548 = vmatpush.msra.mxu0 %v816
    %1549 = vmatpush.msra.mxu0 %v815
    %1550 = vmatpush.msra.mxu0 %v814
    %1551 = vmatpush.msra.mxu0 %v813
    %1552 = vmatmul.f32.gmra.mxu0 %v46
    %v1553 = vpop.f32.mrf.mxu0
    %v1554 = vadd.f32 %v1345, %v1553
    %1555 = vmatmul.f32.gmra.mxu0 %v47
    %v1556 = vpop.f32.mrf.mxu0
    %v1557 = vadd.f32 %v1348, %v1556
    %1558 = vmatmul.f32.gmra.mxu0 %v49
    %v1559 = vpop.f32.mrf.mxu0
    %v1560 = vadd.f32 %v1351, %v1559
    %1561 = vmatmul.f32.gmra.mxu0 %v50
    %v1562 = vpop.f32.mrf.mxu0
    %v1563 = vadd.f32 %v1354, %v1562
    %1564 = vmatmul.f32.gmra.mxu0 %v52
    %v1565 = vpop.f32.mrf.mxu0
    %v1566 = vadd.f32 %v1357, %v1565
    %1567 = vmatmul.f32.gmra.mxu0 %v53
    %v1568 = vpop.f32.mrf.mxu0
    %v1569 = vadd.f32 %v1360, %v1568
    %1570 = vmatmul.f32.gmra.mxu0 %v55
    %v1571 = vpop.f32.mrf.mxu0
    %v1572 = vadd.f32 %v1363, %v1571
    %1573 = vmatmul.f32.gmra.mxu0 %v56
    %v1574 = vpop.f32.mrf.mxu0
    %v1575 = vadd.f32 %v1366, %v1574
    %1576 = vmatmul.f32.gmra.mxu0 %v58
    %v1577 = vpop.f32.mrf.mxu0
    %v1578 = vadd.f32 %v1369, %v1577
    %1579 = vmatmul.f32.gmra.mxu0 %v59
    %v1580 = vpop.f32.mrf.mxu0
    %v1581 = vadd.f32 %v1372, %v1580
    %1582 = vmatmul.f32.gmra.mxu0 %v61
    %v1583 = vpop.f32.mrf.mxu0
    %v1584 = vadd.f32 %v1375, %v1583
    %1585 = vmatmul.f32.gmra.mxu0 %v62
    %v1586 = vpop.f32.mrf.mxu0
    %v1587 = vadd.f32 %v1378, %v1586
    %1588 = vmatmul.f32.gmra.mxu0 %v64
    %v1589 = vpop.f32.mrf.mxu0
    %v1590 = vadd.f32 %v1381, %v1589
    %1591 = vmatmul.f32.gmra.mxu0 %v65
    %v1592 = vpop.f32.mrf.mxu0
    %v1593 = vadd.f32 %v1384, %v1592
    %1594 = vmatmul.f32.gmra.mxu0 %v67
    %v1595 = vpop.f32.mrf.mxu0
    %v1596 = vadd.f32 %v1387, %v1595
    %1597 = vmatmul.f32.gmra.mxu0 %v68
    %v1598 = vpop.f32.mrf.mxu0
    %v1599 = vadd.f32 %v1390, %v1598
    %1600 = vmatmul.f32.gmra.mxu0 %v70
    %v1601 = vpop.f32.mrf.mxu0
    %v1602 = vadd.f32 %v1393, %v1601
    %1603 = vmatmul.f32.gmra.mxu0 %v71
    %v1604 = vpop.f32.mrf.mxu0
    %v1605 = vadd.f32 %v1396, %v1604
    %1606 = vmatmul.f32.gmra.mxu0 %v73
    %v1607 = vpop.f32.mrf.mxu0
    %v1608 = vadd.f32 %v1399, %v1607
    %1609 = vmatmul.f32.gmra.mxu0 %v74
    %v1610 = vpop.f32.mrf.mxu0
    %v1611 = vadd.f32 %v1402, %v1610
    %1612 = vmatmul.f32.gmra.mxu0 %v76
    %v1613 = vpop.f32.mrf.mxu0
    %v1614 = vadd.f32 %v1405, %v1613
    %1615 = vmatmul.f32.gmra.mxu0 %v77
    %v1616 = vpop.f32.mrf.mxu0
    %v1617 = vadd.f32 %v1408, %v1616
    %1618 = vmatmul.f32.gmra.mxu0 %v79
    %v1619 = vpop.f32.mrf.mxu0
    %v1620 = vadd.f32 %v1411, %v1619
    %1621 = vmatmul.f32.gmra.mxu0 %v80
    %v1622 = vpop.f32.mrf.mxu0
    %v1623 = vadd.f32 %v1414, %v1622
    %1624 = vmatmul.f32.gmra.mxu0 %v82
    %v1625 = vpop.f32.mrf.mxu0
    %v1626 = vadd.f32 %v1417, %v1625
    %1627 = vmatmul.f32.gmra.mxu0 %v83
    %v1628 = vpop.f32.mrf.mxu0
    %v1629 = vadd.f32 %v1420, %v1628
    %1630 = vmatmul.f32.gmra.mxu0 %v85
    %v1631 = vpop.f32.mrf.mxu0
    %v1632 = vadd.f32 %v1423, %v1631
    %1633 = vmatmul.f32.gmra.mxu0 %v86
    %v1634 = vpop.f32.mrf.mxu0
    %v1635 = vadd.f32 %v1426, %v1634
    %1636 = vmatmul.f32.gmra.mxu0 %v88
    %v1637 = vpop.f32.mrf.mxu0
    %v1638 = vadd.f32 %v1429, %v1637
    %1639 = vmatmul.f32.gmra.mxu0 %v89
    %v1640 = vpop.f32.mrf.mxu0
    %v1641 = vadd.f32 %v1432, %v1640
    %1642 = vmatmul.f32.gmra.mxu0 %v91
    %v1643 = vpop.f32.mrf.mxu0
    %v1644 = vadd.f32 %v1435, %v1643
    %1645 = vmatmul.f32.gmra.mxu0 %v92
    %v1646 = vpop.f32.mrf.mxu0
    %v1647 = vadd.f32 %v1438, %v1646
    %1648 = vmatmul.f32.gmra.mxu0 %v100
    %v1649 = vpop.f32.mrf.mxu0
    %v1650 = vadd.f32 %v1441, %v1649
    %1651 = vmatmul.f32.gmra.mxu0 %v101
    %v1652 = vpop.f32.mrf.mxu0
    %v1653 = vadd.f32 %v1444, %v1652
    %1654 = vmatmul.f32.gmra.mxu0 %v103
    %v1655 = vpop.f32.mrf.mxu0
    %v1656 = vadd.f32 %v1447, %v1655
    %1657 = vmatmul.f32.gmra.mxu0 %v104
    %v1658 = vpop.f32.mrf.mxu0
    %v1659 = vadd.f32 %v1450, %v1658
    %1660 = vmatmul.f32.gmra.mxu0 %v106
    %v1661 = vpop.f32.mrf.mxu0
    %v1662 = vadd.f32 %v1453, %v1661
    %1663 = vmatmul.f32.gmra.mxu0 %v107
    %v1664 = vpop.f32.mrf.mxu0
    %v1665 = vadd.f32 %v1456, %v1664
    %1666 = vmatmul.f32.gmra.mxu0 %v109
    %v1667 = vpop.f32.mrf.mxu0
    %v1668 = vadd.f32 %v1459, %v1667
    %1669 = vmatmul.f32.gmra.mxu0 %v110
    %v1670 = vpop.f32.mrf.mxu0
    %v1671 = vadd.f32 %v1462, %v1670
    %1672 = vmatmul.f32.gmra.mxu0 %v112
    %v1673 = vpop.f32.mrf.mxu0
    %v1674 = vadd.f32 %v1465, %v1673
    %1675 = vmatmul.f32.gmra.mxu0 %v113
    %v1676 = vpop.f32.mrf.mxu0
    %v1677 = vadd.f32 %v1468, %v1676
    %1678 = vmatmul.f32.gmra.mxu0 %v115
    %v1679 = vpop.f32.mrf.mxu0
    %v1680 = vadd.f32 %v1471, %v1679
    %1681 = vmatmul.f32.gmra.mxu0 %v116
    %v1682 = vpop.f32.mrf.mxu0
    %v1683 = vadd.f32 %v1474, %v1682
    %1684 = vmatmul.f32.gmra.mxu0 %v118
    %v1685 = vpop.f32.mrf.mxu0
    %v1686 = vadd.f32 %v1477, %v1685
    %1687 = vmatmul.f32.gmra.mxu0 %v119
    %v1688 = vpop.f32.mrf.mxu0
    %v1689 = vadd.f32 %v1480, %v1688
    %1690 = vmatmul.f32.gmra.mxu0 %v121
    %v1691 = vpop.f32.mrf.mxu0
    %v1692 = vadd.f32 %v1483, %v1691
    %1693 = vmatmul.f32.gmra.mxu0 %v122
    %v1694 = vpop.f32.mrf.mxu0
    %v1695 = vadd.f32 %v1486, %v1694
    %1696 = vmatmul.f32.gmra.mxu0 %v124
    %v1697 = vpop.f32.mrf.mxu0
    %v1698 = vadd.f32 %v1489, %v1697
    %1699 = vmatmul.f32.gmra.mxu0 %v125
    %v1700 = vpop.f32.mrf.mxu0
    %v1701 = vadd.f32 %v1492, %v1700
    %1702 = vmatmul.f32.gmra.mxu0 %v127
    %v1703 = vpop.f32.mrf.mxu0
    %v1704 = vadd.f32 %v1495, %v1703
    %1705 = vmatmul.f32.gmra.mxu0 %v128
    %v1706 = vpop.f32.mrf.mxu0
    %v1707 = vadd.f32 %v1498, %v1706
    %1708 = vmatmul.f32.gmra.mxu0 %v130
    %v1709 = vpop.f32.mrf.mxu0
    %v1710 = vadd.f32 %v1501, %v1709
    %1711 = vmatmul.f32.gmra.mxu0 %v131
    %v1712 = vpop.f32.mrf.mxu0
    %v1713 = vadd.f32 %v1504, %v1712
    %1714 = vmatmul.f32.gmra.mxu0 %v133
    %v1715 = vpop.f32.mrf.mxu0
    %v1716 = vadd.f32 %v1507, %v1715
    %1717 = vmatmul.f32.gmra.mxu0 %v134
    %v1718 = vpop.f32.mrf.mxu0
    %v1719 = vadd.f32 %v1510, %v1718
    %1720 = vmatmul.f32.gmra.mxu0 %v136
    %v1721 = vpop.f32.mrf.mxu0
    %v1722 = vadd.f32 %v1513, %v1721
    %1723 = vmatmul.f32.gmra.mxu0 %v137
    %v1724 = vpop.f32.mrf.mxu0
    %v1725 = vadd.f32 %v1516, %v1724
    %1726 = vmatmul.f32.gmra.mxu0 %v139
    %v1727 = vpop.f32.mrf.mxu0
    %v1728 = vadd.f32 %v1519, %v1727
    %1729 = vmatmul.f32.gmra.mxu0 %v140
    %v1730 = vpop.f32.mrf.mxu0
    %v1731 = vadd.f32 %v1522, %v1730
    %1732 = vmatmul.f32.gmra.mxu0 %v142
    %v1733 = vpop.f32.mrf.mxu0
    %v1734 = vadd.f32 %v1525, %v1733
    %1735 = vmatmul.f32.gmra.mxu0 %v143
    %v1736 = vpop.f32.mrf.mxu0
    %v1737 = vadd.f32 %v1528, %v1736
    %1738 = vmatmul.f32.gmra.mxu0 %v145
    %v1739 = vpop.f32.mrf.mxu0
    %v1740 = vadd.f32 %v1531, %v1739
    %1741 = vmatmul.f32.gmra.mxu0 %v146
    %v1742 = vpop.f32.mrf.mxu0
    %v1743 = vadd.f32 %v1534, %v1742
    %1744 = vdwg.mxu0
    %1745 = vmatpush.msra.mxu0 %v844
    %1746 = vmatpush.msra.mxu0 %v843
    %1747 = vmatpush.msra.mxu0 %v842
    %1748 = vmatpush.msra.mxu0 %v841
    %1749 = vmatpush.msra.mxu0 %v840
    %1750 = vmatpush.msra.mxu0 %v839
    %1751 = vmatpush.msra.mxu0 %v838
    %1752 = vmatpush.msra.mxu0 %v837
    %1753 = vmatpush.msra.mxu0 %v836
    %1754 = vmatpush.msra.mxu0 %v835
    %1755 = vmatpush.msra.mxu0 %v834
    %1756 = vmatpush.msra.mxu0 %v833
    %1757 = vmatpush.msra.mxu0 %v832
    %1758 = vmatpush.msra.mxu0 %v831
    %1759 = vmatpush.msra.mxu0 %v830
    %1760 = vmatpush.msra.mxu0 %v829
    %1761 = vmatmul.f32.gmra.mxu0 %v255
    %v1762 = vpop.f32.mrf.mxu0
    %v1763 = vadd.f32 %v1554, %v1762
    %1764 = vmatmul.f32.gmra.mxu0 %v257
    %v1765 = vpop.f32.mrf.mxu0
    %v1766 = vadd.f32 %v1557, %v1765
    %1767 = vmatmul.f32.gmra.mxu0 %v260
    %v1768 = vpop.f32.mrf.mxu0
    %v1769 = vadd.f32 %v1560, %v1768
    %1770 = vmatmul.f32.gmra.mxu0 %v262
    %v1771 = vpop.f32.mrf.mxu0
    %v1772 = vadd.f32 %v1563, %v1771
    %1773 = vmatmul.f32.gmra.mxu0 %v265
    %v1774 = vpop.f32.mrf.mxu0
    %v1775 = vadd.f32 %v1566, %v1774
    %1776 = vmatmul.f32.gmra.mxu0 %v267
    %v1777 = vpop.f32.mrf.mxu0
    %v1778 = vadd.f32 %v1569, %v1777
    %1779 = vmatmul.f32.gmra.mxu0 %v270
    %v1780 = vpop.f32.mrf.mxu0
    %v1781 = vadd.f32 %v1572, %v1780
    %1782 = vmatmul.f32.gmra.mxu0 %v272
    %v1783 = vpop.f32.mrf.mxu0
    %v1784 = vadd.f32 %v1575, %v1783
    %1785 = vmatmul.f32.gmra.mxu0 %v275
    %v1786 = vpop.f32.mrf.mxu0
    %v1787 = vadd.f32 %v1578, %v1786
    %1788 = vmatmul.f32.gmra.mxu0 %v277
    %v1789 = vpop.f32.mrf.mxu0
    %v1790 = vadd.f32 %v1581, %v1789
    %1791 = vmatmul.f32.gmra.mxu0 %v280
    %v1792 = vpop.f32.mrf.mxu0
    %v1793 = vadd.f32 %v1584, %v1792
    %1794 = vmatmul.f32.gmra.mxu0 %v282
    %v1795 = vpop.f32.mrf.mxu0
    %v1796 = vadd.f32 %v1587, %v1795
    %1797 = vmatmul.f32.gmra.mxu0 %v285
    %v1798 = vpop.f32.mrf.mxu0
    %v1799 = vadd.f32 %v1590, %v1798
    %1800 = vmatmul.f32.gmra.mxu0 %v287
    %v1801 = vpop.f32.mrf.mxu0
    %v1802 = vadd.f32 %v1593, %v1801
    %1803 = vmatmul.f32.gmra.mxu0 %v290
    %v1804 = vpop.f32.mrf.mxu0
    %v1805 = vadd.f32 %v1596, %v1804
    %1806 = vmatmul.f32.gmra.mxu0 %v292
    %v1807 = vpop.f32.mrf.mxu0
    %v1808 = vadd.f32 %v1599, %v1807
    %1809 = vmatmul.f32.gmra.mxu0 %v295
    %v1810 = vpop.f32.mrf.mxu0
    %v1811 = vadd.f32 %v1602, %v1810
    %1812 = vmatmul.f32.gmra.mxu0 %v297
    %v1813 = vpop.f32.mrf.mxu0
    %v1814 = vadd.f32 %v1605, %v1813
    %1815 = vmatmul.f32.gmra.mxu0 %v300
    %v1816 = vpop.f32.mrf.mxu0
    %v1817 = vadd.f32 %v1608, %v1816
    %1818 = vmatmul.f32.gmra.mxu0 %v302
    %v1819 = vpop.f32.mrf.mxu0
    %v1820 = vadd.f32 %v1611, %v1819
    %1821 = vmatmul.f32.gmra.mxu0 %v305
    %v1822 = vpop.f32.mrf.mxu0
    %v1823 = vadd.f32 %v1614, %v1822
    %1824 = vmatmul.f32.gmra.mxu0 %v307
    %v1825 = vpop.f32.mrf.mxu0
    %v1826 = vadd.f32 %v1617, %v1825
    %1827 = vmatmul.f32.gmra.mxu0 %v310
    %v1828 = vpop.f32.mrf.mxu0
    %v1829 = vadd.f32 %v1620, %v1828
    %1830 = vmatmul.f32.gmra.mxu0 %v312
    %v1831 = vpop.f32.mrf.mxu0
    %v1832 = vadd.f32 %v1623, %v1831
    %1833 = vmatmul.f32.gmra.mxu0 %v315
    %v1834 = vpop.f32.mrf.mxu0
    %v1835 = vadd.f32 %v1626, %v1834
    %1836 = vmatmul.f32.gmra.mxu0 %v317
    %v1837 = vpop.f32.mrf.mxu0
    %v1838 = vadd.f32 %v1629, %v1837
    %1839 = vmatmul.f32.gmra.mxu0 %v320
    %v1840 = vpop.f32.mrf.mxu0
    %v1841 = vadd.f32 %v1632, %v1840
    %1842 = vmatmul.f32.gmra.mxu0 %v322
    %v1843 = vpop.f32.mrf.mxu0
    %v1844 = vadd.f32 %v1635, %v1843
    %1845 = vmatmul.f32.gmra.mxu0 %v325
    %v1846 = vpop.f32.mrf.mxu0
    %v1847 = vadd.f32 %v1638, %v1846
    %1848 = vmatmul.f32.gmra.mxu0 %v327
    %v1849 = vpop.f32.mrf.mxu0
    %v1850 = vadd.f32 %v1641, %v1849
    %1851 = vmatmul.f32.gmra.mxu0 %v705
    %v1852 = vpop.f32.mrf.mxu0
    %v1853 = vadd.f32 %v1644, %v1852
    %1854 = vmatmul.f32.gmra.mxu0 %v707
    %v1855 = vpop.f32.mrf.mxu0
    %v1856 = vadd.f32 %v1647, %v1855
    %1857 = vmatmul.f32.gmra.mxu0 %v335
    %v1858 = vpop.f32.mrf.mxu0
    %v1859 = vadd.f32 %v1650, %v1858
    %1860 = vmatmul.f32.gmra.mxu0 %v337
    %v1861 = vpop.f32.mrf.mxu0
    %v1862 = vadd.f32 %v1653, %v1861
    %1863 = vmatmul.f32.gmra.mxu0 %v340
    %v1864 = vpop.f32.mrf.mxu0
    %v1865 = vadd.f32 %v1656, %v1864
    %1866 = vmatmul.f32.gmra.mxu0 %v342
    %v1867 = vpop.f32.mrf.mxu0
    %v1868 = vadd.f32 %v1659, %v1867
    %1869 = vmatmul.f32.gmra.mxu0 %v345
    %v1870 = vpop.f32.mrf.mxu0
    %v1871 = vadd.f32 %v1662, %v1870
    %1872 = vmatmul.f32.gmra.mxu0 %v347
    %v1873 = vpop.f32.mrf.mxu0
    %v1874 = vadd.f32 %v1665, %v1873
    %1875 = vmatmul.f32.gmra.mxu0 %v350
    %v1876 = vpop.f32.mrf.mxu0
    %v1877 = vadd.f32 %v1668, %v1876
    %1878 = vmatmul.f32.gmra.mxu0 %v352
    %v1879 = vpop.f32.mrf.mxu0
    %v1880 = vadd.f32 %v1671, %v1879
    %1881 = vmatmul.f32.gmra.mxu0 %v355
    %v1882 = vpop.f32.mrf.mxu0
    %v1883 = vadd.f32 %v1674, %v1882
    %1884 = vmatmul.f32.gmra.mxu0 %v357
    %v1885 = vpop.f32.mrf.mxu0
    %v1886 = vadd.f32 %v1677, %v1885
    %1887 = vmatmul.f32.gmra.mxu0 %v360
    %v1888 = vpop.f32.mrf.mxu0
    %v1889 = vadd.f32 %v1680, %v1888
    %1890 = vmatmul.f32.gmra.mxu0 %v362
    %v1891 = vpop.f32.mrf.mxu0
    %v1892 = vadd.f32 %v1683, %v1891
    %1893 = vmatmul.f32.gmra.mxu0 %v365
    %v1894 = vpop.f32.mrf.mxu0
    %v1895 = vadd.f32 %v1686, %v1894
    %1896 = vmatmul.f32.gmra.mxu0 %v367
    %v1897 = vpop.f32.mrf.mxu0
    %v1898 = vadd.f32 %v1689, %v1897
    %1899 = vmatmul.f32.gmra.mxu0 %v370
    %v1900 = vpop.f32.mrf.mxu0
    %v1901 = vadd.f32 %v1692, %v1900
    %1902 = vmatmul.f32.gmra.mxu0 %v372
    %v1903 = vpop.f32.mrf.mxu0
    %v1904 = vadd.f32 %v1695, %v1903
    %1905 = vmatmul.f32.gmra.mxu0 %v375
    %v1906 = vpop.f32.mrf.mxu0
    %v1907 = vadd.f32 %v1698, %v1906
    %1908 = vmatmul.f32.gmra.mxu0 %v377
    %v1909 = vpop.f32.mrf.mxu0
    %v1910 = vadd.f32 %v1701, %v1909
    %1911 = vmatmul.f32.gmra.mxu0 %v380
    %v1912 = vpop.f32.mrf.mxu0
    %v1913 = vadd.f32 %v1704, %v1912
    %1914 = vmatmul.f32.gmra.mxu0 %v382
    %v1915 = vpop.f32.mrf.mxu0
    %v1916 = vadd.f32 %v1707, %v1915
    %1917 = vmatmul.f32.gmra.mxu0 %v385
    %v1918 = vpop.f32.mrf.mxu0
    %v1919 = vadd.f32 %v1710, %v1918
    %1920 = vmatmul.f32.gmra.mxu0 %v387
    %v1921 = vpop.f32.mrf.mxu0
    %v1922 = vadd.f32 %v1713, %v1921
    %1923 = vmatmul.f32.gmra.mxu0 %v390
    %v1924 = vpop.f32.mrf.mxu0
    %v1925 = vadd.f32 %v1716, %v1924
    %1926 = vmatmul.f32.gmra.mxu0 %v392
    %v1927 = vpop.f32.mrf.mxu0
    %v1928 = vadd.f32 %v1719, %v1927
    %1929 = vmatmul.f32.gmra.mxu0 %v395
    %v1930 = vpop.f32.mrf.mxu0
    %v1931 = vadd.f32 %v1722, %v1930
    %1932 = vmatmul.f32.gmra.mxu0 %v397
    %v1933 = vpop.f32.mrf.mxu0
    %v1934 = vadd.f32 %v1725, %v1933
    %1935 = vmatmul.f32.gmra.mxu0 %v400
    %v1936 = vpop.f32.mrf.mxu0
    %v1937 = vadd.f32 %v1728, %v1936
    %1938 = vmatmul.f32.gmra.mxu0 %v402
    %v1939 = vpop.f32.mrf.mxu0
    %v1940 = vadd.f32 %v1731, %v1939
    %1941 = vmatmul.f32.gmra.mxu0 %v405
    %v1942 = vpop.f32.mrf.mxu0
    %v1943 = vadd.f32 %v1734, %v1942
    %1944 = vmatmul.f32.gmra.mxu0 %v407
    %v1945 = vpop.f32.mrf.mxu0
    %v1946 = vadd.f32 %v1737, %v1945
    %1947 = vmatmul.f32.gmra.mxu0 %v710
    %v1948 = vpop.f32.mrf.mxu0
    %v1949 = vadd.f32 %v1740, %v1948
    %1950 = vmatmul.f32.gmra.mxu0 %v712
    %v1951 = vpop.f32.mrf.mxu0
    %v1952 = vadd.f32 %v1743, %v1951
    %1953 = vdwg.mxu0
    %1954 = vmatpush.msra.mxu0 %v860
    %1955 = vmatpush.msra.mxu0 %v859
    %1956 = vmatpush.msra.mxu0 %v858
    %1957 = vmatpush.msra.mxu0 %v857
    %1958 = vmatpush.msra.mxu0 %v856
    %1959 = vmatpush.msra.mxu0 %v855
    %1960 = vmatpush.msra.mxu0 %v854
    %1961 = vmatpush.msra.mxu0 %v853
    %1962 = vmatpush.msra.mxu0 %v852
    %1963 = vmatpush.msra.mxu0 %v851
    %1964 = vmatpush.msra.mxu0 %v850
    %1965 = vmatpush.msra.mxu0 %v849
    %1966 = vmatpush.msra.mxu0 %v848
    %1967 = vmatpush.msra.mxu0 %v847
    %1968 = vmatpush.msra.mxu0 %v846
    %1969 = vmatpush.msra.mxu0 %v845
    %1970 = vmatmul.f32.gmra.mxu0 %v480
    %v1971 = vpop.f32.mrf.mxu0
    %v1972 = vadd.f32 %v1763, %v1971
    %1973 = vmatmul.f32.gmra.mxu0 %v482
    %v1974 = vpop.f32.mrf.mxu0
    %v1975 = vadd.f32 %v1766, %v1974
    %1976 = vmatmul.f32.gmra.mxu0 %v485
    %v1977 = vpop.f32.mrf.mxu0
    %v1978 = vadd.f32 %v1769, %v1977
    %1979 = vmatmul.f32.gmra.mxu0 %v487
    %v1980 = vpop.f32.mrf.mxu0
    %v1981 = vadd.f32 %v1772, %v1980
    %1982 = vmatmul.f32.gmra.mxu0 %v490
    %v1983 = vpop.f32.mrf.mxu0
    %v1984 = vadd.f32 %v1775, %v1983
    %1985 = vmatmul.f32.gmra.mxu0 %v492
    %v1986 = vpop.f32.mrf.mxu0
    %v1987 = vadd.f32 %v1778, %v1986
    %1988 = vmatmul.f32.gmra.mxu0 %v495
    %v1989 = vpop.f32.mrf.mxu0
    %v1990 = vadd.f32 %v1781, %v1989
    %1991 = vmatmul.f32.gmra.mxu0 %v497
    %v1992 = vpop.f32.mrf.mxu0
    %v1993 = vadd.f32 %v1784, %v1992
    %1994 = vmatmul.f32.gmra.mxu0 %v500
    %v1995 = vpop.f32.mrf.mxu0
    %v1996 = vadd.f32 %v1787, %v1995
    %1997 = vmatmul.f32.gmra.mxu0 %v502
    %v1998 = vpop.f32.mrf.mxu0
    %v1999 = vadd.f32 %v1790, %v1998
    %2000 = vmatmul.f32.gmra.mxu0 %v505
    %v2001 = vpop.f32.mrf.mxu0
    %v2002 = vadd.f32 %v1793, %v2001
    %2003 = vmatmul.f32.gmra.mxu0 %v507
    %v2004 = vpop.f32.mrf.mxu0
    %v2005 = vadd.f32 %v1796, %v2004
    %2006 = vmatmul.f32.gmra.mxu0 %v510
    %v2007 = vpop.f32.mrf.mxu0
    %v2008 = vadd.f32 %v1799, %v2007
    %2009 = vmatmul.f32.gmra.mxu0 %v512
    %v2010 = vpop.f32.mrf.mxu0
    %v2011 = vadd.f32 %v1802, %v2010
    %2012 = vmatmul.f32.gmra.mxu0 %v515
    %v2013 = vpop.f32.mrf.mxu0
    %v2014 = vadd.f32 %v1805, %v2013
    %2015 = vmatmul.f32.gmra.mxu0 %v517
    %v2016 = vpop.f32.mrf.mxu0
    %v2017 = vadd.f32 %v1808, %v2016
    %2018 = vmatmul.f32.gmra.mxu0 %v520
    %v2019 = vpop.f32.mrf.mxu0
    %v2020 = vadd.f32 %v1811, %v2019
    %2021 = vmatmul.f32.gmra.mxu0 %v522
    %v2022 = vpop.f32.mrf.mxu0
    %v2023 = vadd.f32 %v1814, %v2022
    %2024 = vmatmul.f32.gmra.mxu0 %v525
    %v2025 = vpop.f32.mrf.mxu0
    %v2026 = vadd.f32 %v1817, %v2025
    %2027 = vmatmul.f32.gmra.mxu0 %v527
    %v2028 = vpop.f32.mrf.mxu0
    %v2029 = vadd.f32 %v1820, %v2028
    %2030 = vmatmul.f32.gmra.mxu0 %v530
    %v2031 = vpop.f32.mrf.mxu0
    %v2032 = vadd.f32 %v1823, %v2031
    %2033 = vmatmul.f32.gmra.mxu0 %v532
    %v2034 = vpop.f32.mrf.mxu0
    %v2035 = vadd.f32 %v1826, %v2034
    %2036 = vmatmul.f32.gmra.mxu0 %v535
    %v2037 = vpop.f32.mrf.mxu0
    %v2038 = vadd.f32 %v1829, %v2037
    %2039 = vmatmul.f32.gmra.mxu0 %v537
    %v2040 = vpop.f32.mrf.mxu0
    %v2041 = vadd.f32 %v1832, %v2040
    %2042 = vmatmul.f32.gmra.mxu0 %v540
    %v2043 = vpop.f32.mrf.mxu0
    %v2044 = vadd.f32 %v1835, %v2043
    %2045 = vmatmul.f32.gmra.mxu0 %v542
    %v2046 = vpop.f32.mrf.mxu0
    %v2047 = vadd.f32 %v1838, %v2046
    %2048 = vmatmul.f32.gmra.mxu0 %v545
    %v2049 = vpop.f32.mrf.mxu0
    %v2050 = vadd.f32 %v1841, %v2049
    %2051 = vmatmul.f32.gmra.mxu0 %v547
    %v2052 = vpop.f32.mrf.mxu0
    %v2053 = vadd.f32 %v1844, %v2052
    %2054 = vmatmul.f32.gmra.mxu0 %v550
    %v2055 = vpop.f32.mrf.mxu0
    %v2056 = vadd.f32 %v1847, %v2055
    %2057 = vmatmul.f32.gmra.mxu0 %v552
    %v2058 = vpop.f32.mrf.mxu0
    %v2059 = vadd.f32 %v1850, %v2058
    %2060 = vmatmul.f32.gmra.mxu0 %v719
    %v2061 = vpop.f32.mrf.mxu0
    %v2062 = vadd.f32 %v1853, %v2061
    %2063 = vmatmul.f32.gmra.mxu0 %v721
    %v2064 = vpop.f32.mrf.mxu0
    %v2065 = vadd.f32 %v1856, %v2064
    %2066 = vmatmul.f32.gmra.mxu0 %v560
    %v2067 = vpop.f32.mrf.mxu0
    %v2068 = vadd.f32 %v1859, %v2067
    %2069 = vmatmul.f32.gmra.mxu0 %v562
    %v2070 = vpop.f32.mrf.mxu0
    %v2071 = vadd.f32 %v1862, %v2070
    %2072 = vmatmul.f32.gmra.mxu0 %v565
    %v2073 = vpop.f32.mrf.mxu0
    %v2074 = vadd.f32 %v1865, %v2073
    %2075 = vmatmul.f32.gmra.mxu0 %v567
    %v2076 = vpop.f32.mrf.mxu0
    %v2077 = vadd.f32 %v1868, %v2076
    %2078 = vmatmul.f32.gmra.mxu0 %v570
    %v2079 = vpop.f32.mrf.mxu0
    %v2080 = vadd.f32 %v1871, %v2079
    %2081 = vmatmul.f32.gmra.mxu0 %v572
    %v2082 = vpop.f32.mrf.mxu0
    %v2083 = vadd.f32 %v1874, %v2082
    %2084 = vmatmul.f32.gmra.mxu0 %v575
    %v2085 = vpop.f32.mrf.mxu0
    %v2086 = vadd.f32 %v1877, %v2085
    %2087 = vmatmul.f32.gmra.mxu0 %v577
    %v2088 = vpop.f32.mrf.mxu0
    %v2089 = vadd.f32 %v1880, %v2088
    %2090 = vmatmul.f32.gmra.mxu0 %v580
    %v2091 = vpop.f32.mrf.mxu0
    %v2092 = vadd.f32 %v1883, %v2091
    %2093 = vmatmul.f32.gmra.mxu0 %v582
    %v2094 = vpop.f32.mrf.mxu0
    %v2095 = vadd.f32 %v1886, %v2094
    %2096 = vmatmul.f32.gmra.mxu0 %v585
    %v2097 = vpop.f32.mrf.mxu0
    %v2098 = vadd.f32 %v1889, %v2097
    %2099 = vmatmul.f32.gmra.mxu0 %v587
    %v2100 = vpop.f32.mrf.mxu0
    %v2101 = vadd.f32 %v1892, %v2100
    %2102 = vmatmul.f32.gmra.mxu0 %v590
    %v2103 = vpop.f32.mrf.mxu0
    %v2104 = vadd.f32 %v1895, %v2103
    %2105 = vmatmul.f32.gmra.mxu0 %v592
    %v2106 = vpop.f32.mrf.mxu0
    %v2107 = vadd.f32 %v1898, %v2106
    %2108 = vmatmul.f32.gmra.mxu0 %v595
    %v2109 = vpop.f32.mrf.mxu0
    %v2110 = vadd.f32 %v1901, %v2109
    %2111 = vmatmul.f32.gmra.mxu0 %v597
    %v2112 = vpop.f32.mrf.mxu0
    %v2113 = vadd.f32 %v1904, %v2112
    %2114 = vmatmul.f32.gmra.mxu0 %v600
    %v2115 = vpop.f32.mrf.mxu0
    %v2116 = vadd.f32 %v1907, %v2115
    %2117 = vmatmul.f32.gmra.mxu0 %v602
    %v2118 = vpop.f32.mrf.mxu0
    %v2119 = vadd.f32 %v1910, %v2118
    %2120 = vmatmul.f32.gmra.mxu0 %v605
    %v2121 = vpop.f32.mrf.mxu0
    %v2122 = vadd.f32 %v1913, %v2121
    %2123 = vmatmul.f32.gmra.mxu0 %v607
    %v2124 = vpop.f32.mrf.mxu0
    %v2125 = vadd.f32 %v1916, %v2124
    %2126 = vmatmul.f32.gmra.mxu0 %v610
    %v2127 = vpop.f32.mrf.mxu0
    %v2128 = vadd.f32 %v1919, %v2127
    %2129 = vmatmul.f32.gmra.mxu0 %v612
    %v2130 = vpop.f32.mrf.mxu0
    %v2131 = vadd.f32 %v1922, %v2130
    %2132 = vmatmul.f32.gmra.mxu0 %v615
    %v2133 = vpop.f32.mrf.mxu0
    %v2134 = vadd.f32 %v1925, %v2133
    %2135 = vmatmul.f32.gmra.mxu0 %v617
    %v2136 = vpop.f32.mrf.mxu0
    %v2137 = vadd.f32 %v1928, %v2136
    %2138 = vmatmul.f32.gmra.mxu0 %v620
    %v2139 = vpop.f32.mrf.mxu0
    %v2140 = vadd.f32 %v1931, %v2139
    %2141 = vmatmul.f32.gmra.mxu0 %v622
    %v2142 = vpop.f32.mrf.mxu0
    %v2143 = vadd.f32 %v1934, %v2142
    %2144 = vmatmul.f32.gmra.mxu0 %v625
    %v2145 = vpop.f32.mrf.mxu0
    %v2146 = vadd.f32 %v1937, %v2145
    %2147 = vmatmul.f32.gmra.mxu0 %v627
    %v2148 = vpop.f32.mrf.mxu0
    %v2149 = vadd.f32 %v1940, %v2148
    %2150 = vmatmul.f32.gmra.mxu0 %v630
    %v2151 = vpop.f32.mrf.mxu0
    %v2152 = vadd.f32 %v1943, %v2151
    %2153 = vmatmul.f32.gmra.mxu0 %v632
    %v2154 = vpop.f32.mrf.mxu0
    %v2155 = vadd.f32 %v1946, %v2154
    %2156 = vmatmul.f32.gmra.mxu0 %v724
    %v2157 = vpop.f32.mrf.mxu0
    %v2158 = vadd.f32 %v1949, %v2157
    %2159 = vmatmul.f32.gmra.mxu0 %v726
    %v2160 = vpop.f32.mrf.mxu0
    %v2161 = vadd.f32 %v1952, %v2160
    %2162 = vdwg.mxu0
    %2163 = vmatpush.msra.mxu0 %v876
    %2164 = vmatpush.msra.mxu0 %v875
    %2165 = vmatpush.msra.mxu0 %v874
    %2166 = vmatpush.msra.mxu0 %v873
    %2167 = vmatpush.msra.mxu0 %v872
    %2168 = vmatpush.msra.mxu0 %v871
    %2169 = vmatpush.msra.mxu0 %v870
    %2170 = vmatpush.msra.mxu0 %v869
    %2171 = vmatpush.msra.mxu0 %v868
    %2172 = vmatpush.msra.mxu0 %v867
    %2173 = vmatpush.msra.mxu0 %v866
    %2174 = vmatpush.msra.mxu0 %v865
    %2175 = vmatpush.msra.mxu0 %v864
    %2176 = vmatpush.msra.mxu0 %v863
    %2177 = vmatpush.msra.mxu0 %v862
    %2178 = vmatpush.msra.mxu0 %v861
    %2179 = vmatmul.f32.gmra.mxu0 %v49
    %v2180 = vpop.f32.mrf.mxu0
    %v2181 = vadd.f32 %v1972, %v2180
    %2182 = vmatmul.f32.gmra.mxu0 %v50
    %v2183 = vpop.f32.mrf.mxu0
    %v2184 = vadd.f32 %v1975, %v2183
    %2185 = vmatmul.f32.gmra.mxu0 %v52
    %v2186 = vpop.f32.mrf.mxu0
    %v2187 = vadd.f32 %v1978, %v2186
    %2188 = vmatmul.f32.gmra.mxu0 %v53
    %v2189 = vpop.f32.mrf.mxu0
    %v2190 = vadd.f32 %v1981, %v2189
    %2191 = vmatmul.f32.gmra.mxu0 %v55
    %v2192 = vpop.f32.mrf.mxu0
    %v2193 = vadd.f32 %v1984, %v2192
    %2194 = vmatmul.f32.gmra.mxu0 %v56
    %v2195 = vpop.f32.mrf.mxu0
    %v2196 = vadd.f32 %v1987, %v2195
    %2197 = vmatmul.f32.gmra.mxu0 %v58
    %v2198 = vpop.f32.mrf.mxu0
    %v2199 = vadd.f32 %v1990, %v2198
    %2200 = vmatmul.f32.gmra.mxu0 %v59
    %v2201 = vpop.f32.mrf.mxu0
    %v2202 = vadd.f32 %v1993, %v2201
    %2203 = vmatmul.f32.gmra.mxu0 %v61
    %v2204 = vpop.f32.mrf.mxu0
    %v2205 = vadd.f32 %v1996, %v2204
    %2206 = vmatmul.f32.gmra.mxu0 %v62
    %v2207 = vpop.f32.mrf.mxu0
    %v2208 = vadd.f32 %v1999, %v2207
    %2209 = vmatmul.f32.gmra.mxu0 %v64
    %v2210 = vpop.f32.mrf.mxu0
    %v2211 = vadd.f32 %v2002, %v2210
    %2212 = vmatmul.f32.gmra.mxu0 %v65
    %v2213 = vpop.f32.mrf.mxu0
    %v2214 = vadd.f32 %v2005, %v2213
    %2215 = vmatmul.f32.gmra.mxu0 %v67
    %v2216 = vpop.f32.mrf.mxu0
    %v2217 = vadd.f32 %v2008, %v2216
    %2218 = vmatmul.f32.gmra.mxu0 %v68
    %v2219 = vpop.f32.mrf.mxu0
    %v2220 = vadd.f32 %v2011, %v2219
    %2221 = vmatmul.f32.gmra.mxu0 %v70
    %v2222 = vpop.f32.mrf.mxu0
    %v2223 = vadd.f32 %v2014, %v2222
    %2224 = vmatmul.f32.gmra.mxu0 %v71
    %v2225 = vpop.f32.mrf.mxu0
    %v2226 = vadd.f32 %v2017, %v2225
    %2227 = vmatmul.f32.gmra.mxu0 %v73
    %v2228 = vpop.f32.mrf.mxu0
    %v2229 = vadd.f32 %v2020, %v2228
    %2230 = vmatmul.f32.gmra.mxu0 %v74
    %v2231 = vpop.f32.mrf.mxu0
    %v2232 = vadd.f32 %v2023, %v2231
    %2233 = vmatmul.f32.gmra.mxu0 %v76
    %v2234 = vpop.f32.mrf.mxu0
    %v2235 = vadd.f32 %v2026, %v2234
    %2236 = vmatmul.f32.gmra.mxu0 %v77
    %v2237 = vpop.f32.mrf.mxu0
    %v2238 = vadd.f32 %v2029, %v2237
    %2239 = vmatmul.f32.gmra.mxu0 %v79
    %v2240 = vpop.f32.mrf.mxu0
    %v2241 = vadd.f32 %v2032, %v2240
    %2242 = vmatmul.f32.gmra.mxu0 %v80
    %v2243 = vpop.f32.mrf.mxu0
    %v2244 = vadd.f32 %v2035, %v2243
    %2245 = vmatmul.f32.gmra.mxu0 %v82
    %v2246 = vpop.f32.mrf.mxu0
    %v2247 = vadd.f32 %v2038, %v2246
    %2248 = vmatmul.f32.gmra.mxu0 %v83
    %v2249 = vpop.f32.mrf.mxu0
    %v2250 = vadd.f32 %v2041, %v2249
    %2251 = vmatmul.f32.gmra.mxu0 %v85
    %v2252 = vpop.f32.mrf.mxu0
    %v2253 = vadd.f32 %v2044, %v2252
    %2254 = vmatmul.f32.gmra.mxu0 %v86
    %v2255 = vpop.f32.mrf.mxu0
    %v2256 = vadd.f32 %v2047, %v2255
    %2257 = vmatmul.f32.gmra.mxu0 %v88
    %v2258 = vpop.f32.mrf.mxu0
    %v2259 = vadd.f32 %v2050, %v2258
    %2260 = vmatmul.f32.gmra.mxu0 %v89
    %v2261 = vpop.f32.mrf.mxu0
    %v2262 = vadd.f32 %v2053, %v2261
    %2263 = vmatmul.f32.gmra.mxu0 %v91
    %v2264 = vpop.f32.mrf.mxu0
    %v2265 = vadd.f32 %v2056, %v2264
    %2266 = vmatmul.f32.gmra.mxu0 %v92
    %v2267 = vpop.f32.mrf.mxu0
    %v2268 = vadd.f32 %v2059, %v2267
    %2269 = vmatmul.f32.gmra.mxu0 %v94
    %v2270 = vpop.f32.mrf.mxu0
    %v2271 = vadd.f32 %v2062, %v2270
    %2272 = vmatmul.f32.gmra.mxu0 %v95
    %v2273 = vpop.f32.mrf.mxu0
    %v2274 = vadd.f32 %v2065, %v2273
    %2275 = vmatmul.f32.gmra.mxu0 %v103
    %v2276 = vpop.f32.mrf.mxu0
    %v2277 = vadd.f32 %v2068, %v2276
    %2278 = vmatmul.f32.gmra.mxu0 %v104
    %v2279 = vpop.f32.mrf.mxu0
    %v2280 = vadd.f32 %v2071, %v2279
    %2281 = vmatmul.f32.gmra.mxu0 %v106
    %v2282 = vpop.f32.mrf.mxu0
    %v2283 = vadd.f32 %v2074, %v2282
    %2284 = vmatmul.f32.gmra.mxu0 %v107
    %v2285 = vpop.f32.mrf.mxu0
    %v2286 = vadd.f32 %v2077, %v2285
    %2287 = vmatmul.f32.gmra.mxu0 %v109
    %v2288 = vpop.f32.mrf.mxu0
    %v2289 = vadd.f32 %v2080, %v2288
    %2290 = vmatmul.f32.gmra.mxu0 %v110
    %v2291 = vpop.f32.mrf.mxu0
    %v2292 = vadd.f32 %v2083, %v2291
    %2293 = vmatmul.f32.gmra.mxu0 %v112
    %v2294 = vpop.f32.mrf.mxu0
    %v2295 = vadd.f32 %v2086, %v2294
    %2296 = vmatmul.f32.gmra.mxu0 %v113
    %v2297 = vpop.f32.mrf.mxu0
    %v2298 = vadd.f32 %v2089, %v2297
    %2299 = vmatmul.f32.gmra.mxu0 %v115
    %v2300 = vpop.f32.mrf.mxu0
    %v2301 = vadd.f32 %v2092, %v2300
    %2302 = vmatmul.f32.gmra.mxu0 %v116
    %v2303 = vpop.f32.mrf.mxu0
    %v2304 = vadd.f32 %v2095, %v2303
    %2305 = vmatmul.f32.gmra.mxu0 %v118
    %v2306 = vpop.f32.mrf.mxu0
    %v2307 = vadd.f32 %v2098, %v2306
    %2308 = vmatmul.f32.gmra.mxu0 %v119
    %v2309 = vpop.f32.mrf.mxu0
    %v2310 = vadd.f32 %v2101, %v2309
    %2311 = vmatmul.f32.gmra.mxu0 %v121
    %v2312 = vpop.f32.mrf.mxu0
    %v2313 = vadd.f32 %v2104, %v2312
    %2314 = vmatmul.f32.gmra.mxu0 %v122
    %v2315 = vpop.f32.mrf.mxu0
    %v2316 = vadd.f32 %v2107, %v2315
    %2317 = vmatmul.f32.gmra.mxu0 %v124
    %v2318 = vpop.f32.mrf.mxu0
    %v2319 = vadd.f32 %v2110, %v2318
    %2320 = vmatmul.f32.gmra.mxu0 %v125
    %v2321 = vpop.f32.mrf.mxu0
    %v2322 = vadd.f32 %v2113, %v2321
    %2323 = vmatmul.f32.gmra.mxu0 %v127
    %v2324 = vpop.f32.mrf.mxu0
    %v2325 = vadd.f32 %v2116, %v2324
    %2326 = vmatmul.f32.gmra.mxu0 %v128
    %v2327 = vpop.f32.mrf.mxu0
    %v2328 = vadd.f32 %v2119, %v2327
    %2329 = vmatmul.f32.gmra.mxu0 %v130
    %v2330 = vpop.f32.mrf.mxu0
    %v2331 = vadd.f32 %v2122, %v2330
    %2332 = vmatmul.f32.gmra.mxu0 %v131
    %v2333 = vpop.f32.mrf.mxu0
    %v2334 = vadd.f32 %v2125, %v2333
    %2335 = vmatmul.f32.gmra.mxu0 %v133
    %v2336 = vpop.f32.mrf.mxu0
    %v2337 = vadd.f32 %v2128, %v2336
    %2338 = vmatmul.f32.gmra.mxu0 %v134
    %v2339 = vpop.f32.mrf.mxu0
    %v2340 = vadd.f32 %v2131, %v2339
    %2341 = vmatmul.f32.gmra.mxu0 %v136
    %v2342 = vpop.f32.mrf.mxu0
    %v2343 = vadd.f32 %v2134, %v2342
    %2344 = vmatmul.f32.gmra.mxu0 %v137
    %v2345 = vpop.f32.mrf.mxu0
    %v2346 = vadd.f32 %v2137, %v2345
    %2347 = vmatmul.f32.gmra.mxu0 %v139
    %v2348 = vpop.f32.mrf.mxu0
    %v2349 = vadd.f32 %v2140, %v2348
    %2350 = vmatmul.f32.gmra.mxu0 %v140
    %v2351 = vpop.f32.mrf.mxu0
    %v2352 = vadd.f32 %v2143, %v2351
    %2353 = vmatmul.f32.gmra.mxu0 %v142
    %v2354 = vpop.f32.mrf.mxu0
    %v2355 = vadd.f32 %v2146, %v2354
    %2356 = vmatmul.f32.gmra.mxu0 %v143
    %v2357 = vpop.f32.mrf.mxu0
    %v2358 = vadd.f32 %v2149, %v2357
    %2359 = vmatmul.f32.gmra.mxu0 %v145
    %v2360 = vpop.f32.mrf.mxu0
    %v2361 = vadd.f32 %v2152, %v2360
    %2362 = vmatmul.f32.gmra.mxu0 %v146
    %v2363 = vpop.f32.mrf.mxu0
    %v2364 = vadd.f32 %v2155, %v2363
    %2365 = vmatmul.f32.gmra.mxu0 %v148
    %v2366 = vpop.f32.mrf.mxu0
    %v2367 = vadd.f32 %v2158, %v2366
    %2368 = vmatmul.f32.gmra.mxu0 %v149
    %v2369 = vpop.f32.mrf.mxu0
    %v2370 = vadd.f32 %v2161, %v2369
    %2371 = vdwg.mxu0
    %2372 = vmatpush.msra.mxu0 %v892
    %2373 = vmatpush.msra.mxu0 %v891
    %2374 = vmatpush.msra.mxu0 %v890
    %2375 = vmatpush.msra.mxu0 %v889
    %2376 = vmatpush.msra.mxu0 %v888
    %2377 = vmatpush.msra.mxu0 %v887
    %2378 = vmatpush.msra.mxu0 %v886
    %2379 = vmatpush.msra.mxu0 %v885
    %2380 = vmatpush.msra.mxu0 %v884
    %2381 = vmatpush.msra.mxu0 %v883
    %2382 = vmatpush.msra.mxu0 %v882
    %2383 = vmatpush.msra.mxu0 %v881
    %2384 = vmatpush.msra.mxu0 %v880
    %2385 = vmatpush.msra.mxu0 %v879
    %2386 = vmatpush.msra.mxu0 %v878
    %2387 = vmatpush.msra.mxu0 %v877
    %2388 = vmatmul.f32.gmra.mxu0 %v260
    %v2389 = vpop.f32.mrf.mxu0
    %v2390 = vadd.f32 %v2181, %v2389
    %2391 = vmatmul.f32.gmra.mxu0 %v262
    %v2392 = vpop.f32.mrf.mxu0
    %v2393 = vadd.f32 %v2184, %v2392
    %2394 = vmatmul.f32.gmra.mxu0 %v265
    %v2395 = vpop.f32.mrf.mxu0
    %v2396 = vadd.f32 %v2187, %v2395
    %2397 = vmatmul.f32.gmra.mxu0 %v267
    %v2398 = vpop.f32.mrf.mxu0
    %v2399 = vadd.f32 %v2190, %v2398
    %2400 = vmatmul.f32.gmra.mxu0 %v270
    %v2401 = vpop.f32.mrf.mxu0
    %v2402 = vadd.f32 %v2193, %v2401
    %2403 = vmatmul.f32.gmra.mxu0 %v272
    %v2404 = vpop.f32.mrf.mxu0
    %v2405 = vadd.f32 %v2196, %v2404
    %2406 = vmatmul.f32.gmra.mxu0 %v275
    %v2407 = vpop.f32.mrf.mxu0
    %v2408 = vadd.f32 %v2199, %v2407
    %2409 = vmatmul.f32.gmra.mxu0 %v277
    %v2410 = vpop.f32.mrf.mxu0
    %v2411 = vadd.f32 %v2202, %v2410
    %2412 = vmatmul.f32.gmra.mxu0 %v280
    %v2413 = vpop.f32.mrf.mxu0
    %v2414 = vadd.f32 %v2205, %v2413
    %2415 = vmatmul.f32.gmra.mxu0 %v282
    %v2416 = vpop.f32.mrf.mxu0
    %v2417 = vadd.f32 %v2208, %v2416
    %2418 = vmatmul.f32.gmra.mxu0 %v285
    %v2419 = vpop.f32.mrf.mxu0
    %v2420 = vadd.f32 %v2211, %v2419
    %2421 = vmatmul.f32.gmra.mxu0 %v287
    %v2422 = vpop.f32.mrf.mxu0
    %v2423 = vadd.f32 %v2214, %v2422
    %2424 = vmatmul.f32.gmra.mxu0 %v290
    %v2425 = vpop.f32.mrf.mxu0
    %v2426 = vadd.f32 %v2217, %v2425
    %2427 = vmatmul.f32.gmra.mxu0 %v292
    %v2428 = vpop.f32.mrf.mxu0
    %v2429 = vadd.f32 %v2220, %v2428
    %2430 = vmatmul.f32.gmra.mxu0 %v295
    %v2431 = vpop.f32.mrf.mxu0
    %v2432 = vadd.f32 %v2223, %v2431
    %2433 = vmatmul.f32.gmra.mxu0 %v297
    %v2434 = vpop.f32.mrf.mxu0
    %v2435 = vadd.f32 %v2226, %v2434
    %2436 = vmatmul.f32.gmra.mxu0 %v300
    %v2437 = vpop.f32.mrf.mxu0
    %v2438 = vadd.f32 %v2229, %v2437
    %2439 = vmatmul.f32.gmra.mxu0 %v302
    %v2440 = vpop.f32.mrf.mxu0
    %v2441 = vadd.f32 %v2232, %v2440
    %2442 = vmatmul.f32.gmra.mxu0 %v305
    %v2443 = vpop.f32.mrf.mxu0
    %v2444 = vadd.f32 %v2235, %v2443
    %2445 = vmatmul.f32.gmra.mxu0 %v307
    %v2446 = vpop.f32.mrf.mxu0
    %v2447 = vadd.f32 %v2238, %v2446
    %2448 = vmatmul.f32.gmra.mxu0 %v310
    %v2449 = vpop.f32.mrf.mxu0
    %v2450 = vadd.f32 %v2241, %v2449
    %2451 = vmatmul.f32.gmra.mxu0 %v312
    %v2452 = vpop.f32.mrf.mxu0
    %v2453 = vadd.f32 %v2244, %v2452
    %2454 = vmatmul.f32.gmra.mxu0 %v315
    %v2455 = vpop.f32.mrf.mxu0
    %v2456 = vadd.f32 %v2247, %v2455
    %2457 = vmatmul.f32.gmra.mxu0 %v317
    %v2458 = vpop.f32.mrf.mxu0
    %v2459 = vadd.f32 %v2250, %v2458
    %2460 = vmatmul.f32.gmra.mxu0 %v320
    %v2461 = vpop.f32.mrf.mxu0
    %v2462 = vadd.f32 %v2253, %v2461
    %2463 = vmatmul.f32.gmra.mxu0 %v322
    %v2464 = vpop.f32.mrf.mxu0
    %v2465 = vadd.f32 %v2256, %v2464
    %2466 = vmatmul.f32.gmra.mxu0 %v325
    %v2467 = vpop.f32.mrf.mxu0
    %v2468 = vadd.f32 %v2259, %v2467
    %2469 = vmatmul.f32.gmra.mxu0 %v327
    %v2470 = vpop.f32.mrf.mxu0
    %v2471 = vadd.f32 %v2262, %v2470
    %2472 = vmatmul.f32.gmra.mxu0 %v705
    %v2473 = vpop.f32.mrf.mxu0
    %v2474 = vadd.f32 %v2265, %v2473
    %2475 = vmatmul.f32.gmra.mxu0 %v707
    %v2476 = vpop.f32.mrf.mxu0
    %v2477 = vadd.f32 %v2268, %v2476
    %2478 = vmatmul.f32.gmra.mxu0 %v739
    %v2479 = vpop.f32.mrf.mxu0
    %v2480 = vadd.f32 %v2271, %v2479
    %2481 = vmatmul.f32.gmra.mxu0 %v741
    %v2482 = vpop.f32.mrf.mxu0
    %v2483 = vadd.f32 %v2274, %v2482
    %2484 = vmatmul.f32.gmra.mxu0 %v340
    %v2485 = vpop.f32.mrf.mxu0
    %v2486 = vadd.f32 %v2277, %v2485
    %2487 = vmatmul.f32.gmra.mxu0 %v342
    %v2488 = vpop.f32.mrf.mxu0
    %v2489 = vadd.f32 %v2280, %v2488
    %2490 = vmatmul.f32.gmra.mxu0 %v345
    %v2491 = vpop.f32.mrf.mxu0
    %v2492 = vadd.f32 %v2283, %v2491
    %2493 = vmatmul.f32.gmra.mxu0 %v347
    %v2494 = vpop.f32.mrf.mxu0
    %v2495 = vadd.f32 %v2286, %v2494
    %2496 = vmatmul.f32.gmra.mxu0 %v350
    %v2497 = vpop.f32.mrf.mxu0
    %v2498 = vadd.f32 %v2289, %v2497
    %2499 = vmatmul.f32.gmra.mxu0 %v352
    %v2500 = vpop.f32.mrf.mxu0
    %v2501 = vadd.f32 %v2292, %v2500
    %2502 = vmatmul.f32.gmra.mxu0 %v355
    %v2503 = vpop.f32.mrf.mxu0
    %v2504 = vadd.f32 %v2295, %v2503
    %2505 = vmatmul.f32.gmra.mxu0 %v357
    %v2506 = vpop.f32.mrf.mxu0
    %v2507 = vadd.f32 %v2298, %v2506
    %2508 = vmatmul.f32.gmra.mxu0 %v360
    %v2509 = vpop.f32.mrf.mxu0
    %v2510 = vadd.f32 %v2301, %v2509
    %2511 = vmatmul.f32.gmra.mxu0 %v362
    %v2512 = vpop.f32.mrf.mxu0
    %v2513 = vadd.f32 %v2304, %v2512
    %2514 = vmatmul.f32.gmra.mxu0 %v365
    %v2515 = vpop.f32.mrf.mxu0
    %v2516 = vadd.f32 %v2307, %v2515
    %2517 = vmatmul.f32.gmra.mxu0 %v367
    %v2518 = vpop.f32.mrf.mxu0
    %v2519 = vadd.f32 %v2310, %v2518
    %2520 = vmatmul.f32.gmra.mxu0 %v370
    %v2521 = vpop.f32.mrf.mxu0
    %v2522 = vadd.f32 %v2313, %v2521
    %2523 = vmatmul.f32.gmra.mxu0 %v372
    %v2524 = vpop.f32.mrf.mxu0
    %v2525 = vadd.f32 %v2316, %v2524
    %2526 = vmatmul.f32.gmra.mxu0 %v375
    %v2527 = vpop.f32.mrf.mxu0
    %v2528 = vadd.f32 %v2319, %v2527
    %2529 = vmatmul.f32.gmra.mxu0 %v377
    %v2530 = vpop.f32.mrf.mxu0
    %v2531 = vadd.f32 %v2322, %v2530
    %2532 = vmatmul.f32.gmra.mxu0 %v380
    %v2533 = vpop.f32.mrf.mxu0
    %v2534 = vadd.f32 %v2325, %v2533
    %2535 = vmatmul.f32.gmra.mxu0 %v382
    %v2536 = vpop.f32.mrf.mxu0
    %v2537 = vadd.f32 %v2328, %v2536
    %2538 = vmatmul.f32.gmra.mxu0 %v385
    %v2539 = vpop.f32.mrf.mxu0
    %v2540 = vadd.f32 %v2331, %v2539
    %2541 = vmatmul.f32.gmra.mxu0 %v387
    %v2542 = vpop.f32.mrf.mxu0
    %v2543 = vadd.f32 %v2334, %v2542
    %2544 = vmatmul.f32.gmra.mxu0 %v390
    %v2545 = vpop.f32.mrf.mxu0
    %v2546 = vadd.f32 %v2337, %v2545
    %2547 = vmatmul.f32.gmra.mxu0 %v392
    %v2548 = vpop.f32.mrf.mxu0
    %v2549 = vadd.f32 %v2340, %v2548
    %2550 = vmatmul.f32.gmra.mxu0 %v395
    %v2551 = vpop.f32.mrf.mxu0
    %v2552 = vadd.f32 %v2343, %v2551
    %2553 = vmatmul.f32.gmra.mxu0 %v397
    %v2554 = vpop.f32.mrf.mxu0
    %v2555 = vadd.f32 %v2346, %v2554
    %2556 = vmatmul.f32.gmra.mxu0 %v400
    %v2557 = vpop.f32.mrf.mxu0
    %v2558 = vadd.f32 %v2349, %v2557
    %2559 = vmatmul.f32.gmra.mxu0 %v402
    %v2560 = vpop.f32.mrf.mxu0
    %v2561 = vadd.f32 %v2352, %v2560
    %2562 = vmatmul.f32.gmra.mxu0 %v405
    %v2563 = vpop.f32.mrf.mxu0
    %v2564 = vadd.f32 %v2355, %v2563
    %2565 = vmatmul.f32.gmra.mxu0 %v407
    %v2566 = vpop.f32.mrf.mxu0
    %v2567 = vadd.f32 %v2358, %v2566
    %2568 = vmatmul.f32.gmra.mxu0 %v710
    %v2569 = vpop.f32.mrf.mxu0
    %v2570 = vadd.f32 %v2361, %v2569
    %2571 = vmatmul.f32.gmra.mxu0 %v712
    %v2572 = vpop.f32.mrf.mxu0
    %v2573 = vadd.f32 %v2364, %v2572
    %2574 = vmatmul.f32.gmra.mxu0 %v744
    %v2575 = vpop.f32.mrf.mxu0
    %v2576 = vadd.f32 %v2367, %v2575
    %2577 = vmatmul.f32.gmra.mxu0 %v746
    %v2578 = vpop.f32.mrf.mxu0
    %v2579 = vadd.f32 %v2370, %v2578
    %2580 = vdwg.mxu0
    %2581 = vmatpush.msra.mxu0 %v908
    %2582 = vmatpush.msra.mxu0 %v907
    %2583 = vmatpush.msra.mxu0 %v906
    %2584 = vmatpush.msra.mxu0 %v905
    %2585 = vmatpush.msra.mxu0 %v904
    %2586 = vmatpush.msra.mxu0 %v903
    %2587 = vmatpush.msra.mxu0 %v902
    %2588 = vmatpush.msra.mxu0 %v901
    %2589 = vmatpush.msra.mxu0 %v900
    %2590 = vmatpush.msra.mxu0 %v899
    %2591 = vmatpush.msra.mxu0 %v898
    %2592 = vmatpush.msra.mxu0 %v897
    %2593 = vmatpush.msra.mxu0 %v896
    %2594 = vmatpush.msra.mxu0 %v895
    %2595 = vmatpush.msra.mxu0 %v894
    %2596 = vmatpush.msra.mxu0 %v893
    %2597 = vmatmul.f32.gmra.mxu0 %v485
    %v2598 = vpop.f32.mrf.mxu0
    %v2599 = vadd.f32 %v2390, %v2598
    %2600 = vmatmul.f32.gmra.mxu0 %v487
    %v2601 = vpop.f32.mrf.mxu0
    %v2602 = vadd.f32 %v2393, %v2601
    %2603 = vmatmul.f32.gmra.mxu0 %v490
    %v2604 = vpop.f32.mrf.mxu0
    %v2605 = vadd.f32 %v2396, %v2604
    %2606 = vmatmul.f32.gmra.mxu0 %v492
    %v2607 = vpop.f32.mrf.mxu0
    %v2608 = vadd.f32 %v2399, %v2607
    %2609 = vmatmul.f32.gmra.mxu0 %v495
    %v2610 = vpop.f32.mrf.mxu0
    %v2611 = vadd.f32 %v2402, %v2610
    %2612 = vmatmul.f32.gmra.mxu0 %v497
    %v2613 = vpop.f32.mrf.mxu0
    %v2614 = vadd.f32 %v2405, %v2613
    %2615 = vmatmul.f32.gmra.mxu0 %v500
    %v2616 = vpop.f32.mrf.mxu0
    %v2617 = vadd.f32 %v2408, %v2616
    %2618 = vmatmul.f32.gmra.mxu0 %v502
    %v2619 = vpop.f32.mrf.mxu0
    %v2620 = vadd.f32 %v2411, %v2619
    %2621 = vmatmul.f32.gmra.mxu0 %v505
    %v2622 = vpop.f32.mrf.mxu0
    %v2623 = vadd.f32 %v2414, %v2622
    %2624 = vmatmul.f32.gmra.mxu0 %v507
    %v2625 = vpop.f32.mrf.mxu0
    %v2626 = vadd.f32 %v2417, %v2625
    %2627 = vmatmul.f32.gmra.mxu0 %v510
    %v2628 = vpop.f32.mrf.mxu0
    %v2629 = vadd.f32 %v2420, %v2628
    %2630 = vmatmul.f32.gmra.mxu0 %v512
    %v2631 = vpop.f32.mrf.mxu0
    %v2632 = vadd.f32 %v2423, %v2631
    %2633 = vmatmul.f32.gmra.mxu0 %v515
    %v2634 = vpop.f32.mrf.mxu0
    %v2635 = vadd.f32 %v2426, %v2634
    %2636 = vmatmul.f32.gmra.mxu0 %v517
    %v2637 = vpop.f32.mrf.mxu0
    %v2638 = vadd.f32 %v2429, %v2637
    %2639 = vmatmul.f32.gmra.mxu0 %v520
    %v2640 = vpop.f32.mrf.mxu0
    %v2641 = vadd.f32 %v2432, %v2640
    %2642 = vmatmul.f32.gmra.mxu0 %v522
    %v2643 = vpop.f32.mrf.mxu0
    %v2644 = vadd.f32 %v2435, %v2643
    %2645 = vmatmul.f32.gmra.mxu0 %v525
    %v2646 = vpop.f32.mrf.mxu0
    %v2647 = vadd.f32 %v2438, %v2646
    %2648 = vmatmul.f32.gmra.mxu0 %v527
    %v2649 = vpop.f32.mrf.mxu0
    %v2650 = vadd.f32 %v2441, %v2649
    %2651 = vmatmul.f32.gmra.mxu0 %v530
    %v2652 = vpop.f32.mrf.mxu0
    %v2653 = vadd.f32 %v2444, %v2652
    %2654 = vmatmul.f32.gmra.mxu0 %v532
    %v2655 = vpop.f32.mrf.mxu0
    %v2656 = vadd.f32 %v2447, %v2655
    %2657 = vmatmul.f32.gmra.mxu0 %v535
    %v2658 = vpop.f32.mrf.mxu0
    %v2659 = vadd.f32 %v2450, %v2658
    %2660 = vmatmul.f32.gmra.mxu0 %v537
    %v2661 = vpop.f32.mrf.mxu0
    %v2662 = vadd.f32 %v2453, %v2661
    %2663 = vmatmul.f32.gmra.mxu0 %v540
    %v2664 = vpop.f32.mrf.mxu0
    %v2665 = vadd.f32 %v2456, %v2664
    %2666 = vmatmul.f32.gmra.mxu0 %v542
    %v2667 = vpop.f32.mrf.mxu0
    %v2668 = vadd.f32 %v2459, %v2667
    %2669 = vmatmul.f32.gmra.mxu0 %v545
    %v2670 = vpop.f32.mrf.mxu0
    %v2671 = vadd.f32 %v2462, %v2670
    %2672 = vmatmul.f32.gmra.mxu0 %v547
    %v2673 = vpop.f32.mrf.mxu0
    %v2674 = vadd.f32 %v2465, %v2673
    %2675 = vmatmul.f32.gmra.mxu0 %v550
    %v2676 = vpop.f32.mrf.mxu0
    %v2677 = vadd.f32 %v2468, %v2676
    %2678 = vmatmul.f32.gmra.mxu0 %v552
    %v2679 = vpop.f32.mrf.mxu0
    %v2680 = vadd.f32 %v2471, %v2679
    %2681 = vmatmul.f32.gmra.mxu0 %v719
    %v2682 = vpop.f32.mrf.mxu0
    %v2683 = vadd.f32 %v2474, %v2682
    %2684 = vmatmul.f32.gmra.mxu0 %v721
    %v2685 = vpop.f32.mrf.mxu0
    %v2686 = vadd.f32 %v2477, %v2685
    %2687 = vmatmul.f32.gmra.mxu0 %v753
    %v2688 = vpop.f32.mrf.mxu0
    %v2689 = vadd.f32 %v2480, %v2688
    %2690 = vmatmul.f32.gmra.mxu0 %v755
    %v2691 = vpop.f32.mrf.mxu0
    %v2692 = vadd.f32 %v2483, %v2691
    %2693 = vmatmul.f32.gmra.mxu0 %v565
    %v2694 = vpop.f32.mrf.mxu0
    %v2695 = vadd.f32 %v2486, %v2694
    %2696 = vmatmul.f32.gmra.mxu0 %v567
    %v2697 = vpop.f32.mrf.mxu0
    %v2698 = vadd.f32 %v2489, %v2697
    %2699 = vmatmul.f32.gmra.mxu0 %v570
    %v2700 = vpop.f32.mrf.mxu0
    %v2701 = vadd.f32 %v2492, %v2700
    %2702 = vmatmul.f32.gmra.mxu0 %v572
    %v2703 = vpop.f32.mrf.mxu0
    %v2704 = vadd.f32 %v2495, %v2703
    %2705 = vmatmul.f32.gmra.mxu0 %v575
    %v2706 = vpop.f32.mrf.mxu0
    %v2707 = vadd.f32 %v2498, %v2706
    %2708 = vmatmul.f32.gmra.mxu0 %v577
    %v2709 = vpop.f32.mrf.mxu0
    %v2710 = vadd.f32 %v2501, %v2709
    %2711 = vmatmul.f32.gmra.mxu0 %v580
    %v2712 = vpop.f32.mrf.mxu0
    %v2713 = vadd.f32 %v2504, %v2712
    %2714 = vmatmul.f32.gmra.mxu0 %v582
    %v2715 = vpop.f32.mrf.mxu0
    %v2716 = vadd.f32 %v2507, %v2715
    %2717 = vmatmul.f32.gmra.mxu0 %v585
    %v2718 = vpop.f32.mrf.mxu0
    %v2719 = vadd.f32 %v2510, %v2718
    %2720 = vmatmul.f32.gmra.mxu0 %v587
    %v2721 = vpop.f32.mrf.mxu0
    %v2722 = vadd.f32 %v2513, %v2721
    %2723 = vmatmul.f32.gmra.mxu0 %v590
    %v2724 = vpop.f32.mrf.mxu0
    %v2725 = vadd.f32 %v2516, %v2724
    %2726 = vmatmul.f32.gmra.mxu0 %v592
    %v2727 = vpop.f32.mrf.mxu0
    %v2728 = vadd.f32 %v2519, %v2727
    %2729 = vmatmul.f32.gmra.mxu0 %v595
    %v2730 = vpop.f32.mrf.mxu0
    %v2731 = vadd.f32 %v2522, %v2730
    %2732 = vmatmul.f32.gmra.mxu0 %v597
    %v2733 = vpop.f32.mrf.mxu0
    %v2734 = vadd.f32 %v2525, %v2733
    %2735 = vmatmul.f32.gmra.mxu0 %v600
    %v2736 = vpop.f32.mrf.mxu0
    %v2737 = vadd.f32 %v2528, %v2736
    %2738 = vmatmul.f32.gmra.mxu0 %v602
    %v2739 = vpop.f32.mrf.mxu0
    %v2740 = vadd.f32 %v2531, %v2739
    %2741 = vmatmul.f32.gmra.mxu0 %v605
    %v2742 = vpop.f32.mrf.mxu0
    %v2743 = vadd.f32 %v2534, %v2742
    %2744 = vmatmul.f32.gmra.mxu0 %v607
    %v2745 = vpop.f32.mrf.mxu0
    %v2746 = vadd.f32 %v2537, %v2745
    %2747 = vmatmul.f32.gmra.mxu0 %v610
    %v2748 = vpop.f32.mrf.mxu0
    %v2749 = vadd.f32 %v2540, %v2748
    %2750 = vmatmul.f32.gmra.mxu0 %v612
    %v2751 = vpop.f32.mrf.mxu0
    %v2752 = vadd.f32 %v2543, %v2751
    %2753 = vmatmul.f32.gmra.mxu0 %v615
    %v2754 = vpop.f32.mrf.mxu0
    %v2755 = vadd.f32 %v2546, %v2754
    %2756 = vmatmul.f32.gmra.mxu0 %v617
    %v2757 = vpop.f32.mrf.mxu0
    %v2758 = vadd.f32 %v2549, %v2757
    %2759 = vmatmul.f32.gmra.mxu0 %v620
    %v2760 = vpop.f32.mrf.mxu0
    %v2761 = vadd.f32 %v2552, %v2760
    %2762 = vmatmul.f32.gmra.mxu0 %v622
    %v2763 = vpop.f32.mrf.mxu0
    %v2764 = vadd.f32 %v2555, %v2763
    %2765 = vmatmul.f32.gmra.mxu0 %v625
    %v2766 = vpop.f32.mrf.mxu0
    %v2767 = vadd.f32 %v2558, %v2766
    %2768 = vmatmul.f32.gmra.mxu0 %v627
    %v2769 = vpop.f32.mrf.mxu0
    %v2770 = vadd.f32 %v2561, %v2769
    %2771 = vmatmul.f32.gmra.mxu0 %v630
    %v2772 = vpop.f32.mrf.mxu0
    %v2773 = vadd.f32 %v2564, %v2772
    %2774 = vmatmul.f32.gmra.mxu0 %v632
    %v2775 = vpop.f32.mrf.mxu0
    %v2776 = vadd.f32 %v2567, %v2775
    %2777 = vmatmul.f32.gmra.mxu0 %v724
    %v2778 = vpop.f32.mrf.mxu0
    %v2779 = vadd.f32 %v2570, %v2778
    %2780 = vmatmul.f32.gmra.mxu0 %v726
    %v2781 = vpop.f32.mrf.mxu0
    %v2782 = vadd.f32 %v2573, %v2781
    %2783 = vmatmul.f32.gmra.mxu0 %v758
    %v2784 = vpop.f32.mrf.mxu0
    %v2785 = vadd.f32 %v2576, %v2784
    %2786 = vmatmul.f32.gmra.mxu0 %v760
    %v2787 = vpop.f32.mrf.mxu0
    %v2788 = vadd.f32 %v2579, %v2787
    %2789 = vdwg.mxu0
    %v2790 = vadd.f32 %v2599, %v2602
    %v2791 = vadd.f32 %v2790, %v2605
    %v2792 = vadd.f32 %v2791, %v2608
    %v2793 = vadd.f32 %v2792, %v2611
    %v2794 = vadd.f32 %v2793, %v2614
    %v2795 = vadd.f32 %v2794, %v2617
    %v2796 = vadd.f32 %v2795, %v2620
    %v2797 = vadd.f32 %v2796, %v2623
    %v2798 = vadd.f32 %v2797, %v2626
    %v2799 = vadd.f32 %v2798, %v2629
    %v2800 = vadd.f32 %v2799, %v2632
    %v2801 = vadd.f32 %v2800, %v2635
    %v2802 = vadd.f32 %v2801, %v2638
    %v2803 = vadd.f32 %v2802, %v2641
    %v2804 = vadd.f32 %v2803, %v2644
    %v2805 = vadd.f32 %v2804, %v2647
    %v2806 = vadd.f32 %v2805, %v2650
    %v2807 = vadd.f32 %v2806, %v2653
    %v2808 = vadd.f32 %v2807, %v2656
    %v2809 = vadd.f32 %v2808, %v2659
    %v2810 = vadd.f32 %v2809, %v2662
    %v2811 = vadd.f32 %v2810, %v2665
    %v2812 = vadd.f32 %v2811, %v2668
    %v2813 = vadd.f32 %v2812, %v2671
    %v2814 = vadd.f32 %v2813, %v2674
    %v2815 = vadd.f32 %v2814, %v2677
    %v2816 = vadd.f32 %v2815, %v2680
    %v2817 = vadd.f32 %v2816, %v2683
    %v2818 = vadd.f32 %v2817, %v2686
    %v2819 = vadd.f32 %v2818, %v2689
    %v2820 = vadd.f32 %v2819, %v2692
    %v2821 = vadd.f32 %v2820, %v2695
    %v2822 = vadd.f32 %v2821, %v2698
    %v2823 = vadd.f32 %v2822, %v2701
    %v2824 = vadd.f32 %v2823, %v2704
    %v2825 = vadd.f32 %v2824, %v2707
    %v2826 = vadd.f32 %v2825, %v2710
    %v2827 = vadd.f32 %v2826, %v2713
    %v2828 = vadd.f32 %v2827, %v2716
    %v2829 = vadd.f32 %v2828, %v2719
    %v2830 = vadd.f32 %v2829, %v2722
    %v2831 = vadd.f32 %v2830, %v2725
    %v2832 = vadd.f32 %v2831, %v2728
    %v2833 = vadd.f32 %v2832, %v2731
    %v2834 = vadd.f32 %v2833, %v2734
    %v2835 = vadd.f32 %v2834, %v2737
    %v2836 = vadd.f32 %v2835, %v2740
    %v2837 = vadd.f32 %v2836, %v2743
    %v2838 = vadd.f32 %v2837, %v2746
    %v2839 = vadd.f32 %v2838, %v2749
    %v2840 = vadd.f32 %v2839, %v2752
    %v2841 = vadd.f32 %v2840, %v2755
    %v2842 = vadd.f32 %v2841, %v2758
    %v2843 = vadd.f32 %v2842, %v2761
    %v2844 = vadd.f32 %v2843, %v2764
    %v2845 = vadd.f32 %v2844, %v2767
    %v2846 = vadd.f32 %v2845, %v2770
    %v2847 = vadd.f32 %v2846, %v2773
    %v2848 = vadd.f32 %v2847, %v2776
    %v2849 = vadd.f32 %v2848, %v2779
    %v2850 = vadd.f32 %v2849, %v2782
    %v2851 = vadd.f32 %v2850, %v2785
    %v2852 = vadd.f32 %v2851, %v2788
    %v2853 = vrot.slane %v2852, 4
    %v2854 = vadd.f32 %v2852, %v2853
    %v2855 = vrot.slane %v2854, 2
    %v2856 = vadd.f32 %v2854, %v2855
    %v2857 = vrot.slane %v2856, 1
    %v2858 = vadd.f32 %v2856, %v2857
    %v2859 = vmul.f32 %v2599, %v2599
    %v2860 = vmul.f32 %v2602, %v2602
    %v2861 = vmul.f32 %v2605, %v2605
    %v2862 = vmul.f32 %v2608, %v2608
    %v2863 = vmul.f32 %v2611, %v2611
    %v2864 = vmul.f32 %v2614, %v2614
    %v2865 = vmul.f32 %v2617, %v2617
    %v2866 = vmul.f32 %v2620, %v2620
    %v2867 = vmul.f32 %v2623, %v2623
    %v2868 = vmul.f32 %v2626, %v2626
    %v2869 = vmul.f32 %v2629, %v2629
    %v2870 = vmul.f32 %v2632, %v2632
    %v2871 = vmul.f32 %v2635, %v2635
    %v2872 = vmul.f32 %v2638, %v2638
    %v2873 = vmul.f32 %v2641, %v2641
    %v2874 = vmul.f32 %v2644, %v2644
    %v2875 = vmul.f32 %v2647, %v2647
    %v2876 = vmul.f32 %v2650, %v2650
    %v2877 = vmul.f32 %v2653, %v2653
    %v2878 = vmul.f32 %v2656, %v2656
    %v2879 = vmul.f32 %v2659, %v2659
    %v2880 = vmul.f32 %v2662, %v2662
    %v2881 = vmul.f32 %v2665, %v2665
    %v2882 = vmul.f32 %v2668, %v2668
    %v2883 = vmul.f32 %v2671, %v2671
    %v2884 = vmul.f32 %v2674, %v2674
    %v2885 = vmul.f32 %v2677, %v2677
    %v2886 = vmul.f32 %v2680, %v2680
    %v2887 = vmul.f32 %v2683, %v2683
    %v2888 = vmul.f32 %v2686, %v2686
    %v2889 = vmul.f32 %v2689, %v2689
    %v2890 = vmul.f32 %v2692, %v2692
    %v2891 = vmul.f32 %v2695, %v2695
    %v2892 = vmul.f32 %v2698, %v2698
    %v2893 = vmul.f32 %v2701, %v2701
    %v2894 = vmul.f32 %v2704, %v2704
    %v2895 = vmul.f32 %v2707, %v2707
    %v2896 = vmul.f32 %v2710, %v2710
    %v2897 = vmul.f32 %v2713, %v2713
    %v2898 = vmul.f32 %v2716, %v2716
    %v2899 = vmul.f32 %v2719, %v2719
    %v2900 = vmul.f32 %v2722, %v2722
    %v2901 = vmul.f32 %v2725, %v2725
    %v2902 = vmul.f32 %v2728, %v2728
    %v2903 = vmul.f32 %v2731, %v2731
    %v2904 = vmul.f32 %v2734, %v2734
    %v2905 = vmul.f32 %v2737, %v2737
    %v2906 = vmul.f32 %v2740, %v2740
    %v2907 = vmul.f32 %v2743, %v2743
    %v2908 = vmul.f32 %v2746, %v2746
    %v2909 = vmul.f32 %v2749, %v2749
    %v2910 = vmul.f32 %v2752, %v2752
    %v2911 = vmul.f32 %v2755, %v2755
    %v2912 = vmul.f32 %v2758, %v2758
    %v2913 = vmul.f32 %v2761, %v2761
    %v2914 = vmul.f32 %v2764, %v2764
    %v2915 = vmul.f32 %v2767, %v2767
    %v2916 = vmul.f32 %v2770, %v2770
    %v2917 = vmul.f32 %v2773, %v2773
    %v2918 = vmul.f32 %v2776, %v2776
    %v2919 = vmul.f32 %v2779, %v2779
    %v2920 = vmul.f32 %v2782, %v2782
    %v2921 = vmul.f32 %v2785, %v2785
    %v2922 = vmul.f32 %v2788, %v2788
    %v2923 = vadd.f32 %v2859, %v2860
    %v2924 = vadd.f32 %v2923, %v2861
    %v2925 = vadd.f32 %v2924, %v2862
    %v2926 = vadd.f32 %v2925, %v2863
    %v2927 = vadd.f32 %v2926, %v2864
    %v2928 = vadd.f32 %v2927, %v2865
    %v2929 = vadd.f32 %v2928, %v2866
    %v2930 = vadd.f32 %v2929, %v2867
    %v2931 = vadd.f32 %v2930, %v2868
    %v2932 = vadd.f32 %v2931, %v2869
    %v2933 = vadd.f32 %v2932, %v2870
    %v2934 = vadd.f32 %v2933, %v2871
    %v2935 = vadd.f32 %v2934, %v2872
    %v2936 = vadd.f32 %v2935, %v2873
    %v2937 = vadd.f32 %v2936, %v2874
    %v2938 = vadd.f32 %v2937, %v2875
    %v2939 = vadd.f32 %v2938, %v2876
    %v2940 = vadd.f32 %v2939, %v2877
    %v2941 = vadd.f32 %v2940, %v2878
    %v2942 = vadd.f32 %v2941, %v2879
    %v2943 = vadd.f32 %v2942, %v2880
    %v2944 = vadd.f32 %v2943, %v2881
    %v2945 = vadd.f32 %v2944, %v2882
    %v2946 = vadd.f32 %v2945, %v2883
    %v2947 = vadd.f32 %v2946, %v2884
    %v2948 = vadd.f32 %v2947, %v2885
    %v2949 = vadd.f32 %v2948, %v2886
    %v2950 = vadd.f32 %v2949, %v2887
    %v2951 = vadd.f32 %v2950, %v2888
    %v2952 = vadd.f32 %v2951, %v2889
    %v2953 = vadd.f32 %v2952, %v2890
    %v2954 = vadd.f32 %v2953, %v2891
    %v2955 = vadd.f32 %v2954, %v2892
    %v2956 = vadd.f32 %v2955, %v2893
    %v2957 = vadd.f32 %v2956, %v2894
    %v2958 = vadd.f32 %v2957, %v2895
    %v2959 = vadd.f32 %v2958, %v2896
    %v2960 = vadd.f32 %v2959, %v2897
    %v2961 = vadd.f32 %v2960, %v2898
    %v2962 = vadd.f32 %v2961, %v2899
    %v2963 = vadd.f32 %v2962, %v2900
    %v2964 = vadd.f32 %v2963, %v2901
    %v2965 = vadd.f32 %v2964, %v2902
    %v2966 = vadd.f32 %v2965, %v2903
    %v2967 = vadd.f32 %v2966, %v2904
    %v2968 = vadd.f32 %v2967, %v2905
    %v2969 = vadd.f32 %v2968, %v2906
    %v2970 = vadd.f32 %v2969, %v2907
    %v2971 = vadd.f32 %v2970, %v2908
    %v2972 = vadd.f32 %v2971, %v2909
    %v2973 = vadd.f32 %v2972, %v2910
    %v2974 = vadd.f32 %v2973, %v2911
    %v2975 = vadd.f32 %v2974, %v2912
    %v2976 = vadd.f32 %v2975, %v2913
    %v2977 = vadd.f32 %v2976, %v2914
    %v2978 = vadd.f32 %v2977, %v2915
    %v2979 = vadd.f32 %v2978, %v2916
    %v2980 = vadd.f32 %v2979, %v2917
    %v2981 = vadd.f32 %v2980, %v2918
    %v2982 = vadd.f32 %v2981, %v2919
    %v2983 = vadd.f32 %v2982, %v2920
    %v2984 = vadd.f32 %v2983, %v2921
    %v2985 = vadd.f32 %v2984, %v2922
    %v2986 = vrot.slane %v2985, 4
    %v2987 = vadd.f32 %v2985, %v2986
    %v2988 = vrot.slane %v2987, 2
    %v2989 = vadd.f32 %v2987, %v2988
    %v2990 = vrot.slane %v2989, 1
    %v2991 = vadd.f32 %v2989, %v2990
    %v2992 = vmul.f32 %v2858, 0.001953125
    %v2993 = vmul.f32 %v2991, 0.001953125
    %v2994 = vmul.f32 %v2992, %v2992
    %v2995 = vsub.f32 %v2993, %v2994
    %v2996 = vld [vmem:[%s2] sm:$0x1]
    %v2997 = vadd.f32 %v2995, 1e-05
    %v2998 = vrsqrt.pop %v2997
    %v2999 = vmul.f32 %v2998, %v2997
    %v3000 = vmul.f32 %v2999, %v2998
    %v3001 = vmul.f32 0.5, %v3000
    %v3002 = vsub.f32 1.5, %v3001
    %v3003 = vmul.f32 %v2998, %v3002
    %vm3004 = vweird.f32 %v2997
    %vm3005 = vweird.f32 %v2998
    %vm3006 = vmor %vm3004, %vm3005
    %v3007 = vsel %vm3006, %v2998, %v3003
    %v3008 = vmul.f32 %v2996, %v3007
    %v3009 = vld [vmem:[%s3] sm:$0x1]
    %v3010 = vmul.f32 %v2992, %v3008
    %v3011 = vsub.f32 %v3009, %v3010
    %v3013 = vperm.slane %v3008, 0
    %v3015 = vmul.f32 %v2599, %v3013
    %v3016 = vmul.f32 %v2602, %v3013
    %v3017 = vmul.f32 %v2605, %v3013
    %v3018 = vmul.f32 %v2608, %v3013
    %v3019 = vmul.f32 %v2611, %v3013
    %v3020 = vmul.f32 %v2614, %v3013
    %v3021 = vmul.f32 %v2617, %v3013
    %v3022 = vmul.f32 %v2620, %v3013
    %v3023 = vmul.f32 %v2623, %v3013
    %v3024 = vmul.f32 %v2626, %v3013
    %v3025 = vmul.f32 %v2629, %v3013
    %v3026 = vmul.f32 %v2632, %v3013
    %v3027 = vmul.f32 %v2635, %v3013
    %v3028 = vmul.f32 %v2638, %v3013
    %v3029 = vmul.f32 %v2641, %v3013
    %v3030 = vmul.f32 %v2644, %v3013
    %v3031 = vmul.f32 %v2647, %v3013
    %v3032 = vmul.f32 %v2650, %v3013
    %v3033 = vmul.f32 %v2653, %v3013
    %v3034 = vmul.f32 %v2656, %v3013
    %v3035 = vmul.f32 %v2659, %v3013
    %v3036 = vmul.f32 %v2662, %v3013
    %v3037 = vmul.f32 %v2665, %v3013
    %v3038 = vmul.f32 %v2668, %v3013
    %v3039 = vmul.f32 %v2671, %v3013
    %v3040 = vmul.f32 %v2674, %v3013
    %v3041 = vmul.f32 %v2677, %v3013
    %v3042 = vmul.f32 %v2680, %v3013
    %v3043 = vmul.f32 %v2683, %v3013
    %v3044 = vmul.f32 %v2686, %v3013
    %v3045 = vmul.f32 %v2689, %v3013
    %v3046 = vmul.f32 %v2692, %v3013
    %v3047 = vmul.f32 %v2695, %v3013
    %v3048 = vmul.f32 %v2698, %v3013
    %v3049 = vmul.f32 %v2701, %v3013
    %v3050 = vmul.f32 %v2704, %v3013
    %v3051 = vmul.f32 %v2707, %v3013
    %v3052 = vmul.f32 %v2710, %v3013
    %v3053 = vmul.f32 %v2713, %v3013
    %v3054 = vmul.f32 %v2716, %v3013
    %v3055 = vmul.f32 %v2719, %v3013
    %v3056 = vmul.f32 %v2722, %v3013
    %v3057 = vmul.f32 %v2725, %v3013
    %v3058 = vmul.f32 %v2728, %v3013
    %v3059 = vmul.f32 %v2731, %v3013
    %v3060 = vmul.f32 %v2734, %v3013
    %v3061 = vmul.f32 %v2737, %v3013
    %v3062 = vmul.f32 %v2740, %v3013
    %v3063 = vmul.f32 %v2743, %v3013
    %v3064 = vmul.f32 %v2746, %v3013
    %v3065 = vmul.f32 %v2749, %v3013
    %v3066 = vmul.f32 %v2752, %v3013
    %v3067 = vmul.f32 %v2755, %v3013
    %v3068 = vmul.f32 %v2758, %v3013
    %v3069 = vmul.f32 %v2761, %v3013
    %v3070 = vmul.f32 %v2764, %v3013
    %v3071 = vmul.f32 %v2767, %v3013
    %v3072 = vmul.f32 %v2770, %v3013
    %v3073 = vmul.f32 %v2773, %v3013
    %v3074 = vmul.f32 %v2776, %v3013
    %v3075 = vmul.f32 %v2779, %v3013
    %v3076 = vmul.f32 %v2782, %v3013
    %v3077 = vmul.f32 %v2785, %v3013
    %v3078 = vmul.f32 %v2788, %v3013
    %v3080 = vperm.slane %v3011, 0
    %v3082 = vadd.f32 %v3015, %v3080
    %v3083 = vadd.f32 %v3016, %v3080
    %v3084 = vadd.f32 %v3017, %v3080
    %v3085 = vadd.f32 %v3018, %v3080
    %v3086 = vadd.f32 %v3019, %v3080
    %v3087 = vadd.f32 %v3020, %v3080
    %v3088 = vadd.f32 %v3021, %v3080
    %v3089 = vadd.f32 %v3022, %v3080
    %v3090 = vadd.f32 %v3023, %v3080
    %v3091 = vadd.f32 %v3024, %v3080
    %v3092 = vadd.f32 %v3025, %v3080
    %v3093 = vadd.f32 %v3026, %v3080
    %v3094 = vadd.f32 %v3027, %v3080
    %v3095 = vadd.f32 %v3028, %v3080
    %v3096 = vadd.f32 %v3029, %v3080
    %v3097 = vadd.f32 %v3030, %v3080
    %v3098 = vadd.f32 %v3031, %v3080
    %v3099 = vadd.f32 %v3032, %v3080
    %v3100 = vadd.f32 %v3033, %v3080
    %v3101 = vadd.f32 %v3034, %v3080
    %v3102 = vadd.f32 %v3035, %v3080
    %v3103 = vadd.f32 %v3036, %v3080
    %v3104 = vadd.f32 %v3037, %v3080
    %v3105 = vadd.f32 %v3038, %v3080
    %v3106 = vadd.f32 %v3039, %v3080
    %v3107 = vadd.f32 %v3040, %v3080
    %v3108 = vadd.f32 %v3041, %v3080
    %v3109 = vadd.f32 %v3042, %v3080
    %v3110 = vadd.f32 %v3043, %v3080
    %v3111 = vadd.f32 %v3044, %v3080
    %v3112 = vadd.f32 %v3045, %v3080
    %v3113 = vadd.f32 %v3046, %v3080
    %v3114 = vadd.f32 %v3047, %v3080
    %v3115 = vadd.f32 %v3048, %v3080
    %v3116 = vadd.f32 %v3049, %v3080
    %v3117 = vadd.f32 %v3050, %v3080
    %v3118 = vadd.f32 %v3051, %v3080
    %v3119 = vadd.f32 %v3052, %v3080
    %v3120 = vadd.f32 %v3053, %v3080
    %v3121 = vadd.f32 %v3054, %v3080
    %v3122 = vadd.f32 %v3055, %v3080
    %v3123 = vadd.f32 %v3056, %v3080
    %v3124 = vadd.f32 %v3057, %v3080
    %v3125 = vadd.f32 %v3058, %v3080
    %v3126 = vadd.f32 %v3059, %v3080
    %v3127 = vadd.f32 %v3060, %v3080
    %v3128 = vadd.f32 %v3061, %v3080
    %v3129 = vadd.f32 %v3062, %v3080
    %v3130 = vadd.f32 %v3063, %v3080
    %v3131 = vadd.f32 %v3064, %v3080
    %v3132 = vadd.f32 %v3065, %v3080
    %v3133 = vadd.f32 %v3066, %v3080
    %v3134 = vadd.f32 %v3067, %v3080
    %v3135 = vadd.f32 %v3068, %v3080
    %v3136 = vadd.f32 %v3069, %v3080
    %v3137 = vadd.f32 %v3070, %v3080
    %v3138 = vadd.f32 %v3071, %v3080
    %v3139 = vadd.f32 %v3072, %v3080
    %v3140 = vadd.f32 %v3073, %v3080
    %v3141 = vadd.f32 %v3074, %v3080
    %v3142 = vadd.f32 %v3075, %v3080
    %v3143 = vadd.f32 %v3076, %v3080
    %v3144 = vadd.f32 %v3077, %v3080
    %v3145 = vadd.f32 %v3078, %v3080
    %v3146 = vmax.f32 %v3082, 0.0
    %v3147 = vmax.f32 %v3083, 0.0
    %v3148 = vmax.f32 %v3084, 0.0
    %v3149 = vmax.f32 %v3085, 0.0
    %v3150 = vmax.f32 %v3086, 0.0
    %v3151 = vmax.f32 %v3087, 0.0
    %v3152 = vmax.f32 %v3088, 0.0
    %v3153 = vmax.f32 %v3089, 0.0
    %v3154 = vmax.f32 %v3090, 0.0
    %v3155 = vmax.f32 %v3091, 0.0
    %v3156 = vmax.f32 %v3092, 0.0
    %v3157 = vmax.f32 %v3093, 0.0
    %v3158 = vmax.f32 %v3094, 0.0
    %v3159 = vmax.f32 %v3095, 0.0
    %v3160 = vmax.f32 %v3096, 0.0
    %v3161 = vmax.f32 %v3097, 0.0
    %v3162 = vmax.f32 %v3098, 0.0
    %v3163 = vmax.f32 %v3099, 0.0
    %v3164 = vmax.f32 %v3100, 0.0
    %v3165 = vmax.f32 %v3101, 0.0
    %v3166 = vmax.f32 %v3102, 0.0
    %v3167 = vmax.f32 %v3103, 0.0
    %v3168 = vmax.f32 %v3104, 0.0
    %v3169 = vmax.f32 %v3105, 0.0
    %v3170 = vmax.f32 %v3106, 0.0
    %v3171 = vmax.f32 %v3107, 0.0
    %v3172 = vmax.f32 %v3108, 0.0
    %v3173 = vmax.f32 %v3109, 0.0
    %v3174 = vmax.f32 %v3110, 0.0
    %v3175 = vmax.f32 %v3111, 0.0
    %v3176 = vmax.f32 %v3112, 0.0
    %v3177 = vmax.f32 %v3113, 0.0
    %v3178 = vmax.f32 %v3114, 0.0
    %v3179 = vmax.f32 %v3115, 0.0
    %v3180 = vmax.f32 %v3116, 0.0
    %v3181 = vmax.f32 %v3117, 0.0
    %v3182 = vmax.f32 %v3118, 0.0
    %v3183 = vmax.f32 %v3119, 0.0
    %v3184 = vmax.f32 %v3120, 0.0
    %v3185 = vmax.f32 %v3121, 0.0
    %v3186 = vmax.f32 %v3122, 0.0
    %v3187 = vmax.f32 %v3123, 0.0
    %v3188 = vmax.f32 %v3124, 0.0
    %v3189 = vmax.f32 %v3125, 0.0
    %v3190 = vmax.f32 %v3126, 0.0
    %v3191 = vmax.f32 %v3127, 0.0
    %v3192 = vmax.f32 %v3128, 0.0
    %v3193 = vmax.f32 %v3129, 0.0
    %v3194 = vmax.f32 %v3130, 0.0
    %v3195 = vmax.f32 %v3131, 0.0
    %v3196 = vmax.f32 %v3132, 0.0
    %v3197 = vmax.f32 %v3133, 0.0
    %v3198 = vmax.f32 %v3134, 0.0
    %v3199 = vmax.f32 %v3135, 0.0
    %v3200 = vmax.f32 %v3136, 0.0
    %v3201 = vmax.f32 %v3137, 0.0
    %v3202 = vmax.f32 %v3138, 0.0
    %v3203 = vmax.f32 %v3139, 0.0
    %v3204 = vmax.f32 %v3140, 0.0
    %v3205 = vmax.f32 %v3141, 0.0
    %v3206 = vmax.f32 %v3142, 0.0
    %v3207 = vmax.f32 %v3143, 0.0
    %v3208 = vmax.f32 %v3144, 0.0
    %v3209 = vmax.f32 %v3145, 0.0
    %3210 = vst [vmem:[#allocation2] sm:$0xff] 0.0
    %3211 = vst [vmem:[#allocation2 + $0x8] sm:$0xff] 0.0
    %3212 = vst [vmem:[#allocation2 + $0x10] sm:$0x3] 0.0
    %3213 = vst [vmem:[#allocation2 + $0x1b0] sm:$0xff] 0.0
    %3214 = vst [vmem:[#allocation2 + $0x1b8] sm:$0xff] 0.0
    %3215 = vst [vmem:[#allocation2 + $0x1c0] sm:$0x3] 0.0
    %s3216 = scalar_lea.vmem [#allocation2], 408
    %3217 = vst [vmem:[%s3216] sm:$0xff] 0.0
    %3218 = vst [vmem:[%s3216 + $0x8] sm:$0xff] 0.0
    %3219 = vst [vmem:[%s3216 + $0x10] sm:$0x3] 0.0
    %3220 = vst [vmem:[%s3216 + $0x1b0] sm:$0xff] 0.0
    %3221 = vst [vmem:[%s3216 + $0x1b8] sm:$0xff] 0.0
    %3222 = vst [vmem:[%s3216 + $0x1c0] sm:$0x3] 0.0
    %3223 = vst [vmem:[#allocation2] sm:$0x1] 0.0
    %3224 = vst [vmem:[#allocation2 + $0x18] sm:$0x1] 0.0
    %3225 = vst [vmem:[#allocation2 + $0x30] sm:$0x1] 0.0
    %3226 = vst [vmem:[#allocation2 + $0x48] sm:$0x1] 0.0
    %3227 = vst [vmem:[#allocation2 + $0x60] sm:$0x1] 0.0
    %3228 = vst [vmem:[#allocation2 + $0x78] sm:$0x1] 0.0
    %3229 = vst [vmem:[#allocation2 + $0x90] sm:$0x1] 0.0
    %3230 = vst [vmem:[#allocation2 + $0xa8] sm:$0x1] 0.0
    %3231 = vst [vmem:[#allocation2 + $0xc0] sm:$0x1] 0.0
    %3232 = vst [vmem:[#allocation2 + $0xd8] sm:$0x1] 0.0
    %3233 = vst [vmem:[#allocation2 + $0xf0] sm:$0x1] 0.0
    %3234 = vst [vmem:[#allocation2 + $0x108] sm:$0x1] 0.0
    %3235 = vst [vmem:[#allocation2 + $0x120] sm:$0x1] 0.0
    %3236 = vst [vmem:[#allocation2 + $0x138] sm:$0x1] 0.0
    %3237 = vst [vmem:[#allocation2 + $0x150] sm:$0x1] 0.0
    %3238 = vst [vmem:[#allocation2 + $0x168] sm:$0x1] 0.0
    %3239 = vst [vmem:[#allocation2 + $0x180] sm:$0x1] 0.0
    %3240 = vst [vmem:[#allocation2 + $0x198] sm:$0x1] 0.0
    %3241 = vst [vmem:[#allocation2 + $0x1b0] sm:$0x1] 0.0
    %3242 = vst [vmem:[#allocation2 + $0x1c8] sm:$0x1] 0.0
    %3243 = vst [vmem:[#allocation2 + $0x1e0] sm:$0x1] 0.0
    %3244 = vst [vmem:[#allocation2 + $0x1f8] sm:$0x1] 0.0
    %3245 = vst [vmem:[#allocation2 + $0x210] sm:$0x1] 0.0
    %3246 = vst [vmem:[#allocation2 + $0x228] sm:$0x1] 0.0
    %3247 = vst [vmem:[#allocation2 + $0x240] sm:$0x1] 0.0
    %3248 = vst [vmem:[#allocation2 + $0x258] sm:$0x1] 0.0
    %3249 = vst [vmem:[#allocation2 + $0x270] sm:$0x1] 0.0
    %3250 = vst [vmem:[#allocation2 + $0x288] sm:$0x1] 0.0
    %3251 = vst [vmem:[#allocation2 + $0x2a0] sm:$0x1] 0.0
    %3252 = vst [vmem:[#allocation2 + $0x2b8] sm:$0x1] 0.0
    %3253 = vst [vmem:[#allocation2 + $0x2d0] sm:$0x1] 0.0
    %3254 = vst [vmem:[#allocation2 + $0x2e8] sm:$0x1] 0.0
    %3255 = vst [vmem:[#allocation2 + $0x300] sm:$0x1] 0.0
    %3256 = vst [vmem:[#allocation2 + $0x318] sm:$0x1] 0.0
    %3257 = vst [vmem:[#allocation2 + $0x330] sm:$0x1] 0.0
    %3258 = vst [vmem:[#allocation2 + $0x348] sm:$0x1] 0.0
    %3259 = vst [vmem:[#allocation2 + $0x11] sm:$0x1] 0.0
    %3260 = vst [vmem:[#allocation2 + $0x29] sm:$0x1] 0.0
    %3261 = vst [vmem:[#allocation2 + $0x41] sm:$0x1] 0.0
    %3262 = vst [vmem:[#allocation2 + $0x59] sm:$0x1] 0.0
    %3263 = vst [vmem:[#allocation2 + $0x71] sm:$0x1] 0.0
    %3264 = vst [vmem:[#allocation2 + $0x89] sm:$0x1] 0.0
    %3265 = vst [vmem:[#allocation2 + $0xa1] sm:$0x1] 0.0
    %3266 = vst [vmem:[#allocation2 + $0xb9] sm:$0x1] 0.0
    %3267 = vst [vmem:[#allocation2 + $0xd1] sm:$0x1] 0.0
    %3268 = vst [vmem:[#allocation2 + $0xe9] sm:$0x1] 0.0
    %3269 = vst [vmem:[#allocation2 + $0x101] sm:$0x1] 0.0
    %3270 = vst [vmem:[#allocation2 + $0x119] sm:$0x1] 0.0
    %3271 = vst [vmem:[#allocation2 + $0x131] sm:$0x1] 0.0
    %3272 = vst [vmem:[#allocation2 + $0x149] sm:$0x1] 0.0
    %3273 = vst [vmem:[#allocation2 + $0x161] sm:$0x1] 0.0
    %3274 = vst [vmem:[#allocation2 + $0x179] sm:$0x1] 0.0
    %3275 = vst [vmem:[#allocation2 + $0x191] sm:$0x1] 0.0
    %3276 = vst [vmem:[#allocation2 + $0x1a9] sm:$0x1] 0.0
    %3277 = vst [vmem:[#allocation2 + $0x1c1] sm:$0x1] 0.0
    %3278 = vst [vmem:[#allocation2 + $0x1d9] sm:$0x1] 0.0
    %3279 = vst [vmem:[#allocation2 + $0x1f1] sm:$0x1] 0.0
    %3280 = vst [vmem:[#allocation2 + $0x209] sm:$0x1] 0.0
    %3281 = vst [vmem:[#allocation2 + $0x221] sm:$0x1] 0.0
    %3282 = vst [vmem:[#allocation2 + $0x239] sm:$0x1] 0.0
    %3283 = vst [vmem:[#allocation2 + $0x251] sm:$0x1] 0.0
    %3284 = vst [vmem:[#allocation2 + $0x269] sm:$0x1] 0.0
    %3285 = vst [vmem:[#allocation2 + $0x281] sm:$0x1] 0.0
    %3286 = vst [vmem:[#allocation2 + $0x299] sm:$0x1] 0.0
    %3287 = vst [vmem:[#allocation2 + $0x2b1] sm:$0x1] 0.0
    %3288 = vst [vmem:[#allocation2 + $0x2c9] sm:$0x1] 0.0
    %3289 = vst [vmem:[#allocation2 + $0x2e1] sm:$0x1] 0.0
    %3290 = vst [vmem:[#allocation2 + $0x2f9] sm:$0x1] 0.0
    %3291 = vst [vmem:[#allocation2 + $0x311] sm:$0x1] 0.0
    %3292 = vst [vmem:[#allocation2 + $0x329] sm:$0x1] 0.0
    %3293 = vst [vmem:[#allocation2 + $0x341] sm:$0x1] 0.0
    %3294 = vst [vmem:[#allocation2 + $0x359] sm:$0x1] 0.0
    %s3295 = scalar_lea.vmem [#allocation2], 24
    %3296 = vst [vmem:[%s3295 + $0x1] sm:$0xff] %v3146
    %3297 = vst [vmem:[%s3295 + $0x9] sm:$0xff] %v3147
    %3298 = vst [vmem:[%s3295 + $0x19] sm:$0xff] %v3148
    %3299 = vst [vmem:[%s3295 + $0x21] sm:$0xff] %v3149
    %3300 = vst [vmem:[%s3295 + $0x31] sm:$0xff] %v3150
    %3301 = vst [vmem:[%s3295 + $0x39] sm:$0xff] %v3151
    %3302 = vst [vmem:[%s3295 + $0x49] sm:$0xff] %v3152
    %3303 = vst [vmem:[%s3295 + $0x51] sm:$0xff] %v3153
    %3304 = vst [vmem:[%s3295 + $0x61] sm:$0xff] %v3154
    %3305 = vst [vmem:[%s3295 + $0x69] sm:$0xff] %v3155
    %3306 = vst [vmem:[%s3295 + $0x79] sm:$0xff] %v3156
    %3307 = vst [vmem:[%s3295 + $0x81] sm:$0xff] %v3157
    %3308 = vst [vmem:[%s3295 + $0x91] sm:$0xff] %v3158
    %3309 = vst [vmem:[%s3295 + $0x99] sm:$0xff] %v3159
    %3310 = vst [vmem:[%s3295 + $0xa9] sm:$0xff] %v3160
    %3311 = vst [vmem:[%s3295 + $0xb1] sm:$0xff] %v3161
    %3312 = vst [vmem:[%s3295 + $0xc1] sm:$0xff] %v3162
    %3313 = vst [vmem:[%s3295 + $0xc9] sm:$0xff] %v3163
    %3314 = vst [vmem:[%s3295 + $0xd9] sm:$0xff] %v3164
    %3315 = vst [vmem:[%s3295 + $0xe1] sm:$0xff] %v3165
    %3316 = vst [vmem:[%s3295 + $0xf1] sm:$0xff] %v3166
    %3317 = vst [vmem:[%s3295 + $0xf9] sm:$0xff] %v3167
    %3318 = vst [vmem:[%s3295 + $0x109] sm:$0xff] %v3168
    %3319 = vst [vmem:[%s3295 + $0x111] sm:$0xff] %v3169
    %3320 = vst [vmem:[%s3295 + $0x121] sm:$0xff] %v3170
    %3321 = vst [vmem:[%s3295 + $0x129] sm:$0xff] %v3171
    %3322 = vst [vmem:[%s3295 + $0x139] sm:$0xff] %v3172
    %3323 = vst [vmem:[%s3295 + $0x141] sm:$0xff] %v3173
    %3324 = vst [vmem:[%s3295 + $0x151] sm:$0xff] %v3174
    %3325 = vst [vmem:[%s3295 + $0x159] sm:$0xff] %v3175
    %3326 = vst [vmem:[%s3295 + $0x169] sm:$0xff] %v3176
    %3327 = vst [vmem:[%s3295 + $0x171] sm:$0xff] %v3177
    %3328 = vst [vmem:[%s3295 + $0x1b1] sm:$0xff] %v3178
    %3329 = vst [vmem:[%s3295 + $0x1b9] sm:$0xff] %v3179
    %3330 = vst [vmem:[%s3295 + $0x1c9] sm:$0xff] %v3180
    %3331 = vst [vmem:[%s3295 + $0x1d1] sm:$0xff] %v3181
    %3332 = vst [vmem:[%s3295 + $0x1e1] sm:$0xff] %v3182
    %3333 = vst [vmem:[%s3295 + $0x1e9] sm:$0xff] %v3183
    %3334 = vst [vmem:[%s3295 + $0x1f9] sm:$0xff] %v3184
    %3335 = vst [vmem:[%s3295 + $0x201] sm:$0xff] %v3185
    %3336 = vst [vmem:[%s3295 + $0x211] sm:$0xff] %v3186
    %3337 = vst [vmem:[%s3295 + $0x219] sm:$0xff] %v3187
    %3338 = vst [vmem:[%s3295 + $0x229] sm:$0xff] %v3188
    %3339 = vst [vmem:[%s3295 + $0x231] sm:$0xff] %v3189
    %3340 = vst [vmem:[%s3295 + $0x241] sm:$0xff] %v3190
    %3341 = vst [vmem:[%s3295 + $0x249] sm:$0xff] %v3191
    %3342 = vst [vmem:[%s3295 + $0x259] sm:$0xff] %v3192
    %3343 = vst [vmem:[%s3295 + $0x261] sm:$0xff] %v3193
    %3344 = vst [vmem:[%s3295 + $0x271] sm:$0xff] %v3194
    %3345 = vst [vmem:[%s3295 + $0x279] sm:$0xff] %v3195
    %3346 = vst [vmem:[%s3295 + $0x289] sm:$0xff] %v3196
    %3347 = vst [vmem:[%s3295 + $0x291] sm:$0xff] %v3197
    %3348 = vst [vmem:[%s3295 + $0x2a1] sm:$0xff] %v3198
    %3349 = vst [vmem:[%s3295 + $0x2a9] sm:$0xff] %v3199
    %3350 = vst [vmem:[%s3295 + $0x2b9] sm:$0xff] %v3200
    %3351 = vst [vmem:[%s3295 + $0x2c1] sm:$0xff] %v3201
    %3352 = vst [vmem:[%s3295 + $0x2d1] sm:$0xff] %v3202
    %3353 = vst [vmem:[%s3295 + $0x2d9] sm:$0xff] %v3203
    %3354 = vst [vmem:[%s3295 + $0x2e9] sm:$0xff] %v3204
    %3355 = vst [vmem:[%s3295 + $0x2f1] sm:$0xff] %v3205
    %3356 = vst [vmem:[%s3295 + $0x301] sm:$0xff] %v3206
    %3357 = vst [vmem:[%s3295 + $0x309] sm:$0xff] %v3207
    %3358 = vst [vmem:[%s3295 + $0x319] sm:$0xff] %v3208
    %3359 = vst [vmem:[%s3295 + $0x321] sm:$0xff] %v3209
    %v3360 = vld [vmem:[#allocation2] sm:$0xff]
    %v3361 = vld [vmem:[#allocation2 + $0x8] sm:$0xff]
    %v3362 = vld [vmem:[#allocation2 + $0x10] sm:$0x3]
    %v3363 = vld [vmem:[#allocation2 + $0x18] sm:$0xff]
    %v3364 = vld [vmem:[#allocation2 + $0x20] sm:$0xff]
    %v3365 = vld [vmem:[#allocation2 + $0x28] sm:$0x3]
    %v3366 = vld [vmem:[#allocation2 + $0x30] sm:$0xff]
    %v3367 = vld [vmem:[#allocation2 + $0x38] sm:$0xff]
    %v3368 = vld [vmem:[#allocation2 + $0x40] sm:$0x3]
    %v3369 = vld [vmem:[#allocation2 + $0x48] sm:$0xff]
    %v3370 = vld [vmem:[#allocation2 + $0x50] sm:$0xff]
    %v3371 = vld [vmem:[#allocation2 + $0x58] sm:$0x3]
    %v3372 = vld [vmem:[#allocation2 + $0x60] sm:$0xff]
    %v3373 = vld [vmem:[#allocation2 + $0x68] sm:$0xff]
    %v3374 = vld [vmem:[#allocation2 + $0x70] sm:$0x3]
    %v3375 = vld [vmem:[#allocation2 + $0x78] sm:$0xff]
    %v3376 = vld [vmem:[#allocation2 + $0x80] sm:$0xff]
    %v3377 = vld [vmem:[#allocation2 + $0x88] sm:$0x3]
    %v3378 = vld [vmem:[#allocation2 + $0x90] sm:$0xff]
    %v3379 = vld [vmem:[#allocation2 + $0x98] sm:$0xff]
    %v3380 = vld [vmem:[#allocation2 + $0xa0] sm:$0x3]
    %v3381 = vld [vmem:[#allocation2 + $0xa8] sm:$0xff]
    %v3382 = vld [vmem:[#allocation2 + $0xb0] sm:$0xff]
    %v3383 = vld [vmem:[#allocation2 + $0xb8] sm:$0x3]
    %v3384 = vld [vmem:[#allocation2 + $0xc0] sm:$0xff]
    %v3385 = vld [vmem:[#allocation2 + $0xc8] sm:$0xff]
    %v3386 = vld [vmem:[#allocation2 + $0xd0] sm:$0x3]
    %v3387 = vld [vmem:[#allocation2 + $0xd8] sm:$0xff]
    %v3388 = vld [vmem:[#allocation2 + $0xe0] sm:$0xff]
    %v3389 = vld [vmem:[#allocation2 + $0xe8] sm:$0x3]
    %v3390 = vld [vmem:[#allocation2 + $0xf0] sm:$0xff]
    %v3391 = vld [vmem:[#allocation2 + $0xf8] sm:$0xff]
    %v3392 = vld [vmem:[#allocation2 + $0x100] sm:$0x3]
    %v3393 = vld [vmem:[#allocation2 + $0x108] sm:$0xff]
    %v3394 = vld [vmem:[#allocation2 + $0x110] sm:$0xff]
    %v3395 = vld [vmem:[#allocation2 + $0x118] sm:$0x3]
    %v3396 = vld [vmem:[#allocation2 + $0x120] sm:$0xff]
    %v3397 = vld [vmem:[#allocation2 + $0x128] sm:$0xff]
    %v3398 = vld [vmem:[#allocation2 + $0x130] sm:$0x3]
    %v3399 = vld [vmem:[#allocation2 + $0x138] sm:$0xff]
    %v3400 = vld [vmem:[#allocation2 + $0x140] sm:$0xff]
    %v3401 = vld [vmem:[#allocation2 + $0x148] sm:$0x3]
    %v3402 = vld [vmem:[#allocation2 + $0x150] sm:$0xff]
    %v3403 = vld [vmem:[#allocation2 + $0x158] sm:$0xff]
    %v3404 = vld [vmem:[#allocation2 + $0x160] sm:$0x3]
    %v3405 = vld [vmem:[#allocation2 + $0x168] sm:$0xff]
    %v3406 = vld [vmem:[#allocation2 + $0x170] sm:$0xff]
    %v3407 = vld [vmem:[#allocation2 + $0x178] sm:$0x3]
    %v3408 = vld [vmem:[#allocation2 + $0x180] sm:$0xff]
    %v3409 = vld [vmem:[#allocation2 + $0x188] sm:$0xff]
    %v3410 = vld [vmem:[#allocation2 + $0x190] sm:$0x3]
    %v3411 = vld [vmem:[#allocation2 + $0x198] sm:$0xff]
    %v3412 = vld [vmem:[#allocation2 + $0x1a0] sm:$0xff]
    %v3413 = vld [vmem:[#allocation2 + $0x1a8] sm:$0x3]
    %v3414 = vld [vmem:[#allocation2 + $0x1b0] sm:$0xff]
    %v3415 = vld [vmem:[#allocation2 + $0x1b8] sm:$0xff]
    %v3416 = vld [vmem:[#allocation2 + $0x1c0] sm:$0x3]
    %v3417 = vld [vmem:[#allocation2 + $0x1c8] sm:$0xff]
    %v3418 = vld [vmem:[#allocation2 + $0x1d0] sm:$0xff]
    %v3419 = vld [vmem:[#allocation2 + $0x1d8] sm:$0x3]
    %v3420 = vld [vmem:[#allocation2 + $0x1e0] sm:$0xff]
    %v3421 = vld [vmem:[#allocation2 + $0x1e8] sm:$0xff]
    %v3422 = vld [vmem:[#allocation2 + $0x1f0] sm:$0x3]
    %v3423 = vld [vmem:[#allocation2 + $0x1f8] sm:$0xff]
    %v3424 = vld [vmem:[#allocation2 + $0x200] sm:$0xff]
    %v3425 = vld [vmem:[#allocation2 + $0x208] sm:$0x3]
    %v3426 = vld [vmem:[#allocation2 + $0x210] sm:$0xff]
    %v3427 = vld [vmem:[#allocation2 + $0x218] sm:$0xff]
    %v3428 = vld [vmem:[#allocation2 + $0x220] sm:$0x3]
    %v3429 = vld [vmem:[#allocation2 + $0x228] sm:$0xff]
    %v3430 = vld [vmem:[#allocation2 + $0x230] sm:$0xff]
    %v3431 = vld [vmem:[#allocation2 + $0x238] sm:$0x3]
    %v3432 = vld [vmem:[#allocation2 + $0x240] sm:$0xff]
    %v3433 = vld [vmem:[#allocation2 + $0x248] sm:$0xff]
    %v3434 = vld [vmem:[#allocation2 + $0x250] sm:$0x3]
    %v3435 = vld [vmem:[#allocation2 + $0x258] sm:$0xff]
    %v3436 = vld [vmem:[#allocation2 + $0x260] sm:$0xff]
    %v3437 = vld [vmem:[#allocation2 + $0x268] sm:$0x3]
    %v3438 = vld [vmem:[#allocation2 + $0x270] sm:$0xff]
    %v3439 = vld [vmem:[#allocation2 + $0x278] sm:$0xff]
    %v3440 = vld [vmem:[#allocation2 + $0x280] sm:$0x3]
    %v3441 = vld [vmem:[#allocation2 + $0x288] sm:$0xff]
    %v3442 = vld [vmem:[#allocation2 + $0x290] sm:$0xff]
    %v3443 = vld [vmem:[#allocation2 + $0x298] sm:$0x3]
    %v3444 = vld [vmem:[#allocation2 + $0x2a0] sm:$0xff]
    %v3445 = vld [vmem:[#allocation2 + $0x2a8] sm:$0xff]
    %v3446 = vld [vmem:[#allocation2 + $0x2b0] sm:$0x3]
    %v3447 = vld [vmem:[#allocation2 + $0x2b8] sm:$0xff]
    %v3448 = vld [vmem:[#allocation2 + $0x2c0] sm:$0xff]
    %v3449 = vld [vmem:[#allocation2 + $0x2c8] sm:$0x3]
    %v3450 = vld [vmem:[#allocation2 + $0x2d0] sm:$0xff]
    %v3451 = vld [vmem:[#allocation2 + $0x2d8] sm:$0xff]
    %v3452 = vld [vmem:[#allocation2 + $0x2e0] sm:$0x3]
    %v3453 = vld [vmem:[#allocation2 + $0x2e8] sm:$0xff]
    %v3454 = vld [vmem:[#allocation2 + $0x2f0] sm:$0xff]
    %v3455 = vld [vmem:[#allocation2 + $0x2f8] sm:$0x3]
    %v3456 = vld [vmem:[#allocation2 + $0x300] sm:$0xff]
    %v3457 = vld [vmem:[#allocation2 + $0x308] sm:$0xff]
    %v3458 = vld [vmem:[#allocation2 + $0x310] sm:$0x3]
    %v3459 = vld [vmem:[#allocation2 + $0x318] sm:$0xff]
    %v3460 = vld [vmem:[#allocation2 + $0x320] sm:$0xff]
    %v3461 = vld [vmem:[#allocation2 + $0x328] sm:$0x3]
    %v3462 = vld [vmem:[#allocation2 + $0x330] sm:$0xff]
    %v3463 = vld [vmem:[#allocation2 + $0x338] sm:$0xff]
    %v3464 = vld [vmem:[#allocation2 + $0x340] sm:$0x3]
    %v3465 = vld [vmem:[#allocation2 + $0x348] sm:$0xff]
    %v3466 = vld [vmem:[#allocation2 + $0x350] sm:$0xff]
    %v3467 = vld [vmem:[#allocation2 + $0x358] sm:$0x3]
    %v3564 = vrot.slane %v3360, 1
    %v3565 = vrot.slane %v3361, 1
    %v3566 = vsel %vm247, %v3564, %v3565
    %v3567 = vrot.slane %v3362, 1
    %v3568 = vsel %vm247, %v3565, %v3567
    %v3569 = vrot.slane %v3363, 1
    %v3570 = vrot.slane %v3364, 1
    %v3571 = vsel %vm247, %v3569, %v3570
    %v3572 = vrot.slane %v3365, 1
    %v3573 = vsel %vm247, %v3570, %v3572
    %v3574 = vrot.slane %v3366, 1
    %v3575 = vrot.slane %v3367, 1
    %v3576 = vsel %vm247, %v3574, %v3575
    %v3577 = vrot.slane %v3368, 1
    %v3578 = vsel %vm247, %v3575, %v3577
    %v3579 = vrot.slane %v3369, 1
    %v3580 = vrot.slane %v3370, 1
    %v3581 = vsel %vm247, %v3579, %v3580
    %v3582 = vrot.slane %v3371, 1
    %v3583 = vsel %vm247, %v3580, %v3582
    %v3584 = vrot.slane %v3372, 1
    %v3585 = vrot.slane %v3373, 1
    %v3586 = vsel %vm247, %v3584, %v3585
    %v3587 = vrot.slane %v3374, 1
    %v3588 = vsel %vm247, %v3585, %v3587
    %v3589 = vrot.slane %v3375, 1
    %v3590 = vrot.slane %v3376, 1
    %v3591 = vsel %vm247, %v3589, %v3590
    %v3592 = vrot.slane %v3377, 1
    %v3593 = vsel %vm247, %v3590, %v3592
    %v3594 = vrot.slane %v3378, 1
    %v3595 = vrot.slane %v3379, 1
    %v3596 = vsel %vm247, %v3594, %v3595
    %v3597 = vrot.slane %v3380, 1
    %v3598 = vsel %vm247, %v3595, %v3597
    %v3599 = vrot.slane %v3381, 1
    %v3600 = vrot.slane %v3382, 1
    %v3601 = vsel %vm247, %v3599, %v3600
    %v3602 = vrot.slane %v3383, 1
    %v3603 = vsel %vm247, %v3600, %v3602
    %v3604 = vrot.slane %v3384, 1
    %v3605 = vrot.slane %v3385, 1
    %v3606 = vsel %vm247, %v3604, %v3605
    %v3607 = vrot.slane %v3386, 1
    %v3608 = vsel %vm247, %v3605, %v3607
    %v3609 = vrot.slane %v3387, 1
    %v3610 = vrot.slane %v3388, 1
    %v3611 = vsel %vm247, %v3609, %v3610
    %v3612 = vrot.slane %v3389, 1
    %v3613 = vsel %vm247, %v3610, %v3612
    %v3614 = vrot.slane %v3390, 1
    %v3615 = vrot.slane %v3391, 1
    %v3616 = vsel %vm247, %v3614, %v3615
    %v3617 = vrot.slane %v3392, 1
    %v3618 = vsel %vm247, %v3615, %v3617
    %v3619 = vrot.slane %v3393, 1
    %v3620 = vrot.slane %v3394, 1
    %v3621 = vsel %vm247, %v3619, %v3620
    %v3622 = vrot.slane %v3395, 1
    %v3623 = vsel %vm247, %v3620, %v3622
    %v3624 = vrot.slane %v3396, 1
    %v3625 = vrot.slane %v3397, 1
    %v3626 = vsel %vm247, %v3624, %v3625
    %v3627 = vrot.slane %v3398, 1
    %v3628 = vsel %vm247, %v3625, %v3627
    %v3629 = vrot.slane %v3399, 1
    %v3630 = vrot.slane %v3400, 1
    %v3631 = vsel %vm247, %v3629, %v3630
    %v3632 = vrot.slane %v3401, 1
    %v3633 = vsel %vm247, %v3630, %v3632
    %v3634 = vrot.slane %v3402, 1
    %v3635 = vrot.slane %v3403, 1
    %v3636 = vsel %vm247, %v3634, %v3635
    %v3637 = vrot.slane %v3404, 1
    %v3638 = vsel %vm247, %v3635, %v3637
    %v3639 = vrot.slane %v3405, 1
    %v3640 = vrot.slane %v3406, 1
    %v3641 = vsel %vm247, %v3639, %v3640
    %v3642 = vrot.slane %v3407, 1
    %v3643 = vsel %vm247, %v3640, %v3642
    %v3644 = vrot.slane %v3414, 1
    %v3645 = vrot.slane %v3415, 1
    %v3646 = vsel %vm247, %v3644, %v3645
    %v3647 = vrot.slane %v3416, 1
    %v3648 = vsel %vm247, %v3645, %v3647
    %v3649 = vrot.slane %v3417, 1
    %v3650 = vrot.slane %v3418, 1
    %v3651 = vsel %vm247, %v3649, %v3650
    %v3652 = vrot.slane %v3419, 1
    %v3653 = vsel %vm247, %v3650, %v3652
    %v3654 = vrot.slane %v3420, 1
    %v3655 = vrot.slane %v3421, 1
    %v3656 = vsel %vm247, %v3654, %v3655
    %v3657 = vrot.slane %v3422, 1
    %v3658 = vsel %vm247, %v3655, %v3657
    %v3659 = vrot.slane %v3423, 1
    %v3660 = vrot.slane %v3424, 1
    %v3661 = vsel %vm247, %v3659, %v3660
    %v3662 = vrot.slane %v3425, 1
    %v3663 = vsel %vm247, %v3660, %v3662
    %v3664 = vrot.slane %v3426, 1
    %v3665 = vrot.slane %v3427, 1
    %v3666 = vsel %vm247, %v3664, %v3665
    %v3667 = vrot.slane %v3428, 1
    %v3668 = vsel %vm247, %v3665, %v3667
    %v3669 = vrot.slane %v3429, 1
    %v3670 = vrot.slane %v3430, 1
    %v3671 = vsel %vm247, %v3669, %v3670
    %v3672 = vrot.slane %v3431, 1
    %v3673 = vsel %vm247, %v3670, %v3672
    %v3674 = vrot.slane %v3432, 1
    %v3675 = vrot.slane %v3433, 1
    %v3676 = vsel %vm247, %v3674, %v3675
    %v3677 = vrot.slane %v3434, 1
    %v3678 = vsel %vm247, %v3675, %v3677
    %v3679 = vrot.slane %v3435, 1
    %v3680 = vrot.slane %v3436, 1
    %v3681 = vsel %vm247, %v3679, %v3680
    %v3682 = vrot.slane %v3437, 1
    %v3683 = vsel %vm247, %v3680, %v3682
    %v3684 = vrot.slane %v3438, 1
    %v3685 = vrot.slane %v3439, 1
    %v3686 = vsel %vm247, %v3684, %v3685
    %v3687 = vrot.slane %v3440, 1
    %v3688 = vsel %vm247, %v3685, %v3687
    %v3689 = vrot.slane %v3441, 1
    %v3690 = vrot.slane %v3442, 1
    %v3691 = vsel %vm247, %v3689, %v3690
    %v3692 = vrot.slane %v3443, 1
    %v3693 = vsel %vm247, %v3690, %v3692
    %v3694 = vrot.slane %v3444, 1
    %v3695 = vrot.slane %v3445, 1
    %v3696 = vsel %vm247, %v3694, %v3695
    %v3697 = vrot.slane %v3446, 1
    %v3698 = vsel %vm247, %v3695, %v3697
    %v3699 = vrot.slane %v3447, 1
    %v3700 = vrot.slane %v3448, 1
    %v3701 = vsel %vm247, %v3699, %v3700
    %v3702 = vrot.slane %v3449, 1
    %v3703 = vsel %vm247, %v3700, %v3702
    %v3704 = vrot.slane %v3450, 1
    %v3705 = vrot.slane %v3451, 1
    %v3706 = vsel %vm247, %v3704, %v3705
    %v3707 = vrot.slane %v3452, 1
    %v3708 = vsel %vm247, %v3705, %v3707
    %v3709 = vrot.slane %v3453, 1
    %v3710 = vrot.slane %v3454, 1
    %v3711 = vsel %vm247, %v3709, %v3710
    %v3712 = vrot.slane %v3455, 1
    %v3713 = vsel %vm247, %v3710, %v3712
    %v3714 = vrot.slane %v3456, 1
    %v3715 = vrot.slane %v3457, 1
    %v3716 = vsel %vm247, %v3714, %v3715
    %v3717 = vrot.slane %v3458, 1
    %v3718 = vsel %vm247, %v3715, %v3717
    %v3719 = vrot.slane %v3459, 1
    %v3720 = vrot.slane %v3460, 1
    %v3721 = vsel %vm247, %v3719, %v3720
    %v3722 = vrot.slane %v3461, 1
    %v3723 = vsel %vm247, %v3720, %v3722
    %v3788 = vrot.slane %v3360, 2
    %v3789 = vrot.slane %v3361, 2
    %v3790 = vsel %vm472, %v3788, %v3789
    %v3791 = vrot.slane %v3362, 2
    %v3792 = vsel %vm472, %v3789, %v3791
    %v3793 = vrot.slane %v3363, 2
    %v3794 = vrot.slane %v3364, 2
    %v3795 = vsel %vm472, %v3793, %v3794
    %v3796 = vrot.slane %v3365, 2
    %v3797 = vsel %vm472, %v3794, %v3796
    %v3798 = vrot.slane %v3366, 2
    %v3799 = vrot.slane %v3367, 2
    %v3800 = vsel %vm472, %v3798, %v3799
    %v3801 = vrot.slane %v3368, 2
    %v3802 = vsel %vm472, %v3799, %v3801
    %v3803 = vrot.slane %v3369, 2
    %v3804 = vrot.slane %v3370, 2
    %v3805 = vsel %vm472, %v3803, %v3804
    %v3806 = vrot.slane %v3371, 2
    %v3807 = vsel %vm472, %v3804, %v3806
    %v3808 = vrot.slane %v3372, 2
    %v3809 = vrot.slane %v3373, 2
    %v3810 = vsel %vm472, %v3808, %v3809
    %v3811 = vrot.slane %v3374, 2
    %v3812 = vsel %vm472, %v3809, %v3811
    %v3813 = vrot.slane %v3375, 2
    %v3814 = vrot.slane %v3376, 2
    %v3815 = vsel %vm472, %v3813, %v3814
    %v3816 = vrot.slane %v3377, 2
    %v3817 = vsel %vm472, %v3814, %v3816
    %v3818 = vrot.slane %v3378, 2
    %v3819 = vrot.slane %v3379, 2
    %v3820 = vsel %vm472, %v3818, %v3819
    %v3821 = vrot.slane %v3380, 2
    %v3822 = vsel %vm472, %v3819, %v3821
    %v3823 = vrot.slane %v3381, 2
    %v3824 = vrot.slane %v3382, 2
    %v3825 = vsel %vm472, %v3823, %v3824
    %v3826 = vrot.slane %v3383, 2
    %v3827 = vsel %vm472, %v3824, %v3826
    %v3828 = vrot.slane %v3384, 2
    %v3829 = vrot.slane %v3385, 2
    %v3830 = vsel %vm472, %v3828, %v3829
    %v3831 = vrot.slane %v3386, 2
    %v3832 = vsel %vm472, %v3829, %v3831
    %v3833 = vrot.slane %v3387, 2
    %v3834 = vrot.slane %v3388, 2
    %v3835 = vsel %vm472, %v3833, %v3834
    %v3836 = vrot.slane %v3389, 2
    %v3837 = vsel %vm472, %v3834, %v3836
    %v3838 = vrot.slane %v3390, 2
    %v3839 = vrot.slane %v3391, 2
    %v3840 = vsel %vm472, %v3838, %v3839
    %v3841 = vrot.slane %v3392, 2
    %v3842 = vsel %vm472, %v3839, %v3841
    %v3843 = vrot.slane %v3393, 2
    %v3844 = vrot.slane %v3394, 2
    %v3845 = vsel %vm472, %v3843, %v3844
    %v3846 = vrot.slane %v3395, 2
    %v3847 = vsel %vm472, %v3844, %v3846
    %v3848 = vrot.slane %v3396, 2
    %v3849 = vrot.slane %v3397, 2
    %v3850 = vsel %vm472, %v3848, %v3849
    %v3851 = vrot.slane %v3398, 2
    %v3852 = vsel %vm472, %v3849, %v3851
    %v3853 = vrot.slane %v3399, 2
    %v3854 = vrot.slane %v3400, 2
    %v3855 = vsel %vm472, %v3853, %v3854
    %v3856 = vrot.slane %v3401, 2
    %v3857 = vsel %vm472, %v3854, %v3856
    %v3858 = vrot.slane %v3402, 2
    %v3859 = vrot.slane %v3403, 2
    %v3860 = vsel %vm472, %v3858, %v3859
    %v3861 = vrot.slane %v3404, 2
    %v3862 = vsel %vm472, %v3859, %v3861
    %v3863 = vrot.slane %v3405, 2
    %v3864 = vrot.slane %v3406, 2
    %v3865 = vsel %vm472, %v3863, %v3864
    %v3866 = vrot.slane %v3407, 2
    %v3867 = vsel %vm472, %v3864, %v3866
    %v3868 = vrot.slane %v3414, 2
    %v3869 = vrot.slane %v3415, 2
    %v3870 = vsel %vm472, %v3868, %v3869
    %v3871 = vrot.slane %v3416, 2
    %v3872 = vsel %vm472, %v3869, %v3871
    %v3873 = vrot.slane %v3417, 2
    %v3874 = vrot.slane %v3418, 2
    %v3875 = vsel %vm472, %v3873, %v3874
    %v3876 = vrot.slane %v3419, 2
    %v3877 = vsel %vm472, %v3874, %v3876
    %v3878 = vrot.slane %v3420, 2
    %v3879 = vrot.slane %v3421, 2
    %v3880 = vsel %vm472, %v3878, %v3879
    %v3881 = vrot.slane %v3422, 2
    %v3882 = vsel %vm472, %v3879, %v3881
    %v3883 = vrot.slane %v3423, 2
    %v3884 = vrot.slane %v3424, 2
    %v3885 = vsel %vm472, %v3883, %v3884
    %v3886 = vrot.slane %v3425, 2
    %v3887 = vsel %vm472, %v3884, %v3886
    %v3888 = vrot.slane %v3426, 2
    %v3889 = vrot.slane %v3427, 2
    %v3890 = vsel %vm472, %v3888, %v3889
    %v3891 = vrot.slane %v3428, 2
    %v3892 = vsel %vm472, %v3889, %v3891
    %v3893 = vrot.slane %v3429, 2
    %v3894 = vrot.slane %v3430, 2
    %v3895 = vsel %vm472, %v3893, %v3894
    %v3896 = vrot.slane %v3431, 2
    %v3897 = vsel %vm472, %v3894, %v3896
    %v3898 = vrot.slane %v3432, 2
    %v3899 = vrot.slane %v3433, 2
    %v3900 = vsel %vm472, %v3898, %v3899
    %v3901 = vrot.slane %v3434, 2
    %v3902 = vsel %vm472, %v3899, %v3901
    %v3903 = vrot.slane %v3435, 2
    %v3904 = vrot.slane %v3436, 2
    %v3905 = vsel %vm472, %v3903, %v3904
    %v3906 = vrot.slane %v3437, 2
    %v3907 = vsel %vm472, %v3904, %v3906
    %v3908 = vrot.slane %v3438, 2
    %v3909 = vrot.slane %v3439, 2
    %v3910 = vsel %vm472, %v3908, %v3909
    %v3911 = vrot.slane %v3440, 2
    %v3912 = vsel %vm472, %v3909, %v3911
    %v3913 = vrot.slane %v3441, 2
    %v3914 = vrot.slane %v3442, 2
    %v3915 = vsel %vm472, %v3913, %v3914
    %v3916 = vrot.slane %v3443, 2
    %v3917 = vsel %vm472, %v3914, %v3916
    %v3918 = vrot.slane %v3444, 2
    %v3919 = vrot.slane %v3445, 2
    %v3920 = vsel %vm472, %v3918, %v3919
    %v3921 = vrot.slane %v3446, 2
    %v3922 = vsel %vm472, %v3919, %v3921
    %v3923 = vrot.slane %v3447, 2
    %v3924 = vrot.slane %v3448, 2
    %v3925 = vsel %vm472, %v3923, %v3924
    %v3926 = vrot.slane %v3449, 2
    %v3927 = vsel %vm472, %v3924, %v3926
    %v3928 = vrot.slane %v3450, 2
    %v3929 = vrot.slane %v3451, 2
    %v3930 = vsel %vm472, %v3928, %v3929
    %v3931 = vrot.slane %v3452, 2
    %v3932 = vsel %vm472, %v3929, %v3931
    %v3933 = vrot.slane %v3453, 2
    %v3934 = vrot.slane %v3454, 2
    %v3935 = vsel %vm472, %v3933, %v3934
    %v3936 = vrot.slane %v3455, 2
    %v3937 = vsel %vm472, %v3934, %v3936
    %v3938 = vrot.slane %v3456, 2
    %v3939 = vrot.slane %v3457, 2
    %v3940 = vsel %vm472, %v3938, %v3939
    %v3941 = vrot.slane %v3458, 2
    %v3942 = vsel %vm472, %v3939, %v3941
    %v3943 = vrot.slane %v3459, 2
    %v3944 = vrot.slane %v3460, 2
    %v3945 = vsel %vm472, %v3943, %v3944
    %v3946 = vrot.slane %v3461, 2
    %v3947 = vsel %vm472, %v3944, %v3946
    %v4018 = vrot.slane %v3408, 1
    %v4019 = vrot.slane %v3409, 1
    %v4020 = vsel %vm247, %v4018, %v4019
    %v4021 = vrot.slane %v3410, 1
    %v4022 = vsel %vm247, %v4019, %v4021
    %v4023 = vrot.slane %v3462, 1
    %v4024 = vrot.slane %v3463, 1
    %v4025 = vsel %vm247, %v4023, %v4024
    %v4026 = vrot.slane %v3464, 1
    %v4027 = vsel %vm247, %v4024, %v4026
    %v4032 = vrot.slane %v3408, 2
    %v4033 = vrot.slane %v3409, 2
    %v4034 = vsel %vm472, %v4032, %v4033
    %v4035 = vrot.slane %v3410, 2
    %v4036 = vsel %vm472, %v4033, %v4035
    %v4037 = vrot.slane %v3462, 2
    %v4038 = vrot.slane %v3463, 2
    %v4039 = vsel %vm472, %v4037, %v4038
    %v4040 = vrot.slane %v3464, 2
    %v4041 = vsel %vm472, %v4038, %v4040
    %v4052 = vrot.slane %v3411, 1
    %v4053 = vrot.slane %v3412, 1
    %v4054 = vsel %vm247, %v4052, %v4053
    %v4055 = vrot.slane %v3413, 1
    %v4056 = vsel %vm247, %v4053, %v4055
    %v4057 = vrot.slane %v3465, 1
    %v4058 = vrot.slane %v3466, 1
    %v4059 = vsel %vm247, %v4057, %v4058
    %v4060 = vrot.slane %v3467, 1
    %v4061 = vsel %vm247, %v4058, %v4060
    %v4066 = vrot.slane %v3411, 2
    %v4067 = vrot.slane %v3412, 2
    %v4068 = vsel %vm472, %v4066, %v4067
    %v4069 = vrot.slane %v3413, 2
    %v4070 = vsel %vm472, %v4067, %v4069
    %v4071 = vrot.slane %v3465, 2
    %v4072 = vrot.slane %v3466, 2
    %v4073 = vsel %vm472, %v4071, %v4072
    %v4074 = vrot.slane %v3467, 2
    %v4075 = vsel %vm472, %v4072, %v4074
    %v4080 = vld [vmem:[#allocation3] sm:$0xff]
    %v4081 = vld [vmem:[#allocation3 + $0x8] sm:$0xff]
    %v4082 = vld [vmem:[#allocation3 + $0x10] sm:$0xff]
    %v4083 = vld [vmem:[#allocation3 + $0x18] sm:$0xff]
    %v4084 = vld [vmem:[#allocation3 + $0x20] sm:$0xff]
    %v4085 = vld [vmem:[#allocation3 + $0x28] sm:$0xff]
    %v4086 = vld [vmem:[#allocation3 + $0x30] sm:$0xff]
    %v4087 = vld [vmem:[#allocation3 + $0x38] sm:$0xff]
    %v4088 = vld [vmem:[#allocation3 + $0x40] sm:$0xff]
    %v4089 = vld [vmem:[#allocation3 + $0x48] sm:$0xff]
    %v4090 = vld [vmem:[#allocation3 + $0x50] sm:$0xff]
    %v4091 = vld [vmem:[#allocation3 + $0x58] sm:$0xff]
    %v4092 = vld [vmem:[#allocation3 + $0x60] sm:$0xff]
    %v4093 = vld [vmem:[#allocation3 + $0x68] sm:$0xff]
    %v4094 = vld [vmem:[#allocation3 + $0x70] sm:$0xff]
    %v4095 = vld [vmem:[#allocation3 + $0x78] sm:$0xff]
    %v4096 = vld [vmem:[#allocation3 + $0x80] sm:$0xff]
    %v4097 = vld [vmem:[#allocation3 + $0x88] sm:$0xff]
    %v4098 = vld [vmem:[#allocation3 + $0x90] sm:$0xff]
    %v4099 = vld [vmem:[#allocation3 + $0x98] sm:$0xff]
    %v4100 = vld [vmem:[#allocation3 + $0xa0] sm:$0xff]
    %v4101 = vld [vmem:[#allocation3 + $0xa8] sm:$0xff]
    %v4102 = vld [vmem:[#allocation3 + $0xb0] sm:$0xff]
    %v4103 = vld [vmem:[#allocation3 + $0xb8] sm:$0xff]
    %v4104 = vld [vmem:[#allocation3 + $0xc0] sm:$0xff]
    %v4105 = vld [vmem:[#allocation3 + $0xc8] sm:$0xff]
    %v4106 = vld [vmem:[#allocation3 + $0xd0] sm:$0xff]
    %v4107 = vld [vmem:[#allocation3 + $0xd8] sm:$0xff]
    %v4108 = vld [vmem:[#allocation3 + $0xe0] sm:$0xff]
    %v4109 = vld [vmem:[#allocation3 + $0xe8] sm:$0xff]
    %v4110 = vld [vmem:[#allocation3 + $0xf0] sm:$0xff]
    %v4111 = vld [vmem:[#allocation3 + $0xf8] sm:$0xff]
    %v4112 = vld [vmem:[#allocation3 + $0x100] sm:$0xff]
    %v4113 = vld [vmem:[#allocation3 + $0x108] sm:$0xff]
    %v4114 = vld [vmem:[#allocation3 + $0x110] sm:$0xff]
    %v4115 = vld [vmem:[#allocation3 + $0x118] sm:$0xff]
    %v4116 = vld [vmem:[#allocation3 + $0x120] sm:$0xff]
    %v4117 = vld [vmem:[#allocation3 + $0x128] sm:$0xff]
    %v4118 = vld [vmem:[#allocation3 + $0x130] sm:$0xff]
    %v4119 = vld [vmem:[#allocation3 + $0x138] sm:$0xff]
    %v4120 = vld [vmem:[#allocation3 + $0x140] sm:$0xff]
    %v4121 = vld [vmem:[#allocation3 + $0x148] sm:$0xff]
    %v4122 = vld [vmem:[#allocation3 + $0x150] sm:$0xff]
    %v4123 = vld [vmem:[#allocation3 + $0x158] sm:$0xff]
    %v4124 = vld [vmem:[#allocation3 + $0x160] sm:$0xff]
    %v4125 = vld [vmem:[#allocation3 + $0x168] sm:$0xff]
    %v4126 = vld [vmem:[#allocation3 + $0x170] sm:$0xff]
    %v4127 = vld [vmem:[#allocation3 + $0x178] sm:$0xff]
    %v4128 = vld [vmem:[#allocation3 + $0x180] sm:$0xff]
    %v4129 = vld [vmem:[#allocation3 + $0x188] sm:$0xff]
    %v4130 = vld [vmem:[#allocation3 + $0x190] sm:$0xff]
    %v4131 = vld [vmem:[#allocation3 + $0x198] sm:$0xff]
    %v4132 = vld [vmem:[#allocation3 + $0x1a0] sm:$0xff]
    %v4133 = vld [vmem:[#allocation3 + $0x1a8] sm:$0xff]
    %v4134 = vld [vmem:[#allocation3 + $0x1b0] sm:$0xff]
    %v4135 = vld [vmem:[#allocation3 + $0x1b8] sm:$0xff]
    %v4136 = vld [vmem:[#allocation3 + $0x1c0] sm:$0xff]
    %v4137 = vld [vmem:[#allocation3 + $0x1c8] sm:$0xff]
    %v4138 = vld [vmem:[#allocation3 + $0x1d0] sm:$0xff]
    %v4139 = vld [vmem:[#allocation3 + $0x1d8] sm:$0xff]
    %v4140 = vld [vmem:[#allocation3 + $0x1e0] sm:$0xff]
    %v4141 = vld [vmem:[#allocation3 + $0x1e8] sm:$0xff]
    %v4142 = vld [vmem:[#allocation3 + $0x1f0] sm:$0xff]
    %v4143 = vld [vmem:[#allocation3 + $0x1f8] sm:$0xff]
    %v4144 = vld [vmem:[#allocation3 + $0x200] sm:$0xff]
    %v4145 = vld [vmem:[#allocation3 + $0x208] sm:$0xff]
    %v4146 = vld [vmem:[#allocation3 + $0x210] sm:$0xff]
    %v4147 = vld [vmem:[#allocation3 + $0x218] sm:$0xff]
    %v4148 = vld [vmem:[#allocation3 + $0x220] sm:$0xff]
    %v4149 = vld [vmem:[#allocation3 + $0x228] sm:$0xff]
    %v4150 = vld [vmem:[#allocation3 + $0x230] sm:$0xff]
    %v4151 = vld [vmem:[#allocation3 + $0x238] sm:$0xff]
    %v4152 = vld [vmem:[#allocation3 + $0x240] sm:$0xff]
    %v4153 = vld [vmem:[#allocation3 + $0x248] sm:$0xff]
    %v4154 = vld [vmem:[#allocation3 + $0x250] sm:$0xff]
    %v4155 = vld [vmem:[#allocation3 + $0x258] sm:$0xff]
    %v4156 = vld [vmem:[#allocation3 + $0x260] sm:$0xff]
    %v4157 = vld [vmem:[#allocation3 + $0x268] sm:$0xff]
    %v4158 = vld [vmem:[#allocation3 + $0x270] sm:$0xff]
    %v4159 = vld [vmem:[#allocation3 + $0x278] sm:$0xff]
    %v4160 = vld [vmem:[#allocation3 + $0x280] sm:$0xff]
    %v4161 = vld [vmem:[#allocation3 + $0x288] sm:$0xff]
    %v4162 = vld [vmem:[#allocation3 + $0x290] sm:$0xff]
    %v4163 = vld [vmem:[#allocation3 + $0x298] sm:$0xff]
    %v4164 = vld [vmem:[#allocation3 + $0x2a0] sm:$0xff]
    %v4165 = vld [vmem:[#allocation3 + $0x2a8] sm:$0xff]
    %v4166 = vld [vmem:[#allocation3 + $0x2b0] sm:$0xff]
    %v4167 = vld [vmem:[#allocation3 + $0x2b8] sm:$0xff]
    %v4168 = vld [vmem:[#allocation3 + $0x2c0] sm:$0xff]
    %v4169 = vld [vmem:[#allocation3 + $0x2c8] sm:$0xff]
    %v4170 = vld [vmem:[#allocation3 + $0x2d0] sm:$0xff]
    %v4171 = vld [vmem:[#allocation3 + $0x2d8] sm:$0xff]
    %v4172 = vld [vmem:[#allocation3 + $0x2e0] sm:$0xff]
    %v4173 = vld [vmem:[#allocation3 + $0x2e8] sm:$0xff]
    %v4174 = vld [vmem:[#allocation3 + $0x2f0] sm:$0xff]
    %v4175 = vld [vmem:[#allocation3 + $0x2f8] sm:$0xff]
    %v4176 = vld [vmem:[#allocation3 + $0x300] sm:$0xff]
    %v4177 = vld [vmem:[#allocation3 + $0x308] sm:$0xff]
    %v4178 = vld [vmem:[#allocation3 + $0x310] sm:$0xff]
    %v4179 = vld [vmem:[#allocation3 + $0x318] sm:$0xff]
    %v4180 = vld [vmem:[#allocation3 + $0x320] sm:$0xff]
    %v4181 = vld [vmem:[#allocation3 + $0x328] sm:$0xff]
    %v4182 = vld [vmem:[#allocation3 + $0x330] sm:$0xff]
    %v4183 = vld [vmem:[#allocation3 + $0x338] sm:$0xff]
    %v4184 = vld [vmem:[#allocation3 + $0x340] sm:$0xff]
    %v4185 = vld [vmem:[#allocation3 + $0x348] sm:$0xff]
    %v4186 = vld [vmem:[#allocation3 + $0x350] sm:$0xff]
    %v4187 = vld [vmem:[#allocation3 + $0x358] sm:$0xff]
    %v4188 = vld [vmem:[#allocation3 + $0x360] sm:$0xff]
    %v4189 = vld [vmem:[#allocation3 + $0x368] sm:$0xff]
    %v4190 = vld [vmem:[#allocation3 + $0x370] sm:$0xff]
    %v4191 = vld [vmem:[#allocation3 + $0x378] sm:$0xff]
    %v4192 = vld [vmem:[#allocation3 + $0x380] sm:$0xff]
    %v4193 = vld [vmem:[#allocation3 + $0x388] sm:$0xff]
    %v4194 = vld [vmem:[#allocation3 + $0x390] sm:$0xff]
    %v4195 = vld [vmem:[#allocation3 + $0x398] sm:$0xff]
    %v4196 = vld [vmem:[#allocation3 + $0x3a0] sm:$0xff]
    %v4197 = vld [vmem:[#allocation3 + $0x3a8] sm:$0xff]
    %v4198 = vld [vmem:[#allocation3 + $0x3b0] sm:$0xff]
    %v4199 = vld [vmem:[#allocation3 + $0x3b8] sm:$0xff]
    %v4200 = vld [vmem:[#allocation3 + $0x3c0] sm:$0xff]
    %v4201 = vld [vmem:[#allocation3 + $0x3c8] sm:$0xff]
    %v4202 = vld [vmem:[#allocation3 + $0x3d0] sm:$0xff]
    %v4203 = vld [vmem:[#allocation3 + $0x3d8] sm:$0xff]
    %v4204 = vld [vmem:[#allocation3 + $0x3e0] sm:$0xff]
    %v4205 = vld [vmem:[#allocation3 + $0x3e8] sm:$0xff]
    %v4206 = vld [vmem:[#allocation3 + $0x3f0] sm:$0xff]
    %v4207 = vld [vmem:[#allocation3 + $0x3f8] sm:$0xff]
    %v4208 = vld [vmem:[#allocation3 + $0x400] sm:$0xff]
    %v4209 = vld [vmem:[#allocation3 + $0x408] sm:$0xff]
    %v4210 = vld [vmem:[#allocation3 + $0x410] sm:$0xff]
    %v4211 = vld [vmem:[#allocation3 + $0x418] sm:$0xff]
    %v4212 = vld [vmem:[#allocation3 + $0x420] sm:$0xff]
    %v4213 = vld [vmem:[#allocation3 + $0x428] sm:$0xff]
    %v4214 = vld [vmem:[#allocation3 + $0x430] sm:$0xff]
    %v4215 = vld [vmem:[#allocation3 + $0x438] sm:$0xff]
    %v4216 = vld [vmem:[#allocation3 + $0x440] sm:$0xff]
    %v4217 = vld [vmem:[#allocation3 + $0x448] sm:$0xff]
    %v4218 = vld [vmem:[#allocation3 + $0x450] sm:$0xff]
    %v4219 = vld [vmem:[#allocation3 + $0x458] sm:$0xff]
    %v4220 = vld [vmem:[#allocation3 + $0x460] sm:$0xff]
    %v4221 = vld [vmem:[#allocation3 + $0x468] sm:$0xff]
    %v4222 = vld [vmem:[#allocation3 + $0x470] sm:$0xff]
    %v4223 = vld [vmem:[#allocation3 + $0x478] sm:$0xff]
    %4224 = vmatpush.msra.mxu0 %v4095
    %4225 = vmatpush.msra.mxu0 %v4094
    %4226 = vmatpush.msra.mxu0 %v4093
    %4227 = vmatpush.msra.mxu0 %v4092
    %4228 = vmatpush.msra.mxu0 %v4091
    %4229 = vmatpush.msra.mxu0 %v4090
    %4230 = vmatpush.msra.mxu0 %v4089
    %4231 = vmatpush.msra.mxu0 %v4088
    %4232 = vmatpush.msra.mxu0 %v4087
    %4233 = vmatpush.msra.mxu0 %v4086
    %4234 = vmatpush.msra.mxu0 %v4085
    %4235 = vmatpush.msra.mxu0 %v4084
    %4236 = vmatpush.msra.mxu0 %v4083
    %4237 = vmatpush.msra.mxu0 %v4082
    %4238 = vmatpush.msra.mxu0 %v4081
    %4239 = vmatpush.msra.mxu0 %v4080
    %4240 = vmatmul.f32.gmra.mxu0 %v3360
    %v4241 = vpop.f32.mrf.mxu0
    %v4242 = vadd.f32 0.0, %v4241
    %4243 = vmatmul.f32.gmra.mxu0 %v3361
    %v4244 = vpop.f32.mrf.mxu0
    %v4245 = vadd.f32 0.0, %v4244
    %4246 = vmatmul.f32.gmra.mxu0 %v3363
    %v4247 = vpop.f32.mrf.mxu0
    %v4248 = vadd.f32 0.0, %v4247
    %4249 = vmatmul.f32.gmra.mxu0 %v3364
    %v4250 = vpop.f32.mrf.mxu0
    %v4251 = vadd.f32 0.0, %v4250
    %4252 = vmatmul.f32.gmra.mxu0 %v3366
    %v4253 = vpop.f32.mrf.mxu0
    %v4254 = vadd.f32 0.0, %v4253
    %4255 = vmatmul.f32.gmra.mxu0 %v3367
    %v4256 = vpop.f32.mrf.mxu0
    %v4257 = vadd.f32 0.0, %v4256
    %4258 = vmatmul.f32.gmra.mxu0 %v3369
    %v4259 = vpop.f32.mrf.mxu0
    %v4260 = vadd.f32 0.0, %v4259
    %4261 = vmatmul.f32.gmra.mxu0 %v3370
    %v4262 = vpop.f32.mrf.mxu0
    %v4263 = vadd.f32 0.0, %v4262
    %4264 = vmatmul.f32.gmra.mxu0 %v3372
    %v4265 = vpop.f32.mrf.mxu0
    %v4266 = vadd.f32 0.0, %v4265
    %4267 = vmatmul.f32.gmra.mxu0 %v3373
    %v4268 = vpop.f32.mrf.mxu0
    %v4269 = vadd.f32 0.0, %v4268
    %4270 = vmatmul.f32.gmra.mxu0 %v3375
    %v4271 = vpop.f32.mrf.mxu0
    %v4272 = vadd.f32 0.0, %v4271
    %4273 = vmatmul.f32.gmra.mxu0 %v3376
    %v4274 = vpop.f32.mrf.mxu0
    %v4275 = vadd.f32 0.0, %v4274
    %4276 = vmatmul.f32.gmra.mxu0 %v3378
    %v4277 = vpop.f32.mrf.mxu0
    %v4278 = vadd.f32 0.0, %v4277
    %4279 = vmatmul.f32.gmra.mxu0 %v3379
    %v4280 = vpop.f32.mrf.mxu0
    %v4281 = vadd.f32 0.0, %v4280
    %4282 = vmatmul.f32.gmra.mxu0 %v3381
    %v4283 = vpop.f32.mrf.mxu0
    %v4284 = vadd.f32 0.0, %v4283
    %4285 = vmatmul.f32.gmra.mxu0 %v3382
    %v4286 = vpop.f32.mrf.mxu0
    %v4287 = vadd.f32 0.0, %v4286
    %4288 = vmatmul.f32.gmra.mxu0 %v3384
    %v4289 = vpop.f32.mrf.mxu0
    %v4290 = vadd.f32 0.0, %v4289
    %4291 = vmatmul.f32.gmra.mxu0 %v3385
    %v4292 = vpop.f32.mrf.mxu0
    %v4293 = vadd.f32 0.0, %v4292
    %4294 = vmatmul.f32.gmra.mxu0 %v3387
    %v4295 = vpop.f32.mrf.mxu0
    %v4296 = vadd.f32 0.0, %v4295
    %4297 = vmatmul.f32.gmra.mxu0 %v3388
    %v4298 = vpop.f32.mrf.mxu0
    %v4299 = vadd.f32 0.0, %v4298
    %4300 = vmatmul.f32.gmra.mxu0 %v3390
    %v4301 = vpop.f32.mrf.mxu0
    %v4302 = vadd.f32 0.0, %v4301
    %4303 = vmatmul.f32.gmra.mxu0 %v3391
    %v4304 = vpop.f32.mrf.mxu0
    %v4305 = vadd.f32 0.0, %v4304
    %4306 = vmatmul.f32.gmra.mxu0 %v3393
    %v4307 = vpop.f32.mrf.mxu0
    %v4308 = vadd.f32 0.0, %v4307
    %4309 = vmatmul.f32.gmra.mxu0 %v3394
    %v4310 = vpop.f32.mrf.mxu0
    %v4311 = vadd.f32 0.0, %v4310
    %4312 = vmatmul.f32.gmra.mxu0 %v3396
    %v4313 = vpop.f32.mrf.mxu0
    %v4314 = vadd.f32 0.0, %v4313
    %4315 = vmatmul.f32.gmra.mxu0 %v3397
    %v4316 = vpop.f32.mrf.mxu0
    %v4317 = vadd.f32 0.0, %v4316
    %4318 = vmatmul.f32.gmra.mxu0 %v3399
    %v4319 = vpop.f32.mrf.mxu0
    %v4320 = vadd.f32 0.0, %v4319
    %4321 = vmatmul.f32.gmra.mxu0 %v3400
    %v4322 = vpop.f32.mrf.mxu0
    %v4323 = vadd.f32 0.0, %v4322
    %4324 = vmatmul.f32.gmra.mxu0 %v3402
    %v4325 = vpop.f32.mrf.mxu0
    %v4326 = vadd.f32 0.0, %v4325
    %4327 = vmatmul.f32.gmra.mxu0 %v3403
    %v4328 = vpop.f32.mrf.mxu0
    %v4329 = vadd.f32 0.0, %v4328
    %4330 = vmatmul.f32.gmra.mxu0 %v3405
    %v4331 = vpop.f32.mrf.mxu0
    %v4332 = vadd.f32 0.0, %v4331
    %4333 = vmatmul.f32.gmra.mxu0 %v3406
    %v4334 = vpop.f32.mrf.mxu0
    %v4335 = vadd.f32 0.0, %v4334
    %4336 = vmatmul.f32.gmra.mxu0 %v3414
    %v4337 = vpop.f32.mrf.mxu0
    %v4338 = vadd.f32 0.0, %v4337
    %4339 = vmatmul.f32.gmra.mxu0 %v3415
    %v4340 = vpop.f32.mrf.mxu0
    %v4341 = vadd.f32 0.0, %v4340
    %4342 = vmatmul.f32.gmra.mxu0 %v3417
    %v4343 = vpop.f32.mrf.mxu0
    %v4344 = vadd.f32 0.0, %v4343
    %4345 = vmatmul.f32.gmra.mxu0 %v3418
    %v4346 = vpop.f32.mrf.mxu0
    %v4347 = vadd.f32 0.0, %v4346
    %4348 = vmatmul.f32.gmra.mxu0 %v3420
    %v4349 = vpop.f32.mrf.mxu0
    %v4350 = vadd.f32 0.0, %v4349
    %4351 = vmatmul.f32.gmra.mxu0 %v3421
    %v4352 = vpop.f32.mrf.mxu0
    %v4353 = vadd.f32 0.0, %v4352
    %4354 = vmatmul.f32.gmra.mxu0 %v3423
    %v4355 = vpop.f32.mrf.mxu0
    %v4356 = vadd.f32 0.0, %v4355
    %4357 = vmatmul.f32.gmra.mxu0 %v3424
    %v4358 = vpop.f32.mrf.mxu0
    %v4359 = vadd.f32 0.0, %v4358
    %4360 = vmatmul.f32.gmra.mxu0 %v3426
    %v4361 = vpop.f32.mrf.mxu0
    %v4362 = vadd.f32 0.0, %v4361
    %4363 = vmatmul.f32.gmra.mxu0 %v3427
    %v4364 = vpop.f32.mrf.mxu0
    %v4365 = vadd.f32 0.0, %v4364
    %4366 = vmatmul.f32.gmra.mxu0 %v3429
    %v4367 = vpop.f32.mrf.mxu0
    %v4368 = vadd.f32 0.0, %v4367
    %4369 = vmatmul.f32.gmra.mxu0 %v3430
    %v4370 = vpop.f32.mrf.mxu0
    %v4371 = vadd.f32 0.0, %v4370
    %4372 = vmatmul.f32.gmra.mxu0 %v3432
    %v4373 = vpop.f32.mrf.mxu0
    %v4374 = vadd.f32 0.0, %v4373
    %4375 = vmatmul.f32.gmra.mxu0 %v3433
    %v4376 = vpop.f32.mrf.mxu0
    %v4377 = vadd.f32 0.0, %v4376
    %4378 = vmatmul.f32.gmra.mxu0 %v3435
    %v4379 = vpop.f32.mrf.mxu0
    %v4380 = vadd.f32 0.0, %v4379
    %4381 = vmatmul.f32.gmra.mxu0 %v3436
    %v4382 = vpop.f32.mrf.mxu0
    %v4383 = vadd.f32 0.0, %v4382
    %4384 = vmatmul.f32.gmra.mxu0 %v3438
    %v4385 = vpop.f32.mrf.mxu0
    %v4386 = vadd.f32 0.0, %v4385
    %4387 = vmatmul.f32.gmra.mxu0 %v3439
    %v4388 = vpop.f32.mrf.mxu0
    %v4389 = vadd.f32 0.0, %v4388
    %4390 = vmatmul.f32.gmra.mxu0 %v3441
    %v4391 = vpop.f32.mrf.mxu0
    %v4392 = vadd.f32 0.0, %v4391
    %4393 = vmatmul.f32.gmra.mxu0 %v3442
    %v4394 = vpop.f32.mrf.mxu0
    %v4395 = vadd.f32 0.0, %v4394
    %4396 = vmatmul.f32.gmra.mxu0 %v3444
    %v4397 = vpop.f32.mrf.mxu0
    %v4398 = vadd.f32 0.0, %v4397
    %4399 = vmatmul.f32.gmra.mxu0 %v3445
    %v4400 = vpop.f32.mrf.mxu0
    %v4401 = vadd.f32 0.0, %v4400
    %4402 = vmatmul.f32.gmra.mxu0 %v3447
    %v4403 = vpop.f32.mrf.mxu0
    %v4404 = vadd.f32 0.0, %v4403
    %4405 = vmatmul.f32.gmra.mxu0 %v3448
    %v4406 = vpop.f32.mrf.mxu0
    %v4407 = vadd.f32 0.0, %v4406
    %4408 = vmatmul.f32.gmra.mxu0 %v3450
    %v4409 = vpop.f32.mrf.mxu0
    %v4410 = vadd.f32 0.0, %v4409
    %4411 = vmatmul.f32.gmra.mxu0 %v3451
    %v4412 = vpop.f32.mrf.mxu0
    %v4413 = vadd.f32 0.0, %v4412
    %4414 = vmatmul.f32.gmra.mxu0 %v3453
    %v4415 = vpop.f32.mrf.mxu0
    %v4416 = vadd.f32 0.0, %v4415
    %4417 = vmatmul.f32.gmra.mxu0 %v3454
    %v4418 = vpop.f32.mrf.mxu0
    %v4419 = vadd.f32 0.0, %v4418
    %4420 = vmatmul.f32.gmra.mxu0 %v3456
    %v4421 = vpop.f32.mrf.mxu0
    %v4422 = vadd.f32 0.0, %v4421
    %4423 = vmatmul.f32.gmra.mxu0 %v3457
    %v4424 = vpop.f32.mrf.mxu0
    %v4425 = vadd.f32 0.0, %v4424
    %4426 = vmatmul.f32.gmra.mxu0 %v3459
    %v4427 = vpop.f32.mrf.mxu0
    %v4428 = vadd.f32 0.0, %v4427
    %4429 = vmatmul.f32.gmra.mxu0 %v3460
    %v4430 = vpop.f32.mrf.mxu0
    %v4431 = vadd.f32 0.0, %v4430
    %4432 = vdwg.mxu0
    %4433 = vmatpush.msra.mxu0 %v4111
    %4434 = vmatpush.msra.mxu0 %v4110
    %4435 = vmatpush.msra.mxu0 %v4109
    %4436 = vmatpush.msra.mxu0 %v4108
    %4437 = vmatpush.msra.mxu0 %v4107
    %4438 = vmatpush.msra.mxu0 %v4106
    %4439 = vmatpush.msra.mxu0 %v4105
    %4440 = vmatpush.msra.mxu0 %v4104
    %4441 = vmatpush.msra.mxu0 %v4103
    %4442 = vmatpush.msra.mxu0 %v4102
    %4443 = vmatpush.msra.mxu0 %v4101
    %4444 = vmatpush.msra.mxu0 %v4100
    %4445 = vmatpush.msra.mxu0 %v4099
    %4446 = vmatpush.msra.mxu0 %v4098
    %4447 = vmatpush.msra.mxu0 %v4097
    %4448 = vmatpush.msra.mxu0 %v4096
    %4449 = vmatmul.f32.gmra.mxu0 %v3566
    %v4450 = vpop.f32.mrf.mxu0
    %v4451 = vadd.f32 %v4242, %v4450
    %4452 = vmatmul.f32.gmra.mxu0 %v3568
    %v4453 = vpop.f32.mrf.mxu0
    %v4454 = vadd.f32 %v4245, %v4453
    %4455 = vmatmul.f32.gmra.mxu0 %v3571
    %v4456 = vpop.f32.mrf.mxu0
    %v4457 = vadd.f32 %v4248, %v4456
    %4458 = vmatmul.f32.gmra.mxu0 %v3573
    %v4459 = vpop.f32.mrf.mxu0
    %v4460 = vadd.f32 %v4251, %v4459
    %4461 = vmatmul.f32.gmra.mxu0 %v3576
    %v4462 = vpop.f32.mrf.mxu0
    %v4463 = vadd.f32 %v4254, %v4462
    %4464 = vmatmul.f32.gmra.mxu0 %v3578
    %v4465 = vpop.f32.mrf.mxu0
    %v4466 = vadd.f32 %v4257, %v4465
    %4467 = vmatmul.f32.gmra.mxu0 %v3581
    %v4468 = vpop.f32.mrf.mxu0
    %v4469 = vadd.f32 %v4260, %v4468
    %4470 = vmatmul.f32.gmra.mxu0 %v3583
    %v4471 = vpop.f32.mrf.mxu0
    %v4472 = vadd.f32 %v4263, %v4471
    %4473 = vmatmul.f32.gmra.mxu0 %v3586
    %v4474 = vpop.f32.mrf.mxu0
    %v4475 = vadd.f32 %v4266, %v4474
    %4476 = vmatmul.f32.gmra.mxu0 %v3588
    %v4477 = vpop.f32.mrf.mxu0
    %v4478 = vadd.f32 %v4269, %v4477
    %4479 = vmatmul.f32.gmra.mxu0 %v3591
    %v4480 = vpop.f32.mrf.mxu0
    %v4481 = vadd.f32 %v4272, %v4480
    %4482 = vmatmul.f32.gmra.mxu0 %v3593
    %v4483 = vpop.f32.mrf.mxu0
    %v4484 = vadd.f32 %v4275, %v4483
    %4485 = vmatmul.f32.gmra.mxu0 %v3596
    %v4486 = vpop.f32.mrf.mxu0
    %v4487 = vadd.f32 %v4278, %v4486
    %4488 = vmatmul.f32.gmra.mxu0 %v3598
    %v4489 = vpop.f32.mrf.mxu0
    %v4490 = vadd.f32 %v4281, %v4489
    %4491 = vmatmul.f32.gmra.mxu0 %v3601
    %v4492 = vpop.f32.mrf.mxu0
    %v4493 = vadd.f32 %v4284, %v4492
    %4494 = vmatmul.f32.gmra.mxu0 %v3603
    %v4495 = vpop.f32.mrf.mxu0
    %v4496 = vadd.f32 %v4287, %v4495
    %4497 = vmatmul.f32.gmra.mxu0 %v3606
    %v4498 = vpop.f32.mrf.mxu0
    %v4499 = vadd.f32 %v4290, %v4498
    %4500 = vmatmul.f32.gmra.mxu0 %v3608
    %v4501 = vpop.f32.mrf.mxu0
    %v4502 = vadd.f32 %v4293, %v4501
    %4503 = vmatmul.f32.gmra.mxu0 %v3611
    %v4504 = vpop.f32.mrf.mxu0
    %v4505 = vadd.f32 %v4296, %v4504
    %4506 = vmatmul.f32.gmra.mxu0 %v3613
    %v4507 = vpop.f32.mrf.mxu0
    %v4508 = vadd.f32 %v4299, %v4507
    %4509 = vmatmul.f32.gmra.mxu0 %v3616
    %v4510 = vpop.f32.mrf.mxu0
    %v4511 = vadd.f32 %v4302, %v4510
    %4512 = vmatmul.f32.gmra.mxu0 %v3618
    %v4513 = vpop.f32.mrf.mxu0
    %v4514 = vadd.f32 %v4305, %v4513
    %4515 = vmatmul.f32.gmra.mxu0 %v3621
    %v4516 = vpop.f32.mrf.mxu0
    %v4517 = vadd.f32 %v4308, %v4516
    %4518 = vmatmul.f32.gmra.mxu0 %v3623
    %v4519 = vpop.f32.mrf.mxu0
    %v4520 = vadd.f32 %v4311, %v4519
    %4521 = vmatmul.f32.gmra.mxu0 %v3626
    %v4522 = vpop.f32.mrf.mxu0
    %v4523 = vadd.f32 %v4314, %v4522
    %4524 = vmatmul.f32.gmra.mxu0 %v3628
    %v4525 = vpop.f32.mrf.mxu0
    %v4526 = vadd.f32 %v4317, %v4525
    %4527 = vmatmul.f32.gmra.mxu0 %v3631
    %v4528 = vpop.f32.mrf.mxu0
    %v4529 = vadd.f32 %v4320, %v4528
    %4530 = vmatmul.f32.gmra.mxu0 %v3633
    %v4531 = vpop.f32.mrf.mxu0
    %v4532 = vadd.f32 %v4323, %v4531
    %4533 = vmatmul.f32.gmra.mxu0 %v3636
    %v4534 = vpop.f32.mrf.mxu0
    %v4535 = vadd.f32 %v4326, %v4534
    %4536 = vmatmul.f32.gmra.mxu0 %v3638
    %v4537 = vpop.f32.mrf.mxu0
    %v4538 = vadd.f32 %v4329, %v4537
    %4539 = vmatmul.f32.gmra.mxu0 %v3641
    %v4540 = vpop.f32.mrf.mxu0
    %v4541 = vadd.f32 %v4332, %v4540
    %4542 = vmatmul.f32.gmra.mxu0 %v3643
    %v4543 = vpop.f32.mrf.mxu0
    %v4544 = vadd.f32 %v4335, %v4543
    %4545 = vmatmul.f32.gmra.mxu0 %v3646
    %v4546 = vpop.f32.mrf.mxu0
    %v4547 = vadd.f32 %v4338, %v4546
    %4548 = vmatmul.f32.gmra.mxu0 %v3648
    %v4549 = vpop.f32.mrf.mxu0
    %v4550 = vadd.f32 %v4341, %v4549
    %4551 = vmatmul.f32.gmra.mxu0 %v3651
    %v4552 = vpop.f32.mrf.mxu0
    %v4553 = vadd.f32 %v4344, %v4552
    %4554 = vmatmul.f32.gmra.mxu0 %v3653
    %v4555 = vpop.f32.mrf.mxu0
    %v4556 = vadd.f32 %v4347, %v4555
    %4557 = vmatmul.f32.gmra.mxu0 %v3656
    %v4558 = vpop.f32.mrf.mxu0
    %v4559 = vadd.f32 %v4350, %v4558
    %4560 = vmatmul.f32.gmra.mxu0 %v3658
    %v4561 = vpop.f32.mrf.mxu0
    %v4562 = vadd.f32 %v4353, %v4561
    %4563 = vmatmul.f32.gmra.mxu0 %v3661
    %v4564 = vpop.f32.mrf.mxu0
    %v4565 = vadd.f32 %v4356, %v4564
    %4566 = vmatmul.f32.gmra.mxu0 %v3663
    %v4567 = vpop.f32.mrf.mxu0
    %v4568 = vadd.f32 %v4359, %v4567
    %4569 = vmatmul.f32.gmra.mxu0 %v3666
    %v4570 = vpop.f32.mrf.mxu0
    %v4571 = vadd.f32 %v4362, %v4570
    %4572 = vmatmul.f32.gmra.mxu0 %v3668
    %v4573 = vpop.f32.mrf.mxu0
    %v4574 = vadd.f32 %v4365, %v4573
    %4575 = vmatmul.f32.gmra.mxu0 %v3671
    %v4576 = vpop.f32.mrf.mxu0
    %v4577 = vadd.f32 %v4368, %v4576
    %4578 = vmatmul.f32.gmra.mxu0 %v3673
    %v4579 = vpop.f32.mrf.mxu0
    %v4580 = vadd.f32 %v4371, %v4579
    %4581 = vmatmul.f32.gmra.mxu0 %v3676
    %v4582 = vpop.f32.mrf.mxu0
    %v4583 = vadd.f32 %v4374, %v4582
    %4584 = vmatmul.f32.gmra.mxu0 %v3678
    %v4585 = vpop.f32.mrf.mxu0
    %v4586 = vadd.f32 %v4377, %v4585
    %4587 = vmatmul.f32.gmra.mxu0 %v3681
    %v4588 = vpop.f32.mrf.mxu0
    %v4589 = vadd.f32 %v4380, %v4588
    %4590 = vmatmul.f32.gmra.mxu0 %v3683
    %v4591 = vpop.f32.mrf.mxu0
    %v4592 = vadd.f32 %v4383, %v4591
    %4593 = vmatmul.f32.gmra.mxu0 %v3686
    %v4594 = vpop.f32.mrf.mxu0
    %v4595 = vadd.f32 %v4386, %v4594
    %4596 = vmatmul.f32.gmra.mxu0 %v3688
    %v4597 = vpop.f32.mrf.mxu0
    %v4598 = vadd.f32 %v4389, %v4597
    %4599 = vmatmul.f32.gmra.mxu0 %v3691
    %v4600 = vpop.f32.mrf.mxu0
    %v4601 = vadd.f32 %v4392, %v4600
    %4602 = vmatmul.f32.gmra.mxu0 %v3693
    %v4603 = vpop.f32.mrf.mxu0
    %v4604 = vadd.f32 %v4395, %v4603
    %4605 = vmatmul.f32.gmra.mxu0 %v3696
    %v4606 = vpop.f32.mrf.mxu0
    %v4607 = vadd.f32 %v4398, %v4606
    %4608 = vmatmul.f32.gmra.mxu0 %v3698
    %v4609 = vpop.f32.mrf.mxu0
    %v4610 = vadd.f32 %v4401, %v4609
    %4611 = vmatmul.f32.gmra.mxu0 %v3701
    %v4612 = vpop.f32.mrf.mxu0
    %v4613 = vadd.f32 %v4404, %v4612
    %4614 = vmatmul.f32.gmra.mxu0 %v3703
    %v4615 = vpop.f32.mrf.mxu0
    %v4616 = vadd.f32 %v4407, %v4615
    %4617 = vmatmul.f32.gmra.mxu0 %v3706
    %v4618 = vpop.f32.mrf.mxu0
    %v4619 = vadd.f32 %v4410, %v4618
    %4620 = vmatmul.f32.gmra.mxu0 %v3708
    %v4621 = vpop.f32.mrf.mxu0
    %v4622 = vadd.f32 %v4413, %v4621
    %4623 = vmatmul.f32.gmra.mxu0 %v3711
    %v4624 = vpop.f32.mrf.mxu0
    %v4625 = vadd.f32 %v4416, %v4624
    %4626 = vmatmul.f32.gmra.mxu0 %v3713
    %v4627 = vpop.f32.mrf.mxu0
    %v4628 = vadd.f32 %v4419, %v4627
    %4629 = vmatmul.f32.gmra.mxu0 %v3716
    %v4630 = vpop.f32.mrf.mxu0
    %v4631 = vadd.f32 %v4422, %v4630
    %4632 = vmatmul.f32.gmra.mxu0 %v3718
    %v4633 = vpop.f32.mrf.mxu0
    %v4634 = vadd.f32 %v4425, %v4633
    %4635 = vmatmul.f32.gmra.mxu0 %v3721
    %v4636 = vpop.f32.mrf.mxu0
    %v4637 = vadd.f32 %v4428, %v4636
    %4638 = vmatmul.f32.gmra.mxu0 %v3723
    %v4639 = vpop.f32.mrf.mxu0
    %v4640 = vadd.f32 %v4431, %v4639
    %4641 = vdwg.mxu0
    %4642 = vmatpush.msra.mxu0 %v4127
    %4643 = vmatpush.msra.mxu0 %v4126
    %4644 = vmatpush.msra.mxu0 %v4125
    %4645 = vmatpush.msra.mxu0 %v4124
    %4646 = vmatpush.msra.mxu0 %v4123
    %4647 = vmatpush.msra.mxu0 %v4122
    %4648 = vmatpush.msra.mxu0 %v4121
    %4649 = vmatpush.msra.mxu0 %v4120
    %4650 = vmatpush.msra.mxu0 %v4119
    %4651 = vmatpush.msra.mxu0 %v4118
    %4652 = vmatpush.msra.mxu0 %v4117
    %4653 = vmatpush.msra.mxu0 %v4116
    %4654 = vmatpush.msra.mxu0 %v4115
    %4655 = vmatpush.msra.mxu0 %v4114
    %4656 = vmatpush.msra.mxu0 %v4113
    %4657 = vmatpush.msra.mxu0 %v4112
    %4658 = vmatmul.f32.gmra.mxu0 %v3790
    %v4659 = vpop.f32.mrf.mxu0
    %v4660 = vadd.f32 %v4451, %v4659
    %4661 = vmatmul.f32.gmra.mxu0 %v3792
    %v4662 = vpop.f32.mrf.mxu0
    %v4663 = vadd.f32 %v4454, %v4662
    %4664 = vmatmul.f32.gmra.mxu0 %v3795
    %v4665 = vpop.f32.mrf.mxu0
    %v4666 = vadd.f32 %v4457, %v4665
    %4667 = vmatmul.f32.gmra.mxu0 %v3797
    %v4668 = vpop.f32.mrf.mxu0
    %v4669 = vadd.f32 %v4460, %v4668
    %4670 = vmatmul.f32.gmra.mxu0 %v3800
    %v4671 = vpop.f32.mrf.mxu0
    %v4672 = vadd.f32 %v4463, %v4671
    %4673 = vmatmul.f32.gmra.mxu0 %v3802
    %v4674 = vpop.f32.mrf.mxu0
    %v4675 = vadd.f32 %v4466, %v4674
    %4676 = vmatmul.f32.gmra.mxu0 %v3805
    %v4677 = vpop.f32.mrf.mxu0
    %v4678 = vadd.f32 %v4469, %v4677
    %4679 = vmatmul.f32.gmra.mxu0 %v3807
    %v4680 = vpop.f32.mrf.mxu0
    %v4681 = vadd.f32 %v4472, %v4680
    %4682 = vmatmul.f32.gmra.mxu0 %v3810
    %v4683 = vpop.f32.mrf.mxu0
    %v4684 = vadd.f32 %v4475, %v4683
    %4685 = vmatmul.f32.gmra.mxu0 %v3812
    %v4686 = vpop.f32.mrf.mxu0
    %v4687 = vadd.f32 %v4478, %v4686
    %4688 = vmatmul.f32.gmra.mxu0 %v3815
    %v4689 = vpop.f32.mrf.mxu0
    %v4690 = vadd.f32 %v4481, %v4689
    %4691 = vmatmul.f32.gmra.mxu0 %v3817
    %v4692 = vpop.f32.mrf.mxu0
    %v4693 = vadd.f32 %v4484, %v4692
    %4694 = vmatmul.f32.gmra.mxu0 %v3820
    %v4695 = vpop.f32.mrf.mxu0
    %v4696 = vadd.f32 %v4487, %v4695
    %4697 = vmatmul.f32.gmra.mxu0 %v3822
    %v4698 = vpop.f32.mrf.mxu0
    %v4699 = vadd.f32 %v4490, %v4698
    %4700 = vmatmul.f32.gmra.mxu0 %v3825
    %v4701 = vpop.f32.mrf.mxu0
    %v4702 = vadd.f32 %v4493, %v4701
    %4703 = vmatmul.f32.gmra.mxu0 %v3827
    %v4704 = vpop.f32.mrf.mxu0
    %v4705 = vadd.f32 %v4496, %v4704
    %4706 = vmatmul.f32.gmra.mxu0 %v3830
    %v4707 = vpop.f32.mrf.mxu0
    %v4708 = vadd.f32 %v4499, %v4707
    %4709 = vmatmul.f32.gmra.mxu0 %v3832
    %v4710 = vpop.f32.mrf.mxu0
    %v4711 = vadd.f32 %v4502, %v4710
    %4712 = vmatmul.f32.gmra.mxu0 %v3835
    %v4713 = vpop.f32.mrf.mxu0
    %v4714 = vadd.f32 %v4505, %v4713
    %4715 = vmatmul.f32.gmra.mxu0 %v3837
    %v4716 = vpop.f32.mrf.mxu0
    %v4717 = vadd.f32 %v4508, %v4716
    %4718 = vmatmul.f32.gmra.mxu0 %v3840
    %v4719 = vpop.f32.mrf.mxu0
    %v4720 = vadd.f32 %v4511, %v4719
    %4721 = vmatmul.f32.gmra.mxu0 %v3842
    %v4722 = vpop.f32.mrf.mxu0
    %v4723 = vadd.f32 %v4514, %v4722
    %4724 = vmatmul.f32.gmra.mxu0 %v3845
    %v4725 = vpop.f32.mrf.mxu0
    %v4726 = vadd.f32 %v4517, %v4725
    %4727 = vmatmul.f32.gmra.mxu0 %v3847
    %v4728 = vpop.f32.mrf.mxu0
    %v4729 = vadd.f32 %v4520, %v4728
    %4730 = vmatmul.f32.gmra.mxu0 %v3850
    %v4731 = vpop.f32.mrf.mxu0
    %v4732 = vadd.f32 %v4523, %v4731
    %4733 = vmatmul.f32.gmra.mxu0 %v3852
    %v4734 = vpop.f32.mrf.mxu0
    %v4735 = vadd.f32 %v4526, %v4734
    %4736 = vmatmul.f32.gmra.mxu0 %v3855
    %v4737 = vpop.f32.mrf.mxu0
    %v4738 = vadd.f32 %v4529, %v4737
    %4739 = vmatmul.f32.gmra.mxu0 %v3857
    %v4740 = vpop.f32.mrf.mxu0
    %v4741 = vadd.f32 %v4532, %v4740
    %4742 = vmatmul.f32.gmra.mxu0 %v3860
    %v4743 = vpop.f32.mrf.mxu0
    %v4744 = vadd.f32 %v4535, %v4743
    %4745 = vmatmul.f32.gmra.mxu0 %v3862
    %v4746 = vpop.f32.mrf.mxu0
    %v4747 = vadd.f32 %v4538, %v4746
    %4748 = vmatmul.f32.gmra.mxu0 %v3865
    %v4749 = vpop.f32.mrf.mxu0
    %v4750 = vadd.f32 %v4541, %v4749
    %4751 = vmatmul.f32.gmra.mxu0 %v3867
    %v4752 = vpop.f32.mrf.mxu0
    %v4753 = vadd.f32 %v4544, %v4752
    %4754 = vmatmul.f32.gmra.mxu0 %v3870
    %v4755 = vpop.f32.mrf.mxu0
    %v4756 = vadd.f32 %v4547, %v4755
    %4757 = vmatmul.f32.gmra.mxu0 %v3872
    %v4758 = vpop.f32.mrf.mxu0
    %v4759 = vadd.f32 %v4550, %v4758
    %4760 = vmatmul.f32.gmra.mxu0 %v3875
    %v4761 = vpop.f32.mrf.mxu0
    %v4762 = vadd.f32 %v4553, %v4761
    %4763 = vmatmul.f32.gmra.mxu0 %v3877
    %v4764 = vpop.f32.mrf.mxu0
    %v4765 = vadd.f32 %v4556, %v4764
    %4766 = vmatmul.f32.gmra.mxu0 %v3880
    %v4767 = vpop.f32.mrf.mxu0
    %v4768 = vadd.f32 %v4559, %v4767
    %4769 = vmatmul.f32.gmra.mxu0 %v3882
    %v4770 = vpop.f32.mrf.mxu0
    %v4771 = vadd.f32 %v4562, %v4770
    %4772 = vmatmul.f32.gmra.mxu0 %v3885
    %v4773 = vpop.f32.mrf.mxu0
    %v4774 = vadd.f32 %v4565, %v4773
    %4775 = vmatmul.f32.gmra.mxu0 %v3887
    %v4776 = vpop.f32.mrf.mxu0
    %v4777 = vadd.f32 %v4568, %v4776
    %4778 = vmatmul.f32.gmra.mxu0 %v3890
    %v4779 = vpop.f32.mrf.mxu0
    %v4780 = vadd.f32 %v4571, %v4779
    %4781 = vmatmul.f32.gmra.mxu0 %v3892
    %v4782 = vpop.f32.mrf.mxu0
    %v4783 = vadd.f32 %v4574, %v4782
    %4784 = vmatmul.f32.gmra.mxu0 %v3895
    %v4785 = vpop.f32.mrf.mxu0
    %v4786 = vadd.f32 %v4577, %v4785
    %4787 = vmatmul.f32.gmra.mxu0 %v3897
    %v4788 = vpop.f32.mrf.mxu0
    %v4789 = vadd.f32 %v4580, %v4788
    %4790 = vmatmul.f32.gmra.mxu0 %v3900
    %v4791 = vpop.f32.mrf.mxu0
    %v4792 = vadd.f32 %v4583, %v4791
    %4793 = vmatmul.f32.gmra.mxu0 %v3902
    %v4794 = vpop.f32.mrf.mxu0
    %v4795 = vadd.f32 %v4586, %v4794
    %4796 = vmatmul.f32.gmra.mxu0 %v3905
    %v4797 = vpop.f32.mrf.mxu0
    %v4798 = vadd.f32 %v4589, %v4797
    %4799 = vmatmul.f32.gmra.mxu0 %v3907
    %v4800 = vpop.f32.mrf.mxu0
    %v4801 = vadd.f32 %v4592, %v4800
    %4802 = vmatmul.f32.gmra.mxu0 %v3910
    %v4803 = vpop.f32.mrf.mxu0
    %v4804 = vadd.f32 %v4595, %v4803
    %4805 = vmatmul.f32.gmra.mxu0 %v3912
    %v4806 = vpop.f32.mrf.mxu0
    %v4807 = vadd.f32 %v4598, %v4806
    %4808 = vmatmul.f32.gmra.mxu0 %v3915
    %v4809 = vpop.f32.mrf.mxu0
    %v4810 = vadd.f32 %v4601, %v4809
    %4811 = vmatmul.f32.gmra.mxu0 %v3917
    %v4812 = vpop.f32.mrf.mxu0
    %v4813 = vadd.f32 %v4604, %v4812
    %4814 = vmatmul.f32.gmra.mxu0 %v3920
    %v4815 = vpop.f32.mrf.mxu0
    %v4816 = vadd.f32 %v4607, %v4815
    %4817 = vmatmul.f32.gmra.mxu0 %v3922
    %v4818 = vpop.f32.mrf.mxu0
    %v4819 = vadd.f32 %v4610, %v4818
    %4820 = vmatmul.f32.gmra.mxu0 %v3925
    %v4821 = vpop.f32.mrf.mxu0
    %v4822 = vadd.f32 %v4613, %v4821
    %4823 = vmatmul.f32.gmra.mxu0 %v3927
    %v4824 = vpop.f32.mrf.mxu0
    %v4825 = vadd.f32 %v4616, %v4824
    %4826 = vmatmul.f32.gmra.mxu0 %v3930
    %v4827 = vpop.f32.mrf.mxu0
    %v4828 = vadd.f32 %v4619, %v4827
    %4829 = vmatmul.f32.gmra.mxu0 %v3932
    %v4830 = vpop.f32.mrf.mxu0
    %v4831 = vadd.f32 %v4622, %v4830
    %4832 = vmatmul.f32.gmra.mxu0 %v3935
    %v4833 = vpop.f32.mrf.mxu0
    %v4834 = vadd.f32 %v4625, %v4833
    %4835 = vmatmul.f32.gmra.mxu0 %v3937
    %v4836 = vpop.f32.mrf.mxu0
    %v4837 = vadd.f32 %v4628, %v4836
    %4838 = vmatmul.f32.gmra.mxu0 %v3940
    %v4839 = vpop.f32.mrf.mxu0
    %v4840 = vadd.f32 %v4631, %v4839
    %4841 = vmatmul.f32.gmra.mxu0 %v3942
    %v4842 = vpop.f32.mrf.mxu0
    %v4843 = vadd.f32 %v4634, %v4842
    %4844 = vmatmul.f32.gmra.mxu0 %v3945
    %v4845 = vpop.f32.mrf.mxu0
    %v4846 = vadd.f32 %v4637, %v4845
    %4847 = vmatmul.f32.gmra.mxu0 %v3947
    %v4848 = vpop.f32.mrf.mxu0
    %v4849 = vadd.f32 %v4640, %v4848
    %4850 = vdwg.mxu0
    %4851 = vmatpush.msra.mxu0 %v4143
    %4852 = vmatpush.msra.mxu0 %v4142
    %4853 = vmatpush.msra.mxu0 %v4141
    %4854 = vmatpush.msra.mxu0 %v4140
    %4855 = vmatpush.msra.mxu0 %v4139
    %4856 = vmatpush.msra.mxu0 %v4138
    %4857 = vmatpush.msra.mxu0 %v4137
    %4858 = vmatpush.msra.mxu0 %v4136
    %4859 = vmatpush.msra.mxu0 %v4135
    %4860 = vmatpush.msra.mxu0 %v4134
    %4861 = vmatpush.msra.mxu0 %v4133
    %4862 = vmatpush.msra.mxu0 %v4132
    %4863 = vmatpush.msra.mxu0 %v4131
    %4864 = vmatpush.msra.mxu0 %v4130
    %4865 = vmatpush.msra.mxu0 %v4129
    %4866 = vmatpush.msra.mxu0 %v4128
    %4867 = vmatmul.f32.gmra.mxu0 %v3363
    %v4868 = vpop.f32.mrf.mxu0
    %v4869 = vadd.f32 %v4660, %v4868
    %4870 = vmatmul.f32.gmra.mxu0 %v3364
    %v4871 = vpop.f32.mrf.mxu0
    %v4872 = vadd.f32 %v4663, %v4871
    %4873 = vmatmul.f32.gmra.mxu0 %v3366
    %v4874 = vpop.f32.mrf.mxu0
    %v4875 = vadd.f32 %v4666, %v4874
    %4876 = vmatmul.f32.gmra.mxu0 %v3367
    %v4877 = vpop.f32.mrf.mxu0
    %v4878 = vadd.f32 %v4669, %v4877
    %4879 = vmatmul.f32.gmra.mxu0 %v3369
    %v4880 = vpop.f32.mrf.mxu0
    %v4881 = vadd.f32 %v4672, %v4880
    %4882 = vmatmul.f32.gmra.mxu0 %v3370
    %v4883 = vpop.f32.mrf.mxu0
    %v4884 = vadd.f32 %v4675, %v4883
    %4885 = vmatmul.f32.gmra.mxu0 %v3372
    %v4886 = vpop.f32.mrf.mxu0
    %v4887 = vadd.f32 %v4678, %v4886
    %4888 = vmatmul.f32.gmra.mxu0 %v3373
    %v4889 = vpop.f32.mrf.mxu0
    %v4890 = vadd.f32 %v4681, %v4889
    %4891 = vmatmul.f32.gmra.mxu0 %v3375
    %v4892 = vpop.f32.mrf.mxu0
    %v4893 = vadd.f32 %v4684, %v4892
    %4894 = vmatmul.f32.gmra.mxu0 %v3376
    %v4895 = vpop.f32.mrf.mxu0
    %v4896 = vadd.f32 %v4687, %v4895
    %4897 = vmatmul.f32.gmra.mxu0 %v3378
    %v4898 = vpop.f32.mrf.mxu0
    %v4899 = vadd.f32 %v4690, %v4898
    %4900 = vmatmul.f32.gmra.mxu0 %v3379
    %v4901 = vpop.f32.mrf.mxu0
    %v4902 = vadd.f32 %v4693, %v4901
    %4903 = vmatmul.f32.gmra.mxu0 %v3381
    %v4904 = vpop.f32.mrf.mxu0
    %v4905 = vadd.f32 %v4696, %v4904
    %4906 = vmatmul.f32.gmra.mxu0 %v3382
    %v4907 = vpop.f32.mrf.mxu0
    %v4908 = vadd.f32 %v4699, %v4907
    %4909 = vmatmul.f32.gmra.mxu0 %v3384
    %v4910 = vpop.f32.mrf.mxu0
    %v4911 = vadd.f32 %v4702, %v4910
    %4912 = vmatmul.f32.gmra.mxu0 %v3385
    %v4913 = vpop.f32.mrf.mxu0
    %v4914 = vadd.f32 %v4705, %v4913
    %4915 = vmatmul.f32.gmra.mxu0 %v3387
    %v4916 = vpop.f32.mrf.mxu0
    %v4917 = vadd.f32 %v4708, %v4916
    %4918 = vmatmul.f32.gmra.mxu0 %v3388
    %v4919 = vpop.f32.mrf.mxu0
    %v4920 = vadd.f32 %v4711, %v4919
    %4921 = vmatmul.f32.gmra.mxu0 %v3390
    %v4922 = vpop.f32.mrf.mxu0
    %v4923 = vadd.f32 %v4714, %v4922
    %4924 = vmatmul.f32.gmra.mxu0 %v3391
    %v4925 = vpop.f32.mrf.mxu0
    %v4926 = vadd.f32 %v4717, %v4925
    %4927 = vmatmul.f32.gmra.mxu0 %v3393
    %v4928 = vpop.f32.mrf.mxu0
    %v4929 = vadd.f32 %v4720, %v4928
    %4930 = vmatmul.f32.gmra.mxu0 %v3394
    %v4931 = vpop.f32.mrf.mxu0
    %v4932 = vadd.f32 %v4723, %v4931
    %4933 = vmatmul.f32.gmra.mxu0 %v3396
    %v4934 = vpop.f32.mrf.mxu0
    %v4935 = vadd.f32 %v4726, %v4934
    %4936 = vmatmul.f32.gmra.mxu0 %v3397
    %v4937 = vpop.f32.mrf.mxu0
    %v4938 = vadd.f32 %v4729, %v4937
    %4939 = vmatmul.f32.gmra.mxu0 %v3399
    %v4940 = vpop.f32.mrf.mxu0
    %v4941 = vadd.f32 %v4732, %v4940
    %4942 = vmatmul.f32.gmra.mxu0 %v3400
    %v4943 = vpop.f32.mrf.mxu0
    %v4944 = vadd.f32 %v4735, %v4943
    %4945 = vmatmul.f32.gmra.mxu0 %v3402
    %v4946 = vpop.f32.mrf.mxu0
    %v4947 = vadd.f32 %v4738, %v4946
    %4948 = vmatmul.f32.gmra.mxu0 %v3403
    %v4949 = vpop.f32.mrf.mxu0
    %v4950 = vadd.f32 %v4741, %v4949
    %4951 = vmatmul.f32.gmra.mxu0 %v3405
    %v4952 = vpop.f32.mrf.mxu0
    %v4953 = vadd.f32 %v4744, %v4952
    %4954 = vmatmul.f32.gmra.mxu0 %v3406
    %v4955 = vpop.f32.mrf.mxu0
    %v4956 = vadd.f32 %v4747, %v4955
    %4957 = vmatmul.f32.gmra.mxu0 %v3408
    %v4958 = vpop.f32.mrf.mxu0
    %v4959 = vadd.f32 %v4750, %v4958
    %4960 = vmatmul.f32.gmra.mxu0 %v3409
    %v4961 = vpop.f32.mrf.mxu0
    %v4962 = vadd.f32 %v4753, %v4961
    %4963 = vmatmul.f32.gmra.mxu0 %v3417
    %v4964 = vpop.f32.mrf.mxu0
    %v4965 = vadd.f32 %v4756, %v4964
    %4966 = vmatmul.f32.gmra.mxu0 %v3418
    %v4967 = vpop.f32.mrf.mxu0
    %v4968 = vadd.f32 %v4759, %v4967
    %4969 = vmatmul.f32.gmra.mxu0 %v3420
    %v4970 = vpop.f32.mrf.mxu0
    %v4971 = vadd.f32 %v4762, %v4970
    %4972 = vmatmul.f32.gmra.mxu0 %v3421
    %v4973 = vpop.f32.mrf.mxu0
    %v4974 = vadd.f32 %v4765, %v4973
    %4975 = vmatmul.f32.gmra.mxu0 %v3423
    %v4976 = vpop.f32.mrf.mxu0
    %v4977 = vadd.f32 %v4768, %v4976
    %4978 = vmatmul.f32.gmra.mxu0 %v3424
    %v4979 = vpop.f32.mrf.mxu0
    %v4980 = vadd.f32 %v4771, %v4979
    %4981 = vmatmul.f32.gmra.mxu0 %v3426
    %v4982 = vpop.f32.mrf.mxu0
    %v4983 = vadd.f32 %v4774, %v4982
    %4984 = vmatmul.f32.gmra.mxu0 %v3427
    %v4985 = vpop.f32.mrf.mxu0
    %v4986 = vadd.f32 %v4777, %v4985
    %4987 = vmatmul.f32.gmra.mxu0 %v3429
    %v4988 = vpop.f32.mrf.mxu0
    %v4989 = vadd.f32 %v4780, %v4988
    %4990 = vmatmul.f32.gmra.mxu0 %v3430
    %v4991 = vpop.f32.mrf.mxu0
    %v4992 = vadd.f32 %v4783, %v4991
    %4993 = vmatmul.f32.gmra.mxu0 %v3432
    %v4994 = vpop.f32.mrf.mxu0
    %v4995 = vadd.f32 %v4786, %v4994
    %4996 = vmatmul.f32.gmra.mxu0 %v3433
    %v4997 = vpop.f32.mrf.mxu0
    %v4998 = vadd.f32 %v4789, %v4997
    %4999 = vmatmul.f32.gmra.mxu0 %v3435
    %v5000 = vpop.f32.mrf.mxu0
    %v5001 = vadd.f32 %v4792, %v5000
    %5002 = vmatmul.f32.gmra.mxu0 %v3436
    %v5003 = vpop.f32.mrf.mxu0
    %v5004 = vadd.f32 %v4795, %v5003
    %5005 = vmatmul.f32.gmra.mxu0 %v3438
    %v5006 = vpop.f32.mrf.mxu0
    %v5007 = vadd.f32 %v4798, %v5006
    %5008 = vmatmul.f32.gmra.mxu0 %v3439
    %v5009 = vpop.f32.mrf.mxu0
    %v5010 = vadd.f32 %v4801, %v5009
    %5011 = vmatmul.f32.gmra.mxu0 %v3441
    %v5012 = vpop.f32.mrf.mxu0
    %v5013 = vadd.f32 %v4804, %v5012
    %5014 = vmatmul.f32.gmra.mxu0 %v3442
    %v5015 = vpop.f32.mrf.mxu0
    %v5016 = vadd.f32 %v4807, %v5015
    %5017 = vmatmul.f32.gmra.mxu0 %v3444
    %v5018 = vpop.f32.mrf.mxu0
    %v5019 = vadd.f32 %v4810, %v5018
    %5020 = vmatmul.f32.gmra.mxu0 %v3445
    %v5021 = vpop.f32.mrf.mxu0
    %v5022 = vadd.f32 %v4813, %v5021
    %5023 = vmatmul.f32.gmra.mxu0 %v3447
    %v5024 = vpop.f32.mrf.mxu0
    %v5025 = vadd.f32 %v4816, %v5024
    %5026 = vmatmul.f32.gmra.mxu0 %v3448
    %v5027 = vpop.f32.mrf.mxu0
    %v5028 = vadd.f32 %v4819, %v5027
    %5029 = vmatmul.f32.gmra.mxu0 %v3450
    %v5030 = vpop.f32.mrf.mxu0
    %v5031 = vadd.f32 %v4822, %v5030
    %5032 = vmatmul.f32.gmra.mxu0 %v3451
    %v5033 = vpop.f32.mrf.mxu0
    %v5034 = vadd.f32 %v4825, %v5033
    %5035 = vmatmul.f32.gmra.mxu0 %v3453
    %v5036 = vpop.f32.mrf.mxu0
    %v5037 = vadd.f32 %v4828, %v5036
    %5038 = vmatmul.f32.gmra.mxu0 %v3454
    %v5039 = vpop.f32.mrf.mxu0
    %v5040 = vadd.f32 %v4831, %v5039
    %5041 = vmatmul.f32.gmra.mxu0 %v3456
    %v5042 = vpop.f32.mrf.mxu0
    %v5043 = vadd.f32 %v4834, %v5042
    %5044 = vmatmul.f32.gmra.mxu0 %v3457
    %v5045 = vpop.f32.mrf.mxu0
    %v5046 = vadd.f32 %v4837, %v5045
    %5047 = vmatmul.f32.gmra.mxu0 %v3459
    %v5048 = vpop.f32.mrf.mxu0
    %v5049 = vadd.f32 %v4840, %v5048
    %5050 = vmatmul.f32.gmra.mxu0 %v3460
    %v5051 = vpop.f32.mrf.mxu0
    %v5052 = vadd.f32 %v4843, %v5051
    %5053 = vmatmul.f32.gmra.mxu0 %v3462
    %v5054 = vpop.f32.mrf.mxu0
    %v5055 = vadd.f32 %v4846, %v5054
    %5056 = vmatmul.f32.gmra.mxu0 %v3463
    %v5057 = vpop.f32.mrf.mxu0
    %v5058 = vadd.f32 %v4849, %v5057
    %5059 = vdwg.mxu0
    %5060 = vmatpush.msra.mxu0 %v4159
    %5061 = vmatpush.msra.mxu0 %v4158
    %5062 = vmatpush.msra.mxu0 %v4157
    %5063 = vmatpush.msra.mxu0 %v4156
    %5064 = vmatpush.msra.mxu0 %v4155
    %5065 = vmatpush.msra.mxu0 %v4154
    %5066 = vmatpush.msra.mxu0 %v4153
    %5067 = vmatpush.msra.mxu0 %v4152
    %5068 = vmatpush.msra.mxu0 %v4151
    %5069 = vmatpush.msra.mxu0 %v4150
    %5070 = vmatpush.msra.mxu0 %v4149
    %5071 = vmatpush.msra.mxu0 %v4148
    %5072 = vmatpush.msra.mxu0 %v4147
    %5073 = vmatpush.msra.mxu0 %v4146
    %5074 = vmatpush.msra.mxu0 %v4145
    %5075 = vmatpush.msra.mxu0 %v4144
    %5076 = vmatmul.f32.gmra.mxu0 %v3571
    %v5077 = vpop.f32.mrf.mxu0
    %v5078 = vadd.f32 %v4869, %v5077
    %5079 = vmatmul.f32.gmra.mxu0 %v3573
    %v5080 = vpop.f32.mrf.mxu0
    %v5081 = vadd.f32 %v4872, %v5080
    %5082 = vmatmul.f32.gmra.mxu0 %v3576
    %v5083 = vpop.f32.mrf.mxu0
    %v5084 = vadd.f32 %v4875, %v5083
    %5085 = vmatmul.f32.gmra.mxu0 %v3578
    %v5086 = vpop.f32.mrf.mxu0
    %v5087 = vadd.f32 %v4878, %v5086
    %5088 = vmatmul.f32.gmra.mxu0 %v3581
    %v5089 = vpop.f32.mrf.mxu0
    %v5090 = vadd.f32 %v4881, %v5089
    %5091 = vmatmul.f32.gmra.mxu0 %v3583
    %v5092 = vpop.f32.mrf.mxu0
    %v5093 = vadd.f32 %v4884, %v5092
    %5094 = vmatmul.f32.gmra.mxu0 %v3586
    %v5095 = vpop.f32.mrf.mxu0
    %v5096 = vadd.f32 %v4887, %v5095
    %5097 = vmatmul.f32.gmra.mxu0 %v3588
    %v5098 = vpop.f32.mrf.mxu0
    %v5099 = vadd.f32 %v4890, %v5098
    %5100 = vmatmul.f32.gmra.mxu0 %v3591
    %v5101 = vpop.f32.mrf.mxu0
    %v5102 = vadd.f32 %v4893, %v5101
    %5103 = vmatmul.f32.gmra.mxu0 %v3593
    %v5104 = vpop.f32.mrf.mxu0
    %v5105 = vadd.f32 %v4896, %v5104
    %5106 = vmatmul.f32.gmra.mxu0 %v3596
    %v5107 = vpop.f32.mrf.mxu0
    %v5108 = vadd.f32 %v4899, %v5107
    %5109 = vmatmul.f32.gmra.mxu0 %v3598
    %v5110 = vpop.f32.mrf.mxu0
    %v5111 = vadd.f32 %v4902, %v5110
    %5112 = vmatmul.f32.gmra.mxu0 %v3601
    %v5113 = vpop.f32.mrf.mxu0
    %v5114 = vadd.f32 %v4905, %v5113
    %5115 = vmatmul.f32.gmra.mxu0 %v3603
    %v5116 = vpop.f32.mrf.mxu0
    %v5117 = vadd.f32 %v4908, %v5116
    %5118 = vmatmul.f32.gmra.mxu0 %v3606
    %v5119 = vpop.f32.mrf.mxu0
    %v5120 = vadd.f32 %v4911, %v5119
    %5121 = vmatmul.f32.gmra.mxu0 %v3608
    %v5122 = vpop.f32.mrf.mxu0
    %v5123 = vadd.f32 %v4914, %v5122
    %5124 = vmatmul.f32.gmra.mxu0 %v3611
    %v5125 = vpop.f32.mrf.mxu0
    %v5126 = vadd.f32 %v4917, %v5125
    %5127 = vmatmul.f32.gmra.mxu0 %v3613
    %v5128 = vpop.f32.mrf.mxu0
    %v5129 = vadd.f32 %v4920, %v5128
    %5130 = vmatmul.f32.gmra.mxu0 %v3616
    %v5131 = vpop.f32.mrf.mxu0
    %v5132 = vadd.f32 %v4923, %v5131
    %5133 = vmatmul.f32.gmra.mxu0 %v3618
    %v5134 = vpop.f32.mrf.mxu0
    %v5135 = vadd.f32 %v4926, %v5134
    %5136 = vmatmul.f32.gmra.mxu0 %v3621
    %v5137 = vpop.f32.mrf.mxu0
    %v5138 = vadd.f32 %v4929, %v5137
    %5139 = vmatmul.f32.gmra.mxu0 %v3623
    %v5140 = vpop.f32.mrf.mxu0
    %v5141 = vadd.f32 %v4932, %v5140
    %5142 = vmatmul.f32.gmra.mxu0 %v3626
    %v5143 = vpop.f32.mrf.mxu0
    %v5144 = vadd.f32 %v4935, %v5143
    %5145 = vmatmul.f32.gmra.mxu0 %v3628
    %v5146 = vpop.f32.mrf.mxu0
    %v5147 = vadd.f32 %v4938, %v5146
    %5148 = vmatmul.f32.gmra.mxu0 %v3631
    %v5149 = vpop.f32.mrf.mxu0
    %v5150 = vadd.f32 %v4941, %v5149
    %5151 = vmatmul.f32.gmra.mxu0 %v3633
    %v5152 = vpop.f32.mrf.mxu0
    %v5153 = vadd.f32 %v4944, %v5152
    %5154 = vmatmul.f32.gmra.mxu0 %v3636
    %v5155 = vpop.f32.mrf.mxu0
    %v5156 = vadd.f32 %v4947, %v5155
    %5157 = vmatmul.f32.gmra.mxu0 %v3638
    %v5158 = vpop.f32.mrf.mxu0
    %v5159 = vadd.f32 %v4950, %v5158
    %5160 = vmatmul.f32.gmra.mxu0 %v3641
    %v5161 = vpop.f32.mrf.mxu0
    %v5162 = vadd.f32 %v4953, %v5161
    %5163 = vmatmul.f32.gmra.mxu0 %v3643
    %v5164 = vpop.f32.mrf.mxu0
    %v5165 = vadd.f32 %v4956, %v5164
    %5166 = vmatmul.f32.gmra.mxu0 %v4020
    %v5167 = vpop.f32.mrf.mxu0
    %v5168 = vadd.f32 %v4959, %v5167
    %5169 = vmatmul.f32.gmra.mxu0 %v4022
    %v5170 = vpop.f32.mrf.mxu0
    %v5171 = vadd.f32 %v4962, %v5170
    %5172 = vmatmul.f32.gmra.mxu0 %v3651
    %v5173 = vpop.f32.mrf.mxu0
    %v5174 = vadd.f32 %v4965, %v5173
    %5175 = vmatmul.f32.gmra.mxu0 %v3653
    %v5176 = vpop.f32.mrf.mxu0
    %v5177 = vadd.f32 %v4968, %v5176
    %5178 = vmatmul.f32.gmra.mxu0 %v3656
    %v5179 = vpop.f32.mrf.mxu0
    %v5180 = vadd.f32 %v4971, %v5179
    %5181 = vmatmul.f32.gmra.mxu0 %v3658
    %v5182 = vpop.f32.mrf.mxu0
    %v5183 = vadd.f32 %v4974, %v5182
    %5184 = vmatmul.f32.gmra.mxu0 %v3661
    %v5185 = vpop.f32.mrf.mxu0
    %v5186 = vadd.f32 %v4977, %v5185
    %5187 = vmatmul.f32.gmra.mxu0 %v3663
    %v5188 = vpop.f32.mrf.mxu0
    %v5189 = vadd.f32 %v4980, %v5188
    %5190 = vmatmul.f32.gmra.mxu0 %v3666
    %v5191 = vpop.f32.mrf.mxu0
    %v5192 = vadd.f32 %v4983, %v5191
    %5193 = vmatmul.f32.gmra.mxu0 %v3668
    %v5194 = vpop.f32.mrf.mxu0
    %v5195 = vadd.f32 %v4986, %v5194
    %5196 = vmatmul.f32.gmra.mxu0 %v3671
    %v5197 = vpop.f32.mrf.mxu0
    %v5198 = vadd.f32 %v4989, %v5197
    %5199 = vmatmul.f32.gmra.mxu0 %v3673
    %v5200 = vpop.f32.mrf.mxu0
    %v5201 = vadd.f32 %v4992, %v5200
    %5202 = vmatmul.f32.gmra.mxu0 %v3676
    %v5203 = vpop.f32.mrf.mxu0
    %v5204 = vadd.f32 %v4995, %v5203
    %5205 = vmatmul.f32.gmra.mxu0 %v3678
    %v5206 = vpop.f32.mrf.mxu0
    %v5207 = vadd.f32 %v4998, %v5206
    %5208 = vmatmul.f32.gmra.mxu0 %v3681
    %v5209 = vpop.f32.mrf.mxu0
    %v5210 = vadd.f32 %v5001, %v5209
    %5211 = vmatmul.f32.gmra.mxu0 %v3683
    %v5212 = vpop.f32.mrf.mxu0
    %v5213 = vadd.f32 %v5004, %v5212
    %5214 = vmatmul.f32.gmra.mxu0 %v3686
    %v5215 = vpop.f32.mrf.mxu0
    %v5216 = vadd.f32 %v5007, %v5215
    %5217 = vmatmul.f32.gmra.mxu0 %v3688
    %v5218 = vpop.f32.mrf.mxu0
    %v5219 = vadd.f32 %v5010, %v5218
    %5220 = vmatmul.f32.gmra.mxu0 %v3691
    %v5221 = vpop.f32.mrf.mxu0
    %v5222 = vadd.f32 %v5013, %v5221
    %5223 = vmatmul.f32.gmra.mxu0 %v3693
    %v5224 = vpop.f32.mrf.mxu0
    %v5225 = vadd.f32 %v5016, %v5224
    %5226 = vmatmul.f32.gmra.mxu0 %v3696
    %v5227 = vpop.f32.mrf.mxu0
    %v5228 = vadd.f32 %v5019, %v5227
    %5229 = vmatmul.f32.gmra.mxu0 %v3698
    %v5230 = vpop.f32.mrf.mxu0
    %v5231 = vadd.f32 %v5022, %v5230
    %5232 = vmatmul.f32.gmra.mxu0 %v3701
    %v5233 = vpop.f32.mrf.mxu0
    %v5234 = vadd.f32 %v5025, %v5233
    %5235 = vmatmul.f32.gmra.mxu0 %v3703
    %v5236 = vpop.f32.mrf.mxu0
    %v5237 = vadd.f32 %v5028, %v5236
    %5238 = vmatmul.f32.gmra.mxu0 %v3706
    %v5239 = vpop.f32.mrf.mxu0
    %v5240 = vadd.f32 %v5031, %v5239
    %5241 = vmatmul.f32.gmra.mxu0 %v3708
    %v5242 = vpop.f32.mrf.mxu0
    %v5243 = vadd.f32 %v5034, %v5242
    %5244 = vmatmul.f32.gmra.mxu0 %v3711
    %v5245 = vpop.f32.mrf.mxu0
    %v5246 = vadd.f32 %v5037, %v5245
    %5247 = vmatmul.f32.gmra.mxu0 %v3713
    %v5248 = vpop.f32.mrf.mxu0
    %v5249 = vadd.f32 %v5040, %v5248
    %5250 = vmatmul.f32.gmra.mxu0 %v3716
    %v5251 = vpop.f32.mrf.mxu0
    %v5252 = vadd.f32 %v5043, %v5251
    %5253 = vmatmul.f32.gmra.mxu0 %v3718
    %v5254 = vpop.f32.mrf.mxu0
    %v5255 = vadd.f32 %v5046, %v5254
    %5256 = vmatmul.f32.gmra.mxu0 %v3721
    %v5257 = vpop.f32.mrf.mxu0
    %v5258 = vadd.f32 %v5049, %v5257
    %5259 = vmatmul.f32.gmra.mxu0 %v3723
    %v5260 = vpop.f32.mrf.mxu0
    %v5261 = vadd.f32 %v5052, %v5260
    %5262 = vmatmul.f32.gmra.mxu0 %v4025
    %v5263 = vpop.f32.mrf.mxu0
    %v5264 = vadd.f32 %v5055, %v5263
    %5265 = vmatmul.f32.gmra.mxu0 %v4027
    %v5266 = vpop.f32.mrf.mxu0
    %v5267 = vadd.f32 %v5058, %v5266
    %5268 = vdwg.mxu0
    %5269 = vmatpush.msra.mxu0 %v4175
    %5270 = vmatpush.msra.mxu0 %v4174
    %5271 = vmatpush.msra.mxu0 %v4173
    %5272 = vmatpush.msra.mxu0 %v4172
    %5273 = vmatpush.msra.mxu0 %v4171
    %5274 = vmatpush.msra.mxu0 %v4170
    %5275 = vmatpush.msra.mxu0 %v4169
    %5276 = vmatpush.msra.mxu0 %v4168
    %5277 = vmatpush.msra.mxu0 %v4167
    %5278 = vmatpush.msra.mxu0 %v4166
    %5279 = vmatpush.msra.mxu0 %v4165
    %5280 = vmatpush.msra.mxu0 %v4164
    %5281 = vmatpush.msra.mxu0 %v4163
    %5282 = vmatpush.msra.mxu0 %v4162
    %5283 = vmatpush.msra.mxu0 %v4161
    %5284 = vmatpush.msra.mxu0 %v4160
    %5285 = vmatmul.f32.gmra.mxu0 %v3795
    %v5286 = vpop.f32.mrf.mxu0
    %v5287 = vadd.f32 %v5078, %v5286
    %5288 = vmatmul.f32.gmra.mxu0 %v3797
    %v5289 = vpop.f32.mrf.mxu0
    %v5290 = vadd.f32 %v5081, %v5289
    %5291 = vmatmul.f32.gmra.mxu0 %v3800
    %v5292 = vpop.f32.mrf.mxu0
    %v5293 = vadd.f32 %v5084, %v5292
    %5294 = vmatmul.f32.gmra.mxu0 %v3802
    %v5295 = vpop.f32.mrf.mxu0
    %v5296 = vadd.f32 %v5087, %v5295
    %5297 = vmatmul.f32.gmra.mxu0 %v3805
    %v5298 = vpop.f32.mrf.mxu0
    %v5299 = vadd.f32 %v5090, %v5298
    %5300 = vmatmul.f32.gmra.mxu0 %v3807
    %v5301 = vpop.f32.mrf.mxu0
    %v5302 = vadd.f32 %v5093, %v5301
    %5303 = vmatmul.f32.gmra.mxu0 %v3810
    %v5304 = vpop.f32.mrf.mxu0
    %v5305 = vadd.f32 %v5096, %v5304
    %5306 = vmatmul.f32.gmra.mxu0 %v3812
    %v5307 = vpop.f32.mrf.mxu0
    %v5308 = vadd.f32 %v5099, %v5307
    %5309 = vmatmul.f32.gmra.mxu0 %v3815
    %v5310 = vpop.f32.mrf.mxu0
    %v5311 = vadd.f32 %v5102, %v5310
    %5312 = vmatmul.f32.gmra.mxu0 %v3817
    %v5313 = vpop.f32.mrf.mxu0
    %v5314 = vadd.f32 %v5105, %v5313
    %5315 = vmatmul.f32.gmra.mxu0 %v3820
    %v5316 = vpop.f32.mrf.mxu0
    %v5317 = vadd.f32 %v5108, %v5316
    %5318 = vmatmul.f32.gmra.mxu0 %v3822
    %v5319 = vpop.f32.mrf.mxu0
    %v5320 = vadd.f32 %v5111, %v5319
    %5321 = vmatmul.f32.gmra.mxu0 %v3825
    %v5322 = vpop.f32.mrf.mxu0
    %v5323 = vadd.f32 %v5114, %v5322
    %5324 = vmatmul.f32.gmra.mxu0 %v3827
    %v5325 = vpop.f32.mrf.mxu0
    %v5326 = vadd.f32 %v5117, %v5325
    %5327 = vmatmul.f32.gmra.mxu0 %v3830
    %v5328 = vpop.f32.mrf.mxu0
    %v5329 = vadd.f32 %v5120, %v5328
    %5330 = vmatmul.f32.gmra.mxu0 %v3832
    %v5331 = vpop.f32.mrf.mxu0
    %v5332 = vadd.f32 %v5123, %v5331
    %5333 = vmatmul.f32.gmra.mxu0 %v3835
    %v5334 = vpop.f32.mrf.mxu0
    %v5335 = vadd.f32 %v5126, %v5334
    %5336 = vmatmul.f32.gmra.mxu0 %v3837
    %v5337 = vpop.f32.mrf.mxu0
    %v5338 = vadd.f32 %v5129, %v5337
    %5339 = vmatmul.f32.gmra.mxu0 %v3840
    %v5340 = vpop.f32.mrf.mxu0
    %v5341 = vadd.f32 %v5132, %v5340
    %5342 = vmatmul.f32.gmra.mxu0 %v3842
    %v5343 = vpop.f32.mrf.mxu0
    %v5344 = vadd.f32 %v5135, %v5343
    %5345 = vmatmul.f32.gmra.mxu0 %v3845
    %v5346 = vpop.f32.mrf.mxu0
    %v5347 = vadd.f32 %v5138, %v5346
    %5348 = vmatmul.f32.gmra.mxu0 %v3847
    %v5349 = vpop.f32.mrf.mxu0
    %v5350 = vadd.f32 %v5141, %v5349
    %5351 = vmatmul.f32.gmra.mxu0 %v3850
    %v5352 = vpop.f32.mrf.mxu0
    %v5353 = vadd.f32 %v5144, %v5352
    %5354 = vmatmul.f32.gmra.mxu0 %v3852
    %v5355 = vpop.f32.mrf.mxu0
    %v5356 = vadd.f32 %v5147, %v5355
    %5357 = vmatmul.f32.gmra.mxu0 %v3855
    %v5358 = vpop.f32.mrf.mxu0
    %v5359 = vadd.f32 %v5150, %v5358
    %5360 = vmatmul.f32.gmra.mxu0 %v3857
    %v5361 = vpop.f32.mrf.mxu0
    %v5362 = vadd.f32 %v5153, %v5361
    %5363 = vmatmul.f32.gmra.mxu0 %v3860
    %v5364 = vpop.f32.mrf.mxu0
    %v5365 = vadd.f32 %v5156, %v5364
    %5366 = vmatmul.f32.gmra.mxu0 %v3862
    %v5367 = vpop.f32.mrf.mxu0
    %v5368 = vadd.f32 %v5159, %v5367
    %5369 = vmatmul.f32.gmra.mxu0 %v3865
    %v5370 = vpop.f32.mrf.mxu0
    %v5371 = vadd.f32 %v5162, %v5370
    %5372 = vmatmul.f32.gmra.mxu0 %v3867
    %v5373 = vpop.f32.mrf.mxu0
    %v5374 = vadd.f32 %v5165, %v5373
    %5375 = vmatmul.f32.gmra.mxu0 %v4034
    %v5376 = vpop.f32.mrf.mxu0
    %v5377 = vadd.f32 %v5168, %v5376
    %5378 = vmatmul.f32.gmra.mxu0 %v4036
    %v5379 = vpop.f32.mrf.mxu0
    %v5380 = vadd.f32 %v5171, %v5379
    %5381 = vmatmul.f32.gmra.mxu0 %v3875
    %v5382 = vpop.f32.mrf.mxu0
    %v5383 = vadd.f32 %v5174, %v5382
    %5384 = vmatmul.f32.gmra.mxu0 %v3877
    %v5385 = vpop.f32.mrf.mxu0
    %v5386 = vadd.f32 %v5177, %v5385
    %5387 = vmatmul.f32.gmra.mxu0 %v3880
    %v5388 = vpop.f32.mrf.mxu0
    %v5389 = vadd.f32 %v5180, %v5388
    %5390 = vmatmul.f32.gmra.mxu0 %v3882
    %v5391 = vpop.f32.mrf.mxu0
    %v5392 = vadd.f32 %v5183, %v5391
    %5393 = vmatmul.f32.gmra.mxu0 %v3885
    %v5394 = vpop.f32.mrf.mxu0
    %v5395 = vadd.f32 %v5186, %v5394
    %5396 = vmatmul.f32.gmra.mxu0 %v3887
    %v5397 = vpop.f32.mrf.mxu0
    %v5398 = vadd.f32 %v5189, %v5397
    %5399 = vmatmul.f32.gmra.mxu0 %v3890
    %v5400 = vpop.f32.mrf.mxu0
    %v5401 = vadd.f32 %v5192, %v5400
    %5402 = vmatmul.f32.gmra.mxu0 %v3892
    %v5403 = vpop.f32.mrf.mxu0
    %v5404 = vadd.f32 %v5195, %v5403
    %5405 = vmatmul.f32.gmra.mxu0 %v3895
    %v5406 = vpop.f32.mrf.mxu0
    %v5407 = vadd.f32 %v5198, %v5406
    %5408 = vmatmul.f32.gmra.mxu0 %v3897
    %v5409 = vpop.f32.mrf.mxu0
    %v5410 = vadd.f32 %v5201, %v5409
    %5411 = vmatmul.f32.gmra.mxu0 %v3900
    %v5412 = vpop.f32.mrf.mxu0
    %v5413 = vadd.f32 %v5204, %v5412
    %5414 = vmatmul.f32.gmra.mxu0 %v3902
    %v5415 = vpop.f32.mrf.mxu0
    %v5416 = vadd.f32 %v5207, %v5415
    %5417 = vmatmul.f32.gmra.mxu0 %v3905
    %v5418 = vpop.f32.mrf.mxu0
    %v5419 = vadd.f32 %v5210, %v5418
    %5420 = vmatmul.f32.gmra.mxu0 %v3907
    %v5421 = vpop.f32.mrf.mxu0
    %v5422 = vadd.f32 %v5213, %v5421
    %5423 = vmatmul.f32.gmra.mxu0 %v3910
    %v5424 = vpop.f32.mrf.mxu0
    %v5425 = vadd.f32 %v5216, %v5424
    %5426 = vmatmul.f32.gmra.mxu0 %v3912
    %v5427 = vpop.f32.mrf.mxu0
    %v5428 = vadd.f32 %v5219, %v5427
    %5429 = vmatmul.f32.gmra.mxu0 %v3915
    %v5430 = vpop.f32.mrf.mxu0
    %v5431 = vadd.f32 %v5222, %v5430
    %5432 = vmatmul.f32.gmra.mxu0 %v3917
    %v5433 = vpop.f32.mrf.mxu0
    %v5434 = vadd.f32 %v5225, %v5433
    %5435 = vmatmul.f32.gmra.mxu0 %v3920
    %v5436 = vpop.f32.mrf.mxu0
    %v5437 = vadd.f32 %v5228, %v5436
    %5438 = vmatmul.f32.gmra.mxu0 %v3922
    %v5439 = vpop.f32.mrf.mxu0
    %v5440 = vadd.f32 %v5231, %v5439
    %5441 = vmatmul.f32.gmra.mxu0 %v3925
    %v5442 = vpop.f32.mrf.mxu0
    %v5443 = vadd.f32 %v5234, %v5442
    %5444 = vmatmul.f32.gmra.mxu0 %v3927
    %v5445 = vpop.f32.mrf.mxu0
    %v5446 = vadd.f32 %v5237, %v5445
    %5447 = vmatmul.f32.gmra.mxu0 %v3930
    %v5448 = vpop.f32.mrf.mxu0
    %v5449 = vadd.f32 %v5240, %v5448
    %5450 = vmatmul.f32.gmra.mxu0 %v3932
    %v5451 = vpop.f32.mrf.mxu0
    %v5452 = vadd.f32 %v5243, %v5451
    %5453 = vmatmul.f32.gmra.mxu0 %v3935
    %v5454 = vpop.f32.mrf.mxu0
    %v5455 = vadd.f32 %v5246, %v5454
    %5456 = vmatmul.f32.gmra.mxu0 %v3937
    %v5457 = vpop.f32.mrf.mxu0
    %v5458 = vadd.f32 %v5249, %v5457
    %5459 = vmatmul.f32.gmra.mxu0 %v3940
    %v5460 = vpop.f32.mrf.mxu0
    %v5461 = vadd.f32 %v5252, %v5460
    %5462 = vmatmul.f32.gmra.mxu0 %v3942
    %v5463 = vpop.f32.mrf.mxu0
    %v5464 = vadd.f32 %v5255, %v5463
    %5465 = vmatmul.f32.gmra.mxu0 %v3945
    %v5466 = vpop.f32.mrf.mxu0
    %v5467 = vadd.f32 %v5258, %v5466
    %5468 = vmatmul.f32.gmra.mxu0 %v3947
    %v5469 = vpop.f32.mrf.mxu0
    %v5470 = vadd.f32 %v5261, %v5469
    %5471 = vmatmul.f32.gmra.mxu0 %v4039
    %v5472 = vpop.f32.mrf.mxu0
    %v5473 = vadd.f32 %v5264, %v5472
    %5474 = vmatmul.f32.gmra.mxu0 %v4041
    %v5475 = vpop.f32.mrf.mxu0
    %v5476 = vadd.f32 %v5267, %v5475
    %5477 = vdwg.mxu0
    %5478 = vmatpush.msra.mxu0 %v4191
    %5479 = vmatpush.msra.mxu0 %v4190
    %5480 = vmatpush.msra.mxu0 %v4189
    %5481 = vmatpush.msra.mxu0 %v4188
    %5482 = vmatpush.msra.mxu0 %v4187
    %5483 = vmatpush.msra.mxu0 %v4186
    %5484 = vmatpush.msra.mxu0 %v4185
    %5485 = vmatpush.msra.mxu0 %v4184
    %5486 = vmatpush.msra.mxu0 %v4183
    %5487 = vmatpush.msra.mxu0 %v4182
    %5488 = vmatpush.msra.mxu0 %v4181
    %5489 = vmatpush.msra.mxu0 %v4180
    %5490 = vmatpush.msra.mxu0 %v4179
    %5491 = vmatpush.msra.mxu0 %v4178
    %5492 = vmatpush.msra.mxu0 %v4177
    %5493 = vmatpush.msra.mxu0 %v4176
    %5494 = vmatmul.f32.gmra.mxu0 %v3366
    %v5495 = vpop.f32.mrf.mxu0
    %v5496 = vadd.f32 %v5287, %v5495
    %5497 = vmatmul.f32.gmra.mxu0 %v3367
    %v5498 = vpop.f32.mrf.mxu0
    %v5499 = vadd.f32 %v5290, %v5498
    %5500 = vmatmul.f32.gmra.mxu0 %v3369
    %v5501 = vpop.f32.mrf.mxu0
    %v5502 = vadd.f32 %v5293, %v5501
    %5503 = vmatmul.f32.gmra.mxu0 %v3370
    %v5504 = vpop.f32.mrf.mxu0
    %v5505 = vadd.f32 %v5296, %v5504
    %5506 = vmatmul.f32.gmra.mxu0 %v3372
    %v5507 = vpop.f32.mrf.mxu0
    %v5508 = vadd.f32 %v5299, %v5507
    %5509 = vmatmul.f32.gmra.mxu0 %v3373
    %v5510 = vpop.f32.mrf.mxu0
    %v5511 = vadd.f32 %v5302, %v5510
    %5512 = vmatmul.f32.gmra.mxu0 %v3375
    %v5513 = vpop.f32.mrf.mxu0
    %v5514 = vadd.f32 %v5305, %v5513
    %5515 = vmatmul.f32.gmra.mxu0 %v3376
    %v5516 = vpop.f32.mrf.mxu0
    %v5517 = vadd.f32 %v5308, %v5516
    %5518 = vmatmul.f32.gmra.mxu0 %v3378
    %v5519 = vpop.f32.mrf.mxu0
    %v5520 = vadd.f32 %v5311, %v5519
    %5521 = vmatmul.f32.gmra.mxu0 %v3379
    %v5522 = vpop.f32.mrf.mxu0
    %v5523 = vadd.f32 %v5314, %v5522
    %5524 = vmatmul.f32.gmra.mxu0 %v3381
    %v5525 = vpop.f32.mrf.mxu0
    %v5526 = vadd.f32 %v5317, %v5525
    %5527 = vmatmul.f32.gmra.mxu0 %v3382
    %v5528 = vpop.f32.mrf.mxu0
    %v5529 = vadd.f32 %v5320, %v5528
    %5530 = vmatmul.f32.gmra.mxu0 %v3384
    %v5531 = vpop.f32.mrf.mxu0
    %v5532 = vadd.f32 %v5323, %v5531
    %5533 = vmatmul.f32.gmra.mxu0 %v3385
    %v5534 = vpop.f32.mrf.mxu0
    %v5535 = vadd.f32 %v5326, %v5534
    %5536 = vmatmul.f32.gmra.mxu0 %v3387
    %v5537 = vpop.f32.mrf.mxu0
    %v5538 = vadd.f32 %v5329, %v5537
    %5539 = vmatmul.f32.gmra.mxu0 %v3388
    %v5540 = vpop.f32.mrf.mxu0
    %v5541 = vadd.f32 %v5332, %v5540
    %5542 = vmatmul.f32.gmra.mxu0 %v3390
    %v5543 = vpop.f32.mrf.mxu0
    %v5544 = vadd.f32 %v5335, %v5543
    %5545 = vmatmul.f32.gmra.mxu0 %v3391
    %v5546 = vpop.f32.mrf.mxu0
    %v5547 = vadd.f32 %v5338, %v5546
    %5548 = vmatmul.f32.gmra.mxu0 %v3393
    %v5549 = vpop.f32.mrf.mxu0
    %v5550 = vadd.f32 %v5341, %v5549
    %5551 = vmatmul.f32.gmra.mxu0 %v3394
    %v5552 = vpop.f32.mrf.mxu0
    %v5553 = vadd.f32 %v5344, %v5552
    %5554 = vmatmul.f32.gmra.mxu0 %v3396
    %v5555 = vpop.f32.mrf.mxu0
    %v5556 = vadd.f32 %v5347, %v5555
    %5557 = vmatmul.f32.gmra.mxu0 %v3397
    %v5558 = vpop.f32.mrf.mxu0
    %v5559 = vadd.f32 %v5350, %v5558
    %5560 = vmatmul.f32.gmra.mxu0 %v3399
    %v5561 = vpop.f32.mrf.mxu0
    %v5562 = vadd.f32 %v5353, %v5561
    %5563 = vmatmul.f32.gmra.mxu0 %v3400
    %v5564 = vpop.f32.mrf.mxu0
    %v5565 = vadd.f32 %v5356, %v5564
    %5566 = vmatmul.f32.gmra.mxu0 %v3402
    %v5567 = vpop.f32.mrf.mxu0
    %v5568 = vadd.f32 %v5359, %v5567
    %5569 = vmatmul.f32.gmra.mxu0 %v3403
    %v5570 = vpop.f32.mrf.mxu0
    %v5571 = vadd.f32 %v5362, %v5570
    %5572 = vmatmul.f32.gmra.mxu0 %v3405
    %v5573 = vpop.f32.mrf.mxu0
    %v5574 = vadd.f32 %v5365, %v5573
    %5575 = vmatmul.f32.gmra.mxu0 %v3406
    %v5576 = vpop.f32.mrf.mxu0
    %v5577 = vadd.f32 %v5368, %v5576
    %5578 = vmatmul.f32.gmra.mxu0 %v3408
    %v5579 = vpop.f32.mrf.mxu0
    %v5580 = vadd.f32 %v5371, %v5579
    %5581 = vmatmul.f32.gmra.mxu0 %v3409
    %v5582 = vpop.f32.mrf.mxu0
    %v5583 = vadd.f32 %v5374, %v5582
    %5584 = vmatmul.f32.gmra.mxu0 %v3411
    %v5585 = vpop.f32.mrf.mxu0
    %v5586 = vadd.f32 %v5377, %v5585
    %5587 = vmatmul.f32.gmra.mxu0 %v3412
    %v5588 = vpop.f32.mrf.mxu0
    %v5589 = vadd.f32 %v5380, %v5588
    %5590 = vmatmul.f32.gmra.mxu0 %v3420
    %v5591 = vpop.f32.mrf.mxu0
    %v5592 = vadd.f32 %v5383, %v5591
    %5593 = vmatmul.f32.gmra.mxu0 %v3421
    %v5594 = vpop.f32.mrf.mxu0
    %v5595 = vadd.f32 %v5386, %v5594
    %5596 = vmatmul.f32.gmra.mxu0 %v3423
    %v5597 = vpop.f32.mrf.mxu0
    %v5598 = vadd.f32 %v5389, %v5597
    %5599 = vmatmul.f32.gmra.mxu0 %v3424
    %v5600 = vpop.f32.mrf.mxu0
    %v5601 = vadd.f32 %v5392, %v5600
    %5602 = vmatmul.f32.gmra.mxu0 %v3426
    %v5603 = vpop.f32.mrf.mxu0
    %v5604 = vadd.f32 %v5395, %v5603
    %5605 = vmatmul.f32.gmra.mxu0 %v3427
    %v5606 = vpop.f32.mrf.mxu0
    %v5607 = vadd.f32 %v5398, %v5606
    %5608 = vmatmul.f32.gmra.mxu0 %v3429
    %v5609 = vpop.f32.mrf.mxu0
    %v5610 = vadd.f32 %v5401, %v5609
    %5611 = vmatmul.f32.gmra.mxu0 %v3430
    %v5612 = vpop.f32.mrf.mxu0
    %v5613 = vadd.f32 %v5404, %v5612
    %5614 = vmatmul.f32.gmra.mxu0 %v3432
    %v5615 = vpop.f32.mrf.mxu0
    %v5616 = vadd.f32 %v5407, %v5615
    %5617 = vmatmul.f32.gmra.mxu0 %v3433
    %v5618 = vpop.f32.mrf.mxu0
    %v5619 = vadd.f32 %v5410, %v5618
    %5620 = vmatmul.f32.gmra.mxu0 %v3435
    %v5621 = vpop.f32.mrf.mxu0
    %v5622 = vadd.f32 %v5413, %v5621
    %5623 = vmatmul.f32.gmra.mxu0 %v3436
    %v5624 = vpop.f32.mrf.mxu0
    %v5625 = vadd.f32 %v5416, %v5624
    %5626 = vmatmul.f32.gmra.mxu0 %v3438
    %v5627 = vpop.f32.mrf.mxu0
    %v5628 = vadd.f32 %v5419, %v5627
    %5629 = vmatmul.f32.gmra.mxu0 %v3439
    %v5630 = vpop.f32.mrf.mxu0
    %v5631 = vadd.f32 %v5422, %v5630
    %5632 = vmatmul.f32.gmra.mxu0 %v3441
    %v5633 = vpop.f32.mrf.mxu0
    %v5634 = vadd.f32 %v5425, %v5633
    %5635 = vmatmul.f32.gmra.mxu0 %v3442
    %v5636 = vpop.f32.mrf.mxu0
    %v5637 = vadd.f32 %v5428, %v5636
    %5638 = vmatmul.f32.gmra.mxu0 %v3444
    %v5639 = vpop.f32.mrf.mxu0
    %v5640 = vadd.f32 %v5431, %v5639
    %5641 = vmatmul.f32.gmra.mxu0 %v3445
    %v5642 = vpop.f32.mrf.mxu0
    %v5643 = vadd.f32 %v5434, %v5642
    %5644 = vmatmul.f32.gmra.mxu0 %v3447
    %v5645 = vpop.f32.mrf.mxu0
    %v5646 = vadd.f32 %v5437, %v5645
    %5647 = vmatmul.f32.gmra.mxu0 %v3448
    %v5648 = vpop.f32.mrf.mxu0
    %v5649 = vadd.f32 %v5440, %v5648
    %5650 = vmatmul.f32.gmra.mxu0 %v3450
    %v5651 = vpop.f32.mrf.mxu0
    %v5652 = vadd.f32 %v5443, %v5651
    %5653 = vmatmul.f32.gmra.mxu0 %v3451
    %v5654 = vpop.f32.mrf.mxu0
    %v5655 = vadd.f32 %v5446, %v5654
    %5656 = vmatmul.f32.gmra.mxu0 %v3453
    %v5657 = vpop.f32.mrf.mxu0
    %v5658 = vadd.f32 %v5449, %v5657
    %5659 = vmatmul.f32.gmra.mxu0 %v3454
    %v5660 = vpop.f32.mrf.mxu0
    %v5661 = vadd.f32 %v5452, %v5660
    %5662 = vmatmul.f32.gmra.mxu0 %v3456
    %v5663 = vpop.f32.mrf.mxu0
    %v5664 = vadd.f32 %v5455, %v5663
    %5665 = vmatmul.f32.gmra.mxu0 %v3457
    %v5666 = vpop.f32.mrf.mxu0
    %v5667 = vadd.f32 %v5458, %v5666
    %5668 = vmatmul.f32.gmra.mxu0 %v3459
    %v5669 = vpop.f32.mrf.mxu0
    %v5670 = vadd.f32 %v5461, %v5669
    %5671 = vmatmul.f32.gmra.mxu0 %v3460
    %v5672 = vpop.f32.mrf.mxu0
    %v5673 = vadd.f32 %v5464, %v5672
    %5674 = vmatmul.f32.gmra.mxu0 %v3462
    %v5675 = vpop.f32.mrf.mxu0
    %v5676 = vadd.f32 %v5467, %v5675
    %5677 = vmatmul.f32.gmra.mxu0 %v3463
    %v5678 = vpop.f32.mrf.mxu0
    %v5679 = vadd.f32 %v5470, %v5678
    %5680 = vmatmul.f32.gmra.mxu0 %v3465
    %v5681 = vpop.f32.mrf.mxu0
    %v5682 = vadd.f32 %v5473, %v5681
    %5683 = vmatmul.f32.gmra.mxu0 %v3466
    %v5684 = vpop.f32.mrf.mxu0
    %v5685 = vadd.f32 %v5476, %v5684
    %5686 = vdwg.mxu0
    %5687 = vmatpush.msra.mxu0 %v4207
    %5688 = vmatpush.msra.mxu0 %v4206
    %5689 = vmatpush.msra.mxu0 %v4205
    %5690 = vmatpush.msra.mxu0 %v4204
    %5691 = vmatpush.msra.mxu0 %v4203
    %5692 = vmatpush.msra.mxu0 %v4202
    %5693 = vmatpush.msra.mxu0 %v4201
    %5694 = vmatpush.msra.mxu0 %v4200
    %5695 = vmatpush.msra.mxu0 %v4199
    %5696 = vmatpush.msra.mxu0 %v4198
    %5697 = vmatpush.msra.mxu0 %v4197
    %5698 = vmatpush.msra.mxu0 %v4196
    %5699 = vmatpush.msra.mxu0 %v4195
    %5700 = vmatpush.msra.mxu0 %v4194
    %5701 = vmatpush.msra.mxu0 %v4193
    %5702 = vmatpush.msra.mxu0 %v4192
    %5703 = vmatmul.f32.gmra.mxu0 %v3576
    %v5704 = vpop.f32.mrf.mxu0
    %v5705 = vadd.f32 %v5496, %v5704
    %5706 = vmatmul.f32.gmra.mxu0 %v3578
    %v5707 = vpop.f32.mrf.mxu0
    %v5708 = vadd.f32 %v5499, %v5707
    %5709 = vmatmul.f32.gmra.mxu0 %v3581
    %v5710 = vpop.f32.mrf.mxu0
    %v5711 = vadd.f32 %v5502, %v5710
    %5712 = vmatmul.f32.gmra.mxu0 %v3583
    %v5713 = vpop.f32.mrf.mxu0
    %v5714 = vadd.f32 %v5505, %v5713
    %5715 = vmatmul.f32.gmra.mxu0 %v3586
    %v5716 = vpop.f32.mrf.mxu0
    %v5717 = vadd.f32 %v5508, %v5716
    %5718 = vmatmul.f32.gmra.mxu0 %v3588
    %v5719 = vpop.f32.mrf.mxu0
    %v5720 = vadd.f32 %v5511, %v5719
    %5721 = vmatmul.f32.gmra.mxu0 %v3591
    %v5722 = vpop.f32.mrf.mxu0
    %v5723 = vadd.f32 %v5514, %v5722
    %5724 = vmatmul.f32.gmra.mxu0 %v3593
    %v5725 = vpop.f32.mrf.mxu0
    %v5726 = vadd.f32 %v5517, %v5725
    %5727 = vmatmul.f32.gmra.mxu0 %v3596
    %v5728 = vpop.f32.mrf.mxu0
    %v5729 = vadd.f32 %v5520, %v5728
    %5730 = vmatmul.f32.gmra.mxu0 %v3598
    %v5731 = vpop.f32.mrf.mxu0
    %v5732 = vadd.f32 %v5523, %v5731
    %5733 = vmatmul.f32.gmra.mxu0 %v3601
    %v5734 = vpop.f32.mrf.mxu0
    %v5735 = vadd.f32 %v5526, %v5734
    %5736 = vmatmul.f32.gmra.mxu0 %v3603
    %v5737 = vpop.f32.mrf.mxu0
    %v5738 = vadd.f32 %v5529, %v5737
    %5739 = vmatmul.f32.gmra.mxu0 %v3606
    %v5740 = vpop.f32.mrf.mxu0
    %v5741 = vadd.f32 %v5532, %v5740
    %5742 = vmatmul.f32.gmra.mxu0 %v3608
    %v5743 = vpop.f32.mrf.mxu0
    %v5744 = vadd.f32 %v5535, %v5743
    %5745 = vmatmul.f32.gmra.mxu0 %v3611
    %v5746 = vpop.f32.mrf.mxu0
    %v5747 = vadd.f32 %v5538, %v5746
    %5748 = vmatmul.f32.gmra.mxu0 %v3613
    %v5749 = vpop.f32.mrf.mxu0
    %v5750 = vadd.f32 %v5541, %v5749
    %5751 = vmatmul.f32.gmra.mxu0 %v3616
    %v5752 = vpop.f32.mrf.mxu0
    %v5753 = vadd.f32 %v5544, %v5752
    %5754 = vmatmul.f32.gmra.mxu0 %v3618
    %v5755 = vpop.f32.mrf.mxu0
    %v5756 = vadd.f32 %v5547, %v5755
    %5757 = vmatmul.f32.gmra.mxu0 %v3621
    %v5758 = vpop.f32.mrf.mxu0
    %v5759 = vadd.f32 %v5550, %v5758
    %5760 = vmatmul.f32.gmra.mxu0 %v3623
    %v5761 = vpop.f32.mrf.mxu0
    %v5762 = vadd.f32 %v5553, %v5761
    %5763 = vmatmul.f32.gmra.mxu0 %v3626
    %v5764 = vpop.f32.mrf.mxu0
    %v5765 = vadd.f32 %v5556, %v5764
    %5766 = vmatmul.f32.gmra.mxu0 %v3628
    %v5767 = vpop.f32.mrf.mxu0
    %v5768 = vadd.f32 %v5559, %v5767
    %5769 = vmatmul.f32.gmra.mxu0 %v3631
    %v5770 = vpop.f32.mrf.mxu0
    %v5771 = vadd.f32 %v5562, %v5770
    %5772 = vmatmul.f32.gmra.mxu0 %v3633
    %v5773 = vpop.f32.mrf.mxu0
    %v5774 = vadd.f32 %v5565, %v5773
    %5775 = vmatmul.f32.gmra.mxu0 %v3636
    %v5776 = vpop.f32.mrf.mxu0
    %v5777 = vadd.f32 %v5568, %v5776
    %5778 = vmatmul.f32.gmra.mxu0 %v3638
    %v5779 = vpop.f32.mrf.mxu0
    %v5780 = vadd.f32 %v5571, %v5779
    %5781 = vmatmul.f32.gmra.mxu0 %v3641
    %v5782 = vpop.f32.mrf.mxu0
    %v5783 = vadd.f32 %v5574, %v5782
    %5784 = vmatmul.f32.gmra.mxu0 %v3643
    %v5785 = vpop.f32.mrf.mxu0
    %v5786 = vadd.f32 %v5577, %v5785
    %5787 = vmatmul.f32.gmra.mxu0 %v4020
    %v5788 = vpop.f32.mrf.mxu0
    %v5789 = vadd.f32 %v5580, %v5788
    %5790 = vmatmul.f32.gmra.mxu0 %v4022
    %v5791 = vpop.f32.mrf.mxu0
    %v5792 = vadd.f32 %v5583, %v5791
    %5793 = vmatmul.f32.gmra.mxu0 %v4054
    %v5794 = vpop.f32.mrf.mxu0
    %v5795 = vadd.f32 %v5586, %v5794
    %5796 = vmatmul.f32.gmra.mxu0 %v4056
    %v5797 = vpop.f32.mrf.mxu0
    %v5798 = vadd.f32 %v5589, %v5797
    %5799 = vmatmul.f32.gmra.mxu0 %v3656
    %v5800 = vpop.f32.mrf.mxu0
    %v5801 = vadd.f32 %v5592, %v5800
    %5802 = vmatmul.f32.gmra.mxu0 %v3658
    %v5803 = vpop.f32.mrf.mxu0
    %v5804 = vadd.f32 %v5595, %v5803
    %5805 = vmatmul.f32.gmra.mxu0 %v3661
    %v5806 = vpop.f32.mrf.mxu0
    %v5807 = vadd.f32 %v5598, %v5806
    %5808 = vmatmul.f32.gmra.mxu0 %v3663
    %v5809 = vpop.f32.mrf.mxu0
    %v5810 = vadd.f32 %v5601, %v5809
    %5811 = vmatmul.f32.gmra.mxu0 %v3666
    %v5812 = vpop.f32.mrf.mxu0
    %v5813 = vadd.f32 %v5604, %v5812
    %5814 = vmatmul.f32.gmra.mxu0 %v3668
    %v5815 = vpop.f32.mrf.mxu0
    %v5816 = vadd.f32 %v5607, %v5815
    %5817 = vmatmul.f32.gmra.mxu0 %v3671
    %v5818 = vpop.f32.mrf.mxu0
    %v5819 = vadd.f32 %v5610, %v5818
    %5820 = vmatmul.f32.gmra.mxu0 %v3673
    %v5821 = vpop.f32.mrf.mxu0
    %v5822 = vadd.f32 %v5613, %v5821
    %5823 = vmatmul.f32.gmra.mxu0 %v3676
    %v5824 = vpop.f32.mrf.mxu0
    %v5825 = vadd.f32 %v5616, %v5824
    %5826 = vmatmul.f32.gmra.mxu0 %v3678
    %v5827 = vpop.f32.mrf.mxu0
    %v5828 = vadd.f32 %v5619, %v5827
    %5829 = vmatmul.f32.gmra.mxu0 %v3681
    %v5830 = vpop.f32.mrf.mxu0
    %v5831 = vadd.f32 %v5622, %v5830
    %5832 = vmatmul.f32.gmra.mxu0 %v3683
    %v5833 = vpop.f32.mrf.mxu0
    %v5834 = vadd.f32 %v5625, %v5833
    %5835 = vmatmul.f32.gmra.mxu0 %v3686
    %v5836 = vpop.f32.mrf.mxu0
    %v5837 = vadd.f32 %v5628, %v5836
    %5838 = vmatmul.f32.gmra.mxu0 %v3688
    %v5839 = vpop.f32.mrf.mxu0
    %v5840 = vadd.f32 %v5631, %v5839
    %5841 = vmatmul.f32.gmra.mxu0 %v3691
    %v5842 = vpop.f32.mrf.mxu0
    %v5843 = vadd.f32 %v5634, %v5842
    %5844 = vmatmul.f32.gmra.mxu0 %v3693
    %v5845 = vpop.f32.mrf.mxu0
    %v5846 = vadd.f32 %v5637, %v5845
    %5847 = vmatmul.f32.gmra.mxu0 %v3696
    %v5848 = vpop.f32.mrf.mxu0
    %v5849 = vadd.f32 %v5640, %v5848
    %5850 = vmatmul.f32.gmra.mxu0 %v3698
    %v5851 = vpop.f32.mrf.mxu0
    %v5852 = vadd.f32 %v5643, %v5851
    %5853 = vmatmul.f32.gmra.mxu0 %v3701
    %v5854 = vpop.f32.mrf.mxu0
    %v5855 = vadd.f32 %v5646, %v5854
    %5856 = vmatmul.f32.gmra.mxu0 %v3703
    %v5857 = vpop.f32.mrf.mxu0
    %v5858 = vadd.f32 %v5649, %v5857
    %5859 = vmatmul.f32.gmra.mxu0 %v3706
    %v5860 = vpop.f32.mrf.mxu0
    %v5861 = vadd.f32 %v5652, %v5860
    %5862 = vmatmul.f32.gmra.mxu0 %v3708
    %v5863 = vpop.f32.mrf.mxu0
    %v5864 = vadd.f32 %v5655, %v5863
    %5865 = vmatmul.f32.gmra.mxu0 %v3711
    %v5866 = vpop.f32.mrf.mxu0
    %v5867 = vadd.f32 %v5658, %v5866
    %5868 = vmatmul.f32.gmra.mxu0 %v3713
    %v5869 = vpop.f32.mrf.mxu0
    %v5870 = vadd.f32 %v5661, %v5869
    %5871 = vmatmul.f32.gmra.mxu0 %v3716
    %v5872 = vpop.f32.mrf.mxu0
    %v5873 = vadd.f32 %v5664, %v5872
    %5874 = vmatmul.f32.gmra.mxu0 %v3718
    %v5875 = vpop.f32.mrf.mxu0
    %v5876 = vadd.f32 %v5667, %v5875
    %5877 = vmatmul.f32.gmra.mxu0 %v3721
    %v5878 = vpop.f32.mrf.mxu0
    %v5879 = vadd.f32 %v5670, %v5878
    %5880 = vmatmul.f32.gmra.mxu0 %v3723
    %v5881 = vpop.f32.mrf.mxu0
    %v5882 = vadd.f32 %v5673, %v5881
    %5883 = vmatmul.f32.gmra.mxu0 %v4025
    %v5884 = vpop.f32.mrf.mxu0
    %v5885 = vadd.f32 %v5676, %v5884
    %5886 = vmatmul.f32.gmra.mxu0 %v4027
    %v5887 = vpop.f32.mrf.mxu0
    %v5888 = vadd.f32 %v5679, %v5887
    %5889 = vmatmul.f32.gmra.mxu0 %v4059
    %v5890 = vpop.f32.mrf.mxu0
    %v5891 = vadd.f32 %v5682, %v5890
    %5892 = vmatmul.f32.gmra.mxu0 %v4061
    %v5893 = vpop.f32.mrf.mxu0
    %v5894 = vadd.f32 %v5685, %v5893
    %5895 = vdwg.mxu0
    %5896 = vmatpush.msra.mxu0 %v4223
    %5897 = vmatpush.msra.mxu0 %v4222
    %5898 = vmatpush.msra.mxu0 %v4221
    %5899 = vmatpush.msra.mxu0 %v4220
    %5900 = vmatpush.msra.mxu0 %v4219
    %5901 = vmatpush.msra.mxu0 %v4218
    %5902 = vmatpush.msra.mxu0 %v4217
    %5903 = vmatpush.msra.mxu0 %v4216
    %5904 = vmatpush.msra.mxu0 %v4215
    %5905 = vmatpush.msra.mxu0 %v4214
    %5906 = vmatpush.msra.mxu0 %v4213
    %5907 = vmatpush.msra.mxu0 %v4212
    %5908 = vmatpush.msra.mxu0 %v4211
    %5909 = vmatpush.msra.mxu0 %v4210
    %5910 = vmatpush.msra.mxu0 %v4209
    %5911 = vmatpush.msra.mxu0 %v4208
    %5912 = vmatmul.f32.gmra.mxu0 %v3800
    %v5913 = vpop.f32.mrf.mxu0
    %v5914 = vadd.f32 %v5705, %v5913
    %5915 = vmatmul.f32.gmra.mxu0 %v3802
    %v5916 = vpop.f32.mrf.mxu0
    %v5917 = vadd.f32 %v5708, %v5916
    %5918 = vmatmul.f32.gmra.mxu0 %v3805
    %v5919 = vpop.f32.mrf.mxu0
    %v5920 = vadd.f32 %v5711, %v5919
    %5921 = vmatmul.f32.gmra.mxu0 %v3807
    %v5922 = vpop.f32.mrf.mxu0
    %v5923 = vadd.f32 %v5714, %v5922
    %5924 = vmatmul.f32.gmra.mxu0 %v3810
    %v5925 = vpop.f32.mrf.mxu0
    %v5926 = vadd.f32 %v5717, %v5925
    %5927 = vmatmul.f32.gmra.mxu0 %v3812
    %v5928 = vpop.f32.mrf.mxu0
    %v5929 = vadd.f32 %v5720, %v5928
    %5930 = vmatmul.f32.gmra.mxu0 %v3815
    %v5931 = vpop.f32.mrf.mxu0
    %v5932 = vadd.f32 %v5723, %v5931
    %5933 = vmatmul.f32.gmra.mxu0 %v3817
    %v5934 = vpop.f32.mrf.mxu0
    %v5935 = vadd.f32 %v5726, %v5934
    %5936 = vmatmul.f32.gmra.mxu0 %v3820
    %v5937 = vpop.f32.mrf.mxu0
    %v5938 = vadd.f32 %v5729, %v5937
    %5939 = vmatmul.f32.gmra.mxu0 %v3822
    %v5940 = vpop.f32.mrf.mxu0
    %v5941 = vadd.f32 %v5732, %v5940
    %5942 = vmatmul.f32.gmra.mxu0 %v3825
    %v5943 = vpop.f32.mrf.mxu0
    %v5944 = vadd.f32 %v5735, %v5943
    %5945 = vmatmul.f32.gmra.mxu0 %v3827
    %v5946 = vpop.f32.mrf.mxu0
    %v5947 = vadd.f32 %v5738, %v5946
    %5948 = vmatmul.f32.gmra.mxu0 %v3830
    %v5949 = vpop.f32.mrf.mxu0
    %v5950 = vadd.f32 %v5741, %v5949
    %5951 = vmatmul.f32.gmra.mxu0 %v3832
    %v5952 = vpop.f32.mrf.mxu0
    %v5953 = vadd.f32 %v5744, %v5952
    %5954 = vmatmul.f32.gmra.mxu0 %v3835
    %v5955 = vpop.f32.mrf.mxu0
    %v5956 = vadd.f32 %v5747, %v5955
    %5957 = vmatmul.f32.gmra.mxu0 %v3837
    %v5958 = vpop.f32.mrf.mxu0
    %v5959 = vadd.f32 %v5750, %v5958
    %5960 = vmatmul.f32.gmra.mxu0 %v3840
    %v5961 = vpop.f32.mrf.mxu0
    %v5962 = vadd.f32 %v5753, %v5961
    %5963 = vmatmul.f32.gmra.mxu0 %v3842
    %v5964 = vpop.f32.mrf.mxu0
    %v5965 = vadd.f32 %v5756, %v5964
    %5966 = vmatmul.f32.gmra.mxu0 %v3845
    %v5967 = vpop.f32.mrf.mxu0
    %v5968 = vadd.f32 %v5759, %v5967
    %5969 = vmatmul.f32.gmra.mxu0 %v3847
    %v5970 = vpop.f32.mrf.mxu0
    %v5971 = vadd.f32 %v5762, %v5970
    %5972 = vmatmul.f32.gmra.mxu0 %v3850
    %v5973 = vpop.f32.mrf.mxu0
    %v5974 = vadd.f32 %v5765, %v5973
    %5975 = vmatmul.f32.gmra.mxu0 %v3852
    %v5976 = vpop.f32.mrf.mxu0
    %v5977 = vadd.f32 %v5768, %v5976
    %5978 = vmatmul.f32.gmra.mxu0 %v3855
    %v5979 = vpop.f32.mrf.mxu0
    %v5980 = vadd.f32 %v5771, %v5979
    %5981 = vmatmul.f32.gmra.mxu0 %v3857
    %v5982 = vpop.f32.mrf.mxu0
    %v5983 = vadd.f32 %v5774, %v5982
    %5984 = vmatmul.f32.gmra.mxu0 %v3860
    %v5985 = vpop.f32.mrf.mxu0
    %v5986 = vadd.f32 %v5777, %v5985
    %5987 = vmatmul.f32.gmra.mxu0 %v3862
    %v5988 = vpop.f32.mrf.mxu0
    %v5989 = vadd.f32 %v5780, %v5988
    %5990 = vmatmul.f32.gmra.mxu0 %v3865
    %v5991 = vpop.f32.mrf.mxu0
    %v5992 = vadd.f32 %v5783, %v5991
    %5993 = vmatmul.f32.gmra.mxu0 %v3867
    %v5994 = vpop.f32.mrf.mxu0
    %v5995 = vadd.f32 %v5786, %v5994
    %5996 = vmatmul.f32.gmra.mxu0 %v4034
    %v5997 = vpop.f32.mrf.mxu0
    %v5998 = vadd.f32 %v5789, %v5997
    %5999 = vmatmul.f32.gmra.mxu0 %v4036
    %v6000 = vpop.f32.mrf.mxu0
    %v6001 = vadd.f32 %v5792, %v6000
    %6002 = vmatmul.f32.gmra.mxu0 %v4068
    %v6003 = vpop.f32.mrf.mxu0
    %v6004 = vadd.f32 %v5795, %v6003
    %6005 = vmatmul.f32.gmra.mxu0 %v4070
    %v6006 = vpop.f32.mrf.mxu0
    %v6007 = vadd.f32 %v5798, %v6006
    %6008 = vmatmul.f32.gmra.mxu0 %v3880
    %v6009 = vpop.f32.mrf.mxu0
    %v6010 = vadd.f32 %v5801, %v6009
    %6011 = vmatmul.f32.gmra.mxu0 %v3882
    %v6012 = vpop.f32.mrf.mxu0
    %v6013 = vadd.f32 %v5804, %v6012
    %6014 = vmatmul.f32.gmra.mxu0 %v3885
    %v6015 = vpop.f32.mrf.mxu0
    %v6016 = vadd.f32 %v5807, %v6015
    %6017 = vmatmul.f32.gmra.mxu0 %v3887
    %v6018 = vpop.f32.mrf.mxu0
    %v6019 = vadd.f32 %v5810, %v6018
    %6020 = vmatmul.f32.gmra.mxu0 %v3890
    %v6021 = vpop.f32.mrf.mxu0
    %v6022 = vadd.f32 %v5813, %v6021
    %6023 = vmatmul.f32.gmra.mxu0 %v3892
    %v6024 = vpop.f32.mrf.mxu0
    %v6025 = vadd.f32 %v5816, %v6024
    %6026 = vmatmul.f32.gmra.mxu0 %v3895
    %v6027 = vpop.f32.mrf.mxu0
    %v6028 = vadd.f32 %v5819, %v6027
    %6029 = vmatmul.f32.gmra.mxu0 %v3897
    %v6030 = vpop.f32.mrf.mxu0
    %v6031 = vadd.f32 %v5822, %v6030
    %6032 = vmatmul.f32.gmra.mxu0 %v3900
    %v6033 = vpop.f32.mrf.mxu0
    %v6034 = vadd.f32 %v5825, %v6033
    %6035 = vmatmul.f32.gmra.mxu0 %v3902
    %v6036 = vpop.f32.mrf.mxu0
    %v6037 = vadd.f32 %v5828, %v6036
    %6038 = vmatmul.f32.gmra.mxu0 %v3905
    %v6039 = vpop.f32.mrf.mxu0
    %v6040 = vadd.f32 %v5831, %v6039
    %6041 = vmatmul.f32.gmra.mxu0 %v3907
    %v6042 = vpop.f32.mrf.mxu0
    %v6043 = vadd.f32 %v5834, %v6042
    %6044 = vmatmul.f32.gmra.mxu0 %v3910
    %v6045 = vpop.f32.mrf.mxu0
    %v6046 = vadd.f32 %v5837, %v6045
    %6047 = vmatmul.f32.gmra.mxu0 %v3912
    %v6048 = vpop.f32.mrf.mxu0
    %v6049 = vadd.f32 %v5840, %v6048
    %6050 = vmatmul.f32.gmra.mxu0 %v3915
    %v6051 = vpop.f32.mrf.mxu0
    %v6052 = vadd.f32 %v5843, %v6051
    %6053 = vmatmul.f32.gmra.mxu0 %v3917
    %v6054 = vpop.f32.mrf.mxu0
    %v6055 = vadd.f32 %v5846, %v6054
    %6056 = vmatmul.f32.gmra.mxu0 %v3920
    %v6057 = vpop.f32.mrf.mxu0
    %v6058 = vadd.f32 %v5849, %v6057
    %6059 = vmatmul.f32.gmra.mxu0 %v3922
    %v6060 = vpop.f32.mrf.mxu0
    %v6061 = vadd.f32 %v5852, %v6060
    %6062 = vmatmul.f32.gmra.mxu0 %v3925
    %v6063 = vpop.f32.mrf.mxu0
    %v6064 = vadd.f32 %v5855, %v6063
    %6065 = vmatmul.f32.gmra.mxu0 %v3927
    %v6066 = vpop.f32.mrf.mxu0
    %v6067 = vadd.f32 %v5858, %v6066
    %6068 = vmatmul.f32.gmra.mxu0 %v3930
    %v6069 = vpop.f32.mrf.mxu0
    %v6070 = vadd.f32 %v5861, %v6069
    %6071 = vmatmul.f32.gmra.mxu0 %v3932
    %v6072 = vpop.f32.mrf.mxu0
    %v6073 = vadd.f32 %v5864, %v6072
    %6074 = vmatmul.f32.gmra.mxu0 %v3935
    %v6075 = vpop.f32.mrf.mxu0
    %v6076 = vadd.f32 %v5867, %v6075
    %6077 = vmatmul.f32.gmra.mxu0 %v3937
    %v6078 = vpop.f32.mrf.mxu0
    %v6079 = vadd.f32 %v5870, %v6078
    %6080 = vmatmul.f32.gmra.mxu0 %v3940
    %v6081 = vpop.f32.mrf.mxu0
    %v6082 = vadd.f32 %v5873, %v6081
    %6083 = vmatmul.f32.gmra.mxu0 %v3942
    %v6084 = vpop.f32.mrf.mxu0
    %v6085 = vadd.f32 %v5876, %v6084
    %6086 = vmatmul.f32.gmra.mxu0 %v3945
    %v6087 = vpop.f32.mrf.mxu0
    %v6088 = vadd.f32 %v5879, %v6087
    %6089 = vmatmul.f32.gmra.mxu0 %v3947
    %v6090 = vpop.f32.mrf.mxu0
    %v6091 = vadd.f32 %v5882, %v6090
    %6092 = vmatmul.f32.gmra.mxu0 %v4039
    %v6093 = vpop.f32.mrf.mxu0
    %v6094 = vadd.f32 %v5885, %v6093
    %6095 = vmatmul.f32.gmra.mxu0 %v4041
    %v6096 = vpop.f32.mrf.mxu0
    %v6097 = vadd.f32 %v5888, %v6096
    %6098 = vmatmul.f32.gmra.mxu0 %v4073
    %v6099 = vpop.f32.mrf.mxu0
    %v6100 = vadd.f32 %v5891, %v6099
    %6101 = vmatmul.f32.gmra.mxu0 %v4075
    %v6102 = vpop.f32.mrf.mxu0
    %v6103 = vadd.f32 %v5894, %v6102
    %6104 = vdwg.mxu0
    %v6105 = vadd.f32 %v5914, %v5917
    %v6106 = vadd.f32 %v6105, %v5920
    %v6107 = vadd.f32 %v6106, %v5923
    %v6108 = vadd.f32 %v6107, %v5926
    %v6109 = vadd.f32 %v6108, %v5929
    %v6110 = vadd.f32 %v6109, %v5932
    %v6111 = vadd.f32 %v6110, %v5935
    %v6112 = vadd.f32 %v6111, %v5938
    %v6113 = vadd.f32 %v6112, %v5941
    %v6114 = vadd.f32 %v6113, %v5944
    %v6115 = vadd.f32 %v6114, %v5947
    %v6116 = vadd.f32 %v6115, %v5950
    %v6117 = vadd.f32 %v6116, %v5953
    %v6118 = vadd.f32 %v6117, %v5956
    %v6119 = vadd.f32 %v6118, %v5959
    %v6120 = vadd.f32 %v6119, %v5962
    %v6121 = vadd.f32 %v6120, %v5965
    %v6122 = vadd.f32 %v6121, %v5968
    %v6123 = vadd.f32 %v6122, %v5971
    %v6124 = vadd.f32 %v6123, %v5974
    %v6125 = vadd.f32 %v6124, %v5977
    %v6126 = vadd.f32 %v6125, %v5980
    %v6127 = vadd.f32 %v6126, %v5983
    %v6128 = vadd.f32 %v6127, %v5986
    %v6129 = vadd.f32 %v6128, %v5989
    %v6130 = vadd.f32 %v6129, %v5992
    %v6131 = vadd.f32 %v6130, %v5995
    %v6132 = vadd.f32 %v6131, %v5998
    %v6133 = vadd.f32 %v6132, %v6001
    %v6134 = vadd.f32 %v6133, %v6004
    %v6135 = vadd.f32 %v6134, %v6007
    %v6136 = vadd.f32 %v6135, %v6010
    %v6137 = vadd.f32 %v6136, %v6013
    %v6138 = vadd.f32 %v6137, %v6016
    %v6139 = vadd.f32 %v6138, %v6019
    %v6140 = vadd.f32 %v6139, %v6022
    %v6141 = vadd.f32 %v6140, %v6025
    %v6142 = vadd.f32 %v6141, %v6028
    %v6143 = vadd.f32 %v6142, %v6031
    %v6144 = vadd.f32 %v6143, %v6034
    %v6145 = vadd.f32 %v6144, %v6037
    %v6146 = vadd.f32 %v6145, %v6040
    %v6147 = vadd.f32 %v6146, %v6043
    %v6148 = vadd.f32 %v6147, %v6046
    %v6149 = vadd.f32 %v6148, %v6049
    %v6150 = vadd.f32 %v6149, %v6052
    %v6151 = vadd.f32 %v6150, %v6055
    %v6152 = vadd.f32 %v6151, %v6058
    %v6153 = vadd.f32 %v6152, %v6061
    %v6154 = vadd.f32 %v6153, %v6064
    %v6155 = vadd.f32 %v6154, %v6067
    %v6156 = vadd.f32 %v6155, %v6070
    %v6157 = vadd.f32 %v6156, %v6073
    %v6158 = vadd.f32 %v6157, %v6076
    %v6159 = vadd.f32 %v6158, %v6079
    %v6160 = vadd.f32 %v6159, %v6082
    %v6161 = vadd.f32 %v6160, %v6085
    %v6162 = vadd.f32 %v6161, %v6088
    %v6163 = vadd.f32 %v6162, %v6091
    %v6164 = vadd.f32 %v6163, %v6094
    %v6165 = vadd.f32 %v6164, %v6097
    %v6166 = vadd.f32 %v6165, %v6100
    %v6167 = vadd.f32 %v6166, %v6103
    %v6168 = vrot.slane %v6167, 4
    %v6169 = vadd.f32 %v6167, %v6168
    %v6170 = vrot.slane %v6169, 2
    %v6171 = vadd.f32 %v6169, %v6170
    %v6172 = vrot.slane %v6171, 1
    %v6173 = vadd.f32 %v6171, %v6172
    %v6174 = vmul.f32 %v5914, %v5914
    %v6175 = vmul.f32 %v5917, %v5917
    %v6176 = vmul.f32 %v5920, %v5920
    %v6177 = vmul.f32 %v5923, %v5923
    %v6178 = vmul.f32 %v5926, %v5926
    %v6179 = vmul.f32 %v5929, %v5929
    %v6180 = vmul.f32 %v5932, %v5932
    %v6181 = vmul.f32 %v5935, %v5935
    %v6182 = vmul.f32 %v5938, %v5938
    %v6183 = vmul.f32 %v5941, %v5941
    %v6184 = vmul.f32 %v5944, %v5944
    %v6185 = vmul.f32 %v5947, %v5947
    %v6186 = vmul.f32 %v5950, %v5950
    %v6187 = vmul.f32 %v5953, %v5953
    %v6188 = vmul.f32 %v5956, %v5956
    %v6189 = vmul.f32 %v5959, %v5959
    %v6190 = vmul.f32 %v5962, %v5962
    %v6191 = vmul.f32 %v5965, %v5965
    %v6192 = vmul.f32 %v5968, %v5968
    %v6193 = vmul.f32 %v5971, %v5971
    %v6194 = vmul.f32 %v5974, %v5974
    %v6195 = vmul.f32 %v5977, %v5977
    %v6196 = vmul.f32 %v5980, %v5980
    %v6197 = vmul.f32 %v5983, %v5983
    %v6198 = vmul.f32 %v5986, %v5986
    %v6199 = vmul.f32 %v5989, %v5989
    %v6200 = vmul.f32 %v5992, %v5992
    %v6201 = vmul.f32 %v5995, %v5995
    %v6202 = vmul.f32 %v5998, %v5998
    %v6203 = vmul.f32 %v6001, %v6001
    %v6204 = vmul.f32 %v6004, %v6004
    %v6205 = vmul.f32 %v6007, %v6007
    %v6206 = vmul.f32 %v6010, %v6010
    %v6207 = vmul.f32 %v6013, %v6013
    %v6208 = vmul.f32 %v6016, %v6016
    %v6209 = vmul.f32 %v6019, %v6019
    %v6210 = vmul.f32 %v6022, %v6022
    %v6211 = vmul.f32 %v6025, %v6025
    %v6212 = vmul.f32 %v6028, %v6028
    %v6213 = vmul.f32 %v6031, %v6031
    %v6214 = vmul.f32 %v6034, %v6034
    %v6215 = vmul.f32 %v6037, %v6037
    %v6216 = vmul.f32 %v6040, %v6040
    %v6217 = vmul.f32 %v6043, %v6043
    %v6218 = vmul.f32 %v6046, %v6046
    %v6219 = vmul.f32 %v6049, %v6049
    %v6220 = vmul.f32 %v6052, %v6052
    %v6221 = vmul.f32 %v6055, %v6055
    %v6222 = vmul.f32 %v6058, %v6058
    %v6223 = vmul.f32 %v6061, %v6061
    %v6224 = vmul.f32 %v6064, %v6064
    %v6225 = vmul.f32 %v6067, %v6067
    %v6226 = vmul.f32 %v6070, %v6070
    %v6227 = vmul.f32 %v6073, %v6073
    %v6228 = vmul.f32 %v6076, %v6076
    %v6229 = vmul.f32 %v6079, %v6079
    %v6230 = vmul.f32 %v6082, %v6082
    %v6231 = vmul.f32 %v6085, %v6085
    %v6232 = vmul.f32 %v6088, %v6088
    %v6233 = vmul.f32 %v6091, %v6091
    %v6234 = vmul.f32 %v6094, %v6094
    %v6235 = vmul.f32 %v6097, %v6097
    %v6236 = vmul.f32 %v6100, %v6100
    %v6237 = vmul.f32 %v6103, %v6103
    %v6238 = vadd.f32 %v6174, %v6175
    %v6239 = vadd.f32 %v6238, %v6176
    %v6240 = vadd.f32 %v6239, %v6177
    %v6241 = vadd.f32 %v6240, %v6178
    %v6242 = vadd.f32 %v6241, %v6179
    %v6243 = vadd.f32 %v6242, %v6180
    %v6244 = vadd.f32 %v6243, %v6181
    %v6245 = vadd.f32 %v6244, %v6182
    %v6246 = vadd.f32 %v6245, %v6183
    %v6247 = vadd.f32 %v6246, %v6184
    %v6248 = vadd.f32 %v6247, %v6185
    %v6249 = vadd.f32 %v6248, %v6186
    %v6250 = vadd.f32 %v6249, %v6187
    %v6251 = vadd.f32 %v6250, %v6188
    %v6252 = vadd.f32 %v6251, %v6189
    %v6253 = vadd.f32 %v6252, %v6190
    %v6254 = vadd.f32 %v6253, %v6191
    %v6255 = vadd.f32 %v6254, %v6192
    %v6256 = vadd.f32 %v6255, %v6193
    %v6257 = vadd.f32 %v6256, %v6194
    %v6258 = vadd.f32 %v6257, %v6195
    %v6259 = vadd.f32 %v6258, %v6196
    %v6260 = vadd.f32 %v6259, %v6197
    %v6261 = vadd.f32 %v6260, %v6198
    %v6262 = vadd.f32 %v6261, %v6199
    %v6263 = vadd.f32 %v6262, %v6200
    %v6264 = vadd.f32 %v6263, %v6201
    %v6265 = vadd.f32 %v6264, %v6202
    %v6266 = vadd.f32 %v6265, %v6203
    %v6267 = vadd.f32 %v6266, %v6204
    %v6268 = vadd.f32 %v6267, %v6205
    %v6269 = vadd.f32 %v6268, %v6206
    %v6270 = vadd.f32 %v6269, %v6207
    %v6271 = vadd.f32 %v6270, %v6208
    %v6272 = vadd.f32 %v6271, %v6209
    %v6273 = vadd.f32 %v6272, %v6210
    %v6274 = vadd.f32 %v6273, %v6211
    %v6275 = vadd.f32 %v6274, %v6212
    %v6276 = vadd.f32 %v6275, %v6213
    %v6277 = vadd.f32 %v6276, %v6214
    %v6278 = vadd.f32 %v6277, %v6215
    %v6279 = vadd.f32 %v6278, %v6216
    %v6280 = vadd.f32 %v6279, %v6217
    %v6281 = vadd.f32 %v6280, %v6218
    %v6282 = vadd.f32 %v6281, %v6219
    %v6283 = vadd.f32 %v6282, %v6220
    %v6284 = vadd.f32 %v6283, %v6221
    %v6285 = vadd.f32 %v6284, %v6222
    %v6286 = vadd.f32 %v6285, %v6223
    %v6287 = vadd.f32 %v6286, %v6224
    %v6288 = vadd.f32 %v6287, %v6225
    %v6289 = vadd.f32 %v6288, %v6226
    %v6290 = vadd.f32 %v6289, %v6227
    %v6291 = vadd.f32 %v6290, %v6228
    %v6292 = vadd.f32 %v6291, %v6229
    %v6293 = vadd.f32 %v6292, %v6230
    %v6294 = vadd.f32 %v6293, %v6231
    %v6295 = vadd.f32 %v6294, %v6232
    %v6296 = vadd.f32 %v6295, %v6233
    %v6297 = vadd.f32 %v6296, %v6234
    %v6298 = vadd.f32 %v6297, %v6235
    %v6299 = vadd.f32 %v6298, %v6236
    %v6300 = vadd.f32 %v6299, %v6237
    %v6301 = vrot.slane %v6300, 4
    %v6302 = vadd.f32 %v6300, %v6301
    %v6303 = vrot.slane %v6302, 2
    %v6304 = vadd.f32 %v6302, %v6303
    %v6305 = vrot.slane %v6304, 1
    %v6306 = vadd.f32 %v6304, %v6305
    %v6307 = vmul.f32 %v6173, 0.001953125
    %v6308 = vmul.f32 %v6306, 0.001953125
    %v6309 = vmul.f32 %v6307, %v6307
    %v6310 = vsub.f32 %v6308, %v6309
    %v6311 = vld [vmem:[%s5] sm:$0x1]
    %v6312 = vadd.f32 %v6310, 1e-05
    %v6313 = vrsqrt.pop %v6312
    %v6314 = vmul.f32 %v6313, %v6312
    %v6315 = vmul.f32 %v6314, %v6313
    %v6316 = vmul.f32 0.5, %v6315
    %v6317 = vsub.f32 1.5, %v6316
    %v6318 = vmul.f32 %v6313, %v6317
    %vm6319 = vweird.f32 %v6312
    %vm6320 = vweird.f32 %v6313
    %vm6321 = vmor %vm6319, %vm6320
    %v6322 = vsel %vm6321, %v6313, %v6318
    %v6323 = vmul.f32 %v6311, %v6322
    %v6324 = vld [vmem:[%s6] sm:$0x1]
    %v6325 = vmul.f32 %v6307, %v6323
    %v6326 = vsub.f32 %v6324, %v6325
    %v6328 = vperm.slane %v6323, 0
    %v6330 = vmul.f32 %v5914, %v6328
    %v6331 = vmul.f32 %v5917, %v6328
    %v6332 = vmul.f32 %v5920, %v6328
    %v6333 = vmul.f32 %v5923, %v6328
    %v6334 = vmul.f32 %v5926, %v6328
    %v6335 = vmul.f32 %v5929, %v6328
    %v6336 = vmul.f32 %v5932, %v6328
    %v6337 = vmul.f32 %v5935, %v6328
    %v6338 = vmul.f32 %v5938, %v6328
    %v6339 = vmul.f32 %v5941, %v6328
    %v6340 = vmul.f32 %v5944, %v6328
    %v6341 = vmul.f32 %v5947, %v6328
    %v6342 = vmul.f32 %v5950, %v6328
    %v6343 = vmul.f32 %v5953, %v6328
    %v6344 = vmul.f32 %v5956, %v6328
    %v6345 = vmul.f32 %v5959, %v6328
    %v6346 = vmul.f32 %v5962, %v6328
    %v6347 = vmul.f32 %v5965, %v6328
    %v6348 = vmul.f32 %v5968, %v6328
    %v6349 = vmul.f32 %v5971, %v6328
    %v6350 = vmul.f32 %v5974, %v6328
    %v6351 = vmul.f32 %v5977, %v6328
    %v6352 = vmul.f32 %v5980, %v6328
    %v6353 = vmul.f32 %v5983, %v6328
    %v6354 = vmul.f32 %v5986, %v6328
    %v6355 = vmul.f32 %v5989, %v6328
    %v6356 = vmul.f32 %v5992, %v6328
    %v6357 = vmul.f32 %v5995, %v6328
    %v6358 = vmul.f32 %v5998, %v6328
    %v6359 = vmul.f32 %v6001, %v6328
    %v6360 = vmul.f32 %v6004, %v6328
    %v6361 = vmul.f32 %v6007, %v6328
    %v6362 = vmul.f32 %v6010, %v6328
    %v6363 = vmul.f32 %v6013, %v6328
    %v6364 = vmul.f32 %v6016, %v6328
    %v6365 = vmul.f32 %v6019, %v6328
    %v6366 = vmul.f32 %v6022, %v6328
    %v6367 = vmul.f32 %v6025, %v6328
    %v6368 = vmul.f32 %v6028, %v6328
    %v6369 = vmul.f32 %v6031, %v6328
    %v6370 = vmul.f32 %v6034, %v6328
    %v6371 = vmul.f32 %v6037, %v6328
    %v6372 = vmul.f32 %v6040, %v6328
    %v6373 = vmul.f32 %v6043, %v6328
    %v6374 = vmul.f32 %v6046, %v6328
    %v6375 = vmul.f32 %v6049, %v6328
    %v6376 = vmul.f32 %v6052, %v6328
    %v6377 = vmul.f32 %v6055, %v6328
    %v6378 = vmul.f32 %v6058, %v6328
    %v6379 = vmul.f32 %v6061, %v6328
    %v6380 = vmul.f32 %v6064, %v6328
    %v6381 = vmul.f32 %v6067, %v6328
    %v6382 = vmul.f32 %v6070, %v6328
    %v6383 = vmul.f32 %v6073, %v6328
    %v6384 = vmul.f32 %v6076, %v6328
    %v6385 = vmul.f32 %v6079, %v6328
    %v6386 = vmul.f32 %v6082, %v6328
    %v6387 = vmul.f32 %v6085, %v6328
    %v6388 = vmul.f32 %v6088, %v6328
    %v6389 = vmul.f32 %v6091, %v6328
    %v6390 = vmul.f32 %v6094, %v6328
    %v6391 = vmul.f32 %v6097, %v6328
    %v6392 = vmul.f32 %v6100, %v6328
    %v6393 = vmul.f32 %v6103, %v6328
    %v6395 = vperm.slane %v6326, 0
    %v6397 = vadd.f32 %v6330, %v6395
    %v6398 = vadd.f32 %v6331, %v6395
    %v6399 = vadd.f32 %v6332, %v6395
    %v6400 = vadd.f32 %v6333, %v6395
    %v6401 = vadd.f32 %v6334, %v6395
    %v6402 = vadd.f32 %v6335, %v6395
    %v6403 = vadd.f32 %v6336, %v6395
    %v6404 = vadd.f32 %v6337, %v6395
    %v6405 = vadd.f32 %v6338, %v6395
    %v6406 = vadd.f32 %v6339, %v6395
    %v6407 = vadd.f32 %v6340, %v6395
    %v6408 = vadd.f32 %v6341, %v6395
    %v6409 = vadd.f32 %v6342, %v6395
    %v6410 = vadd.f32 %v6343, %v6395
    %v6411 = vadd.f32 %v6344, %v6395
    %v6412 = vadd.f32 %v6345, %v6395
    %v6413 = vadd.f32 %v6346, %v6395
    %v6414 = vadd.f32 %v6347, %v6395
    %v6415 = vadd.f32 %v6348, %v6395
    %v6416 = vadd.f32 %v6349, %v6395
    %v6417 = vadd.f32 %v6350, %v6395
    %v6418 = vadd.f32 %v6351, %v6395
    %v6419 = vadd.f32 %v6352, %v6395
    %v6420 = vadd.f32 %v6353, %v6395
    %v6421 = vadd.f32 %v6354, %v6395
    %v6422 = vadd.f32 %v6355, %v6395
    %v6423 = vadd.f32 %v6356, %v6395
    %v6424 = vadd.f32 %v6357, %v6395
    %v6425 = vadd.f32 %v6358, %v6395
    %v6426 = vadd.f32 %v6359, %v6395
    %v6427 = vadd.f32 %v6360, %v6395
    %v6428 = vadd.f32 %v6361, %v6395
    %v6429 = vadd.f32 %v6362, %v6395
    %v6430 = vadd.f32 %v6363, %v6395
    %v6431 = vadd.f32 %v6364, %v6395
    %v6432 = vadd.f32 %v6365, %v6395
    %v6433 = vadd.f32 %v6366, %v6395
    %v6434 = vadd.f32 %v6367, %v6395
    %v6435 = vadd.f32 %v6368, %v6395
    %v6436 = vadd.f32 %v6369, %v6395
    %v6437 = vadd.f32 %v6370, %v6395
    %v6438 = vadd.f32 %v6371, %v6395
    %v6439 = vadd.f32 %v6372, %v6395
    %v6440 = vadd.f32 %v6373, %v6395
    %v6441 = vadd.f32 %v6374, %v6395
    %v6442 = vadd.f32 %v6375, %v6395
    %v6443 = vadd.f32 %v6376, %v6395
    %v6444 = vadd.f32 %v6377, %v6395
    %v6445 = vadd.f32 %v6378, %v6395
    %v6446 = vadd.f32 %v6379, %v6395
    %v6447 = vadd.f32 %v6380, %v6395
    %v6448 = vadd.f32 %v6381, %v6395
    %v6449 = vadd.f32 %v6382, %v6395
    %v6450 = vadd.f32 %v6383, %v6395
    %v6451 = vadd.f32 %v6384, %v6395
    %v6452 = vadd.f32 %v6385, %v6395
    %v6453 = vadd.f32 %v6386, %v6395
    %v6454 = vadd.f32 %v6387, %v6395
    %v6455 = vadd.f32 %v6388, %v6395
    %v6456 = vadd.f32 %v6389, %v6395
    %v6457 = vadd.f32 %v6390, %v6395
    %v6458 = vadd.f32 %v6391, %v6395
    %v6459 = vadd.f32 %v6392, %v6395
    %v6460 = vadd.f32 %v6393, %v6395
    %v6461 = vmax.f32 %v6397, 0.0
    %v6462 = vmax.f32 %v6398, 0.0
    %v6463 = vmax.f32 %v6399, 0.0
    %v6464 = vmax.f32 %v6400, 0.0
    %v6465 = vmax.f32 %v6401, 0.0
    %v6466 = vmax.f32 %v6402, 0.0
    %v6467 = vmax.f32 %v6403, 0.0
    %v6468 = vmax.f32 %v6404, 0.0
    %v6469 = vmax.f32 %v6405, 0.0
    %v6470 = vmax.f32 %v6406, 0.0
    %v6471 = vmax.f32 %v6407, 0.0
    %v6472 = vmax.f32 %v6408, 0.0
    %v6473 = vmax.f32 %v6409, 0.0
    %v6474 = vmax.f32 %v6410, 0.0
    %v6475 = vmax.f32 %v6411, 0.0
    %v6476 = vmax.f32 %v6412, 0.0
    %v6477 = vmax.f32 %v6413, 0.0
    %v6478 = vmax.f32 %v6414, 0.0
    %v6479 = vmax.f32 %v6415, 0.0
    %v6480 = vmax.f32 %v6416, 0.0
    %v6481 = vmax.f32 %v6417, 0.0
    %v6482 = vmax.f32 %v6418, 0.0
    %v6483 = vmax.f32 %v6419, 0.0
    %v6484 = vmax.f32 %v6420, 0.0
    %v6485 = vmax.f32 %v6421, 0.0
    %v6486 = vmax.f32 %v6422, 0.0
    %v6487 = vmax.f32 %v6423, 0.0
    %v6488 = vmax.f32 %v6424, 0.0
    %v6489 = vmax.f32 %v6425, 0.0
    %v6490 = vmax.f32 %v6426, 0.0
    %v6491 = vmax.f32 %v6427, 0.0
    %v6492 = vmax.f32 %v6428, 0.0
    %v6493 = vmax.f32 %v6429, 0.0
    %v6494 = vmax.f32 %v6430, 0.0
    %v6495 = vmax.f32 %v6431, 0.0
    %v6496 = vmax.f32 %v6432, 0.0
    %v6497 = vmax.f32 %v6433, 0.0
    %v6498 = vmax.f32 %v6434, 0.0
    %v6499 = vmax.f32 %v6435, 0.0
    %v6500 = vmax.f32 %v6436, 0.0
    %v6501 = vmax.f32 %v6437, 0.0
    %v6502 = vmax.f32 %v6438, 0.0
    %v6503 = vmax.f32 %v6439, 0.0
    %v6504 = vmax.f32 %v6440, 0.0
    %v6505 = vmax.f32 %v6441, 0.0
    %v6506 = vmax.f32 %v6442, 0.0
    %v6507 = vmax.f32 %v6443, 0.0
    %v6508 = vmax.f32 %v6444, 0.0
    %v6509 = vmax.f32 %v6445, 0.0
    %v6510 = vmax.f32 %v6446, 0.0
    %v6511 = vmax.f32 %v6447, 0.0
    %v6512 = vmax.f32 %v6448, 0.0
    %v6513 = vmax.f32 %v6449, 0.0
    %v6514 = vmax.f32 %v6450, 0.0
    %v6515 = vmax.f32 %v6451, 0.0
    %v6516 = vmax.f32 %v6452, 0.0
    %v6517 = vmax.f32 %v6453, 0.0
    %v6518 = vmax.f32 %v6454, 0.0
    %v6519 = vmax.f32 %v6455, 0.0
    %v6520 = vmax.f32 %v6456, 0.0
    %v6521 = vmax.f32 %v6457, 0.0
    %v6522 = vmax.f32 %v6458, 0.0
    %v6523 = vmax.f32 %v6459, 0.0
    %v6524 = vmax.f32 %v6460, 0.0
    %6525 = vst [vmem:[#allocation6] sm:$0xff] %v6461
    %6526 = vst [vmem:[#allocation6 + $0x8] sm:$0xff] %v6462
    %6527 = vst [vmem:[#allocation6 + $0x10] sm:$0xff] %v6463
    %6528 = vst [vmem:[#allocation6 + $0x18] sm:$0xff] %v6464
    %6529 = vst [vmem:[#allocation6 + $0x20] sm:$0xff] %v6465
    %6530 = vst [vmem:[#allocation6 + $0x28] sm:$0xff] %v6466
    %6531 = vst [vmem:[#allocation6 + $0x30] sm:$0xff] %v6467
    %6532 = vst [vmem:[#allocation6 + $0x38] sm:$0xff] %v6468
    %6533 = vst [vmem:[#allocation6 + $0x40] sm:$0xff] %v6469
    %6534 = vst [vmem:[#allocation6 + $0x48] sm:$0xff] %v6470
    %6535 = vst [vmem:[#allocation6 + $0x50] sm:$0xff] %v6471
    %6536 = vst [vmem:[#allocation6 + $0x58] sm:$0xff] %v6472
    %6537 = vst [vmem:[#allocation6 + $0x60] sm:$0xff] %v6473
    %6538 = vst [vmem:[#allocation6 + $0x68] sm:$0xff] %v6474
    %6539 = vst [vmem:[#allocation6 + $0x70] sm:$0xff] %v6475
    %6540 = vst [vmem:[#allocation6 + $0x78] sm:$0xff] %v6476
    %6541 = vst [vmem:[#allocation6 + $0x80] sm:$0xff] %v6477
    %6542 = vst [vmem:[#allocation6 + $0x88] sm:$0xff] %v6478
    %6543 = vst [vmem:[#allocation6 + $0x90] sm:$0xff] %v6479
    %6544 = vst [vmem:[#allocation6 + $0x98] sm:$0xff] %v6480
    %6545 = vst [vmem:[#allocation6 + $0xa0] sm:$0xff] %v6481
    %6546 = vst [vmem:[#allocation6 + $0xa8] sm:$0xff] %v6482
    %6547 = vst [vmem:[#allocation6 + $0xb0] sm:$0xff] %v6483
    %6548 = vst [vmem:[#allocation6 + $0xb8] sm:$0xff] %v6484
    %6549 = vst [vmem:[#allocation6 + $0xc0] sm:$0xff] %v6485
    %6550 = vst [vmem:[#allocation6 + $0xc8] sm:$0xff] %v6486
    %6551 = vst [vmem:[#allocation6 + $0xd0] sm:$0xff] %v6487
    %6552 = vst [vmem:[#allocation6 + $0xd8] sm:$0xff] %v6488
    %6553 = vst [vmem:[#allocation6 + $0xe0] sm:$0xff] %v6489
    %6554 = vst [vmem:[#allocation6 + $0xe8] sm:$0xff] %v6490
    %6555 = vst [vmem:[#allocation6 + $0xf0] sm:$0xff] %v6491
    %6556 = vst [vmem:[#allocation6 + $0xf8] sm:$0xff] %v6492
    %6557 = vst [vmem:[#allocation6 + $0x100] sm:$0xff] %v6493
    %6558 = vst [vmem:[#allocation6 + $0x108] sm:$0xff] %v6494
    %6559 = vst [vmem:[#allocation6 + $0x110] sm:$0xff] %v6495
    %6560 = vst [vmem:[#allocation6 + $0x118] sm:$0xff] %v6496
    %6561 = vst [vmem:[#allocation6 + $0x120] sm:$0xff] %v6497
    %6562 = vst [vmem:[#allocation6 + $0x128] sm:$0xff] %v6498
    %6563 = vst [vmem:[#allocation6 + $0x130] sm:$0xff] %v6499
    %6564 = vst [vmem:[#allocation6 + $0x138] sm:$0xff] %v6500
    %6565 = vst [vmem:[#allocation6 + $0x140] sm:$0xff] %v6501
    %6566 = vst [vmem:[#allocation6 + $0x148] sm:$0xff] %v6502
    %6567 = vst [vmem:[#allocation6 + $0x150] sm:$0xff] %v6503
    %6568 = vst [vmem:[#allocation6 + $0x158] sm:$0xff] %v6504
    %6569 = vst [vmem:[#allocation6 + $0x160] sm:$0xff] %v6505
    %6570 = vst [vmem:[#allocation6 + $0x168] sm:$0xff] %v6506
    %6571 = vst [vmem:[#allocation6 + $0x170] sm:$0xff] %v6507
    %6572 = vst [vmem:[#allocation6 + $0x178] sm:$0xff] %v6508
    %6573 = vst [vmem:[#allocation6 + $0x180] sm:$0xff] %v6509
    %6574 = vst [vmem:[#allocation6 + $0x188] sm:$0xff] %v6510
    %6575 = vst [vmem:[#allocation6 + $0x190] sm:$0xff] %v6511
    %6576 = vst [vmem:[#allocation6 + $0x198] sm:$0xff] %v6512
    %6577 = vst [vmem:[#allocation6 + $0x1a0] sm:$0xff] %v6513
    %6578 = vst [vmem:[#allocation6 + $0x1a8] sm:$0xff] %v6514
    %6579 = vst [vmem:[#allocation6 + $0x1b0] sm:$0xff] %v6515
    %6580 = vst [vmem:[#allocation6 + $0x1b8] sm:$0xff] %v6516
    %6581 = vst [vmem:[#allocation6 + $0x1c0] sm:$0xff] %v6517
    %6582 = vst [vmem:[#allocation6 + $0x1c8] sm:$0xff] %v6518
    %6583 = vst [vmem:[#allocation6 + $0x1d0] sm:$0xff] %v6519
    %6584 = vst [vmem:[#allocation6 + $0x1d8] sm:$0xff] %v6520
    %6585 = vst [vmem:[#allocation6 + $0x1e0] sm:$0xff] %v6521
    %6586 = vst [vmem:[#allocation6 + $0x1e8] sm:$0xff] %v6522
    %6587 = vst [vmem:[#allocation6 + $0x1f0] sm:$0xff] %v6523
    %6588 = vst [vmem:[#allocation6 + $0x1f8] sm:$0xff] %v6524
    // Predicated region
    $region34: #{tpu_custom_call.1} parent=1 // pred_check
      _
    $region35: #{tpu_custom_call.1} parent=1 // pred_check_branch
      %6590 = sbr.rel (0) target = $region37
    $region36: #{tpu_custom_call.1} parent=1 // pred_region
      %6592 = vsyncadd [#allocation5], 0
      %s6593 = sshll.u32 [#allocation6], 4
      %s6594 = int_to_ptr.vmem [resolvable:$true] %s6593
      %s6595 = sshll.u32 %s7, 4
      %s6596 = int_to_ptr.hbm [resolvable:$true] %s6595
      %6601 = dma.vmem_to_hbm [thread:$0]  %s6594, 8192, %s6596, [#allocation5], 128, 128, 8
    $region37: #{tpu_custom_call.1} parent=1 // pred_fallthru
      _
    // Predicated region
    $region38: #{tpu_custom_call.1} parent=1 // pred_check
      _
    $region39: #{tpu_custom_call.1} parent=1 // pred_check_branch
      %6603 = sbr.rel (0) target = $region41
    $region40: #{tpu_custom_call.1} parent=1 // pred_region
      %6605 = dma.done [#allocation5], 8192
    $region41: #{tpu_custom_call.1} parent=1 // pred_fallthru
      _
    %6606 = vsyncpa [#allocation4], 1
    %6607 = vsyncpa [#allocation5], 1

</llo_original>
